<compile_context>
chip_gen: v6e
topology: v6e:2x2x1
jax: 0.10.0
libtpu: 0.0.40
codegen_flags: <defaults>
</compile_context>

<pallas_src>
import functools

import jax
import jax.numpy as jnp
from jax.experimental import pallas as pl
from jax.experimental.pallas import tpu as pltpu


def _recon_kernel(H, W, Cin, C1, C2, Cout, B_TILE,
                  x1_ref, w1_ref, b1_ref, w2_ref, b2_ref,
                  w3_ref, b3_ref, w4t_ref, b4_ref,
                  out_ref, h1pad_ref):
    HW = H * W
    M = B_TILE * HW

    # ---- conv1: 3x3 as one im2col matmul (K = 9*Cin), bf16 operands, f32 acc ----
    x1 = x1_ref[...].reshape(M, 9 * Cin)                       # bf16 (M, 9*Cin)
    h1 = jnp.maximum(
        jnp.dot(x1, w1_ref[...], preferred_element_type=jnp.float32)
        + b1_ref[...], 0.0)                                    # f32 (M, C1)

    # ---- stage zero-padded h1 for conv2.  Border-only zeroing (done every step:
    # correctness must not depend on program_id when the batch axis is sharded
    # across cores); the interior is written exactly once.
    zrow = jnp.zeros((B_TILE, 1, W + 2, C1), jnp.float32)
    zcol = jnp.zeros((B_TILE, H + 2, 1, C1), jnp.float32)
    h1pad_ref[:, 0:1, :, :] = zrow
    h1pad_ref[:, H + 1:H + 2, :, :] = zrow
    h1pad_ref[:, :, 0:1, :] = zcol
    h1pad_ref[:, :, W + 1:W + 2, :] = zcol
    h1pad_ref[:, 1:1 + H, 1:1 + W, :] = h1.reshape(B_TILE, H, W, C1)

    # ---- conv2: 3x3, pad 1, as ONE im2col matmul (K = 9*C1) instead of 9 dots --
    patches2 = jnp.concatenate(
        [h1pad_ref[:, di:di + H, dj:dj + W, :].reshape(M, C1)
         for di in range(3) for dj in range(3)], axis=-1)      # f32 (M, 9*C1)
    h2 = jnp.maximum(
        jnp.dot(patches2.astype(jnp.bfloat16), w2_ref[...],
                preferred_element_type=jnp.float32)
        + b2_ref[...], 0.0)                                    # f32 (M, C2)

    # ---- conv3: 1x1, C2 -> C2 (row-major, bf16 operands, f32 acc) ----
    h3 = jnp.maximum(
        jnp.dot(h2.astype(jnp.bfloat16), w3_ref[...],
                preferred_element_type=jnp.float32)
        + b3_ref[...], 0.0)                                    # f32 (M, C2)

    # ---- conv4: 1x1, C2 -> Cout, ONE matmul over all of M, channel-major output
    # (Cout, M); bias broadcast hoisted out of the store loop.
    out_cm = jnp.einsum('ck,mk->cm', w4t_ref[...], h3.astype(jnp.bfloat16),
                        preferred_element_type=jnp.float32) + b4_ref[...]

    # Per-image (Cout, HW) slab stores; lane slices are HW-aligned (multiple of
    # 128), so the stores are lane-dense.
    for b in range(B_TILE):
        out_ref[b] = out_cm[:, b * HW:(b + 1) * HW]


def _pick_b_tile(N, H, W, Cin, C1, C2):
    """Largest divisor of N that (a) keeps >= 2 grid steps when N > 1 (so v7x's
    two TensorCores both get work) and (b) keeps the per-step VMEM footprint
    comfortably small on every generation."""
    HW = H * W
    lanes = lambda c: ((c + 127) // 128) * 128
    per_img = (2 * HW * lanes(9 * Cin) * 2            # bf16 input block, 2 buffers
               + (H + 2) * (W + 2) * lanes(C1) * 4    # padded h1 scratch (f32)
               + HW * (lanes(9 * C1) * 2              # conv2 im2col operand (bf16)
                       + 4 * lanes(C2) * 4))          # h1/h2/h3/temps (f32)
    budget = 16 << 20
    for cand in range(min(N, 16), 0, -1):
        if N % cand:
            continue
        if N > 1 and N // cand < 2:       # keep >= 2 grid steps for 2-TC chips
            continue
        if cand * per_img > budget:
            continue
        return cand
    return 1


def _vmem_limit_bytes(B_TILE, H, W, Cin, C1, C2, Cout):
    """Estimate the per-step VMEM footprint and clamp to a range that is safe on
    all generations (>= 32 MiB scoped default, <= 48 MiB for v7x's 64 MiB VMEM)."""
    HW = H * W
    lanes = lambda c: ((c + 127) // 128) * 128
    est = (2 * B_TILE * HW * lanes(9 * Cin) * 2            # input block, 2 buffers
           + 2 * B_TILE * 8 * HW * 4                       # output block, 2 buffers
           + B_TILE * (H + 2) * (W + 2) * lanes(C1) * 4    # h1pad scratch
           + B_TILE * HW * (lanes(9 * C1) * 2 + 4 * lanes(C2) * 4)   # temps
           + (8 << 20))                                    # weights + headroom
    return max(32 << 20, min(est, 48 << 20))


def recon_net_pallas(x_nchw, params):
    """x_nchw: (N, Cin, H, W) float32.  Returns (N, Cout, H, W) float32."""
    w1, b1, w2, b2, w3, b3, w4, b4 = params
    N, Cin, H, W = x_nchw.shape
    C1 = w1.shape[-1]
    C2 = w2.shape[-1]
    Cout = w4.shape[-1]
    HW = H * W

    B_TILE = _pick_b_tile(N, H, W, Cin, C1, C2)

    # XLA-side im2col for conv1: (N, H*W, 9*Cin), channel order (kh, kw, cin)
    # matching w1.reshape(9*Cin, C1).  Shipped in bf16 (halves the 9x HBM traffic).
    # TODO(synk): for large H*W on v5e, DMA a compact padded NHWC block instead and
    # build the conv1 im2col in-kernel to avoid the 9x HBM blow-up.
    x_nhwc = jnp.transpose(x_nchw, (0, 2, 3, 1))
    xp = jnp.pad(x_nhwc, ((0, 0), (1, 1), (1, 1), (0, 0)))
    patches = jnp.concatenate(
        [xp[:, di:di + H, dj:dj + W, :] for di in range(3) for dj in range(3)],
        axis=-1).reshape(N, HW, 9 * Cin).astype(jnp.bfloat16)

    w1r = w1.reshape(9 * Cin, C1).astype(jnp.bfloat16)
    w2r = w2.reshape(9 * C1, C2).astype(jnp.bfloat16)
    w3r = w3.astype(jnp.bfloat16)                    # (C2, C2)
    w4t = jnp.transpose(w4).astype(jnp.bfloat16)     # (Cout, C2)
    b1r = b1.reshape(1, C1).astype(jnp.float32)
    b2r = b2.reshape(1, C2).astype(jnp.float32)
    b3r = b3.reshape(1, C2).astype(jnp.float32)
    b4c = b4.reshape(Cout, 1).astype(jnp.float32)    # column bias for (Cout, M)

    kernel = functools.partial(_recon_kernel, H, W, Cin, C1, C2, Cout, B_TILE)

    out = pl.pallas_call(
        kernel,
        out_shape=jax.ShapeDtypeStruct((N, Cout, HW), jnp.float32),
        grid_spec=pltpu.PrefetchScalarGridSpec(
            num_scalar_prefetch=0,
            grid=(N // B_TILE,),
            in_specs=[
                pl.BlockSpec((B_TILE, HW, 9 * Cin), lambda n: (n, 0, 0)),
                pl.BlockSpec((9 * Cin, C1), lambda n: (0, 0)),
                pl.BlockSpec((1, C1), lambda n: (0, 0)),
                pl.BlockSpec((9 * C1, C2), lambda n: (0, 0)),
                pl.BlockSpec((1, C2), lambda n: (0, 0)),
                pl.BlockSpec((C2, C2), lambda n: (0, 0)),
                pl.BlockSpec((1, C2), lambda n: (0, 0)),
                pl.BlockSpec((Cout, C2), lambda n: (0, 0)),
                pl.BlockSpec((Cout, 1), lambda n: (0, 0)),
            ],
            out_specs=pl.BlockSpec((B_TILE, Cout, HW), lambda n: (n, 0, 0)),
            scratch_shapes=[
                pltpu.VMEM((B_TILE, H + 2, W + 2, C1), jnp.float32)],
        ),
        compiler_params=pltpu.CompilerParams(
            dimension_semantics=("parallel",),        # batch is independent
            vmem_limit_bytes=_vmem_limit_bytes(B_TILE, H, W, Cin, C1, C2, Cout)),
    )(patches, w1r, b1r, w2r, b2r, w3r, b3r, w4t, b4c)

    # (N, Cout, H*W) -> (N, Cout, H, W) is a free reshape (no transpose needed).
    return out.reshape(N, Cout, H, W)


def ref_forward(x_nchw, params):
    """Pure-JAX reference (lax conv, highest precision) for correctness checking."""
    w1, b1, w2, b2, w3, b3, w4, b4 = params
    x = jnp.transpose(x_nchw, (0, 2, 3, 1))

    def conv(x, w, b, pad):
        y = jax.lax.conv_general_dilated(
            x, w, window_strides=(1, 1),
            padding=[(pad, pad), (pad, pad)],
            dimension_numbers=('NHWC', 'HWIO', 'NHWC'),
            precision=jax.lax.Precision.HIGHEST)
        return y + b.reshape(1, 1, 1, -1)

    h = jax.nn.relu(conv(x, w1, b1, 1))
    h = jax.nn.relu(conv(h, w2, b2, 1))
    h = jax.nn.relu(conv(h, w3.reshape(1, 1, *w3.shape), b3, 0))
    y = conv(h, w4.reshape(1, 1, *w4.shape), b4, 0)
    return jnp.transpose(y, (0, 3, 1, 2))


def init_params(key, inc=3, outc=3):
    ks = jax.random.split(key, 8)
    scale = 0.1
    w1 = scale * jax.random.normal(ks[0], (3, 3, inc, 32), jnp.float32)
    b1 = scale * jax.random.normal(ks[1], (1, 32), jnp.float32)
    w2 = scale * jax.random.normal(ks[2], (3, 3, 32, 32), jnp.float32)
    b2 = scale * jax.random.normal(ks[3], (1, 32), jnp.float32)
    w3 = scale * jax.random.normal(ks[4], (32, 32), jnp.float32)
    b3 = scale * jax.random.normal(ks[5], (1, 32), jnp.float32)
    w4 = scale * jax.random.normal(ks[6], (32, outc), jnp.float32)
    b4 = scale * jax.random.normal(ks[7], (1, outc), jnp.float32)
    return (w1, b1, w2, b2, w3, b3, w4, b4)


if __name__ == "__main__":
    key = jax.random.PRNGKey(0)
    k_x, k_p = jax.random.split(key)

    # N=6 -> B_TILE=3, grid=(2,): exercises batch packing and >= 2 grid steps.
    N, Cin, Cout, H, W = 6, 3, 3, 16, 16
    x = jax.random.normal(k_x, (N, Cin, H, W), jnp.float32)
    params = init_params(k_p, inc=Cin, outc=Cout)

    out = jax.block_until_ready(recon_net_pallas(x, params))
    ref = jax.block_until_ready(ref_forward(x, params))

    assert out.shape == (N, Cout, H, W)
    err = jnp.max(jnp.abs(out - ref))
    # bf16 MXU operands with f32 accumulation -> loosen the pure-f32 tolerance.
    assert jnp.allclose(out, ref, atol=5e-2, rtol=5e-2), f"max abs err {err}"

    print("KERNEL_OK")
</pallas_src>

<mosaic_0001>
module attributes {stable_mosaic.version = 11 : i64} {
  func.func @_recon_kernel(%arg0: i32, %arg1: memref<3x256x27xbf16, #tpu.memory_space<vmem>>, %arg2: memref<27x32xbf16, #tpu.memory_space<vmem>>, %arg3: memref<1x32xf32, #tpu.memory_space<vmem>>, %arg4: memref<288x32xbf16, #tpu.memory_space<vmem>>, %arg5: memref<1x32xf32, #tpu.memory_space<vmem>>, %arg6: memref<32x32xbf16, #tpu.memory_space<vmem>>, %arg7: memref<1x32xf32, #tpu.memory_space<vmem>>, %arg8: memref<3x32xbf16, #tpu.memory_space<vmem>>, %arg9: memref<3x1xf32, #tpu.memory_space<vmem>>, %arg10: memref<3x3x256xf32, #tpu.memory_space<vmem>>, %arg11: memref<3x18x18x32xf32, #tpu.memory_space<vmem>>) attributes {dimension_semantics = [#tpu.dimension_semantics<parallel>], iteration_bounds = array<i64: 2>, scalar_prefetch = 0 : i64, scratch_operands = 1 : i64, tpu.core_type = #tpu.core_type<tc>, window_params = [{transform_indices = @transform_0, window_bounds = array<i64: 3, 256, 27>}, {pipeline_mode = #tpu.pipeline_mode<synchronous>, transform_indices = @transform_1, window_bounds = array<i64: 27, 32>}, {pipeline_mode = #tpu.pipeline_mode<synchronous>, transform_indices = @transform_2, window_bounds = array<i64: 1, 32>}, {pipeline_mode = #tpu.pipeline_mode<synchronous>, transform_indices = @transform_3, window_bounds = array<i64: 288, 32>}, {pipeline_mode = #tpu.pipeline_mode<synchronous>, transform_indices = @transform_4, window_bounds = array<i64: 1, 32>}, {pipeline_mode = #tpu.pipeline_mode<synchronous>, transform_indices = @transform_5, window_bounds = array<i64: 32, 32>}, {pipeline_mode = #tpu.pipeline_mode<synchronous>, transform_indices = @transform_6, window_bounds = array<i64: 1, 32>}, {pipeline_mode = #tpu.pipeline_mode<synchronous>, transform_indices = @transform_7, window_bounds = array<i64: 3, 32>}, {pipeline_mode = #tpu.pipeline_mode<synchronous>, transform_indices = @transform_8, window_bounds = array<i64: 3, 1>}, {transform_indices = @transform_9, window_bounds = array<i64: 3, 3, 256>}]} {
    %c0 = arith.constant 0 : index
    %c0_0 = arith.constant 0 : index
    %c0_1 = arith.constant 0 : index
    %0 = vector.load %arg1[%c0, %c0_0, %c0_1] : memref<3x256x27xbf16, #tpu.memory_space<vmem>>, vector<3x256x27xbf16>
    %1 = vector.shape_cast %0 : vector<3x256x27xbf16> to vector<768x27xbf16>
    %c0_2 = arith.constant 0 : index
    %c0_3 = arith.constant 0 : index
    %2 = vector.load %arg2[%c0_2, %c0_3] : memref<27x32xbf16, #tpu.memory_space<vmem>>, vector<27x32xbf16>
    %cst = arith.constant dense<0.000000e+00> : vector<768x32xf32>
    %3 = tpu.matmul %1, %2, %cst {dimension_numbers = #tpu.dot_dimension_numbers<[1], [0], [0], [1], [0, 0, 1, 1], [], []>} : vector<768x27xbf16>, vector<27x32xbf16>, vector<768x32xf32> -> vector<768x32xf32>
    %c0_4 = arith.constant 0 : index
    %c0_5 = arith.constant 0 : index
    %4 = vector.load %arg3[%c0_4, %c0_5] : memref<1x32xf32, #tpu.memory_space<vmem>>, vector<1x32xf32>
    %5 = vector.broadcast %4 : vector<1x32xf32> to vector<768x32xf32>
    %6 = arith.addf %3, %5 : vector<768x32xf32>
    %cst_6 = arith.constant 0.000000e+00 : f32
    %7 = vector.broadcast %cst_6 : f32 to vector<768x32xf32>
    %8 = arith.maximumf %6, %7 : vector<768x32xf32>
    %cst_7 = arith.constant 0.000000e+00 : f32
    %9 = vector.broadcast %cst_7 : f32 to vector<3x1x18x32xf32>
    %cst_8 = arith.constant 0.000000e+00 : f32
    %10 = vector.broadcast %cst_8 : f32 to vector<3x18x1x32xf32>
    %c0_9 = arith.constant 0 : index
    %c0_10 = arith.constant 0 : index
    %c0_11 = arith.constant 0 : index
    %c0_12 = arith.constant 0 : index
    %11 = vector.load %arg11[%c0_9, %c0_10, %c0_11, %c0_12] : memref<3x18x18x32xf32, #tpu.memory_space<vmem>>, vector<3x1x18x32xf32>
    tpu.vector_store %arg11[%c0_9, %c0_10, %c0_11, %c0_12], %9 {strides = array<i32>} : memref<3x18x18x32xf32, #tpu.memory_space<vmem>>, vector<3x1x18x32xf32>,
    %c0_13 = arith.constant 0 : index
    %c17 = arith.constant 17 : index
    %c0_14 = arith.constant 0 : index
    %c0_15 = arith.constant 0 : index
    %12 = vector.load %arg11[%c0_13, %c17, %c0_14, %c0_15] : memref<3x18x18x32xf32, #tpu.memory_space<vmem>>, vector<3x1x18x32xf32>
    tpu.vector_store %arg11[%c0_13, %c17, %c0_14, %c0_15], %9 {strides = array<i32>} : memref<3x18x18x32xf32, #tpu.memory_space<vmem>>, vector<3x1x18x32xf32>,
    %c0_16 = arith.constant 0 : index
    %c0_17 = arith.constant 0 : index
    %c0_18 = arith.constant 0 : index
    %c0_19 = arith.constant 0 : index
    %13 = vector.load %arg11[%c0_16, %c0_17, %c0_18, %c0_19] : memref<3x18x18x32xf32, #tpu.memory_space<vmem>>, vector<3x18x1x32xf32>
    tpu.vector_store %arg11[%c0_16, %c0_17, %c0_18, %c0_19], %10 {strides = array<i32>} : memref<3x18x18x32xf32, #tpu.memory_space<vmem>>, vector<3x18x1x32xf32>,
    %c0_20 = arith.constant 0 : index
    %c0_21 = arith.constant 0 : index
    %c17_22 = arith.constant 17 : index
    %c0_23 = arith.constant 0 : index
    %14 = vector.load %arg11[%c0_20, %c0_21, %c17_22, %c0_23] : memref<3x18x18x32xf32, #tpu.memory_space<vmem>>, vector<3x18x1x32xf32>
    tpu.vector_store %arg11[%c0_20, %c0_21, %c17_22, %c0_23], %10 {strides = array<i32>} : memref<3x18x18x32xf32, #tpu.memory_space<vmem>>, vector<3x18x1x32xf32>,
    %15 = vector.shape_cast %8 : vector<768x32xf32> to vector<3x16x16x32xf32>
    %c0_24 = arith.constant 0 : index
    %c1 = arith.constant 1 : index
    %c1_25 = arith.constant 1 : index
    %c0_26 = arith.constant 0 : index
    %16 = vector.load %arg11[%c0_24, %c1, %c1_25, %c0_26] : memref<3x18x18x32xf32, #tpu.memory_space<vmem>>, vector<3x16x16x32xf32>
    tpu.vector_store %arg11[%c0_24, %c1, %c1_25, %c0_26], %15 {strides = array<i32>} : memref<3x18x18x32xf32, #tpu.memory_space<vmem>>, vector<3x16x16x32xf32>,
    %c0_27 = arith.constant 0 : index
    %c0_28 = arith.constant 0 : index
    %c0_29 = arith.constant 0 : index
    %c0_30 = arith.constant 0 : index
    %17 = vector.load %arg11[%c0_27, %c0_28, %c0_29, %c0_30] : memref<3x18x18x32xf32, #tpu.memory_space<vmem>>, vector<3x16x16x32xf32>
    %18 = vector.shape_cast %17 : vector<3x16x16x32xf32> to vector<768x32xf32>
    %c0_31 = arith.constant 0 : index
    %c0_32 = arith.constant 0 : index
    %c1_33 = arith.constant 1 : index
    %c0_34 = arith.constant 0 : index
    %19 = vector.load %arg11[%c0_31, %c0_32, %c1_33, %c0_34] : memref<3x18x18x32xf32, #tpu.memory_space<vmem>>, vector<3x16x16x32xf32>
    %20 = vector.shape_cast %19 : vector<3x16x16x32xf32> to vector<768x32xf32>
    %c0_35 = arith.constant 0 : index
    %c0_36 = arith.constant 0 : index
    %c2 = arith.constant 2 : index
    %c0_37 = arith.constant 0 : index
    %21 = vector.load %arg11[%c0_35, %c0_36, %c2, %c0_37] : memref<3x18x18x32xf32, #tpu.memory_space<vmem>>, vector<3x16x16x32xf32>
    %22 = vector.shape_cast %21 : vector<3x16x16x32xf32> to vector<768x32xf32>
    %c0_38 = arith.constant 0 : index
    %c1_39 = arith.constant 1 : index
    %c0_40 = arith.constant 0 : index
    %c0_41 = arith.constant 0 : index
    %23 = vector.load %arg11[%c0_38, %c1_39, %c0_40, %c0_41] : memref<3x18x18x32xf32, #tpu.memory_space<vmem>>, vector<3x16x16x32xf32>
    %24 = vector.shape_cast %23 : vector<3x16x16x32xf32> to vector<768x32xf32>
    %c0_42 = arith.constant 0 : index
    %c1_43 = arith.constant 1 : index
    %c1_44 = arith.constant 1 : index
    %c0_45 = arith.constant 0 : index
    %25 = vector.load %arg11[%c0_42, %c1_43, %c1_44, %c0_45] : memref<3x18x18x32xf32, #tpu.memory_space<vmem>>, vector<3x16x16x32xf32>
    %26 = vector.shape_cast %25 : vector<3x16x16x32xf32> to vector<768x32xf32>
    %c0_46 = arith.constant 0 : index
    %c1_47 = arith.constant 1 : index
    %c2_48 = arith.constant 2 : index
    %c0_49 = arith.constant 0 : index
    %27 = vector.load %arg11[%c0_46, %c1_47, %c2_48, %c0_49] : memref<3x18x18x32xf32, #tpu.memory_space<vmem>>, vector<3x16x16x32xf32>
    %28 = vector.shape_cast %27 : vector<3x16x16x32xf32> to vector<768x32xf32>
    %c0_50 = arith.constant 0 : index
    %c2_51 = arith.constant 2 : index
    %c0_52 = arith.constant 0 : index
    %c0_53 = arith.constant 0 : index
    %29 = vector.load %arg11[%c0_50, %c2_51, %c0_52, %c0_53] : memref<3x18x18x32xf32, #tpu.memory_space<vmem>>, vector<3x16x16x32xf32>
    %30 = vector.shape_cast %29 : vector<3x16x16x32xf32> to vector<768x32xf32>
    %c0_54 = arith.constant 0 : index
    %c2_55 = arith.constant 2 : index
    %c1_56 = arith.constant 1 : index
    %c0_57 = arith.constant 0 : index
    %31 = vector.load %arg11[%c0_54, %c2_55, %c1_56, %c0_57] : memref<3x18x18x32xf32, #tpu.memory_space<vmem>>, vector<3x16x16x32xf32>
    %32 = vector.shape_cast %31 : vector<3x16x16x32xf32> to vector<768x32xf32>
    %c0_58 = arith.constant 0 : index
    %c2_59 = arith.constant 2 : index
    %c2_60 = arith.constant 2 : index
    %c0_61 = arith.constant 0 : index
    %33 = vector.load %arg11[%c0_58, %c2_59, %c2_60, %c0_61] : memref<3x18x18x32xf32, #tpu.memory_space<vmem>>, vector<3x16x16x32xf32>
    %34 = vector.shape_cast %33 : vector<3x16x16x32xf32> to vector<768x32xf32>
    %35 = tpu.concatenate %18, %20, %22, %24, %26, %28, %30, %32, %34 in 1 : vector<768x32xf32>, vector<768x32xf32>, vector<768x32xf32>, vector<768x32xf32>, vector<768x32xf32>, vector<768x32xf32>, vector<768x32xf32>, vector<768x32xf32>, vector<768x32xf32> -> vector<768x288xf32>
    %36 = arith.truncf %35 : vector<768x288xf32> to vector<768x288xbf16>
    %c0_62 = arith.constant 0 : index
    %c0_63 = arith.constant 0 : index
    %37 = vector.load %arg4[%c0_62, %c0_63] : memref<288x32xbf16, #tpu.memory_space<vmem>>, vector<288x32xbf16>
    %cst_64 = arith.constant dense<0.000000e+00> : vector<768x32xf32>
    %38 = tpu.matmul %36, %37, %cst_64 {dimension_numbers = #tpu.dot_dimension_numbers<[1], [0], [0], [1], [0, 0, 1, 1], [], []>} : vector<768x288xbf16>, vector<288x32xbf16>, vector<768x32xf32> -> vector<768x32xf32>
    %c0_65 = arith.constant 0 : index
    %c0_66 = arith.constant 0 : index
    %39 = vector.load %arg5[%c0_65, %c0_66] : memref<1x32xf32, #tpu.memory_space<vmem>>, vector<1x32xf32>
    %40 = vector.broadcast %39 : vector<1x32xf32> to vector<768x32xf32>
    %41 = arith.addf %38, %40 : vector<768x32xf32>
    %cst_67 = arith.constant 0.000000e+00 : f32
    %42 = vector.broadcast %cst_67 : f32 to vector<768x32xf32>
    %43 = arith.maximumf %41, %42 : vector<768x32xf32>
    %44 = arith.truncf %43 : vector<768x32xf32> to vector<768x32xbf16>
    %c0_68 = arith.constant 0 : index
    %c0_69 = arith.constant 0 : index
    %45 = vector.load %arg6[%c0_68, %c0_69] : memref<32x32xbf16, #tpu.memory_space<vmem>>, vector<32x32xbf16>
    %cst_70 = arith.constant dense<0.000000e+00> : vector<768x32xf32>
    %46 = tpu.matmul %44, %45, %cst_70 {dimension_numbers = #tpu.dot_dimension_numbers<[1], [0], [0], [1], [0, 0, 1, 1], [], []>} : vector<768x32xbf16>, vector<32x32xbf16>, vector<768x32xf32> -> vector<768x32xf32>
    %c0_71 = arith.constant 0 : index
    %c0_72 = arith.constant 0 : index
    %47 = vector.load %arg7[%c0_71, %c0_72] : memref<1x32xf32, #tpu.memory_space<vmem>>, vector<1x32xf32>
    %48 = vector.broadcast %47 : vector<1x32xf32> to vector<768x32xf32>
    %49 = arith.addf %46, %48 : vector<768x32xf32>
    %cst_73 = arith.constant 0.000000e+00 : f32
    %50 = vector.broadcast %cst_73 : f32 to vector<768x32xf32>
    %51 = arith.maximumf %49, %50 : vector<768x32xf32>
    %c0_74 = arith.constant 0 : index
    %c0_75 = arith.constant 0 : index
    %52 = vector.load %arg8[%c0_74, %c0_75] : memref<3x32xbf16, #tpu.memory_space<vmem>>, vector<3x32xbf16>
    %53 = arith.truncf %51 : vector<768x32xf32> to vector<768x32xbf16>
    "tpu.trace_start"() <{level = 10 : i32, message = "ck,mk->cm"}> : () -> ()
    %cst_76 = arith.constant dense<0.000000e+00> : vector<3x768xf32>
    %54 = tpu.matmul %52, %53, %cst_76 {dimension_numbers = #tpu.dot_dimension_numbers<[1], [1], [0], [0], [0, 0, 1, 0], [], []>} : vector<3x32xbf16>, vector<768x32xbf16>, vector<3x768xf32> -> vector<3x768xf32>
    "tpu.trace_stop"() : () -> ()
    %c0_77 = arith.constant 0 : index
    %c0_78 = arith.constant 0 : index
    %55 = vector.load %arg9[%c0_77, %c0_78] : memref<3x1xf32, #tpu.memory_space<vmem>>, vector<3x1xf32>
    %56 = vector.broadcast %55 : vector<3x1xf32> to vector<3x768xf32>
    %57 = arith.addf %54, %56 : vector<3x768xf32>
    %58 = vector.extract_strided_slice %57 {offsets = [0, 0], sizes = [3, 256], strides = [1, 1]} : vector<3x768xf32> to vector<3x256xf32>
    %c0_79 = arith.constant 0 : index
    %c0_80 = arith.constant 0 : index
    %c0_81 = arith.constant 0 : index
    %59 = vector.load %arg10[%c0_79, %c0_80, %c0_81] : memref<3x3x256xf32, #tpu.memory_space<vmem>>, vector<1x3x256xf32>
    %60 = vector.shape_cast %59 : vector<1x3x256xf32> to vector<3x256xf32>
    %61 = vector.shape_cast %58 : vector<3x256xf32> to vector<1x3x256xf32>
    tpu.vector_store %arg10[%c0_79, %c0_80, %c0_81], %61 {strides = array<i32>} : memref<3x3x256xf32, #tpu.memory_space<vmem>>, vector<1x3x256xf32>,
    %62 = vector.extract_strided_slice %57 {offsets = [0, 256], sizes = [3, 256], strides = [1, 1]} : vector<3x768xf32> to vector<3x256xf32>
    %c1_82 = arith.constant 1 : index
    %c0_83 = arith.constant 0 : index
    %c0_84 = arith.constant 0 : index
    %63 = vector.load %arg10[%c1_82, %c0_83, %c0_84] : memref<3x3x256xf32, #tpu.memory_space<vmem>>, vector<1x3x256xf32>
    %64 = vector.shape_cast %63 : vector<1x3x256xf32> to vector<3x256xf32>
    %65 = vector.shape_cast %62 : vector<3x256xf32> to vector<1x3x256xf32>
    tpu.vector_store %arg10[%c1_82, %c0_83, %c0_84], %65 {strides = array<i32>} : memref<3x3x256xf32, #tpu.memory_space<vmem>>, vector<1x3x256xf32>,
    %66 = vector.extract_strided_slice %57 {offsets = [0, 512], sizes = [3, 256], strides = [1, 1]} : vector<3x768xf32> to vector<3x256xf32>
    %c2_85 = arith.constant 2 : index
    %c0_86 = arith.constant 0 : index
    %c0_87 = arith.constant 0 : index
    %67 = vector.load %arg10[%c2_85, %c0_86, %c0_87] : memref<3x3x256xf32, #tpu.memory_space<vmem>>, vector<1x3x256xf32>
    %68 = vector.shape_cast %67 : vector<1x3x256xf32> to vector<3x256xf32>
    %69 = vector.shape_cast %66 : vector<3x256xf32> to vector<1x3x256xf32>
    tpu.vector_store %arg10[%c2_85, %c0_86, %c0_87], %69 {strides = array<i32>} : memref<3x3x256xf32, #tpu.memory_space<vmem>>, vector<1x3x256xf32>,
    return
  }
  func.func @transform_0(%arg0: i32) -> (i32, i32, i32) {
    %c0_i32 = arith.constant 0 : i32
    %c0_i32_0 = arith.constant 0 : i32
    %c0_i32_1 = arith.constant 0 : i32
    return %arg0, %c0_i32, %c0_i32_0 : i32, i32, i32
  }
  func.func @transform_1(%arg0: i32) -> (i32, i32) {
    %c0_i32 = arith.constant 0 : i32
    %c0_i32_0 = arith.constant 0 : i32
    %c0_i32_1 = arith.constant 0 : i32
    return %c0_i32, %c0_i32_0 : i32, i32
  }
  func.func @transform_2(%arg0: i32) -> (i32, i32) {
    %c0_i32 = arith.constant 0 : i32
    %c0_i32_0 = arith.constant 0 : i32
    %c0_i32_1 = arith.constant 0 : i32
    return %c0_i32, %c0_i32_0 : i32, i32
  }
  func.func @transform_3(%arg0: i32) -> (i32, i32) {
    %c0_i32 = arith.constant 0 : i32
    %c0_i32_0 = arith.constant 0 : i32
    %c0_i32_1 = arith.constant 0 : i32
    return %c0_i32, %c0_i32_0 : i32, i32
  }
  func.func @transform_4(%arg0: i32) -> (i32, i32) {
    %c0_i32 = arith.constant 0 : i32
    %c0_i32_0 = arith.constant 0 : i32
    %c0_i32_1 = arith.constant 0 : i32
    return %c0_i32, %c0_i32_0 : i32, i32
  }
  func.func @transform_5(%arg0: i32) -> (i32, i32) {
    %c0_i32 = arith.constant 0 : i32
    %c0_i32_0 = arith.constant 0 : i32
    %c0_i32_1 = arith.constant 0 : i32
    return %c0_i32, %c0_i32_0 : i32, i32
  }
  func.func @transform_6(%arg0: i32) -> (i32, i32) {
    %c0_i32 = arith.constant 0 : i32
    %c0_i32_0 = arith.constant 0 : i32
    %c0_i32_1 = arith.constant 0 : i32
    return %c0_i32, %c0_i32_0 : i32, i32
  }
  func.func @transform_7(%arg0: i32) -> (i32, i32) {
    %c0_i32 = arith.constant 0 : i32
    %c0_i32_0 = arith.constant 0 : i32
    %c0_i32_1 = arith.constant 0 : i32
    return %c0_i32, %c0_i32_0 : i32, i32
  }
  func.func @transform_8(%arg0: i32) -> (i32, i32) {
    %c0_i32 = arith.constant 0 : i32
    %c0_i32_0 = arith.constant 0 : i32
    %c0_i32_1 = arith.constant 0 : i32
    return %c0_i32, %c0_i32_0 : i32, i32
  }
  func.func @transform_9(%arg0: i32) -> (i32, i32, i32) {
    %c0_i32 = arith.constant 0 : i32
    %c0_i32_0 = arith.constant 0 : i32
    %c0_i32_1 = arith.constant 0 : i32
    return %arg0, %c0_i32, %c0_i32_0 : i32, i32, i32
  }
}

</mosaic_0001>

<llo_original>
// kernel: tpu_custom_call.1
$region0: #{tpu_custom_call.1}
  #allocation0 [shape = 'u32[]', space=smem, size = 0x4, offset = 0x4, fixed_abs, tag = 'smem constant byte address 0x4 - core index']
  #allocation1 [shape = 'u32[144,128]{1,0:T(1,128)}', space=vmem, size = 0x12000, scoped, tag = 'internal scratch']
  #allocation2 [shape = 'f32[3,18,18,32]{3,2,1,0:T(8,128)}', space=vmem, size = 0xa2000, scoped, tag = 'scratch operand']
  %s0 = inlined_call_operand.vmem [shape: bf16[6,256,27], index: 0, kind: input, shape index: {}]
  %s1 = inlined_call_operand.vmem [shape: bf16[27,32], index: 1, kind: input, shape index: {}]
  %s2 = inlined_call_operand.vmem [shape: f32[1,32], index: 2, kind: input, shape index: {}]
  %s3 = inlined_call_operand.vmem [shape: bf16[288,32], index: 3, kind: input, shape index: {}]
  %s4 = inlined_call_operand.vmem [shape: f32[1,32], index: 4, kind: input, shape index: {}]
  %s5 = inlined_call_operand.vmem [shape: bf16[32,32], index: 5, kind: input, shape index: {}]
  %s6 = inlined_call_operand.vmem [shape: f32[1,32], index: 6, kind: input, shape index: {}]
  %s7 = inlined_call_operand.vmem [shape: bf16[3,32], index: 7, kind: input, shape index: {}]
  %s8 = inlined_call_operand.vmem [shape: f32[3,1], index: 8, kind: input, shape index: {}]
  %s9 = inlined_call_operand.hbm [shape: f32[6,3,256], index: 9, kind: output, shape index: {}]
  %s10 = sld [smem:[#allocation0]]
  $region69: #{tpu_custom_call.1} parent=0
    _
  %s12 = ssub.s32 1, %s10
  %s13 = scalar_select 0, %s12, %s10
  $region1: #{tpu_custom_call.1} parent=0
    #allocation3 [shape = 'u8[24576]{0}', space=vmem, size = 0x6000, scoped, tag = 'output window, operand 0']
    #allocation4 [shape = 's32[2]{0}', space=sflag, size = 0x8, scoped, tag = 'scoped memory for tpu_custom_call.1']
    %14 = vsyncpa [#allocation4], 0
    %s15 = scalar_lea.sflag [#allocation4], 1
    %16 = vsyncpa %s15, 0
    loop: start=0, step=1, limit=4
    $region2: #{tpu_custom_call.1} parent=1 // loop_pre_header
      _
    $region3: #{tpu_custom_call.1} parent=1 // loop_header
      %s18 = sphi 0, %s22
      %p19 = scmp.ge.s32.totalorder %s18, 4
      %s28 = sphi 0, %s30
      %s31 = sphi 0, %s28
      %s32 = sphi 0, %s31
      %s48 = sphi 0, %s32
      %s52 = sphi 0, %s52
      %s54 = sphi 0, %s52
      %s55 = sphi 0, %s54
      %s69 = sphi 0, %s55
      %s73 = sphi 0, %s73
      %s75 = sphi 0, %s73
      %s76 = sphi 0, %s75
      %s90 = sphi 0, %s76
      %s94 = sphi 0, %s94
      %s96 = sphi 0, %s94
      %s97 = sphi 0, %s96
      %s111 = sphi 0, %s97
      %s115 = sphi 0, %s115
      %s117 = sphi 0, %s115
      %s118 = sphi 0, %s117
      %s132 = sphi 0, %s118
      %s136 = sphi 0, %s136
      %s138 = sphi 0, %s136
      %s139 = sphi 0, %s138
      %s153 = sphi 0, %s139
      %s157 = sphi 0, %s157
      %s159 = sphi 0, %s157
      %s160 = sphi 0, %s159
      %s174 = sphi 0, %s160
      %s178 = sphi 0, %s178
      %s180 = sphi 0, %s178
      %s181 = sphi 0, %s180
      %s195 = sphi 0, %s181
      %s199 = sphi 0, %s199
      %s201 = sphi 0, %s199
      %s202 = sphi 0, %s201
      %s216 = sphi 0, %s202
      %s222 = sphi 0, %s224
      %s225 = sphi 0, %s222
      %s226 = sphi 0, %s225
      %s242 = sphi 0, %s226
    $region4: #{tpu_custom_call.1} parent=1 // loop_header_branch
      %21 = sbr.rel (%p19) target = $region8
    $region5: #{tpu_custom_call.1} parent=1 // loop_body
      %s23 = ssub.s32 %s18, 1
      %s24 = ssub.s32 %s18, 2
      %s25 = sadd.s32 %s18, 1
      %s26 = ssub.s32 %s18, %s25
      %p27 = scmp.eq.s32.totalorder %s26, 0
      %s29 = sadd.s32 %s28, 1
      %s30 = scalar_select %p27, %s28, %s29
      %p33 = pneg %p27
      %p34 = scmp.eq.s32.totalorder %s18, 1
      %p35 = por %p33, %p34
      %p36 = scmp.ne.s32.totalorder %s28, %s31
      %p37 = scmp.eq.s32.totalorder %s18, 0
      %p38 = por %p36, %p37
      %p39 = scmp.ne.s32.totalorder %s28, %s31
      %p40 = scmp.eq.s32.totalorder %s23, 1
      %p41 = por %p39, %p40
      %p42 = scmp.ne.s32.totalorder %s31, %s32
      %p43 = scmp.eq.s32.totalorder %s23, 0
      %p44 = por %p42, %p43
      %p45 = scmp.ne.s32.totalorder %s31, %s32
      %p46 = scmp.eq.s32.totalorder %s24, 1
      %p47 = por %p45, %p46
      %p49 = scmp.ne.s32.totalorder %s32, %s48
      %p50 = scmp.eq.s32.totalorder %s24, 0
      %p51 = por %p49, %p50
      %s53 = sadd.s32 %s52, 1
      %p56 = scmp.eq.s32.totalorder %s18, 1
      %p57 = scmp.ne.s32.totalorder %s52, %s54
      %p58 = scmp.eq.s32.totalorder %s18, 0
      %p59 = por %p57, %p58
      %p60 = scmp.ne.s32.totalorder %s52, %s54
      %p61 = scmp.eq.s32.totalorder %s23, 1
      %p62 = por %p60, %p61
      %p63 = scmp.ne.s32.totalorder %s54, %s55
      %p64 = scmp.eq.s32.totalorder %s23, 0
      %p65 = por %p63, %p64
      %p66 = scmp.ne.s32.totalorder %s54, %s55
      %p67 = scmp.eq.s32.totalorder %s24, 1
      %p68 = por %p66, %p67
      %p70 = scmp.ne.s32.totalorder %s55, %s69
      %p71 = scmp.eq.s32.totalorder %s24, 0
      %p72 = por %p70, %p71
      %s74 = sadd.s32 %s73, 1
      %p77 = scmp.eq.s32.totalorder %s18, 1
      %p78 = scmp.ne.s32.totalorder %s73, %s75
      %p79 = scmp.eq.s32.totalorder %s18, 0
      %p80 = por %p78, %p79
      %p81 = scmp.ne.s32.totalorder %s73, %s75
      %p82 = scmp.eq.s32.totalorder %s23, 1
      %p83 = por %p81, %p82
      %p84 = scmp.ne.s32.totalorder %s75, %s76
      %p85 = scmp.eq.s32.totalorder %s23, 0
      %p86 = por %p84, %p85
      %p87 = scmp.ne.s32.totalorder %s75, %s76
      %p88 = scmp.eq.s32.totalorder %s24, 1
      %p89 = por %p87, %p88
      %p91 = scmp.ne.s32.totalorder %s76, %s90
      %p92 = scmp.eq.s32.totalorder %s24, 0
      %p93 = por %p91, %p92
      %s95 = sadd.s32 %s94, 1
      %p98 = scmp.eq.s32.totalorder %s18, 1
      %p99 = scmp.ne.s32.totalorder %s94, %s96
      %p100 = scmp.eq.s32.totalorder %s18, 0
      %p101 = por %p99, %p100
      %p102 = scmp.ne.s32.totalorder %s94, %s96
      %p103 = scmp.eq.s32.totalorder %s23, 1
      %p104 = por %p102, %p103
      %p105 = scmp.ne.s32.totalorder %s96, %s97
      %p106 = scmp.eq.s32.totalorder %s23, 0
      %p107 = por %p105, %p106
      %p108 = scmp.ne.s32.totalorder %s96, %s97
      %p109 = scmp.eq.s32.totalorder %s24, 1
      %p110 = por %p108, %p109
      %p112 = scmp.ne.s32.totalorder %s97, %s111
      %p113 = scmp.eq.s32.totalorder %s24, 0
      %p114 = por %p112, %p113
      %s116 = sadd.s32 %s115, 1
      %p119 = scmp.eq.s32.totalorder %s18, 1
      %p120 = scmp.ne.s32.totalorder %s115, %s117
      %p121 = scmp.eq.s32.totalorder %s18, 0
      %p122 = por %p120, %p121
      %p123 = scmp.ne.s32.totalorder %s115, %s117
      %p124 = scmp.eq.s32.totalorder %s23, 1
      %p125 = por %p123, %p124
      %p126 = scmp.ne.s32.totalorder %s117, %s118
      %p127 = scmp.eq.s32.totalorder %s23, 0
      %p128 = por %p126, %p127
      %p129 = scmp.ne.s32.totalorder %s117, %s118
      %p130 = scmp.eq.s32.totalorder %s24, 1
      %p131 = por %p129, %p130
      %p133 = scmp.ne.s32.totalorder %s118, %s132
      %p134 = scmp.eq.s32.totalorder %s24, 0
      %p135 = por %p133, %p134
      %s137 = sadd.s32 %s136, 1
      %p140 = scmp.eq.s32.totalorder %s18, 1
      %p141 = scmp.ne.s32.totalorder %s136, %s138
      %p142 = scmp.eq.s32.totalorder %s18, 0
      %p143 = por %p141, %p142
      %p144 = scmp.ne.s32.totalorder %s136, %s138
      %p145 = scmp.eq.s32.totalorder %s23, 1
      %p146 = por %p144, %p145
      %p147 = scmp.ne.s32.totalorder %s138, %s139
      %p148 = scmp.eq.s32.totalorder %s23, 0
      %p149 = por %p147, %p148
      %p150 = scmp.ne.s32.totalorder %s138, %s139
      %p151 = scmp.eq.s32.totalorder %s24, 1
      %p152 = por %p150, %p151
      %p154 = scmp.ne.s32.totalorder %s139, %s153
      %p155 = scmp.eq.s32.totalorder %s24, 0
      %p156 = por %p154, %p155
      %s158 = sadd.s32 %s157, 1
      %p161 = scmp.eq.s32.totalorder %s18, 1
      %p162 = scmp.ne.s32.totalorder %s157, %s159
      %p163 = scmp.eq.s32.totalorder %s18, 0
      %p164 = por %p162, %p163
      %p165 = scmp.ne.s32.totalorder %s157, %s159
      %p166 = scmp.eq.s32.totalorder %s23, 1
      %p167 = por %p165, %p166
      %p168 = scmp.ne.s32.totalorder %s159, %s160
      %p169 = scmp.eq.s32.totalorder %s23, 0
      %p170 = por %p168, %p169
      %p171 = scmp.ne.s32.totalorder %s159, %s160
      %p172 = scmp.eq.s32.totalorder %s24, 1
      %p173 = por %p171, %p172
      %p175 = scmp.ne.s32.totalorder %s160, %s174
      %p176 = scmp.eq.s32.totalorder %s24, 0
      %p177 = por %p175, %p176
      %s179 = sadd.s32 %s178, 1
      %p182 = scmp.eq.s32.totalorder %s18, 1
      %p183 = scmp.ne.s32.totalorder %s178, %s180
      %p184 = scmp.eq.s32.totalorder %s18, 0
      %p185 = por %p183, %p184
      %p186 = scmp.ne.s32.totalorder %s178, %s180
      %p187 = scmp.eq.s32.totalorder %s23, 1
      %p188 = por %p186, %p187
      %p189 = scmp.ne.s32.totalorder %s180, %s181
      %p190 = scmp.eq.s32.totalorder %s23, 0
      %p191 = por %p189, %p190
      %p192 = scmp.ne.s32.totalorder %s180, %s181
      %p193 = scmp.eq.s32.totalorder %s24, 1
      %p194 = por %p192, %p193
      %p196 = scmp.ne.s32.totalorder %s181, %s195
      %p197 = scmp.eq.s32.totalorder %s24, 0
      %p198 = por %p196, %p197
      %s200 = sadd.s32 %s199, 1
      %p203 = scmp.eq.s32.totalorder %s18, 1
      %p204 = scmp.ne.s32.totalorder %s199, %s201
      %p205 = scmp.eq.s32.totalorder %s18, 0
      %p206 = por %p204, %p205
      %p207 = scmp.ne.s32.totalorder %s199, %s201
      %p208 = scmp.eq.s32.totalorder %s23, 1
      %p209 = por %p207, %p208
      %p210 = scmp.ne.s32.totalorder %s201, %s202
      %p211 = scmp.eq.s32.totalorder %s23, 0
      %p212 = por %p210, %p211
      %p213 = scmp.ne.s32.totalorder %s201, %s202
      %p214 = scmp.eq.s32.totalorder %s24, 1
      %p215 = por %p213, %p214
      %p217 = scmp.ne.s32.totalorder %s202, %s216
      %p218 = scmp.eq.s32.totalorder %s24, 0
      %p219 = por %p217, %p218
      %s220 = ssub.s32 %s18, %s25
      %p221 = scmp.eq.s32.totalorder %s220, 0
      %s223 = sadd.s32 %s222, 1
      %s224 = scalar_select %p221, %s222, %s223
      %p227 = pneg %p221
      %p228 = scmp.eq.s32.totalorder %s18, 1
      %p229 = por %p227, %p228
      %p230 = scmp.ne.s32.totalorder %s222, %s225
      %p231 = scmp.eq.s32.totalorder %s18, 0
      %p232 = por %p230, %p231
      %p233 = scmp.ne.s32.totalorder %s222, %s225
      %p234 = scmp.eq.s32.totalorder %s23, 1
      %p235 = por %p233, %p234
      %p236 = scmp.ne.s32.totalorder %s225, %s226
      %p237 = scmp.eq.s32.totalorder %s23, 0
      %p238 = por %p236, %p237
      %p239 = scmp.ne.s32.totalorder %s225, %s226
      %p240 = scmp.eq.s32.totalorder %s24, 1
      %p241 = por %p239, %p240
      %p243 = scmp.ne.s32.totalorder %s226, %s242
      %p244 = scmp.eq.s32.totalorder %s24, 0
      %p245 = por %p243, %p244
      %p246 = scmp.le.s32.totalorder 1, %s18
      %p247 = scmp.lt.s32.totalorder %s18, 3
      %p248 = pnand %p246, %p247
      %p249 = pneg %p248
      // Predicated region
      $region9: #{tpu_custom_call.1} parent=5 // pred_check
        _
      $region10: #{tpu_custom_call.1} parent=5 // pred_check_branch
        %251 = sbr.rel (%p248) target = $region12
      $region11: #{tpu_custom_call.1} parent=5 // pred_region
        %s252 = ssub.s32 %s18, 1
        // Predicated region
        $region13: #{tpu_custom_call.1} parent=11 // pred_check
          %p253 = pneg %p65
        $region14: #{tpu_custom_call.1} parent=11 // pred_check_branch
          %255 = sbr.rel (%p253) target = $region16
        $region15: #{tpu_custom_call.1} parent=11 // pred_region
          _
        $region16: #{tpu_custom_call.1} parent=11 // pred_fallthru
          _
        // Predicated region
        $region17: #{tpu_custom_call.1} parent=11 // pred_check
          %p256 = pneg %p86
        $region18: #{tpu_custom_call.1} parent=11 // pred_check_branch
          %258 = sbr.rel (%p256) target = $region20
        $region19: #{tpu_custom_call.1} parent=11 // pred_region
          _
        $region20: #{tpu_custom_call.1} parent=11 // pred_fallthru
          _
        // Predicated region
        $region21: #{tpu_custom_call.1} parent=11 // pred_check
          %p259 = pneg %p107
        $region22: #{tpu_custom_call.1} parent=11 // pred_check_branch
          %261 = sbr.rel (%p259) target = $region24
        $region23: #{tpu_custom_call.1} parent=11 // pred_region
          _
        $region24: #{tpu_custom_call.1} parent=11 // pred_fallthru
          _
        // Predicated region
        $region25: #{tpu_custom_call.1} parent=11 // pred_check
          %p262 = pneg %p128
        $region26: #{tpu_custom_call.1} parent=11 // pred_check_branch
          %264 = sbr.rel (%p262) target = $region28
        $region27: #{tpu_custom_call.1} parent=11 // pred_region
          _
        $region28: #{tpu_custom_call.1} parent=11 // pred_fallthru
          _
        // Predicated region
        $region29: #{tpu_custom_call.1} parent=11 // pred_check
          %p265 = pneg %p149
        $region30: #{tpu_custom_call.1} parent=11 // pred_check_branch
          %267 = sbr.rel (%p265) target = $region32
        $region31: #{tpu_custom_call.1} parent=11 // pred_region
          _
        $region32: #{tpu_custom_call.1} parent=11 // pred_fallthru
          _
        // Predicated region
        $region33: #{tpu_custom_call.1} parent=11 // pred_check
          %p268 = pneg %p170
        $region34: #{tpu_custom_call.1} parent=11 // pred_check_branch
          %270 = sbr.rel (%p268) target = $region36
        $region35: #{tpu_custom_call.1} parent=11 // pred_region
          _
        $region36: #{tpu_custom_call.1} parent=11 // pred_fallthru
          _
        // Predicated region
        $region37: #{tpu_custom_call.1} parent=11 // pred_check
          %p271 = pneg %p191
        $region38: #{tpu_custom_call.1} parent=11 // pred_check_branch
          %273 = sbr.rel (%p271) target = $region40
        $region39: #{tpu_custom_call.1} parent=11 // pred_region
          _
        $region40: #{tpu_custom_call.1} parent=11 // pred_fallthru
          _
        // Predicated region
        $region41: #{tpu_custom_call.1} parent=11 // pred_check
          %p274 = pneg %p212
        $region42: #{tpu_custom_call.1} parent=11 // pred_check_branch
          %276 = sbr.rel (%p274) target = $region44
        $region43: #{tpu_custom_call.1} parent=11 // pred_region
          _
        $region44: #{tpu_custom_call.1} parent=11 // pred_fallthru
          _
      $region12: #{tpu_custom_call.1} parent=5 // pred_fallthru
        _
      %p277 = scmp.lt.s32.totalorder %s18, 2
      // Predicated region
      $region45: #{tpu_custom_call.1} parent=5 // pred_check
        %p278 = pneg %p277
      $region46: #{tpu_custom_call.1} parent=5 // pred_check_branch
        %280 = sbr.rel (%p278) target = $region48
      $region47: #{tpu_custom_call.1} parent=5 // pred_region
        // Predicated region
        $region49: #{tpu_custom_call.1} parent=47 // pred_check
          %p281 = pneg %p38
        $region50: #{tpu_custom_call.1} parent=47 // pred_check_branch
          %283 = sbr.rel (%p281) target = $region52
        $region51: #{tpu_custom_call.1} parent=47 // pred_region
          %s284 = smul.u32 3, %s18
          %p285 = scmp.lt.s32.totalorder %s284, 5
          %s286 = scalar_select %p285, %s284, 5
          %s287 = smul.addr %s286, 32
          %s288 = smul.addr %s287, 4
          %s289 = scalar_lea.vmem %s0, %s288
          %s290 = smul.u32 3, %s18
        $region52: #{tpu_custom_call.1} parent=47 // pred_fallthru
          _
      $region48: #{tpu_custom_call.1} parent=5 // pred_fallthru
        _
      %p291 = scmp.le.s32.totalorder 1, %s18
      %p292 = scmp.lt.s32.totalorder %s18, 3
      %p293 = pnand %p291, %p292
      %p294 = pneg %p293
      // Predicated region
      $region53: #{tpu_custom_call.1} parent=5 // pred_check
        _
      $region54: #{tpu_custom_call.1} parent=5 // pred_check_branch
        %296 = sbr.rel (%p293) target = $region56
      $region55: #{tpu_custom_call.1} parent=5 // pred_region
        %s297 = ssub.s32 %s18, 1
        %s298 = smul.u32 3, %s23
        %p299 = scmp.lt.s32.totalorder %s298, 5
        %s300 = scalar_select %p299, %s298, 5
        %s301 = smul.addr %s300, 32
        %s302 = smul.addr %s301, 4
        %s303 = scalar_lea.vmem %s0, %s302
        %p304 = pneg %p44
        %p305 = pneg %p41
        %p306 = pneg %p65
        %p307 = pneg %p62
        %p308 = pneg %p86
        %p309 = pneg %p83
        %p310 = pneg %p107
        %p311 = pneg %p104
        %p312 = pneg %p128
        %p313 = pneg %p125
        %p314 = pneg %p149
        %p315 = pneg %p146
        %p316 = pneg %p170
        %p317 = pneg %p167
        %p318 = pneg %p191
        %p319 = pneg %p188
        %p320 = pneg %p212
        %p321 = pneg %p209
        %p322 = pneg %p238
        %p323 = pneg %p235
        %s324 = sand.u32 %s225, 1
        %s325 = scalar_lea.sflag [#allocation4], %s324
        %s326 = sand.u32 %s225, 1
        %s327 = smul.addr %s326, 24
        %s328 = scalar_lea.vmem [#allocation3], %s327
        %s329 = smul.u32 3, %s23
        %p330 = scmp.lt.s32.totalorder %s329, 5
        %s331 = scalar_select %p330, %s329, 5
        %s332 = smul.addr %s331, 32
        %s333 = smul.addr %s332, 4
        %s334 = scalar_lea.vmem %s0, %s333
        %s335 = smul.u32 3, %s23
        %s336 = smul.u32 3, %s23
        %v338 = vld [vmem:[%s334] sm:$0xf]
        %v339 = vld [vmem:[%s334 + $0x4] sm:$0xf]
        %v340 = vld [vmem:[%s334 + $0x8] sm:$0xf]
        %v341 = vld [vmem:[%s334 + $0xc] sm:$0xf]
        %v342 = vld [vmem:[%s334 + $0x10] sm:$0xf]
        %v343 = vld [vmem:[%s334 + $0x14] sm:$0xf]
        %v344 = vld [vmem:[%s334 + $0x18] sm:$0xf]
        %v345 = vld [vmem:[%s334 + $0x1c] sm:$0xf]
        %v346 = vld [vmem:[%s334 + $0x20] sm:$0xf]
        %v347 = vld [vmem:[%s334 + $0x24] sm:$0xf]
        %v348 = vld [vmem:[%s334 + $0x28] sm:$0xf]
        %v349 = vld [vmem:[%s334 + $0x2c] sm:$0xf]
        %v350 = vld [vmem:[%s334 + $0x30] sm:$0xf]
        %v351 = vld [vmem:[%s334 + $0x34] sm:$0xf]
        %v352 = vld [vmem:[%s334 + $0x38] sm:$0xf]
        %v353 = vld [vmem:[%s334 + $0x3c] sm:$0xf]
        %v354 = vld [vmem:[%s334 + $0x40] sm:$0xf]
        %v355 = vld [vmem:[%s334 + $0x44] sm:$0xf]
        %v356 = vld [vmem:[%s334 + $0x48] sm:$0xf]
        %v357 = vld [vmem:[%s334 + $0x4c] sm:$0xf]
        %v358 = vld [vmem:[%s334 + $0x50] sm:$0xf]
        %v359 = vld [vmem:[%s334 + $0x54] sm:$0xf]
        %v360 = vld [vmem:[%s334 + $0x58] sm:$0xf]
        %v361 = vld [vmem:[%s334 + $0x5c] sm:$0xf]
        %v362 = vld [vmem:[%s334 + $0x60] sm:$0xf]
        %v363 = vld [vmem:[%s334 + $0x64] sm:$0xf]
        %v364 = vld [vmem:[%s334 + $0x68] sm:$0xf]
        %v365 = vld [vmem:[%s334 + $0x6c] sm:$0xf]
        %v366 = vld [vmem:[%s334 + $0x70] sm:$0xf]
        %v367 = vld [vmem:[%s334 + $0x74] sm:$0xf]
        %v368 = vld [vmem:[%s334 + $0x78] sm:$0xf]
        %v369 = vld [vmem:[%s334 + $0x7c] sm:$0xf]
        %v370 = vld [vmem:[%s334 + $0x80] sm:$0xf]
        %v371 = vld [vmem:[%s334 + $0x84] sm:$0xf]
        %v372 = vld [vmem:[%s334 + $0x88] sm:$0xf]
        %v373 = vld [vmem:[%s334 + $0x8c] sm:$0xf]
        %v374 = vld [vmem:[%s334 + $0x90] sm:$0xf]
        %v375 = vld [vmem:[%s334 + $0x94] sm:$0xf]
        %v376 = vld [vmem:[%s334 + $0x98] sm:$0xf]
        %v377 = vld [vmem:[%s334 + $0x9c] sm:$0xf]
        %v378 = vld [vmem:[%s334 + $0xa0] sm:$0xf]
        %v379 = vld [vmem:[%s334 + $0xa4] sm:$0xf]
        %v380 = vld [vmem:[%s334 + $0xa8] sm:$0xf]
        %v381 = vld [vmem:[%s334 + $0xac] sm:$0xf]
        %v382 = vld [vmem:[%s334 + $0xb0] sm:$0xf]
        %v383 = vld [vmem:[%s334 + $0xb4] sm:$0xf]
        %v384 = vld [vmem:[%s334 + $0xb8] sm:$0xf]
        %v385 = vld [vmem:[%s334 + $0xbc] sm:$0xf]
        %v386 = vld [vmem:[%s334 + $0xc0] sm:$0xf]
        %v387 = vld [vmem:[%s334 + $0xc4] sm:$0xf]
        %v388 = vld [vmem:[%s334 + $0xc8] sm:$0xf]
        %v389 = vld [vmem:[%s334 + $0xcc] sm:$0xf]
        %v390 = vld [vmem:[%s334 + $0xd0] sm:$0xf]
        %v391 = vld [vmem:[%s334 + $0xd4] sm:$0xf]
        %v392 = vld [vmem:[%s334 + $0xd8] sm:$0xf]
        %v393 = vld [vmem:[%s334 + $0xdc] sm:$0xf]
        %v394 = vld [vmem:[%s334 + $0xe0] sm:$0xf]
        %v395 = vld [vmem:[%s334 + $0xe4] sm:$0xf]
        %v396 = vld [vmem:[%s334 + $0xe8] sm:$0xf]
        %v397 = vld [vmem:[%s334 + $0xec] sm:$0xf]
        %v398 = vld [vmem:[%s334 + $0xf0] sm:$0xf]
        %v399 = vld [vmem:[%s334 + $0xf4] sm:$0xf]
        %v400 = vld [vmem:[%s334 + $0xf8] sm:$0xf]
        %v401 = vld [vmem:[%s334 + $0xfc] sm:$0xf]
        %v402 = vld [vmem:[%s334 + $0x100] sm:$0xf]
        %v403 = vld [vmem:[%s334 + $0x104] sm:$0xf]
        %v404 = vld [vmem:[%s334 + $0x108] sm:$0xf]
        %v405 = vld [vmem:[%s334 + $0x10c] sm:$0xf]
        %v406 = vld [vmem:[%s334 + $0x110] sm:$0xf]
        %v407 = vld [vmem:[%s334 + $0x114] sm:$0xf]
        %v408 = vld [vmem:[%s334 + $0x118] sm:$0xf]
        %v409 = vld [vmem:[%s334 + $0x11c] sm:$0xf]
        %v410 = vld [vmem:[%s334 + $0x120] sm:$0xf]
        %v411 = vld [vmem:[%s334 + $0x124] sm:$0xf]
        %v412 = vld [vmem:[%s334 + $0x128] sm:$0xf]
        %v413 = vld [vmem:[%s334 + $0x12c] sm:$0xf]
        %v414 = vld [vmem:[%s334 + $0x130] sm:$0xf]
        %v415 = vld [vmem:[%s334 + $0x134] sm:$0xf]
        %v416 = vld [vmem:[%s334 + $0x138] sm:$0xf]
        %v417 = vld [vmem:[%s334 + $0x13c] sm:$0xf]
        %v418 = vld [vmem:[%s334 + $0x140] sm:$0xf]
        %v419 = vld [vmem:[%s334 + $0x144] sm:$0xf]
        %v420 = vld [vmem:[%s334 + $0x148] sm:$0xf]
        %v421 = vld [vmem:[%s334 + $0x14c] sm:$0xf]
        %v422 = vld [vmem:[%s334 + $0x150] sm:$0xf]
        %v423 = vld [vmem:[%s334 + $0x154] sm:$0xf]
        %v424 = vld [vmem:[%s334 + $0x158] sm:$0xf]
        %v425 = vld [vmem:[%s334 + $0x15c] sm:$0xf]
        %v426 = vld [vmem:[%s334 + $0x160] sm:$0xf]
        %v427 = vld [vmem:[%s334 + $0x164] sm:$0xf]
        %v428 = vld [vmem:[%s334 + $0x168] sm:$0xf]
        %v429 = vld [vmem:[%s334 + $0x16c] sm:$0xf]
        %v430 = vld [vmem:[%s334 + $0x170] sm:$0xf]
        %v431 = vld [vmem:[%s334 + $0x174] sm:$0xf]
        %v432 = vld [vmem:[%s334 + $0x178] sm:$0xf]
        %v433 = vld [vmem:[%s334 + $0x17c] sm:$0xf]
        %v434 = vld [vmem:[%s1] sm:$0xf]
        %v435 = vld [vmem:[%s1 + $0x4] sm:$0xf]
        %v436 = vld [vmem:[%s1 + $0x8] sm:$0xf]
        %v437 = vld [vmem:[%s1 + $0xc] sm:$0x3]
        %v438 = vld [vmem:[%s2] sm:$0x1]
        %v440 = vlaneseq
        %v441 = vshrl.u32 %v440, 7
        %v442 = vsub.s32 0, %v441
        %v443 = vrot.slane %v438, %v442
        %v541 = vunpack.c.l.b16 %v338
        %v542 = vunpack.c.l.b16 %v339
        %v543 = vunpack.c.l.b16 %v340
        %v544 = vunpack.c.l.b16 %v341
        %v545 = vunpack.c.l.b16 %v342
        %v546 = vunpack.c.l.b16 %v343
        %v547 = vunpack.c.l.b16 %v344
        %v548 = vunpack.c.l.b16 %v345
        %v549 = vunpack.c.l.b16 %v346
        %v550 = vunpack.c.l.b16 %v347
        %v551 = vunpack.c.l.b16 %v348
        %v552 = vunpack.c.l.b16 %v349
        %v553 = vunpack.c.l.b16 %v350
        %v554 = vunpack.c.l.b16 %v351
        %v555 = vunpack.c.l.b16 %v352
        %v556 = vunpack.c.l.b16 %v353
        %v557 = vunpack.c.l.b16 %v354
        %v558 = vunpack.c.l.b16 %v355
        %v559 = vunpack.c.l.b16 %v356
        %v560 = vunpack.c.l.b16 %v357
        %v561 = vunpack.c.l.b16 %v358
        %v562 = vunpack.c.l.b16 %v359
        %v563 = vunpack.c.l.b16 %v360
        %v564 = vunpack.c.l.b16 %v361
        %v565 = vunpack.c.l.b16 %v362
        %v566 = vunpack.c.l.b16 %v363
        %v567 = vunpack.c.l.b16 %v364
        %v568 = vunpack.c.l.b16 %v365
        %v569 = vunpack.c.l.b16 %v366
        %v570 = vunpack.c.l.b16 %v367
        %v571 = vunpack.c.l.b16 %v368
        %v572 = vunpack.c.l.b16 %v369
        %v573 = vunpack.c.l.b16 %v370
        %v574 = vunpack.c.l.b16 %v371
        %v575 = vunpack.c.l.b16 %v372
        %v576 = vunpack.c.l.b16 %v373
        %v577 = vunpack.c.l.b16 %v374
        %v578 = vunpack.c.l.b16 %v375
        %v579 = vunpack.c.l.b16 %v376
        %v580 = vunpack.c.l.b16 %v377
        %v581 = vunpack.c.l.b16 %v378
        %v582 = vunpack.c.l.b16 %v379
        %v583 = vunpack.c.l.b16 %v380
        %v584 = vunpack.c.l.b16 %v381
        %v585 = vunpack.c.l.b16 %v382
        %v586 = vunpack.c.l.b16 %v383
        %v587 = vunpack.c.l.b16 %v384
        %v588 = vunpack.c.l.b16 %v385
        %v589 = vunpack.c.l.b16 %v386
        %v590 = vunpack.c.l.b16 %v387
        %v591 = vunpack.c.l.b16 %v388
        %v592 = vunpack.c.l.b16 %v389
        %v593 = vunpack.c.l.b16 %v390
        %v594 = vunpack.c.l.b16 %v391
        %v595 = vunpack.c.l.b16 %v392
        %v596 = vunpack.c.l.b16 %v393
        %v597 = vunpack.c.l.b16 %v394
        %v598 = vunpack.c.l.b16 %v395
        %v599 = vunpack.c.l.b16 %v396
        %v600 = vunpack.c.l.b16 %v397
        %v601 = vunpack.c.l.b16 %v398
        %v602 = vunpack.c.l.b16 %v399
        %v603 = vunpack.c.l.b16 %v400
        %v604 = vunpack.c.l.b16 %v401
        %v605 = vunpack.c.l.b16 %v402
        %v606 = vunpack.c.l.b16 %v403
        %v607 = vunpack.c.l.b16 %v404
        %v608 = vunpack.c.l.b16 %v405
        %v609 = vunpack.c.l.b16 %v406
        %v610 = vunpack.c.l.b16 %v407
        %v611 = vunpack.c.l.b16 %v408
        %v612 = vunpack.c.l.b16 %v409
        %v613 = vunpack.c.l.b16 %v410
        %v614 = vunpack.c.l.b16 %v411
        %v615 = vunpack.c.l.b16 %v412
        %v616 = vunpack.c.l.b16 %v413
        %v617 = vunpack.c.l.b16 %v414
        %v618 = vunpack.c.l.b16 %v415
        %v619 = vunpack.c.l.b16 %v416
        %v620 = vunpack.c.l.b16 %v417
        %v621 = vunpack.c.l.b16 %v418
        %v622 = vunpack.c.l.b16 %v419
        %v623 = vunpack.c.l.b16 %v420
        %v624 = vunpack.c.l.b16 %v421
        %v625 = vunpack.c.l.b16 %v422
        %v626 = vunpack.c.l.b16 %v423
        %v627 = vunpack.c.l.b16 %v424
        %v628 = vunpack.c.l.b16 %v425
        %v629 = vunpack.c.l.b16 %v426
        %v630 = vunpack.c.l.b16 %v427
        %v631 = vunpack.c.l.b16 %v428
        %v632 = vunpack.c.l.b16 %v429
        %v633 = vunpack.c.l.b16 %v430
        %v634 = vunpack.c.l.b16 %v431
        %v635 = vunpack.c.l.b16 %v432
        %v636 = vunpack.c.l.b16 %v433
        %v637 = vpack.c.b16 %v542, %v541
        %v638 = vpack.c.b16 %v544, %v543
        %v639 = vpack.c.b16 %v546, %v545
        %v640 = vpack.c.b16 %v548, %v547
        %v641 = vpack.c.b16 %v550, %v549
        %v642 = vpack.c.b16 %v552, %v551
        %v643 = vpack.c.b16 %v554, %v553
        %v644 = vpack.c.b16 %v556, %v555
        %v645 = vpack.c.b16 %v558, %v557
        %v646 = vpack.c.b16 %v560, %v559
        %v647 = vpack.c.b16 %v562, %v561
        %v648 = vpack.c.b16 %v564, %v563
        %v649 = vpack.c.b16 %v566, %v565
        %v650 = vpack.c.b16 %v568, %v567
        %v651 = vpack.c.b16 %v570, %v569
        %v652 = vpack.c.b16 %v572, %v571
        %v653 = vpack.c.b16 %v574, %v573
        %v654 = vpack.c.b16 %v576, %v575
        %v655 = vpack.c.b16 %v578, %v577
        %v656 = vpack.c.b16 %v580, %v579
        %v657 = vpack.c.b16 %v582, %v581
        %v658 = vpack.c.b16 %v584, %v583
        %v659 = vpack.c.b16 %v586, %v585
        %v660 = vpack.c.b16 %v588, %v587
        %v661 = vpack.c.b16 %v590, %v589
        %v662 = vpack.c.b16 %v592, %v591
        %v663 = vpack.c.b16 %v594, %v593
        %v664 = vpack.c.b16 %v596, %v595
        %v665 = vpack.c.b16 %v598, %v597
        %v666 = vpack.c.b16 %v600, %v599
        %v667 = vpack.c.b16 %v602, %v601
        %v668 = vpack.c.b16 %v604, %v603
        %v669 = vpack.c.b16 %v606, %v605
        %v670 = vpack.c.b16 %v608, %v607
        %v671 = vpack.c.b16 %v610, %v609
        %v672 = vpack.c.b16 %v612, %v611
        %v673 = vpack.c.b16 %v614, %v613
        %v674 = vpack.c.b16 %v616, %v615
        %v675 = vpack.c.b16 %v618, %v617
        %v676 = vpack.c.b16 %v620, %v619
        %v677 = vpack.c.b16 %v622, %v621
        %v678 = vpack.c.b16 %v624, %v623
        %v679 = vpack.c.b16 %v626, %v625
        %v680 = vpack.c.b16 %v628, %v627
        %v681 = vpack.c.b16 %v630, %v629
        %v682 = vpack.c.b16 %v632, %v631
        %v683 = vpack.c.b16 %v634, %v633
        %v684 = vpack.c.b16 %v636, %v635
        %v689 = vunpack.c.l.b16 %v434
        %v690 = vunpack.c.l.b16 %v435
        %v691 = vunpack.c.l.b16 %v436
        %v692 = vunpack.c.l.b16 %v437
        %v693 = vpack.c.b16 %v690, %v689
        %v694 = vpack.c.b16 %v692, %v691
        %vm696 = vcmask 220160
        %v698 = vsel %vm696, %v637, 0
        %v701 = vsel %vm696, %v638, 0
        %v704 = vsel %vm696, %v639, 0
        %v707 = vsel %vm696, %v640, 0
        %v710 = vsel %vm696, %v641, 0
        %v713 = vsel %vm696, %v642, 0
        %v716 = vsel %vm696, %v643, 0
        %v719 = vsel %vm696, %v644, 0
        %v722 = vsel %vm696, %v645, 0
        %v725 = vsel %vm696, %v646, 0
        %v728 = vsel %vm696, %v647, 0
        %v731 = vsel %vm696, %v648, 0
        %v734 = vsel %vm696, %v649, 0
        %v737 = vsel %vm696, %v650, 0
        %v740 = vsel %vm696, %v651, 0
        %v743 = vsel %vm696, %v652, 0
        %v746 = vsel %vm696, %v653, 0
        %v749 = vsel %vm696, %v654, 0
        %v752 = vsel %vm696, %v655, 0
        %v755 = vsel %vm696, %v656, 0
        %v758 = vsel %vm696, %v657, 0
        %v761 = vsel %vm696, %v658, 0
        %v764 = vsel %vm696, %v659, 0
        %v767 = vsel %vm696, %v660, 0
        %v770 = vsel %vm696, %v661, 0
        %v773 = vsel %vm696, %v662, 0
        %v776 = vsel %vm696, %v663, 0
        %v779 = vsel %vm696, %v664, 0
        %v782 = vsel %vm696, %v665, 0
        %v785 = vsel %vm696, %v666, 0
        %v788 = vsel %vm696, %v667, 0
        %v791 = vsel %vm696, %v668, 0
        %v794 = vsel %vm696, %v669, 0
        %v797 = vsel %vm696, %v670, 0
        %v800 = vsel %vm696, %v671, 0
        %v803 = vsel %vm696, %v672, 0
        %v806 = vsel %vm696, %v673, 0
        %v809 = vsel %vm696, %v674, 0
        %v812 = vsel %vm696, %v675, 0
        %v815 = vsel %vm696, %v676, 0
        %v818 = vsel %vm696, %v677, 0
        %v821 = vsel %vm696, %v678, 0
        %v824 = vsel %vm696, %v679, 0
        %v827 = vsel %vm696, %v680, 0
        %v830 = vsel %vm696, %v681, 0
        %v833 = vsel %vm696, %v682, 0
        %v836 = vsel %vm696, %v683, 0
        %v839 = vsel %vm696, %v684, 0
        %vm841 = vcmask 1044480
        %vm842 = vcmask 1045504
        %v843 = vsel %vm841, 4294967295, 65535
        %v844 = vsel %vm842, %v843, 0
        %v846 = vand.u32 %v694, %v844
        %848 = vmatprep.subr.bf16.mxu0 0
        %849 = vmatpush1.bf16.msra.mxu0 0
        %850 = vmatprep.subr.bf16.mxu0 0
        %851 = vmatpush1.bf16.msra.mxu0 0
        %852 = vmatprep.subr.bf16.mxu0 0
        %853 = vmatpush1.bf16.msra.mxu0 0
        %854 = vmatprep.subr.bf16.mxu0 0
        %855 = vmatpush1.bf16.msra.mxu0 0
        %856 = vmatprep.subr.bf16.mxu0 0
        %857 = vmatpush1.bf16.msra.mxu0 0
        %858 = vmatprep.subr.bf16.mxu0 0
        %859 = vmatpush1.bf16.msra.mxu0 0
        %860 = vmatprep.subr.bf16.mxu0 0
        %861 = vmatpush1.bf16.msra.mxu0 %v846
        %862 = vmatprep.subr.bf16.mxu0 0
        %863 = vmatpush1.bf16.msra.mxu0 %v693
        %864 = vmatprep.subr.bf16.mxu0 0
        %865 = vmatpush2.bf16.msra.mxu0 0
        %866 = vmatprep.subr.bf16.mxu0 0
        %867 = vmatpush2.bf16.msra.mxu0 0
        %868 = vmatprep.subr.bf16.mxu0 0
        %869 = vmatpush2.bf16.msra.mxu0 0
        %870 = vmatprep.subr.bf16.mxu0 0
        %871 = vmatpush2.bf16.msra.mxu0 0
        %872 = vmatprep.subr.bf16.mxu0 0
        %873 = vmatpush2.bf16.msra.mxu0 0
        %874 = vmatprep.subr.bf16.mxu0 0
        %875 = vmatpush2.bf16.msra.mxu0 0
        %876 = vmatprep.subr.bf16.mxu0 0
        %877 = vmatpush2.bf16.msra.mxu0 0
        %878 = vmatprep.subr.bf16.mxu0 0
        %879 = vmatpush2.bf16.msra.mxu0 0
        %880 = vmatprep.mubr.bf16.mxu0 0
        %881 = vmatmul.mubr.bf16.gmra.mxu0 %v698
        %v882 = vpop.f32.mrf.mxu0
        %v883 = vadd.f32 %v443, %v882
        %v884 = vpop.f32.mrf.mxu0
        %v885 = vpop.f32.mrf.mxu0
        %v886 = vadd.f32 %v443, %v885
        %v887 = vpop.f32.mrf.mxu0
        %888 = vmatprep.mubr.bf16.mxu0 0
        %889 = vmatmul.mubr.bf16.gmra.mxu0 %v701
        %v890 = vpop.f32.mrf.mxu0
        %v891 = vadd.f32 %v443, %v890
        %v892 = vpop.f32.mrf.mxu0
        %v893 = vpop.f32.mrf.mxu0
        %v894 = vadd.f32 %v443, %v893
        %v895 = vpop.f32.mrf.mxu0
        %896 = vmatprep.mubr.bf16.mxu0 0
        %897 = vmatmul.mubr.bf16.gmra.mxu0 %v704
        %v898 = vpop.f32.mrf.mxu0
        %v899 = vadd.f32 %v443, %v898
        %v900 = vpop.f32.mrf.mxu0
        %v901 = vpop.f32.mrf.mxu0
        %v902 = vadd.f32 %v443, %v901
        %v903 = vpop.f32.mrf.mxu0
        %904 = vmatprep.mubr.bf16.mxu0 0
        %905 = vmatmul.mubr.bf16.gmra.mxu0 %v707
        %v906 = vpop.f32.mrf.mxu0
        %v907 = vadd.f32 %v443, %v906
        %v908 = vpop.f32.mrf.mxu0
        %v909 = vpop.f32.mrf.mxu0
        %v910 = vadd.f32 %v443, %v909
        %v911 = vpop.f32.mrf.mxu0
        %912 = vmatprep.mubr.bf16.mxu0 0
        %913 = vmatmul.mubr.bf16.gmra.mxu0 %v710
        %v914 = vpop.f32.mrf.mxu0
        %v915 = vadd.f32 %v443, %v914
        %v916 = vpop.f32.mrf.mxu0
        %v917 = vpop.f32.mrf.mxu0
        %v918 = vadd.f32 %v443, %v917
        %v919 = vpop.f32.mrf.mxu0
        %920 = vmatprep.mubr.bf16.mxu0 0
        %921 = vmatmul.mubr.bf16.gmra.mxu0 %v713
        %v922 = vpop.f32.mrf.mxu0
        %v923 = vadd.f32 %v443, %v922
        %v924 = vpop.f32.mrf.mxu0
        %v925 = vpop.f32.mrf.mxu0
        %v926 = vadd.f32 %v443, %v925
        %v927 = vpop.f32.mrf.mxu0
        %928 = vmatprep.mubr.bf16.mxu0 0
        %929 = vmatmul.mubr.bf16.gmra.mxu0 %v716
        %v930 = vpop.f32.mrf.mxu0
        %v931 = vadd.f32 %v443, %v930
        %v932 = vpop.f32.mrf.mxu0
        %v933 = vpop.f32.mrf.mxu0
        %v934 = vadd.f32 %v443, %v933
        %v935 = vpop.f32.mrf.mxu0
        %936 = vmatprep.mubr.bf16.mxu0 0
        %937 = vmatmul.mubr.bf16.gmra.mxu0 %v719
        %v938 = vpop.f32.mrf.mxu0
        %v939 = vadd.f32 %v443, %v938
        %v940 = vpop.f32.mrf.mxu0
        %v941 = vpop.f32.mrf.mxu0
        %v942 = vadd.f32 %v443, %v941
        %v943 = vpop.f32.mrf.mxu0
        %944 = vmatprep.mubr.bf16.mxu0 0
        %945 = vmatmul.mubr.bf16.gmra.mxu0 %v722
        %v946 = vpop.f32.mrf.mxu0
        %v947 = vadd.f32 %v443, %v946
        %v948 = vpop.f32.mrf.mxu0
        %v949 = vpop.f32.mrf.mxu0
        %v950 = vadd.f32 %v443, %v949
        %v951 = vpop.f32.mrf.mxu0
        %952 = vmatprep.mubr.bf16.mxu0 0
        %953 = vmatmul.mubr.bf16.gmra.mxu0 %v725
        %v954 = vpop.f32.mrf.mxu0
        %v955 = vadd.f32 %v443, %v954
        %v956 = vpop.f32.mrf.mxu0
        %v957 = vpop.f32.mrf.mxu0
        %v958 = vadd.f32 %v443, %v957
        %v959 = vpop.f32.mrf.mxu0
        %960 = vmatprep.mubr.bf16.mxu0 0
        %961 = vmatmul.mubr.bf16.gmra.mxu0 %v728
        %v962 = vpop.f32.mrf.mxu0
        %v963 = vadd.f32 %v443, %v962
        %v964 = vpop.f32.mrf.mxu0
        %v965 = vpop.f32.mrf.mxu0
        %v966 = vadd.f32 %v443, %v965
        %v967 = vpop.f32.mrf.mxu0
        %968 = vmatprep.mubr.bf16.mxu0 0
        %969 = vmatmul.mubr.bf16.gmra.mxu0 %v731
        %v970 = vpop.f32.mrf.mxu0
        %v971 = vadd.f32 %v443, %v970
        %v972 = vpop.f32.mrf.mxu0
        %v973 = vpop.f32.mrf.mxu0
        %v974 = vadd.f32 %v443, %v973
        %v975 = vpop.f32.mrf.mxu0
        %976 = vmatprep.mubr.bf16.mxu0 0
        %977 = vmatmul.mubr.bf16.gmra.mxu0 %v734
        %v978 = vpop.f32.mrf.mxu0
        %v979 = vadd.f32 %v443, %v978
        %v980 = vpop.f32.mrf.mxu0
        %v981 = vpop.f32.mrf.mxu0
        %v982 = vadd.f32 %v443, %v981
        %v983 = vpop.f32.mrf.mxu0
        %984 = vmatprep.mubr.bf16.mxu0 0
        %985 = vmatmul.mubr.bf16.gmra.mxu0 %v737
        %v986 = vpop.f32.mrf.mxu0
        %v987 = vadd.f32 %v443, %v986
        %v988 = vpop.f32.mrf.mxu0
        %v989 = vpop.f32.mrf.mxu0
        %v990 = vadd.f32 %v443, %v989
        %v991 = vpop.f32.mrf.mxu0
        %992 = vmatprep.mubr.bf16.mxu0 0
        %993 = vmatmul.mubr.bf16.gmra.mxu0 %v740
        %v994 = vpop.f32.mrf.mxu0
        %v995 = vadd.f32 %v443, %v994
        %v996 = vpop.f32.mrf.mxu0
        %v997 = vpop.f32.mrf.mxu0
        %v998 = vadd.f32 %v443, %v997
        %v999 = vpop.f32.mrf.mxu0
        %1000 = vmatprep.mubr.bf16.mxu0 0
        %1001 = vmatmul.mubr.bf16.gmra.mxu0 %v743
        %v1002 = vpop.f32.mrf.mxu0
        %v1003 = vadd.f32 %v443, %v1002
        %v1004 = vpop.f32.mrf.mxu0
        %v1005 = vpop.f32.mrf.mxu0
        %v1006 = vadd.f32 %v443, %v1005
        %v1007 = vpop.f32.mrf.mxu0
        %1008 = vmatprep.mubr.bf16.mxu0 0
        %1009 = vmatmul.mubr.bf16.gmra.mxu0 %v746
        %v1010 = vpop.f32.mrf.mxu0
        %v1011 = vadd.f32 %v443, %v1010
        %v1012 = vpop.f32.mrf.mxu0
        %v1013 = vpop.f32.mrf.mxu0
        %v1014 = vadd.f32 %v443, %v1013
        %v1015 = vpop.f32.mrf.mxu0
        %1016 = vmatprep.mubr.bf16.mxu0 0
        %1017 = vmatmul.mubr.bf16.gmra.mxu0 %v749
        %v1018 = vpop.f32.mrf.mxu0
        %v1019 = vadd.f32 %v443, %v1018
        %v1020 = vpop.f32.mrf.mxu0
        %v1021 = vpop.f32.mrf.mxu0
        %v1022 = vadd.f32 %v443, %v1021
        %v1023 = vpop.f32.mrf.mxu0
        %1024 = vmatprep.mubr.bf16.mxu0 0
        %1025 = vmatmul.mubr.bf16.gmra.mxu0 %v752
        %v1026 = vpop.f32.mrf.mxu0
        %v1027 = vadd.f32 %v443, %v1026
        %v1028 = vpop.f32.mrf.mxu0
        %v1029 = vpop.f32.mrf.mxu0
        %v1030 = vadd.f32 %v443, %v1029
        %v1031 = vpop.f32.mrf.mxu0
        %1032 = vmatprep.mubr.bf16.mxu0 0
        %1033 = vmatmul.mubr.bf16.gmra.mxu0 %v755
        %v1034 = vpop.f32.mrf.mxu0
        %v1035 = vadd.f32 %v443, %v1034
        %v1036 = vpop.f32.mrf.mxu0
        %v1037 = vpop.f32.mrf.mxu0
        %v1038 = vadd.f32 %v443, %v1037
        %v1039 = vpop.f32.mrf.mxu0
        %1040 = vmatprep.mubr.bf16.mxu0 0
        %1041 = vmatmul.mubr.bf16.gmra.mxu0 %v758
        %v1042 = vpop.f32.mrf.mxu0
        %v1043 = vadd.f32 %v443, %v1042
        %v1044 = vpop.f32.mrf.mxu0
        %v1045 = vpop.f32.mrf.mxu0
        %v1046 = vadd.f32 %v443, %v1045
        %v1047 = vpop.f32.mrf.mxu0
        %1048 = vmatprep.mubr.bf16.mxu0 0
        %1049 = vmatmul.mubr.bf16.gmra.mxu0 %v761
        %v1050 = vpop.f32.mrf.mxu0
        %v1051 = vadd.f32 %v443, %v1050
        %v1052 = vpop.f32.mrf.mxu0
        %v1053 = vpop.f32.mrf.mxu0
        %v1054 = vadd.f32 %v443, %v1053
        %v1055 = vpop.f32.mrf.mxu0
        %1056 = vmatprep.mubr.bf16.mxu0 0
        %1057 = vmatmul.mubr.bf16.gmra.mxu0 %v764
        %v1058 = vpop.f32.mrf.mxu0
        %v1059 = vadd.f32 %v443, %v1058
        %v1060 = vpop.f32.mrf.mxu0
        %v1061 = vpop.f32.mrf.mxu0
        %v1062 = vadd.f32 %v443, %v1061
        %v1063 = vpop.f32.mrf.mxu0
        %1064 = vmatprep.mubr.bf16.mxu0 0
        %1065 = vmatmul.mubr.bf16.gmra.mxu0 %v767
        %v1066 = vpop.f32.mrf.mxu0
        %v1067 = vadd.f32 %v443, %v1066
        %v1068 = vpop.f32.mrf.mxu0
        %v1069 = vpop.f32.mrf.mxu0
        %v1070 = vadd.f32 %v443, %v1069
        %v1071 = vpop.f32.mrf.mxu0
        %1072 = vmatprep.mubr.bf16.mxu0 0
        %1073 = vmatmul.mubr.bf16.gmra.mxu0 %v770
        %v1074 = vpop.f32.mrf.mxu0
        %v1075 = vadd.f32 %v443, %v1074
        %v1076 = vpop.f32.mrf.mxu0
        %v1077 = vpop.f32.mrf.mxu0
        %v1078 = vadd.f32 %v443, %v1077
        %v1079 = vpop.f32.mrf.mxu0
        %1080 = vmatprep.mubr.bf16.mxu0 0
        %1081 = vmatmul.mubr.bf16.gmra.mxu0 %v773
        %v1082 = vpop.f32.mrf.mxu0
        %v1083 = vadd.f32 %v443, %v1082
        %v1084 = vpop.f32.mrf.mxu0
        %v1085 = vpop.f32.mrf.mxu0
        %v1086 = vadd.f32 %v443, %v1085
        %v1087 = vpop.f32.mrf.mxu0
        %1088 = vmatprep.mubr.bf16.mxu0 0
        %1089 = vmatmul.mubr.bf16.gmra.mxu0 %v776
        %v1090 = vpop.f32.mrf.mxu0
        %v1091 = vadd.f32 %v443, %v1090
        %v1092 = vpop.f32.mrf.mxu0
        %v1093 = vpop.f32.mrf.mxu0
        %v1094 = vadd.f32 %v443, %v1093
        %v1095 = vpop.f32.mrf.mxu0
        %1096 = vmatprep.mubr.bf16.mxu0 0
        %1097 = vmatmul.mubr.bf16.gmra.mxu0 %v779
        %v1098 = vpop.f32.mrf.mxu0
        %v1099 = vadd.f32 %v443, %v1098
        %v1100 = vpop.f32.mrf.mxu0
        %v1101 = vpop.f32.mrf.mxu0
        %v1102 = vadd.f32 %v443, %v1101
        %v1103 = vpop.f32.mrf.mxu0
        %1104 = vmatprep.mubr.bf16.mxu0 0
        %1105 = vmatmul.mubr.bf16.gmra.mxu0 %v782
        %v1106 = vpop.f32.mrf.mxu0
        %v1107 = vadd.f32 %v443, %v1106
        %v1108 = vpop.f32.mrf.mxu0
        %v1109 = vpop.f32.mrf.mxu0
        %v1110 = vadd.f32 %v443, %v1109
        %v1111 = vpop.f32.mrf.mxu0
        %1112 = vmatprep.mubr.bf16.mxu0 0
        %1113 = vmatmul.mubr.bf16.gmra.mxu0 %v785
        %v1114 = vpop.f32.mrf.mxu0
        %v1115 = vadd.f32 %v443, %v1114
        %v1116 = vpop.f32.mrf.mxu0
        %v1117 = vpop.f32.mrf.mxu0
        %v1118 = vadd.f32 %v443, %v1117
        %v1119 = vpop.f32.mrf.mxu0
        %1120 = vmatprep.mubr.bf16.mxu0 0
        %1121 = vmatmul.mubr.bf16.gmra.mxu0 %v788
        %v1122 = vpop.f32.mrf.mxu0
        %v1123 = vadd.f32 %v443, %v1122
        %v1124 = vpop.f32.mrf.mxu0
        %v1125 = vpop.f32.mrf.mxu0
        %v1126 = vadd.f32 %v443, %v1125
        %v1127 = vpop.f32.mrf.mxu0
        %1128 = vmatprep.mubr.bf16.mxu0 0
        %1129 = vmatmul.mubr.bf16.gmra.mxu0 %v791
        %v1130 = vpop.f32.mrf.mxu0
        %v1131 = vadd.f32 %v443, %v1130
        %v1132 = vpop.f32.mrf.mxu0
        %v1133 = vpop.f32.mrf.mxu0
        %v1134 = vadd.f32 %v443, %v1133
        %v1135 = vpop.f32.mrf.mxu0
        %1136 = vmatprep.mubr.bf16.mxu0 0
        %1137 = vmatmul.mubr.bf16.gmra.mxu0 %v794
        %v1138 = vpop.f32.mrf.mxu0
        %v1139 = vadd.f32 %v443, %v1138
        %v1140 = vpop.f32.mrf.mxu0
        %v1141 = vpop.f32.mrf.mxu0
        %v1142 = vadd.f32 %v443, %v1141
        %v1143 = vpop.f32.mrf.mxu0
        %1144 = vmatprep.mubr.bf16.mxu0 0
        %1145 = vmatmul.mubr.bf16.gmra.mxu0 %v797
        %v1146 = vpop.f32.mrf.mxu0
        %v1147 = vadd.f32 %v443, %v1146
        %v1148 = vpop.f32.mrf.mxu0
        %v1149 = vpop.f32.mrf.mxu0
        %v1150 = vadd.f32 %v443, %v1149
        %v1151 = vpop.f32.mrf.mxu0
        %1152 = vmatprep.mubr.bf16.mxu0 0
        %1153 = vmatmul.mubr.bf16.gmra.mxu0 %v800
        %v1154 = vpop.f32.mrf.mxu0
        %v1155 = vadd.f32 %v443, %v1154
        %v1156 = vpop.f32.mrf.mxu0
        %v1157 = vpop.f32.mrf.mxu0
        %v1158 = vadd.f32 %v443, %v1157
        %v1159 = vpop.f32.mrf.mxu0
        %1160 = vmatprep.mubr.bf16.mxu0 0
        %1161 = vmatmul.mubr.bf16.gmra.mxu0 %v803
        %v1162 = vpop.f32.mrf.mxu0
        %v1163 = vadd.f32 %v443, %v1162
        %v1164 = vpop.f32.mrf.mxu0
        %v1165 = vpop.f32.mrf.mxu0
        %v1166 = vadd.f32 %v443, %v1165
        %v1167 = vpop.f32.mrf.mxu0
        %1168 = vmatprep.mubr.bf16.mxu0 0
        %1169 = vmatmul.mubr.bf16.gmra.mxu0 %v806
        %v1170 = vpop.f32.mrf.mxu0
        %v1171 = vadd.f32 %v443, %v1170
        %v1172 = vpop.f32.mrf.mxu0
        %v1173 = vpop.f32.mrf.mxu0
        %v1174 = vadd.f32 %v443, %v1173
        %v1175 = vpop.f32.mrf.mxu0
        %1176 = vmatprep.mubr.bf16.mxu0 0
        %1177 = vmatmul.mubr.bf16.gmra.mxu0 %v809
        %v1178 = vpop.f32.mrf.mxu0
        %v1179 = vadd.f32 %v443, %v1178
        %v1180 = vpop.f32.mrf.mxu0
        %v1181 = vpop.f32.mrf.mxu0
        %v1182 = vadd.f32 %v443, %v1181
        %v1183 = vpop.f32.mrf.mxu0
        %1184 = vmatprep.mubr.bf16.mxu0 0
        %1185 = vmatmul.mubr.bf16.gmra.mxu0 %v812
        %v1186 = vpop.f32.mrf.mxu0
        %v1187 = vadd.f32 %v443, %v1186
        %v1188 = vpop.f32.mrf.mxu0
        %v1189 = vpop.f32.mrf.mxu0
        %v1190 = vadd.f32 %v443, %v1189
        %v1191 = vpop.f32.mrf.mxu0
        %1192 = vmatprep.mubr.bf16.mxu0 0
        %1193 = vmatmul.mubr.bf16.gmra.mxu0 %v815
        %v1194 = vpop.f32.mrf.mxu0
        %v1195 = vadd.f32 %v443, %v1194
        %v1196 = vpop.f32.mrf.mxu0
        %v1197 = vpop.f32.mrf.mxu0
        %v1198 = vadd.f32 %v443, %v1197
        %v1199 = vpop.f32.mrf.mxu0
        %1200 = vmatprep.mubr.bf16.mxu0 0
        %1201 = vmatmul.mubr.bf16.gmra.mxu0 %v818
        %v1202 = vpop.f32.mrf.mxu0
        %v1203 = vadd.f32 %v443, %v1202
        %v1204 = vpop.f32.mrf.mxu0
        %v1205 = vpop.f32.mrf.mxu0
        %v1206 = vadd.f32 %v443, %v1205
        %v1207 = vpop.f32.mrf.mxu0
        %1208 = vmatprep.mubr.bf16.mxu0 0
        %1209 = vmatmul.mubr.bf16.gmra.mxu0 %v821
        %v1210 = vpop.f32.mrf.mxu0
        %v1211 = vadd.f32 %v443, %v1210
        %v1212 = vpop.f32.mrf.mxu0
        %v1213 = vpop.f32.mrf.mxu0
        %v1214 = vadd.f32 %v443, %v1213
        %v1215 = vpop.f32.mrf.mxu0
        %1216 = vmatprep.mubr.bf16.mxu0 0
        %1217 = vmatmul.mubr.bf16.gmra.mxu0 %v824
        %v1218 = vpop.f32.mrf.mxu0
        %v1219 = vadd.f32 %v443, %v1218
        %v1220 = vpop.f32.mrf.mxu0
        %v1221 = vpop.f32.mrf.mxu0
        %v1222 = vadd.f32 %v443, %v1221
        %v1223 = vpop.f32.mrf.mxu0
        %1224 = vmatprep.mubr.bf16.mxu0 0
        %1225 = vmatmul.mubr.bf16.gmra.mxu0 %v827
        %v1226 = vpop.f32.mrf.mxu0
        %v1227 = vadd.f32 %v443, %v1226
        %v1228 = vpop.f32.mrf.mxu0
        %v1229 = vpop.f32.mrf.mxu0
        %v1230 = vadd.f32 %v443, %v1229
        %v1231 = vpop.f32.mrf.mxu0
        %1232 = vmatprep.mubr.bf16.mxu0 0
        %1233 = vmatmul.mubr.bf16.gmra.mxu0 %v830
        %v1234 = vpop.f32.mrf.mxu0
        %v1235 = vadd.f32 %v443, %v1234
        %v1236 = vpop.f32.mrf.mxu0
        %v1237 = vpop.f32.mrf.mxu0
        %v1238 = vadd.f32 %v443, %v1237
        %v1239 = vpop.f32.mrf.mxu0
        %1240 = vmatprep.mubr.bf16.mxu0 0
        %1241 = vmatmul.mubr.bf16.gmra.mxu0 %v833
        %v1242 = vpop.f32.mrf.mxu0
        %v1243 = vadd.f32 %v443, %v1242
        %v1244 = vpop.f32.mrf.mxu0
        %v1245 = vpop.f32.mrf.mxu0
        %v1246 = vadd.f32 %v443, %v1245
        %v1247 = vpop.f32.mrf.mxu0
        %1248 = vmatprep.mubr.bf16.mxu0 0
        %1249 = vmatmul.mubr.bf16.gmra.mxu0 %v836
        %v1250 = vpop.f32.mrf.mxu0
        %v1251 = vadd.f32 %v443, %v1250
        %v1252 = vpop.f32.mrf.mxu0
        %v1253 = vpop.f32.mrf.mxu0
        %v1254 = vadd.f32 %v443, %v1253
        %v1255 = vpop.f32.mrf.mxu0
        %1256 = vmatprep.mubr.bf16.mxu0 0
        %1257 = vmatmul.mubr.bf16.gmra.mxu0 %v839
        %v1258 = vpop.f32.mrf.mxu0
        %v1259 = vadd.f32 %v443, %v1258
        %v1260 = vpop.f32.mrf.mxu0
        %v1261 = vpop.f32.mrf.mxu0
        %v1262 = vadd.f32 %v443, %v1261
        %v1263 = vpop.f32.mrf.mxu0
        %1264 = vdwg.mxu0
        %v1265 = vmax.f32 %v883, 0.0
        %v1266 = vmax.f32 %v886, 0.0
        %v1267 = vmax.f32 %v891, 0.0
        %v1268 = vmax.f32 %v894, 0.0
        %v1269 = vmax.f32 %v899, 0.0
        %v1270 = vmax.f32 %v902, 0.0
        %v1271 = vmax.f32 %v907, 0.0
        %v1272 = vmax.f32 %v910, 0.0
        %v1273 = vmax.f32 %v915, 0.0
        %v1274 = vmax.f32 %v918, 0.0
        %v1275 = vmax.f32 %v923, 0.0
        %v1276 = vmax.f32 %v926, 0.0
        %v1277 = vmax.f32 %v931, 0.0
        %v1278 = vmax.f32 %v934, 0.0
        %v1279 = vmax.f32 %v939, 0.0
        %v1280 = vmax.f32 %v942, 0.0
        %v1281 = vmax.f32 %v947, 0.0
        %v1282 = vmax.f32 %v950, 0.0
        %v1283 = vmax.f32 %v955, 0.0
        %v1284 = vmax.f32 %v958, 0.0
        %v1285 = vmax.f32 %v963, 0.0
        %v1286 = vmax.f32 %v966, 0.0
        %v1287 = vmax.f32 %v971, 0.0
        %v1288 = vmax.f32 %v974, 0.0
        %v1289 = vmax.f32 %v979, 0.0
        %v1290 = vmax.f32 %v982, 0.0
        %v1291 = vmax.f32 %v987, 0.0
        %v1292 = vmax.f32 %v990, 0.0
        %v1293 = vmax.f32 %v995, 0.0
        %v1294 = vmax.f32 %v998, 0.0
        %v1295 = vmax.f32 %v1003, 0.0
        %v1296 = vmax.f32 %v1006, 0.0
        %v1297 = vmax.f32 %v1011, 0.0
        %v1298 = vmax.f32 %v1014, 0.0
        %v1299 = vmax.f32 %v1019, 0.0
        %v1300 = vmax.f32 %v1022, 0.0
        %v1301 = vmax.f32 %v1027, 0.0
        %v1302 = vmax.f32 %v1030, 0.0
        %v1303 = vmax.f32 %v1035, 0.0
        %v1304 = vmax.f32 %v1038, 0.0
        %v1305 = vmax.f32 %v1043, 0.0
        %v1306 = vmax.f32 %v1046, 0.0
        %v1307 = vmax.f32 %v1051, 0.0
        %v1308 = vmax.f32 %v1054, 0.0
        %v1309 = vmax.f32 %v1059, 0.0
        %v1310 = vmax.f32 %v1062, 0.0
        %v1311 = vmax.f32 %v1067, 0.0
        %v1312 = vmax.f32 %v1070, 0.0
        %v1313 = vmax.f32 %v1075, 0.0
        %v1314 = vmax.f32 %v1078, 0.0
        %v1315 = vmax.f32 %v1083, 0.0
        %v1316 = vmax.f32 %v1086, 0.0
        %v1317 = vmax.f32 %v1091, 0.0
        %v1318 = vmax.f32 %v1094, 0.0
        %v1319 = vmax.f32 %v1099, 0.0
        %v1320 = vmax.f32 %v1102, 0.0
        %v1321 = vmax.f32 %v1107, 0.0
        %v1322 = vmax.f32 %v1110, 0.0
        %v1323 = vmax.f32 %v1115, 0.0
        %v1324 = vmax.f32 %v1118, 0.0
        %v1325 = vmax.f32 %v1123, 0.0
        %v1326 = vmax.f32 %v1126, 0.0
        %v1327 = vmax.f32 %v1131, 0.0
        %v1328 = vmax.f32 %v1134, 0.0
        %v1329 = vmax.f32 %v1139, 0.0
        %v1330 = vmax.f32 %v1142, 0.0
        %v1331 = vmax.f32 %v1147, 0.0
        %v1332 = vmax.f32 %v1150, 0.0
        %v1333 = vmax.f32 %v1155, 0.0
        %v1334 = vmax.f32 %v1158, 0.0
        %v1335 = vmax.f32 %v1163, 0.0
        %v1336 = vmax.f32 %v1166, 0.0
        %v1337 = vmax.f32 %v1171, 0.0
        %v1338 = vmax.f32 %v1174, 0.0
        %v1339 = vmax.f32 %v1179, 0.0
        %v1340 = vmax.f32 %v1182, 0.0
        %v1341 = vmax.f32 %v1187, 0.0
        %v1342 = vmax.f32 %v1190, 0.0
        %v1343 = vmax.f32 %v1195, 0.0
        %v1344 = vmax.f32 %v1198, 0.0
        %v1345 = vmax.f32 %v1203, 0.0
        %v1346 = vmax.f32 %v1206, 0.0
        %v1347 = vmax.f32 %v1211, 0.0
        %v1348 = vmax.f32 %v1214, 0.0
        %v1349 = vmax.f32 %v1219, 0.0
        %v1350 = vmax.f32 %v1222, 0.0
        %v1351 = vmax.f32 %v1227, 0.0
        %v1352 = vmax.f32 %v1230, 0.0
        %v1353 = vmax.f32 %v1235, 0.0
        %v1354 = vmax.f32 %v1238, 0.0
        %v1355 = vmax.f32 %v1243, 0.0
        %v1356 = vmax.f32 %v1246, 0.0
        %v1357 = vmax.f32 %v1251, 0.0
        %v1358 = vmax.f32 %v1254, 0.0
        %v1359 = vmax.f32 %v1259, 0.0
        %v1360 = vmax.f32 %v1262, 0.0
        %vm1361 = vcmask 261120
        %1362 = vst.msk [vmem:[#allocation2] sm:$0xff] %vm1361, 0.0
        %1363 = vst.msk [vmem:[#allocation2 + $0x8] sm:$0xff] %vm1361, 0.0
        %vm1364 = vcmask 254976
        %1365 = vst.msk [vmem:[#allocation2 + $0x10] sm:$0x3] %vm1364, 0.0
        %1366 = vst.msk [vmem:[#allocation2 + $0x1b0] sm:$0xff] %vm1361, 0.0
        %1367 = vst.msk [vmem:[#allocation2 + $0x1b8] sm:$0xff] %vm1361, 0.0
        %1368 = vst.msk [vmem:[#allocation2 + $0x1c0] sm:$0x3] %vm1364, 0.0
        %1369 = vst.msk [vmem:[#allocation2 + $0x360] sm:$0xff] %vm1361, 0.0
        %1370 = vst.msk [vmem:[#allocation2 + $0x368] sm:$0xff] %vm1361, 0.0
        %1371 = vst.msk [vmem:[#allocation2 + $0x370] sm:$0x3] %vm1364, 0.0
        %s1372 = scalar_lea.vmem [#allocation2], 408
        %1373 = vst.msk [vmem:[%s1372] sm:$0xff] %vm1361, 0.0
        %1374 = vst.msk [vmem:[%s1372 + $0x8] sm:$0xff] %vm1361, 0.0
        %1375 = vst.msk [vmem:[%s1372 + $0x10] sm:$0x3] %vm1364, 0.0
        %1376 = vst.msk [vmem:[%s1372 + $0x1b0] sm:$0xff] %vm1361, 0.0
        %1377 = vst.msk [vmem:[%s1372 + $0x1b8] sm:$0xff] %vm1361, 0.0
        %1378 = vst.msk [vmem:[%s1372 + $0x1c0] sm:$0x3] %vm1364, 0.0
        %1379 = vst.msk [vmem:[%s1372 + $0x360] sm:$0xff] %vm1361, 0.0
        %1380 = vst.msk [vmem:[%s1372 + $0x368] sm:$0xff] %vm1361, 0.0
        %1381 = vst.msk [vmem:[%s1372 + $0x370] sm:$0x3] %vm1364, 0.0
        %vm1382 = vcmask 253952
        %1383 = vst.msk [vmem:[#allocation2] sm:$0x1] %vm1382, 0.0
        %1384 = vst.msk [vmem:[#allocation2 + $0x18] sm:$0x1] %vm1382, 0.0
        %1385 = vst.msk [vmem:[#allocation2 + $0x30] sm:$0x1] %vm1382, 0.0
        %1386 = vst.msk [vmem:[#allocation2 + $0x48] sm:$0x1] %vm1382, 0.0
        %1387 = vst.msk [vmem:[#allocation2 + $0x60] sm:$0x1] %vm1382, 0.0
        %1388 = vst.msk [vmem:[#allocation2 + $0x78] sm:$0x1] %vm1382, 0.0
        %1389 = vst.msk [vmem:[#allocation2 + $0x90] sm:$0x1] %vm1382, 0.0
        %1390 = vst.msk [vmem:[#allocation2 + $0xa8] sm:$0x1] %vm1382, 0.0
        %1391 = vst.msk [vmem:[#allocation2 + $0xc0] sm:$0x1] %vm1382, 0.0
        %1392 = vst.msk [vmem:[#allocation2 + $0xd8] sm:$0x1] %vm1382, 0.0
        %1393 = vst.msk [vmem:[#allocation2 + $0xf0] sm:$0x1] %vm1382, 0.0
        %1394 = vst.msk [vmem:[#allocation2 + $0x108] sm:$0x1] %vm1382, 0.0
        %1395 = vst.msk [vmem:[#allocation2 + $0x120] sm:$0x1] %vm1382, 0.0
        %1396 = vst.msk [vmem:[#allocation2 + $0x138] sm:$0x1] %vm1382, 0.0
        %1397 = vst.msk [vmem:[#allocation2 + $0x150] sm:$0x1] %vm1382, 0.0
        %1398 = vst.msk [vmem:[#allocation2 + $0x168] sm:$0x1] %vm1382, 0.0
        %1399 = vst.msk [vmem:[#allocation2 + $0x180] sm:$0x1] %vm1382, 0.0
        %1400 = vst.msk [vmem:[#allocation2 + $0x198] sm:$0x1] %vm1382, 0.0
        %1401 = vst.msk [vmem:[#allocation2 + $0x1b0] sm:$0x1] %vm1382, 0.0
        %1402 = vst.msk [vmem:[#allocation2 + $0x1c8] sm:$0x1] %vm1382, 0.0
        %1403 = vst.msk [vmem:[#allocation2 + $0x1e0] sm:$0x1] %vm1382, 0.0
        %1404 = vst.msk [vmem:[#allocation2 + $0x1f8] sm:$0x1] %vm1382, 0.0
        %1405 = vst.msk [vmem:[#allocation2 + $0x210] sm:$0x1] %vm1382, 0.0
        %1406 = vst.msk [vmem:[#allocation2 + $0x228] sm:$0x1] %vm1382, 0.0
        %1407 = vst.msk [vmem:[#allocation2 + $0x240] sm:$0x1] %vm1382, 0.0
        %1408 = vst.msk [vmem:[#allocation2 + $0x258] sm:$0x1] %vm1382, 0.0
        %1409 = vst.msk [vmem:[#allocation2 + $0x270] sm:$0x1] %vm1382, 0.0
        %1410 = vst.msk [vmem:[#allocation2 + $0x288] sm:$0x1] %vm1382, 0.0
        %1411 = vst.msk [vmem:[#allocation2 + $0x2a0] sm:$0x1] %vm1382, 0.0
        %1412 = vst.msk [vmem:[#allocation2 + $0x2b8] sm:$0x1] %vm1382, 0.0
        %1413 = vst.msk [vmem:[#allocation2 + $0x2d0] sm:$0x1] %vm1382, 0.0
        %1414 = vst.msk [vmem:[#allocation2 + $0x2e8] sm:$0x1] %vm1382, 0.0
        %1415 = vst.msk [vmem:[#allocation2 + $0x300] sm:$0x1] %vm1382, 0.0
        %1416 = vst.msk [vmem:[#allocation2 + $0x318] sm:$0x1] %vm1382, 0.0
        %1417 = vst.msk [vmem:[#allocation2 + $0x330] sm:$0x1] %vm1382, 0.0
        %1418 = vst.msk [vmem:[#allocation2 + $0x348] sm:$0x1] %vm1382, 0.0
        %1419 = vst.msk [vmem:[#allocation2 + $0x360] sm:$0x1] %vm1382, 0.0
        %1420 = vst.msk [vmem:[#allocation2 + $0x378] sm:$0x1] %vm1382, 0.0
        %1421 = vst.msk [vmem:[#allocation2 + $0x390] sm:$0x1] %vm1382, 0.0
        %1422 = vst.msk [vmem:[#allocation2 + $0x3a8] sm:$0x1] %vm1382, 0.0
        %1423 = vst.msk [vmem:[#allocation2 + $0x3c0] sm:$0x1] %vm1382, 0.0
        %1424 = vst.msk [vmem:[#allocation2 + $0x3d8] sm:$0x1] %vm1382, 0.0
        %1425 = vst.msk [vmem:[#allocation2 + $0x3f0] sm:$0x1] %vm1382, 0.0
        %1426 = vst.msk [vmem:[#allocation2 + $0x408] sm:$0x1] %vm1382, 0.0
        %1427 = vst.msk [vmem:[#allocation2 + $0x420] sm:$0x1] %vm1382, 0.0
        %1428 = vst.msk [vmem:[#allocation2 + $0x438] sm:$0x1] %vm1382, 0.0
        %1429 = vst.msk [vmem:[#allocation2 + $0x450] sm:$0x1] %vm1382, 0.0
        %1430 = vst.msk [vmem:[#allocation2 + $0x468] sm:$0x1] %vm1382, 0.0
        %1431 = vst.msk [vmem:[#allocation2 + $0x480] sm:$0x1] %vm1382, 0.0
        %1432 = vst.msk [vmem:[#allocation2 + $0x498] sm:$0x1] %vm1382, 0.0
        %1433 = vst.msk [vmem:[#allocation2 + $0x4b0] sm:$0x1] %vm1382, 0.0
        %1434 = vst.msk [vmem:[#allocation2 + $0x4c8] sm:$0x1] %vm1382, 0.0
        %1435 = vst.msk [vmem:[#allocation2 + $0x4e0] sm:$0x1] %vm1382, 0.0
        %1436 = vst.msk [vmem:[#allocation2 + $0x4f8] sm:$0x1] %vm1382, 0.0
        %1437 = vst.msk [vmem:[#allocation2 + $0x11] sm:$0x1] %vm1382, 0.0
        %1438 = vst.msk [vmem:[#allocation2 + $0x29] sm:$0x1] %vm1382, 0.0
        %1439 = vst.msk [vmem:[#allocation2 + $0x41] sm:$0x1] %vm1382, 0.0
        %1440 = vst.msk [vmem:[#allocation2 + $0x59] sm:$0x1] %vm1382, 0.0
        %1441 = vst.msk [vmem:[#allocation2 + $0x71] sm:$0x1] %vm1382, 0.0
        %1442 = vst.msk [vmem:[#allocation2 + $0x89] sm:$0x1] %vm1382, 0.0
        %1443 = vst.msk [vmem:[#allocation2 + $0xa1] sm:$0x1] %vm1382, 0.0
        %1444 = vst.msk [vmem:[#allocation2 + $0xb9] sm:$0x1] %vm1382, 0.0
        %1445 = vst.msk [vmem:[#allocation2 + $0xd1] sm:$0x1] %vm1382, 0.0
        %1446 = vst.msk [vmem:[#allocation2 + $0xe9] sm:$0x1] %vm1382, 0.0
        %1447 = vst.msk [vmem:[#allocation2 + $0x101] sm:$0x1] %vm1382, 0.0
        %1448 = vst.msk [vmem:[#allocation2 + $0x119] sm:$0x1] %vm1382, 0.0
        %1449 = vst.msk [vmem:[#allocation2 + $0x131] sm:$0x1] %vm1382, 0.0
        %1450 = vst.msk [vmem:[#allocation2 + $0x149] sm:$0x1] %vm1382, 0.0
        %1451 = vst.msk [vmem:[#allocation2 + $0x161] sm:$0x1] %vm1382, 0.0
        %1452 = vst.msk [vmem:[#allocation2 + $0x179] sm:$0x1] %vm1382, 0.0
        %1453 = vst.msk [vmem:[#allocation2 + $0x191] sm:$0x1] %vm1382, 0.0
        %1454 = vst.msk [vmem:[#allocation2 + $0x1a9] sm:$0x1] %vm1382, 0.0
        %1455 = vst.msk [vmem:[#allocation2 + $0x1c1] sm:$0x1] %vm1382, 0.0
        %1456 = vst.msk [vmem:[#allocation2 + $0x1d9] sm:$0x1] %vm1382, 0.0
        %1457 = vst.msk [vmem:[#allocation2 + $0x1f1] sm:$0x1] %vm1382, 0.0
        %1458 = vst.msk [vmem:[#allocation2 + $0x209] sm:$0x1] %vm1382, 0.0
        %1459 = vst.msk [vmem:[#allocation2 + $0x221] sm:$0x1] %vm1382, 0.0
        %1460 = vst.msk [vmem:[#allocation2 + $0x239] sm:$0x1] %vm1382, 0.0
        %1461 = vst.msk [vmem:[#allocation2 + $0x251] sm:$0x1] %vm1382, 0.0
        %1462 = vst.msk [vmem:[#allocation2 + $0x269] sm:$0x1] %vm1382, 0.0
        %1463 = vst.msk [vmem:[#allocation2 + $0x281] sm:$0x1] %vm1382, 0.0
        %1464 = vst.msk [vmem:[#allocation2 + $0x299] sm:$0x1] %vm1382, 0.0
        %1465 = vst.msk [vmem:[#allocation2 + $0x2b1] sm:$0x1] %vm1382, 0.0
        %1466 = vst.msk [vmem:[#allocation2 + $0x2c9] sm:$0x1] %vm1382, 0.0
        %1467 = vst.msk [vmem:[#allocation2 + $0x2e1] sm:$0x1] %vm1382, 0.0
        %1468 = vst.msk [vmem:[#allocation2 + $0x2f9] sm:$0x1] %vm1382, 0.0
        %1469 = vst.msk [vmem:[#allocation2 + $0x311] sm:$0x1] %vm1382, 0.0
        %1470 = vst.msk [vmem:[#allocation2 + $0x329] sm:$0x1] %vm1382, 0.0
        %1471 = vst.msk [vmem:[#allocation2 + $0x341] sm:$0x1] %vm1382, 0.0
        %1472 = vst.msk [vmem:[#allocation2 + $0x359] sm:$0x1] %vm1382, 0.0
        %1473 = vst.msk [vmem:[#allocation2 + $0x371] sm:$0x1] %vm1382, 0.0
        %1474 = vst.msk [vmem:[#allocation2 + $0x389] sm:$0x1] %vm1382, 0.0
        %1475 = vst.msk [vmem:[#allocation2 + $0x3a1] sm:$0x1] %vm1382, 0.0
        %1476 = vst.msk [vmem:[#allocation2 + $0x3b9] sm:$0x1] %vm1382, 0.0
        %1477 = vst.msk [vmem:[#allocation2 + $0x3d1] sm:$0x1] %vm1382, 0.0
        %1478 = vst.msk [vmem:[#allocation2 + $0x3e9] sm:$0x1] %vm1382, 0.0
        %1479 = vst.msk [vmem:[#allocation2 + $0x401] sm:$0x1] %vm1382, 0.0
        %1480 = vst.msk [vmem:[#allocation2 + $0x419] sm:$0x1] %vm1382, 0.0
        %1481 = vst.msk [vmem:[#allocation2 + $0x431] sm:$0x1] %vm1382, 0.0
        %1482 = vst.msk [vmem:[#allocation2 + $0x449] sm:$0x1] %vm1382, 0.0
        %1483 = vst.msk [vmem:[#allocation2 + $0x461] sm:$0x1] %vm1382, 0.0
        %1484 = vst.msk [vmem:[#allocation2 + $0x479] sm:$0x1] %vm1382, 0.0
        %1485 = vst.msk [vmem:[#allocation2 + $0x491] sm:$0x1] %vm1382, 0.0
        %1486 = vst.msk [vmem:[#allocation2 + $0x4a9] sm:$0x1] %vm1382, 0.0
        %1487 = vst.msk [vmem:[#allocation2 + $0x4c1] sm:$0x1] %vm1382, 0.0
        %1488 = vst.msk [vmem:[#allocation2 + $0x4d9] sm:$0x1] %vm1382, 0.0
        %1489 = vst.msk [vmem:[#allocation2 + $0x4f1] sm:$0x1] %vm1382, 0.0
        %1490 = vst.msk [vmem:[#allocation2 + $0x509] sm:$0x1] %vm1382, 0.0
        %s1491 = scalar_lea.vmem [#allocation2], 24
        %1492 = vst.msk [vmem:[%s1491 + $0x1] sm:$0xff] %vm1361, %v1265
        %1493 = vst.msk [vmem:[%s1491 + $0x9] sm:$0xff] %vm1361, %v1266
        %1494 = vst.msk [vmem:[%s1491 + $0x19] sm:$0xff] %vm1361, %v1267
        %1495 = vst.msk [vmem:[%s1491 + $0x21] sm:$0xff] %vm1361, %v1268
        %1496 = vst.msk [vmem:[%s1491 + $0x31] sm:$0xff] %vm1361, %v1269
        %1497 = vst.msk [vmem:[%s1491 + $0x39] sm:$0xff] %vm1361, %v1270
        %1498 = vst.msk [vmem:[%s1491 + $0x49] sm:$0xff] %vm1361, %v1271
        %1499 = vst.msk [vmem:[%s1491 + $0x51] sm:$0xff] %vm1361, %v1272
        %1500 = vst.msk [vmem:[%s1491 + $0x61] sm:$0xff] %vm1361, %v1273
        %1501 = vst.msk [vmem:[%s1491 + $0x69] sm:$0xff] %vm1361, %v1274
        %1502 = vst.msk [vmem:[%s1491 + $0x79] sm:$0xff] %vm1361, %v1275
        %1503 = vst.msk [vmem:[%s1491 + $0x81] sm:$0xff] %vm1361, %v1276
        %1504 = vst.msk [vmem:[%s1491 + $0x91] sm:$0xff] %vm1361, %v1277
        %1505 = vst.msk [vmem:[%s1491 + $0x99] sm:$0xff] %vm1361, %v1278
        %1506 = vst.msk [vmem:[%s1491 + $0xa9] sm:$0xff] %vm1361, %v1279
        %1507 = vst.msk [vmem:[%s1491 + $0xb1] sm:$0xff] %vm1361, %v1280
        %1508 = vst.msk [vmem:[%s1491 + $0xc1] sm:$0xff] %vm1361, %v1281
        %1509 = vst.msk [vmem:[%s1491 + $0xc9] sm:$0xff] %vm1361, %v1282
        %1510 = vst.msk [vmem:[%s1491 + $0xd9] sm:$0xff] %vm1361, %v1283
        %1511 = vst.msk [vmem:[%s1491 + $0xe1] sm:$0xff] %vm1361, %v1284
        %1512 = vst.msk [vmem:[%s1491 + $0xf1] sm:$0xff] %vm1361, %v1285
        %1513 = vst.msk [vmem:[%s1491 + $0xf9] sm:$0xff] %vm1361, %v1286
        %1514 = vst.msk [vmem:[%s1491 + $0x109] sm:$0xff] %vm1361, %v1287
        %1515 = vst.msk [vmem:[%s1491 + $0x111] sm:$0xff] %vm1361, %v1288
        %1516 = vst.msk [vmem:[%s1491 + $0x121] sm:$0xff] %vm1361, %v1289
        %1517 = vst.msk [vmem:[%s1491 + $0x129] sm:$0xff] %vm1361, %v1290
        %1518 = vst.msk [vmem:[%s1491 + $0x139] sm:$0xff] %vm1361, %v1291
        %1519 = vst.msk [vmem:[%s1491 + $0x141] sm:$0xff] %vm1361, %v1292
        %1520 = vst.msk [vmem:[%s1491 + $0x151] sm:$0xff] %vm1361, %v1293
        %1521 = vst.msk [vmem:[%s1491 + $0x159] sm:$0xff] %vm1361, %v1294
        %1522 = vst.msk [vmem:[%s1491 + $0x169] sm:$0xff] %vm1361, %v1295
        %1523 = vst.msk [vmem:[%s1491 + $0x171] sm:$0xff] %vm1361, %v1296
        %1524 = vst.msk [vmem:[%s1491 + $0x1b1] sm:$0xff] %vm1361, %v1297
        %1525 = vst.msk [vmem:[%s1491 + $0x1b9] sm:$0xff] %vm1361, %v1298
        %1526 = vst.msk [vmem:[%s1491 + $0x1c9] sm:$0xff] %vm1361, %v1299
        %1527 = vst.msk [vmem:[%s1491 + $0x1d1] sm:$0xff] %vm1361, %v1300
        %1528 = vst.msk [vmem:[%s1491 + $0x1e1] sm:$0xff] %vm1361, %v1301
        %1529 = vst.msk [vmem:[%s1491 + $0x1e9] sm:$0xff] %vm1361, %v1302
        %1530 = vst.msk [vmem:[%s1491 + $0x1f9] sm:$0xff] %vm1361, %v1303
        %1531 = vst.msk [vmem:[%s1491 + $0x201] sm:$0xff] %vm1361, %v1304
        %1532 = vst.msk [vmem:[%s1491 + $0x211] sm:$0xff] %vm1361, %v1305
        %1533 = vst.msk [vmem:[%s1491 + $0x219] sm:$0xff] %vm1361, %v1306
        %1534 = vst.msk [vmem:[%s1491 + $0x229] sm:$0xff] %vm1361, %v1307
        %1535 = vst.msk [vmem:[%s1491 + $0x231] sm:$0xff] %vm1361, %v1308
        %1536 = vst.msk [vmem:[%s1491 + $0x241] sm:$0xff] %vm1361, %v1309
        %1537 = vst.msk [vmem:[%s1491 + $0x249] sm:$0xff] %vm1361, %v1310
        %1538 = vst.msk [vmem:[%s1491 + $0x259] sm:$0xff] %vm1361, %v1311
        %1539 = vst.msk [vmem:[%s1491 + $0x261] sm:$0xff] %vm1361, %v1312
        %1540 = vst.msk [vmem:[%s1491 + $0x271] sm:$0xff] %vm1361, %v1313
        %1541 = vst.msk [vmem:[%s1491 + $0x279] sm:$0xff] %vm1361, %v1314
        %1542 = vst.msk [vmem:[%s1491 + $0x289] sm:$0xff] %vm1361, %v1315
        %1543 = vst.msk [vmem:[%s1491 + $0x291] sm:$0xff] %vm1361, %v1316
        %1544 = vst.msk [vmem:[%s1491 + $0x2a1] sm:$0xff] %vm1361, %v1317
        %1545 = vst.msk [vmem:[%s1491 + $0x2a9] sm:$0xff] %vm1361, %v1318
        %1546 = vst.msk [vmem:[%s1491 + $0x2b9] sm:$0xff] %vm1361, %v1319
        %1547 = vst.msk [vmem:[%s1491 + $0x2c1] sm:$0xff] %vm1361, %v1320
        %1548 = vst.msk [vmem:[%s1491 + $0x2d1] sm:$0xff] %vm1361, %v1321
        %1549 = vst.msk [vmem:[%s1491 + $0x2d9] sm:$0xff] %vm1361, %v1322
        %1550 = vst.msk [vmem:[%s1491 + $0x2e9] sm:$0xff] %vm1361, %v1323
        %1551 = vst.msk [vmem:[%s1491 + $0x2f1] sm:$0xff] %vm1361, %v1324
        %1552 = vst.msk [vmem:[%s1491 + $0x301] sm:$0xff] %vm1361, %v1325
        %1553 = vst.msk [vmem:[%s1491 + $0x309] sm:$0xff] %vm1361, %v1326
        %1554 = vst.msk [vmem:[%s1491 + $0x319] sm:$0xff] %vm1361, %v1327
        %1555 = vst.msk [vmem:[%s1491 + $0x321] sm:$0xff] %vm1361, %v1328
        %1556 = vst.msk [vmem:[%s1491 + $0x361] sm:$0xff] %vm1361, %v1329
        %1557 = vst.msk [vmem:[%s1491 + $0x369] sm:$0xff] %vm1361, %v1330
        %1558 = vst.msk [vmem:[%s1491 + $0x379] sm:$0xff] %vm1361, %v1331
        %1559 = vst.msk [vmem:[%s1491 + $0x381] sm:$0xff] %vm1361, %v1332
        %1560 = vst.msk [vmem:[%s1491 + $0x391] sm:$0xff] %vm1361, %v1333
        %1561 = vst.msk [vmem:[%s1491 + $0x399] sm:$0xff] %vm1361, %v1334
        %1562 = vst.msk [vmem:[%s1491 + $0x3a9] sm:$0xff] %vm1361, %v1335
        %1563 = vst.msk [vmem:[%s1491 + $0x3b1] sm:$0xff] %vm1361, %v1336
        %1564 = vst.msk [vmem:[%s1491 + $0x3c1] sm:$0xff] %vm1361, %v1337
        %1565 = vst.msk [vmem:[%s1491 + $0x3c9] sm:$0xff] %vm1361, %v1338
        %1566 = vst.msk [vmem:[%s1491 + $0x3d9] sm:$0xff] %vm1361, %v1339
        %1567 = vst.msk [vmem:[%s1491 + $0x3e1] sm:$0xff] %vm1361, %v1340
        %1568 = vst.msk [vmem:[%s1491 + $0x3f1] sm:$0xff] %vm1361, %v1341
        %1569 = vst.msk [vmem:[%s1491 + $0x3f9] sm:$0xff] %vm1361, %v1342
        %1570 = vst.msk [vmem:[%s1491 + $0x409] sm:$0xff] %vm1361, %v1343
        %1571 = vst.msk [vmem:[%s1491 + $0x411] sm:$0xff] %vm1361, %v1344
        %1572 = vst.msk [vmem:[%s1491 + $0x421] sm:$0xff] %vm1361, %v1345
        %1573 = vst.msk [vmem:[%s1491 + $0x429] sm:$0xff] %vm1361, %v1346
        %1574 = vst.msk [vmem:[%s1491 + $0x439] sm:$0xff] %vm1361, %v1347
        %1575 = vst.msk [vmem:[%s1491 + $0x441] sm:$0xff] %vm1361, %v1348
        %1576 = vst.msk [vmem:[%s1491 + $0x451] sm:$0xff] %vm1361, %v1349
        %1577 = vst.msk [vmem:[%s1491 + $0x459] sm:$0xff] %vm1361, %v1350
        %1578 = vst.msk [vmem:[%s1491 + $0x469] sm:$0xff] %vm1361, %v1351
        %1579 = vst.msk [vmem:[%s1491 + $0x471] sm:$0xff] %vm1361, %v1352
        %1580 = vst.msk [vmem:[%s1491 + $0x481] sm:$0xff] %vm1361, %v1353
        %1581 = vst.msk [vmem:[%s1491 + $0x489] sm:$0xff] %vm1361, %v1354
        %1582 = vst.msk [vmem:[%s1491 + $0x499] sm:$0xff] %vm1361, %v1355
        %1583 = vst.msk [vmem:[%s1491 + $0x4a1] sm:$0xff] %vm1361, %v1356
        %1584 = vst.msk [vmem:[%s1491 + $0x4b1] sm:$0xff] %vm1361, %v1357
        %1585 = vst.msk [vmem:[%s1491 + $0x4b9] sm:$0xff] %vm1361, %v1358
        %1586 = vst.msk [vmem:[%s1491 + $0x4c9] sm:$0xff] %vm1361, %v1359
        %1587 = vst.msk [vmem:[%s1491 + $0x4d1] sm:$0xff] %vm1361, %v1360
        %v1588 = vld [vmem:[#allocation2] sm:$0xff]
        %v1589 = vld [vmem:[#allocation2 + $0x8] sm:$0xff]
        %v1590 = vld [vmem:[#allocation2 + $0x18] sm:$0xff]
        %v1591 = vld [vmem:[#allocation2 + $0x20] sm:$0xff]
        %v1592 = vld [vmem:[#allocation2 + $0x30] sm:$0xff]
        %v1593 = vld [vmem:[#allocation2 + $0x38] sm:$0xff]
        %v1594 = vld [vmem:[#allocation2 + $0x48] sm:$0xff]
        %v1595 = vld [vmem:[#allocation2 + $0x50] sm:$0xff]
        %v1596 = vld [vmem:[#allocation2 + $0x60] sm:$0xff]
        %v1597 = vld [vmem:[#allocation2 + $0x68] sm:$0xff]
        %v1598 = vld [vmem:[#allocation2 + $0x78] sm:$0xff]
        %v1599 = vld [vmem:[#allocation2 + $0x80] sm:$0xff]
        %v1600 = vld [vmem:[#allocation2 + $0x90] sm:$0xff]
        %v1601 = vld [vmem:[#allocation2 + $0x98] sm:$0xff]
        %v1602 = vld [vmem:[#allocation2 + $0xa8] sm:$0xff]
        %v1603 = vld [vmem:[#allocation2 + $0xb0] sm:$0xff]
        %v1604 = vld [vmem:[#allocation2 + $0xc0] sm:$0xff]
        %v1605 = vld [vmem:[#allocation2 + $0xc8] sm:$0xff]
        %v1606 = vld [vmem:[#allocation2 + $0xd8] sm:$0xff]
        %v1607 = vld [vmem:[#allocation2 + $0xe0] sm:$0xff]
        %v1608 = vld [vmem:[#allocation2 + $0xf0] sm:$0xff]
        %v1609 = vld [vmem:[#allocation2 + $0xf8] sm:$0xff]
        %v1610 = vld [vmem:[#allocation2 + $0x108] sm:$0xff]
        %v1611 = vld [vmem:[#allocation2 + $0x110] sm:$0xff]
        %v1612 = vld [vmem:[#allocation2 + $0x120] sm:$0xff]
        %v1613 = vld [vmem:[#allocation2 + $0x128] sm:$0xff]
        %v1614 = vld [vmem:[#allocation2 + $0x138] sm:$0xff]
        %v1615 = vld [vmem:[#allocation2 + $0x140] sm:$0xff]
        %v1616 = vld [vmem:[#allocation2 + $0x150] sm:$0xff]
        %v1617 = vld [vmem:[#allocation2 + $0x158] sm:$0xff]
        %v1618 = vld [vmem:[#allocation2 + $0x168] sm:$0xff]
        %v1619 = vld [vmem:[#allocation2 + $0x170] sm:$0xff]
        %v1620 = vld [vmem:[#allocation2 + $0x1b0] sm:$0xff]
        %v1621 = vld [vmem:[#allocation2 + $0x1b8] sm:$0xff]
        %v1622 = vld [vmem:[#allocation2 + $0x1c8] sm:$0xff]
        %v1623 = vld [vmem:[#allocation2 + $0x1d0] sm:$0xff]
        %v1624 = vld [vmem:[#allocation2 + $0x1e0] sm:$0xff]
        %v1625 = vld [vmem:[#allocation2 + $0x1e8] sm:$0xff]
        %v1626 = vld [vmem:[#allocation2 + $0x1f8] sm:$0xff]
        %v1627 = vld [vmem:[#allocation2 + $0x200] sm:$0xff]
        %v1628 = vld [vmem:[#allocation2 + $0x210] sm:$0xff]
        %v1629 = vld [vmem:[#allocation2 + $0x218] sm:$0xff]
        %v1630 = vld [vmem:[#allocation2 + $0x228] sm:$0xff]
        %v1631 = vld [vmem:[#allocation2 + $0x230] sm:$0xff]
        %v1632 = vld [vmem:[#allocation2 + $0x240] sm:$0xff]
        %v1633 = vld [vmem:[#allocation2 + $0x248] sm:$0xff]
        %v1634 = vld [vmem:[#allocation2 + $0x258] sm:$0xff]
        %v1635 = vld [vmem:[#allocation2 + $0x260] sm:$0xff]
        %v1636 = vld [vmem:[#allocation2 + $0x270] sm:$0xff]
        %v1637 = vld [vmem:[#allocation2 + $0x278] sm:$0xff]
        %v1638 = vld [vmem:[#allocation2 + $0x288] sm:$0xff]
        %v1639 = vld [vmem:[#allocation2 + $0x290] sm:$0xff]
        %v1640 = vld [vmem:[#allocation2 + $0x2a0] sm:$0xff]
        %v1641 = vld [vmem:[#allocation2 + $0x2a8] sm:$0xff]
        %v1642 = vld [vmem:[#allocation2 + $0x2b8] sm:$0xff]
        %v1643 = vld [vmem:[#allocation2 + $0x2c0] sm:$0xff]
        %v1644 = vld [vmem:[#allocation2 + $0x2d0] sm:$0xff]
        %v1645 = vld [vmem:[#allocation2 + $0x2d8] sm:$0xff]
        %v1646 = vld [vmem:[#allocation2 + $0x2e8] sm:$0xff]
        %v1647 = vld [vmem:[#allocation2 + $0x2f0] sm:$0xff]
        %v1648 = vld [vmem:[#allocation2 + $0x300] sm:$0xff]
        %v1649 = vld [vmem:[#allocation2 + $0x308] sm:$0xff]
        %v1650 = vld [vmem:[#allocation2 + $0x318] sm:$0xff]
        %v1651 = vld [vmem:[#allocation2 + $0x320] sm:$0xff]
        %v1652 = vld [vmem:[#allocation2 + $0x360] sm:$0xff]
        %v1653 = vld [vmem:[#allocation2 + $0x368] sm:$0xff]
        %v1654 = vld [vmem:[#allocation2 + $0x378] sm:$0xff]
        %v1655 = vld [vmem:[#allocation2 + $0x380] sm:$0xff]
        %v1656 = vld [vmem:[#allocation2 + $0x390] sm:$0xff]
        %v1657 = vld [vmem:[#allocation2 + $0x398] sm:$0xff]
        %v1658 = vld [vmem:[#allocation2 + $0x3a8] sm:$0xff]
        %v1659 = vld [vmem:[#allocation2 + $0x3b0] sm:$0xff]
        %v1660 = vld [vmem:[#allocation2 + $0x3c0] sm:$0xff]
        %v1661 = vld [vmem:[#allocation2 + $0x3c8] sm:$0xff]
        %v1662 = vld [vmem:[#allocation2 + $0x3d8] sm:$0xff]
        %v1663 = vld [vmem:[#allocation2 + $0x3e0] sm:$0xff]
        %v1664 = vld [vmem:[#allocation2 + $0x3f0] sm:$0xff]
        %v1665 = vld [vmem:[#allocation2 + $0x3f8] sm:$0xff]
        %v1666 = vld [vmem:[#allocation2 + $0x408] sm:$0xff]
        %v1667 = vld [vmem:[#allocation2 + $0x410] sm:$0xff]
        %v1668 = vld [vmem:[#allocation2 + $0x420] sm:$0xff]
        %v1669 = vld [vmem:[#allocation2 + $0x428] sm:$0xff]
        %v1670 = vld [vmem:[#allocation2 + $0x438] sm:$0xff]
        %v1671 = vld [vmem:[#allocation2 + $0x440] sm:$0xff]
        %v1672 = vld [vmem:[#allocation2 + $0x450] sm:$0xff]
        %v1673 = vld [vmem:[#allocation2 + $0x458] sm:$0xff]
        %v1674 = vld [vmem:[#allocation2 + $0x468] sm:$0xff]
        %v1675 = vld [vmem:[#allocation2 + $0x470] sm:$0xff]
        %v1676 = vld [vmem:[#allocation2 + $0x480] sm:$0xff]
        %v1677 = vld [vmem:[#allocation2 + $0x488] sm:$0xff]
        %v1678 = vld [vmem:[#allocation2 + $0x498] sm:$0xff]
        %v1679 = vld [vmem:[#allocation2 + $0x4a0] sm:$0xff]
        %v1680 = vld [vmem:[#allocation2 + $0x4b0] sm:$0xff]
        %v1681 = vld [vmem:[#allocation2 + $0x4b8] sm:$0xff]
        %v1682 = vld [vmem:[#allocation2 + $0x4c8] sm:$0xff]
        %v1683 = vld [vmem:[#allocation2 + $0x4d0] sm:$0xff]
        %v1684 = vld [vmem:[#allocation2 + $0x1] sm:$0xff]
        %v1685 = vld [vmem:[#allocation2 + $0x9] sm:$0xff]
        %v1686 = vld [vmem:[#allocation2 + $0x19] sm:$0xff]
        %v1687 = vld [vmem:[#allocation2 + $0x21] sm:$0xff]
        %v1688 = vld [vmem:[#allocation2 + $0x31] sm:$0xff]
        %v1689 = vld [vmem:[#allocation2 + $0x39] sm:$0xff]
        %v1690 = vld [vmem:[#allocation2 + $0x49] sm:$0xff]
        %v1691 = vld [vmem:[#allocation2 + $0x51] sm:$0xff]
        %v1692 = vld [vmem:[#allocation2 + $0x61] sm:$0xff]
        %v1693 = vld [vmem:[#allocation2 + $0x69] sm:$0xff]
        %v1694 = vld [vmem:[#allocation2 + $0x79] sm:$0xff]
        %v1695 = vld [vmem:[#allocation2 + $0x81] sm:$0xff]
        %v1696 = vld [vmem:[#allocation2 + $0x91] sm:$0xff]
        %v1697 = vld [vmem:[#allocation2 + $0x99] sm:$0xff]
        %v1698 = vld [vmem:[#allocation2 + $0xa9] sm:$0xff]
        %v1699 = vld [vmem:[#allocation2 + $0xb1] sm:$0xff]
        %v1700 = vld [vmem:[#allocation2 + $0xc1] sm:$0xff]
        %v1701 = vld [vmem:[#allocation2 + $0xc9] sm:$0xff]
        %v1702 = vld [vmem:[#allocation2 + $0xd9] sm:$0xff]
        %v1703 = vld [vmem:[#allocation2 + $0xe1] sm:$0xff]
        %v1704 = vld [vmem:[#allocation2 + $0xf1] sm:$0xff]
        %v1705 = vld [vmem:[#allocation2 + $0xf9] sm:$0xff]
        %v1706 = vld [vmem:[#allocation2 + $0x109] sm:$0xff]
        %v1707 = vld [vmem:[#allocation2 + $0x111] sm:$0xff]
        %v1708 = vld [vmem:[#allocation2 + $0x121] sm:$0xff]
        %v1709 = vld [vmem:[#allocation2 + $0x129] sm:$0xff]
        %v1710 = vld [vmem:[#allocation2 + $0x139] sm:$0xff]
        %v1711 = vld [vmem:[#allocation2 + $0x141] sm:$0xff]
        %v1712 = vld [vmem:[#allocation2 + $0x151] sm:$0xff]
        %v1713 = vld [vmem:[#allocation2 + $0x159] sm:$0xff]
        %v1714 = vld [vmem:[#allocation2 + $0x169] sm:$0xff]
        %v1715 = vld [vmem:[#allocation2 + $0x171] sm:$0xff]
        %v1716 = vld [vmem:[#allocation2 + $0x1b1] sm:$0xff]
        %v1717 = vld [vmem:[#allocation2 + $0x1b9] sm:$0xff]
        %v1718 = vld [vmem:[#allocation2 + $0x1c9] sm:$0xff]
        %v1719 = vld [vmem:[#allocation2 + $0x1d1] sm:$0xff]
        %v1720 = vld [vmem:[#allocation2 + $0x1e1] sm:$0xff]
        %v1721 = vld [vmem:[#allocation2 + $0x1e9] sm:$0xff]
        %v1722 = vld [vmem:[#allocation2 + $0x1f9] sm:$0xff]
        %v1723 = vld [vmem:[#allocation2 + $0x201] sm:$0xff]
        %v1724 = vld [vmem:[#allocation2 + $0x211] sm:$0xff]
        %v1725 = vld [vmem:[#allocation2 + $0x219] sm:$0xff]
        %v1726 = vld [vmem:[#allocation2 + $0x229] sm:$0xff]
        %v1727 = vld [vmem:[#allocation2 + $0x231] sm:$0xff]
        %v1728 = vld [vmem:[#allocation2 + $0x241] sm:$0xff]
        %v1729 = vld [vmem:[#allocation2 + $0x249] sm:$0xff]
        %v1730 = vld [vmem:[#allocation2 + $0x259] sm:$0xff]
        %v1731 = vld [vmem:[#allocation2 + $0x261] sm:$0xff]
        %v1732 = vld [vmem:[#allocation2 + $0x271] sm:$0xff]
        %v1733 = vld [vmem:[#allocation2 + $0x279] sm:$0xff]
        %v1734 = vld [vmem:[#allocation2 + $0x289] sm:$0xff]
        %v1735 = vld [vmem:[#allocation2 + $0x291] sm:$0xff]
        %v1736 = vld [vmem:[#allocation2 + $0x2a1] sm:$0xff]
        %v1737 = vld [vmem:[#allocation2 + $0x2a9] sm:$0xff]
        %v1738 = vld [vmem:[#allocation2 + $0x2b9] sm:$0xff]
        %v1739 = vld [vmem:[#allocation2 + $0x2c1] sm:$0xff]
        %v1740 = vld [vmem:[#allocation2 + $0x2d1] sm:$0xff]
        %v1741 = vld [vmem:[#allocation2 + $0x2d9] sm:$0xff]
        %v1742 = vld [vmem:[#allocation2 + $0x2e9] sm:$0xff]
        %v1743 = vld [vmem:[#allocation2 + $0x2f1] sm:$0xff]
        %v1744 = vld [vmem:[#allocation2 + $0x301] sm:$0xff]
        %v1745 = vld [vmem:[#allocation2 + $0x309] sm:$0xff]
        %v1746 = vld [vmem:[#allocation2 + $0x319] sm:$0xff]
        %v1747 = vld [vmem:[#allocation2 + $0x321] sm:$0xff]
        %v1748 = vld [vmem:[#allocation2 + $0x361] sm:$0xff]
        %v1749 = vld [vmem:[#allocation2 + $0x369] sm:$0xff]
        %v1750 = vld [vmem:[#allocation2 + $0x379] sm:$0xff]
        %v1751 = vld [vmem:[#allocation2 + $0x381] sm:$0xff]
        %v1752 = vld [vmem:[#allocation2 + $0x391] sm:$0xff]
        %v1753 = vld [vmem:[#allocation2 + $0x399] sm:$0xff]
        %v1754 = vld [vmem:[#allocation2 + $0x3a9] sm:$0xff]
        %v1755 = vld [vmem:[#allocation2 + $0x3b1] sm:$0xff]
        %v1756 = vld [vmem:[#allocation2 + $0x3c1] sm:$0xff]
        %v1757 = vld [vmem:[#allocation2 + $0x3c9] sm:$0xff]
        %v1758 = vld [vmem:[#allocation2 + $0x3d9] sm:$0xff]
        %v1759 = vld [vmem:[#allocation2 + $0x3e1] sm:$0xff]
        %v1760 = vld [vmem:[#allocation2 + $0x3f1] sm:$0xff]
        %v1761 = vld [vmem:[#allocation2 + $0x3f9] sm:$0xff]
        %v1762 = vld [vmem:[#allocation2 + $0x409] sm:$0xff]
        %v1763 = vld [vmem:[#allocation2 + $0x411] sm:$0xff]
        %v1764 = vld [vmem:[#allocation2 + $0x421] sm:$0xff]
        %v1765 = vld [vmem:[#allocation2 + $0x429] sm:$0xff]
        %v1766 = vld [vmem:[#allocation2 + $0x439] sm:$0xff]
        %v1767 = vld [vmem:[#allocation2 + $0x441] sm:$0xff]
        %v1768 = vld [vmem:[#allocation2 + $0x451] sm:$0xff]
        %v1769 = vld [vmem:[#allocation2 + $0x459] sm:$0xff]
        %v1770 = vld [vmem:[#allocation2 + $0x469] sm:$0xff]
        %v1771 = vld [vmem:[#allocation2 + $0x471] sm:$0xff]
        %v1772 = vld [vmem:[#allocation2 + $0x481] sm:$0xff]
        %v1773 = vld [vmem:[#allocation2 + $0x489] sm:$0xff]
        %v1774 = vld [vmem:[#allocation2 + $0x499] sm:$0xff]
        %v1775 = vld [vmem:[#allocation2 + $0x4a1] sm:$0xff]
        %v1776 = vld [vmem:[#allocation2 + $0x4b1] sm:$0xff]
        %v1777 = vld [vmem:[#allocation2 + $0x4b9] sm:$0xff]
        %v1778 = vld [vmem:[#allocation2 + $0x4c9] sm:$0xff]
        %v1779 = vld [vmem:[#allocation2 + $0x4d1] sm:$0xff]
        %v1780 = vld [vmem:[#allocation2 + $0x2] sm:$0xff]
        %v1781 = vld [vmem:[#allocation2 + $0xa] sm:$0xff]
        %v1782 = vld [vmem:[#allocation2 + $0x1a] sm:$0xff]
        %v1783 = vld [vmem:[#allocation2 + $0x22] sm:$0xff]
        %v1784 = vld [vmem:[#allocation2 + $0x32] sm:$0xff]
        %v1785 = vld [vmem:[#allocation2 + $0x3a] sm:$0xff]
        %v1786 = vld [vmem:[#allocation2 + $0x4a] sm:$0xff]
        %v1787 = vld [vmem:[#allocation2 + $0x52] sm:$0xff]
        %v1788 = vld [vmem:[#allocation2 + $0x62] sm:$0xff]
        %v1789 = vld [vmem:[#allocation2 + $0x6a] sm:$0xff]
        %v1790 = vld [vmem:[#allocation2 + $0x7a] sm:$0xff]
        %v1791 = vld [vmem:[#allocation2 + $0x82] sm:$0xff]
        %v1792 = vld [vmem:[#allocation2 + $0x92] sm:$0xff]
        %v1793 = vld [vmem:[#allocation2 + $0x9a] sm:$0xff]
        %v1794 = vld [vmem:[#allocation2 + $0xaa] sm:$0xff]
        %v1795 = vld [vmem:[#allocation2 + $0xb2] sm:$0xff]
        %v1796 = vld [vmem:[#allocation2 + $0xc2] sm:$0xff]
        %v1797 = vld [vmem:[#allocation2 + $0xca] sm:$0xff]
        %v1798 = vld [vmem:[#allocation2 + $0xda] sm:$0xff]
        %v1799 = vld [vmem:[#allocation2 + $0xe2] sm:$0xff]
        %v1800 = vld [vmem:[#allocation2 + $0xf2] sm:$0xff]
        %v1801 = vld [vmem:[#allocation2 + $0xfa] sm:$0xff]
        %v1802 = vld [vmem:[#allocation2 + $0x10a] sm:$0xff]
        %v1803 = vld [vmem:[#allocation2 + $0x112] sm:$0xff]
        %v1804 = vld [vmem:[#allocation2 + $0x122] sm:$0xff]
        %v1805 = vld [vmem:[#allocation2 + $0x12a] sm:$0xff]
        %v1806 = vld [vmem:[#allocation2 + $0x13a] sm:$0xff]
        %v1807 = vld [vmem:[#allocation2 + $0x142] sm:$0xff]
        %v1808 = vld [vmem:[#allocation2 + $0x152] sm:$0xff]
        %v1809 = vld [vmem:[#allocation2 + $0x15a] sm:$0xff]
        %v1810 = vld [vmem:[#allocation2 + $0x16a] sm:$0xff]
        %v1811 = vld [vmem:[#allocation2 + $0x172] sm:$0xff]
        %v1812 = vld [vmem:[#allocation2 + $0x1b2] sm:$0xff]
        %v1813 = vld [vmem:[#allocation2 + $0x1ba] sm:$0xff]
        %v1814 = vld [vmem:[#allocation2 + $0x1ca] sm:$0xff]
        %v1815 = vld [vmem:[#allocation2 + $0x1d2] sm:$0xff]
        %v1816 = vld [vmem:[#allocation2 + $0x1e2] sm:$0xff]
        %v1817 = vld [vmem:[#allocation2 + $0x1ea] sm:$0xff]
        %v1818 = vld [vmem:[#allocation2 + $0x1fa] sm:$0xff]
        %v1819 = vld [vmem:[#allocation2 + $0x202] sm:$0xff]
        %v1820 = vld [vmem:[#allocation2 + $0x212] sm:$0xff]
        %v1821 = vld [vmem:[#allocation2 + $0x21a] sm:$0xff]
        %v1822 = vld [vmem:[#allocation2 + $0x22a] sm:$0xff]
        %v1823 = vld [vmem:[#allocation2 + $0x232] sm:$0xff]
        %v1824 = vld [vmem:[#allocation2 + $0x242] sm:$0xff]
        %v1825 = vld [vmem:[#allocation2 + $0x24a] sm:$0xff]
        %v1826 = vld [vmem:[#allocation2 + $0x25a] sm:$0xff]
        %v1827 = vld [vmem:[#allocation2 + $0x262] sm:$0xff]
        %v1828 = vld [vmem:[#allocation2 + $0x272] sm:$0xff]
        %v1829 = vld [vmem:[#allocation2 + $0x27a] sm:$0xff]
        %v1830 = vld [vmem:[#allocation2 + $0x28a] sm:$0xff]
        %v1831 = vld [vmem:[#allocation2 + $0x292] sm:$0xff]
        %v1832 = vld [vmem:[#allocation2 + $0x2a2] sm:$0xff]
        %v1833 = vld [vmem:[#allocation2 + $0x2aa] sm:$0xff]
        %v1834 = vld [vmem:[#allocation2 + $0x2ba] sm:$0xff]
        %v1835 = vld [vmem:[#allocation2 + $0x2c2] sm:$0xff]
        %v1836 = vld [vmem:[#allocation2 + $0x2d2] sm:$0xff]
        %v1837 = vld [vmem:[#allocation2 + $0x2da] sm:$0xff]
        %v1838 = vld [vmem:[#allocation2 + $0x2ea] sm:$0xff]
        %v1839 = vld [vmem:[#allocation2 + $0x2f2] sm:$0xff]
        %v1840 = vld [vmem:[#allocation2 + $0x302] sm:$0xff]
        %v1841 = vld [vmem:[#allocation2 + $0x30a] sm:$0xff]
        %v1842 = vld [vmem:[#allocation2 + $0x31a] sm:$0xff]
        %v1843 = vld [vmem:[#allocation2 + $0x322] sm:$0xff]
        %v1844 = vld [vmem:[#allocation2 + $0x362] sm:$0xff]
        %v1845 = vld [vmem:[#allocation2 + $0x36a] sm:$0xff]
        %v1846 = vld [vmem:[#allocation2 + $0x37a] sm:$0xff]
        %v1847 = vld [vmem:[#allocation2 + $0x382] sm:$0xff]
        %v1848 = vld [vmem:[#allocation2 + $0x392] sm:$0xff]
        %v1849 = vld [vmem:[#allocation2 + $0x39a] sm:$0xff]
        %v1850 = vld [vmem:[#allocation2 + $0x3aa] sm:$0xff]
        %v1851 = vld [vmem:[#allocation2 + $0x3b2] sm:$0xff]
        %v1852 = vld [vmem:[#allocation2 + $0x3c2] sm:$0xff]
        %v1853 = vld [vmem:[#allocation2 + $0x3ca] sm:$0xff]
        %v1854 = vld [vmem:[#allocation2 + $0x3da] sm:$0xff]
        %v1855 = vld [vmem:[#allocation2 + $0x3e2] sm:$0xff]
        %v1856 = vld [vmem:[#allocation2 + $0x3f2] sm:$0xff]
        %v1857 = vld [vmem:[#allocation2 + $0x3fa] sm:$0xff]
        %v1858 = vld [vmem:[#allocation2 + $0x40a] sm:$0xff]
        %v1859 = vld [vmem:[#allocation2 + $0x412] sm:$0xff]
        %v1860 = vld [vmem:[#allocation2 + $0x422] sm:$0xff]
        %v1861 = vld [vmem:[#allocation2 + $0x42a] sm:$0xff]
        %v1862 = vld [vmem:[#allocation2 + $0x43a] sm:$0xff]
        %v1863 = vld [vmem:[#allocation2 + $0x442] sm:$0xff]
        %v1864 = vld [vmem:[#allocation2 + $0x452] sm:$0xff]
        %v1865 = vld [vmem:[#allocation2 + $0x45a] sm:$0xff]
        %v1866 = vld [vmem:[#allocation2 + $0x46a] sm:$0xff]
        %v1867 = vld [vmem:[#allocation2 + $0x472] sm:$0xff]
        %v1868 = vld [vmem:[#allocation2 + $0x482] sm:$0xff]
        %v1869 = vld [vmem:[#allocation2 + $0x48a] sm:$0xff]
        %v1870 = vld [vmem:[#allocation2 + $0x49a] sm:$0xff]
        %v1871 = vld [vmem:[#allocation2 + $0x4a2] sm:$0xff]
        %v1872 = vld [vmem:[#allocation2 + $0x4b2] sm:$0xff]
        %v1873 = vld [vmem:[#allocation2 + $0x4ba] sm:$0xff]
        %v1874 = vld [vmem:[#allocation2 + $0x4ca] sm:$0xff]
        %v1875 = vld [vmem:[#allocation2 + $0x4d2] sm:$0xff]
        %v1876 = vld [vmem:[%s1491] sm:$0xff]
        %v1877 = vld [vmem:[%s1491 + $0x8] sm:$0xff]
        %v1878 = vld [vmem:[%s1491 + $0x18] sm:$0xff]
        %v1879 = vld [vmem:[%s1491 + $0x20] sm:$0xff]
        %v1880 = vld [vmem:[%s1491 + $0x30] sm:$0xff]
        %v1881 = vld [vmem:[%s1491 + $0x38] sm:$0xff]
        %v1882 = vld [vmem:[%s1491 + $0x48] sm:$0xff]
        %v1883 = vld [vmem:[%s1491 + $0x50] sm:$0xff]
        %v1884 = vld [vmem:[%s1491 + $0x60] sm:$0xff]
        %v1885 = vld [vmem:[%s1491 + $0x68] sm:$0xff]
        %v1886 = vld [vmem:[%s1491 + $0x78] sm:$0xff]
        %v1887 = vld [vmem:[%s1491 + $0x80] sm:$0xff]
        %v1888 = vld [vmem:[%s1491 + $0x90] sm:$0xff]
        %v1889 = vld [vmem:[%s1491 + $0x98] sm:$0xff]
        %v1890 = vld [vmem:[%s1491 + $0xa8] sm:$0xff]
        %v1891 = vld [vmem:[%s1491 + $0xb0] sm:$0xff]
        %v1892 = vld [vmem:[%s1491 + $0xc0] sm:$0xff]
        %v1893 = vld [vmem:[%s1491 + $0xc8] sm:$0xff]
        %v1894 = vld [vmem:[%s1491 + $0xd8] sm:$0xff]
        %v1895 = vld [vmem:[%s1491 + $0xe0] sm:$0xff]
        %v1896 = vld [vmem:[%s1491 + $0xf0] sm:$0xff]
        %v1897 = vld [vmem:[%s1491 + $0xf8] sm:$0xff]
        %v1898 = vld [vmem:[%s1491 + $0x108] sm:$0xff]
        %v1899 = vld [vmem:[%s1491 + $0x110] sm:$0xff]
        %v1900 = vld [vmem:[%s1491 + $0x120] sm:$0xff]
        %v1901 = vld [vmem:[%s1491 + $0x128] sm:$0xff]
        %v1902 = vld [vmem:[%s1491 + $0x138] sm:$0xff]
        %v1903 = vld [vmem:[%s1491 + $0x140] sm:$0xff]
        %v1904 = vld [vmem:[%s1491 + $0x150] sm:$0xff]
        %v1905 = vld [vmem:[%s1491 + $0x158] sm:$0xff]
        %v1906 = vld [vmem:[%s1491 + $0x168] sm:$0xff]
        %v1907 = vld [vmem:[%s1491 + $0x170] sm:$0xff]
        %v1908 = vld [vmem:[%s1491 + $0x1b0] sm:$0xff]
        %v1909 = vld [vmem:[%s1491 + $0x1b8] sm:$0xff]
        %v1910 = vld [vmem:[%s1491 + $0x1c8] sm:$0xff]
        %v1911 = vld [vmem:[%s1491 + $0x1d0] sm:$0xff]
        %v1912 = vld [vmem:[%s1491 + $0x1e0] sm:$0xff]
        %v1913 = vld [vmem:[%s1491 + $0x1e8] sm:$0xff]
        %v1914 = vld [vmem:[%s1491 + $0x1f8] sm:$0xff]
        %v1915 = vld [vmem:[%s1491 + $0x200] sm:$0xff]
        %v1916 = vld [vmem:[%s1491 + $0x210] sm:$0xff]
        %v1917 = vld [vmem:[%s1491 + $0x218] sm:$0xff]
        %v1918 = vld [vmem:[%s1491 + $0x228] sm:$0xff]
        %v1919 = vld [vmem:[%s1491 + $0x230] sm:$0xff]
        %v1920 = vld [vmem:[%s1491 + $0x240] sm:$0xff]
        %v1921 = vld [vmem:[%s1491 + $0x248] sm:$0xff]
        %v1922 = vld [vmem:[%s1491 + $0x258] sm:$0xff]
        %v1923 = vld [vmem:[%s1491 + $0x260] sm:$0xff]
        %v1924 = vld [vmem:[%s1491 + $0x270] sm:$0xff]
        %v1925 = vld [vmem:[%s1491 + $0x278] sm:$0xff]
        %v1926 = vld [vmem:[%s1491 + $0x288] sm:$0xff]
        %v1927 = vld [vmem:[%s1491 + $0x290] sm:$0xff]
        %v1928 = vld [vmem:[%s1491 + $0x2a0] sm:$0xff]
        %v1929 = vld [vmem:[%s1491 + $0x2a8] sm:$0xff]
        %v1930 = vld [vmem:[%s1491 + $0x2b8] sm:$0xff]
        %v1931 = vld [vmem:[%s1491 + $0x2c0] sm:$0xff]
        %v1932 = vld [vmem:[%s1491 + $0x2d0] sm:$0xff]
        %v1933 = vld [vmem:[%s1491 + $0x2d8] sm:$0xff]
        %v1934 = vld [vmem:[%s1491 + $0x2e8] sm:$0xff]
        %v1935 = vld [vmem:[%s1491 + $0x2f0] sm:$0xff]
        %v1936 = vld [vmem:[%s1491 + $0x300] sm:$0xff]
        %v1937 = vld [vmem:[%s1491 + $0x308] sm:$0xff]
        %v1938 = vld [vmem:[%s1491 + $0x318] sm:$0xff]
        %v1939 = vld [vmem:[%s1491 + $0x320] sm:$0xff]
        %v1940 = vld [vmem:[%s1491 + $0x360] sm:$0xff]
        %v1941 = vld [vmem:[%s1491 + $0x368] sm:$0xff]
        %v1942 = vld [vmem:[%s1491 + $0x378] sm:$0xff]
        %v1943 = vld [vmem:[%s1491 + $0x380] sm:$0xff]
        %v1944 = vld [vmem:[%s1491 + $0x390] sm:$0xff]
        %v1945 = vld [vmem:[%s1491 + $0x398] sm:$0xff]
        %v1946 = vld [vmem:[%s1491 + $0x3a8] sm:$0xff]
        %v1947 = vld [vmem:[%s1491 + $0x3b0] sm:$0xff]
        %v1948 = vld [vmem:[%s1491 + $0x3c0] sm:$0xff]
        %v1949 = vld [vmem:[%s1491 + $0x3c8] sm:$0xff]
        %v1950 = vld [vmem:[%s1491 + $0x3d8] sm:$0xff]
        %v1951 = vld [vmem:[%s1491 + $0x3e0] sm:$0xff]
        %v1952 = vld [vmem:[%s1491 + $0x3f0] sm:$0xff]
        %v1953 = vld [vmem:[%s1491 + $0x3f8] sm:$0xff]
        %v1954 = vld [vmem:[%s1491 + $0x408] sm:$0xff]
        %v1955 = vld [vmem:[%s1491 + $0x410] sm:$0xff]
        %v1956 = vld [vmem:[%s1491 + $0x420] sm:$0xff]
        %v1957 = vld [vmem:[%s1491 + $0x428] sm:$0xff]
        %v1958 = vld [vmem:[%s1491 + $0x438] sm:$0xff]
        %v1959 = vld [vmem:[%s1491 + $0x440] sm:$0xff]
        %v1960 = vld [vmem:[%s1491 + $0x450] sm:$0xff]
        %v1961 = vld [vmem:[%s1491 + $0x458] sm:$0xff]
        %v1962 = vld [vmem:[%s1491 + $0x468] sm:$0xff]
        %v1963 = vld [vmem:[%s1491 + $0x470] sm:$0xff]
        %v1964 = vld [vmem:[%s1491 + $0x480] sm:$0xff]
        %v1965 = vld [vmem:[%s1491 + $0x488] sm:$0xff]
        %v1966 = vld [vmem:[%s1491 + $0x498] sm:$0xff]
        %v1967 = vld [vmem:[%s1491 + $0x4a0] sm:$0xff]
        %v1968 = vld [vmem:[%s1491 + $0x4b0] sm:$0xff]
        %v1969 = vld [vmem:[%s1491 + $0x4b8] sm:$0xff]
        %v1970 = vld [vmem:[%s1491 + $0x4c8] sm:$0xff]
        %v1971 = vld [vmem:[%s1491 + $0x4d0] sm:$0xff]
        %v1972 = vld [vmem:[%s1491 + $0x1] sm:$0xff]
        %v1973 = vld [vmem:[%s1491 + $0x9] sm:$0xff]
        %v1974 = vld [vmem:[%s1491 + $0x19] sm:$0xff]
        %v1975 = vld [vmem:[%s1491 + $0x21] sm:$0xff]
        %v1976 = vld [vmem:[%s1491 + $0x31] sm:$0xff]
        %v1977 = vld [vmem:[%s1491 + $0x39] sm:$0xff]
        %v1978 = vld [vmem:[%s1491 + $0x49] sm:$0xff]
        %v1979 = vld [vmem:[%s1491 + $0x51] sm:$0xff]
        %v1980 = vld [vmem:[%s1491 + $0x61] sm:$0xff]
        %v1981 = vld [vmem:[%s1491 + $0x69] sm:$0xff]
        %v1982 = vld [vmem:[%s1491 + $0x79] sm:$0xff]
        %v1983 = vld [vmem:[%s1491 + $0x81] sm:$0xff]
        %v1984 = vld [vmem:[%s1491 + $0x91] sm:$0xff]
        %v1985 = vld [vmem:[%s1491 + $0x99] sm:$0xff]
        %v1986 = vld [vmem:[%s1491 + $0xa9] sm:$0xff]
        %v1987 = vld [vmem:[%s1491 + $0xb1] sm:$0xff]
        %v1988 = vld [vmem:[%s1491 + $0xc1] sm:$0xff]
        %v1989 = vld [vmem:[%s1491 + $0xc9] sm:$0xff]
        %v1990 = vld [vmem:[%s1491 + $0xd9] sm:$0xff]
        %v1991 = vld [vmem:[%s1491 + $0xe1] sm:$0xff]
        %v1992 = vld [vmem:[%s1491 + $0xf1] sm:$0xff]
        %v1993 = vld [vmem:[%s1491 + $0xf9] sm:$0xff]
        %v1994 = vld [vmem:[%s1491 + $0x109] sm:$0xff]
        %v1995 = vld [vmem:[%s1491 + $0x111] sm:$0xff]
        %v1996 = vld [vmem:[%s1491 + $0x121] sm:$0xff]
        %v1997 = vld [vmem:[%s1491 + $0x129] sm:$0xff]
        %v1998 = vld [vmem:[%s1491 + $0x139] sm:$0xff]
        %v1999 = vld [vmem:[%s1491 + $0x141] sm:$0xff]
        %v2000 = vld [vmem:[%s1491 + $0x151] sm:$0xff]
        %v2001 = vld [vmem:[%s1491 + $0x159] sm:$0xff]
        %v2002 = vld [vmem:[%s1491 + $0x169] sm:$0xff]
        %v2003 = vld [vmem:[%s1491 + $0x171] sm:$0xff]
        %v2004 = vld [vmem:[%s1491 + $0x1b1] sm:$0xff]
        %v2005 = vld [vmem:[%s1491 + $0x1b9] sm:$0xff]
        %v2006 = vld [vmem:[%s1491 + $0x1c9] sm:$0xff]
        %v2007 = vld [vmem:[%s1491 + $0x1d1] sm:$0xff]
        %v2008 = vld [vmem:[%s1491 + $0x1e1] sm:$0xff]
        %v2009 = vld [vmem:[%s1491 + $0x1e9] sm:$0xff]
        %v2010 = vld [vmem:[%s1491 + $0x1f9] sm:$0xff]
        %v2011 = vld [vmem:[%s1491 + $0x201] sm:$0xff]
        %v2012 = vld [vmem:[%s1491 + $0x211] sm:$0xff]
        %v2013 = vld [vmem:[%s1491 + $0x219] sm:$0xff]
        %v2014 = vld [vmem:[%s1491 + $0x229] sm:$0xff]
        %v2015 = vld [vmem:[%s1491 + $0x231] sm:$0xff]
        %v2016 = vld [vmem:[%s1491 + $0x241] sm:$0xff]
        %v2017 = vld [vmem:[%s1491 + $0x249] sm:$0xff]
        %v2018 = vld [vmem:[%s1491 + $0x259] sm:$0xff]
        %v2019 = vld [vmem:[%s1491 + $0x261] sm:$0xff]
        %v2020 = vld [vmem:[%s1491 + $0x271] sm:$0xff]
        %v2021 = vld [vmem:[%s1491 + $0x279] sm:$0xff]
        %v2022 = vld [vmem:[%s1491 + $0x289] sm:$0xff]
        %v2023 = vld [vmem:[%s1491 + $0x291] sm:$0xff]
        %v2024 = vld [vmem:[%s1491 + $0x2a1] sm:$0xff]
        %v2025 = vld [vmem:[%s1491 + $0x2a9] sm:$0xff]
        %v2026 = vld [vmem:[%s1491 + $0x2b9] sm:$0xff]
        %v2027 = vld [vmem:[%s1491 + $0x2c1] sm:$0xff]
        %v2028 = vld [vmem:[%s1491 + $0x2d1] sm:$0xff]
        %v2029 = vld [vmem:[%s1491 + $0x2d9] sm:$0xff]
        %v2030 = vld [vmem:[%s1491 + $0x2e9] sm:$0xff]
        %v2031 = vld [vmem:[%s1491 + $0x2f1] sm:$0xff]
        %v2032 = vld [vmem:[%s1491 + $0x301] sm:$0xff]
        %v2033 = vld [vmem:[%s1491 + $0x309] sm:$0xff]
        %v2034 = vld [vmem:[%s1491 + $0x319] sm:$0xff]
        %v2035 = vld [vmem:[%s1491 + $0x321] sm:$0xff]
        %v2036 = vld [vmem:[%s1491 + $0x361] sm:$0xff]
        %v2037 = vld [vmem:[%s1491 + $0x369] sm:$0xff]
        %v2038 = vld [vmem:[%s1491 + $0x379] sm:$0xff]
        %v2039 = vld [vmem:[%s1491 + $0x381] sm:$0xff]
        %v2040 = vld [vmem:[%s1491 + $0x391] sm:$0xff]
        %v2041 = vld [vmem:[%s1491 + $0x399] sm:$0xff]
        %v2042 = vld [vmem:[%s1491 + $0x3a9] sm:$0xff]
        %v2043 = vld [vmem:[%s1491 + $0x3b1] sm:$0xff]
        %v2044 = vld [vmem:[%s1491 + $0x3c1] sm:$0xff]
        %v2045 = vld [vmem:[%s1491 + $0x3c9] sm:$0xff]
        %v2046 = vld [vmem:[%s1491 + $0x3d9] sm:$0xff]
        %v2047 = vld [vmem:[%s1491 + $0x3e1] sm:$0xff]
        %v2048 = vld [vmem:[%s1491 + $0x3f1] sm:$0xff]
        %v2049 = vld [vmem:[%s1491 + $0x3f9] sm:$0xff]
        %v2050 = vld [vmem:[%s1491 + $0x409] sm:$0xff]
        %v2051 = vld [vmem:[%s1491 + $0x411] sm:$0xff]
        %v2052 = vld [vmem:[%s1491 + $0x421] sm:$0xff]
        %v2053 = vld [vmem:[%s1491 + $0x429] sm:$0xff]
        %v2054 = vld [vmem:[%s1491 + $0x439] sm:$0xff]
        %v2055 = vld [vmem:[%s1491 + $0x441] sm:$0xff]
        %v2056 = vld [vmem:[%s1491 + $0x451] sm:$0xff]
        %v2057 = vld [vmem:[%s1491 + $0x459] sm:$0xff]
        %v2058 = vld [vmem:[%s1491 + $0x469] sm:$0xff]
        %v2059 = vld [vmem:[%s1491 + $0x471] sm:$0xff]
        %v2060 = vld [vmem:[%s1491 + $0x481] sm:$0xff]
        %v2061 = vld [vmem:[%s1491 + $0x489] sm:$0xff]
        %v2062 = vld [vmem:[%s1491 + $0x499] sm:$0xff]
        %v2063 = vld [vmem:[%s1491 + $0x4a1] sm:$0xff]
        %v2064 = vld [vmem:[%s1491 + $0x4b1] sm:$0xff]
        %v2065 = vld [vmem:[%s1491 + $0x4b9] sm:$0xff]
        %v2066 = vld [vmem:[%s1491 + $0x4c9] sm:$0xff]
        %v2067 = vld [vmem:[%s1491 + $0x4d1] sm:$0xff]
        %v2068 = vld [vmem:[%s1491 + $0x2] sm:$0xff]
        %v2069 = vld [vmem:[%s1491 + $0xa] sm:$0xff]
        %v2070 = vld [vmem:[%s1491 + $0x1a] sm:$0xff]
        %v2071 = vld [vmem:[%s1491 + $0x22] sm:$0xff]
        %v2072 = vld [vmem:[%s1491 + $0x32] sm:$0xff]
        %v2073 = vld [vmem:[%s1491 + $0x3a] sm:$0xff]
        %v2074 = vld [vmem:[%s1491 + $0x4a] sm:$0xff]
        %v2075 = vld [vmem:[%s1491 + $0x52] sm:$0xff]
        %v2076 = vld [vmem:[%s1491 + $0x62] sm:$0xff]
        %v2077 = vld [vmem:[%s1491 + $0x6a] sm:$0xff]
        %v2078 = vld [vmem:[%s1491 + $0x7a] sm:$0xff]
        %v2079 = vld [vmem:[%s1491 + $0x82] sm:$0xff]
        %v2080 = vld [vmem:[%s1491 + $0x92] sm:$0xff]
        %v2081 = vld [vmem:[%s1491 + $0x9a] sm:$0xff]
        %v2082 = vld [vmem:[%s1491 + $0xaa] sm:$0xff]
        %v2083 = vld [vmem:[%s1491 + $0xb2] sm:$0xff]
        %v2084 = vld [vmem:[%s1491 + $0xc2] sm:$0xff]
        %v2085 = vld [vmem:[%s1491 + $0xca] sm:$0xff]
        %v2086 = vld [vmem:[%s1491 + $0xda] sm:$0xff]
        %v2087 = vld [vmem:[%s1491 + $0xe2] sm:$0xff]
        %v2088 = vld [vmem:[%s1491 + $0xf2] sm:$0xff]
        %v2089 = vld [vmem:[%s1491 + $0xfa] sm:$0xff]
        %v2090 = vld [vmem:[%s1491 + $0x10a] sm:$0xff]
        %v2091 = vld [vmem:[%s1491 + $0x112] sm:$0xff]
        %v2092 = vld [vmem:[%s1491 + $0x122] sm:$0xff]
        %v2093 = vld [vmem:[%s1491 + $0x12a] sm:$0xff]
        %v2094 = vld [vmem:[%s1491 + $0x13a] sm:$0xff]
        %v2095 = vld [vmem:[%s1491 + $0x142] sm:$0xff]
        %v2096 = vld [vmem:[%s1491 + $0x152] sm:$0xff]
        %v2097 = vld [vmem:[%s1491 + $0x15a] sm:$0xff]
        %v2098 = vld [vmem:[%s1491 + $0x16a] sm:$0xff]
        %v2099 = vld [vmem:[%s1491 + $0x172] sm:$0xff]
        %v2100 = vld [vmem:[%s1491 + $0x1b2] sm:$0xff]
        %v2101 = vld [vmem:[%s1491 + $0x1ba] sm:$0xff]
        %v2102 = vld [vmem:[%s1491 + $0x1ca] sm:$0xff]
        %v2103 = vld [vmem:[%s1491 + $0x1d2] sm:$0xff]
        %v2104 = vld [vmem:[%s1491 + $0x1e2] sm:$0xff]
        %v2105 = vld [vmem:[%s1491 + $0x1ea] sm:$0xff]
        %v2106 = vld [vmem:[%s1491 + $0x1fa] sm:$0xff]
        %v2107 = vld [vmem:[%s1491 + $0x202] sm:$0xff]
        %v2108 = vld [vmem:[%s1491 + $0x212] sm:$0xff]
        %v2109 = vld [vmem:[%s1491 + $0x21a] sm:$0xff]
        %v2110 = vld [vmem:[%s1491 + $0x22a] sm:$0xff]
        %v2111 = vld [vmem:[%s1491 + $0x232] sm:$0xff]
        %v2112 = vld [vmem:[%s1491 + $0x242] sm:$0xff]
        %v2113 = vld [vmem:[%s1491 + $0x24a] sm:$0xff]
        %v2114 = vld [vmem:[%s1491 + $0x25a] sm:$0xff]
        %v2115 = vld [vmem:[%s1491 + $0x262] sm:$0xff]
        %v2116 = vld [vmem:[%s1491 + $0x272] sm:$0xff]
        %v2117 = vld [vmem:[%s1491 + $0x27a] sm:$0xff]
        %v2118 = vld [vmem:[%s1491 + $0x28a] sm:$0xff]
        %v2119 = vld [vmem:[%s1491 + $0x292] sm:$0xff]
        %v2120 = vld [vmem:[%s1491 + $0x2a2] sm:$0xff]
        %v2121 = vld [vmem:[%s1491 + $0x2aa] sm:$0xff]
        %v2122 = vld [vmem:[%s1491 + $0x2ba] sm:$0xff]
        %v2123 = vld [vmem:[%s1491 + $0x2c2] sm:$0xff]
        %v2124 = vld [vmem:[%s1491 + $0x2d2] sm:$0xff]
        %v2125 = vld [vmem:[%s1491 + $0x2da] sm:$0xff]
        %v2126 = vld [vmem:[%s1491 + $0x2ea] sm:$0xff]
        %v2127 = vld [vmem:[%s1491 + $0x2f2] sm:$0xff]
        %v2128 = vld [vmem:[%s1491 + $0x302] sm:$0xff]
        %v2129 = vld [vmem:[%s1491 + $0x30a] sm:$0xff]
        %v2130 = vld [vmem:[%s1491 + $0x31a] sm:$0xff]
        %v2131 = vld [vmem:[%s1491 + $0x322] sm:$0xff]
        %v2132 = vld [vmem:[%s1491 + $0x362] sm:$0xff]
        %v2133 = vld [vmem:[%s1491 + $0x36a] sm:$0xff]
        %v2134 = vld [vmem:[%s1491 + $0x37a] sm:$0xff]
        %v2135 = vld [vmem:[%s1491 + $0x382] sm:$0xff]
        %v2136 = vld [vmem:[%s1491 + $0x392] sm:$0xff]
        %v2137 = vld [vmem:[%s1491 + $0x39a] sm:$0xff]
        %v2138 = vld [vmem:[%s1491 + $0x3aa] sm:$0xff]
        %v2139 = vld [vmem:[%s1491 + $0x3b2] sm:$0xff]
        %v2140 = vld [vmem:[%s1491 + $0x3c2] sm:$0xff]
        %v2141 = vld [vmem:[%s1491 + $0x3ca] sm:$0xff]
        %v2142 = vld [vmem:[%s1491 + $0x3da] sm:$0xff]
        %v2143 = vld [vmem:[%s1491 + $0x3e2] sm:$0xff]
        %v2144 = vld [vmem:[%s1491 + $0x3f2] sm:$0xff]
        %v2145 = vld [vmem:[%s1491 + $0x3fa] sm:$0xff]
        %v2146 = vld [vmem:[%s1491 + $0x40a] sm:$0xff]
        %v2147 = vld [vmem:[%s1491 + $0x412] sm:$0xff]
        %v2148 = vld [vmem:[%s1491 + $0x422] sm:$0xff]
        %v2149 = vld [vmem:[%s1491 + $0x42a] sm:$0xff]
        %v2150 = vld [vmem:[%s1491 + $0x43a] sm:$0xff]
        %v2151 = vld [vmem:[%s1491 + $0x442] sm:$0xff]
        %v2152 = vld [vmem:[%s1491 + $0x452] sm:$0xff]
        %v2153 = vld [vmem:[%s1491 + $0x45a] sm:$0xff]
        %v2154 = vld [vmem:[%s1491 + $0x46a] sm:$0xff]
        %v2155 = vld [vmem:[%s1491 + $0x472] sm:$0xff]
        %v2156 = vld [vmem:[%s1491 + $0x482] sm:$0xff]
        %v2157 = vld [vmem:[%s1491 + $0x48a] sm:$0xff]
        %v2158 = vld [vmem:[%s1491 + $0x49a] sm:$0xff]
        %v2159 = vld [vmem:[%s1491 + $0x4a2] sm:$0xff]
        %v2160 = vld [vmem:[%s1491 + $0x4b2] sm:$0xff]
        %v2161 = vld [vmem:[%s1491 + $0x4ba] sm:$0xff]
        %v2162 = vld [vmem:[%s1491 + $0x4ca] sm:$0xff]
        %v2163 = vld [vmem:[%s1491 + $0x4d2] sm:$0xff]
        %s2164 = scalar_lea.vmem [#allocation2], 48
        %v2165 = vld [vmem:[%s2164] sm:$0xff]
        %v2166 = vld [vmem:[%s2164 + $0x8] sm:$0xff]
        %v2167 = vld [vmem:[%s2164 + $0x18] sm:$0xff]
        %v2168 = vld [vmem:[%s2164 + $0x20] sm:$0xff]
        %v2169 = vld [vmem:[%s2164 + $0x30] sm:$0xff]
        %v2170 = vld [vmem:[%s2164 + $0x38] sm:$0xff]
        %v2171 = vld [vmem:[%s2164 + $0x48] sm:$0xff]
        %v2172 = vld [vmem:[%s2164 + $0x50] sm:$0xff]
        %v2173 = vld [vmem:[%s2164 + $0x60] sm:$0xff]
        %v2174 = vld [vmem:[%s2164 + $0x68] sm:$0xff]
        %v2175 = vld [vmem:[%s2164 + $0x78] sm:$0xff]
        %v2176 = vld [vmem:[%s2164 + $0x80] sm:$0xff]
        %v2177 = vld [vmem:[%s2164 + $0x90] sm:$0xff]
        %v2178 = vld [vmem:[%s2164 + $0x98] sm:$0xff]
        %v2179 = vld [vmem:[%s2164 + $0xa8] sm:$0xff]
        %v2180 = vld [vmem:[%s2164 + $0xb0] sm:$0xff]
        %v2181 = vld [vmem:[%s2164 + $0xc0] sm:$0xff]
        %v2182 = vld [vmem:[%s2164 + $0xc8] sm:$0xff]
        %v2183 = vld [vmem:[%s2164 + $0xd8] sm:$0xff]
        %v2184 = vld [vmem:[%s2164 + $0xe0] sm:$0xff]
        %v2185 = vld [vmem:[%s2164 + $0xf0] sm:$0xff]
        %v2186 = vld [vmem:[%s2164 + $0xf8] sm:$0xff]
        %v2187 = vld [vmem:[%s2164 + $0x108] sm:$0xff]
        %v2188 = vld [vmem:[%s2164 + $0x110] sm:$0xff]
        %v2189 = vld [vmem:[%s2164 + $0x120] sm:$0xff]
        %v2190 = vld [vmem:[%s2164 + $0x128] sm:$0xff]
        %v2191 = vld [vmem:[%s2164 + $0x138] sm:$0xff]
        %v2192 = vld [vmem:[%s2164 + $0x140] sm:$0xff]
        %v2193 = vld [vmem:[%s2164 + $0x150] sm:$0xff]
        %v2194 = vld [vmem:[%s2164 + $0x158] sm:$0xff]
        %v2195 = vld [vmem:[%s2164 + $0x168] sm:$0xff]
        %v2196 = vld [vmem:[%s2164 + $0x170] sm:$0xff]
        %v2197 = vld [vmem:[%s2164 + $0x1b0] sm:$0xff]
        %v2198 = vld [vmem:[%s2164 + $0x1b8] sm:$0xff]
        %v2199 = vld [vmem:[%s2164 + $0x1c8] sm:$0xff]
        %v2200 = vld [vmem:[%s2164 + $0x1d0] sm:$0xff]
        %v2201 = vld [vmem:[%s2164 + $0x1e0] sm:$0xff]
        %v2202 = vld [vmem:[%s2164 + $0x1e8] sm:$0xff]
        %v2203 = vld [vmem:[%s2164 + $0x1f8] sm:$0xff]
        %v2204 = vld [vmem:[%s2164 + $0x200] sm:$0xff]
        %v2205 = vld [vmem:[%s2164 + $0x210] sm:$0xff]
        %v2206 = vld [vmem:[%s2164 + $0x218] sm:$0xff]
        %v2207 = vld [vmem:[%s2164 + $0x228] sm:$0xff]
        %v2208 = vld [vmem:[%s2164 + $0x230] sm:$0xff]
        %v2209 = vld [vmem:[%s2164 + $0x240] sm:$0xff]
        %v2210 = vld [vmem:[%s2164 + $0x248] sm:$0xff]
        %v2211 = vld [vmem:[%s2164 + $0x258] sm:$0xff]
        %v2212 = vld [vmem:[%s2164 + $0x260] sm:$0xff]
        %v2213 = vld [vmem:[%s2164 + $0x270] sm:$0xff]
        %v2214 = vld [vmem:[%s2164 + $0x278] sm:$0xff]
        %v2215 = vld [vmem:[%s2164 + $0x288] sm:$0xff]
        %v2216 = vld [vmem:[%s2164 + $0x290] sm:$0xff]
        %v2217 = vld [vmem:[%s2164 + $0x2a0] sm:$0xff]
        %v2218 = vld [vmem:[%s2164 + $0x2a8] sm:$0xff]
        %v2219 = vld [vmem:[%s2164 + $0x2b8] sm:$0xff]
        %v2220 = vld [vmem:[%s2164 + $0x2c0] sm:$0xff]
        %v2221 = vld [vmem:[%s2164 + $0x2d0] sm:$0xff]
        %v2222 = vld [vmem:[%s2164 + $0x2d8] sm:$0xff]
        %v2223 = vld [vmem:[%s2164 + $0x2e8] sm:$0xff]
        %v2224 = vld [vmem:[%s2164 + $0x2f0] sm:$0xff]
        %v2225 = vld [vmem:[%s2164 + $0x300] sm:$0xff]
        %v2226 = vld [vmem:[%s2164 + $0x308] sm:$0xff]
        %v2227 = vld [vmem:[%s2164 + $0x318] sm:$0xff]
        %v2228 = vld [vmem:[%s2164 + $0x320] sm:$0xff]
        %v2229 = vld [vmem:[%s2164 + $0x360] sm:$0xff]
        %v2230 = vld [vmem:[%s2164 + $0x368] sm:$0xff]
        %v2231 = vld [vmem:[%s2164 + $0x378] sm:$0xff]
        %v2232 = vld [vmem:[%s2164 + $0x380] sm:$0xff]
        %v2233 = vld [vmem:[%s2164 + $0x390] sm:$0xff]
        %v2234 = vld [vmem:[%s2164 + $0x398] sm:$0xff]
        %v2235 = vld [vmem:[%s2164 + $0x3a8] sm:$0xff]
        %v2236 = vld [vmem:[%s2164 + $0x3b0] sm:$0xff]
        %v2237 = vld [vmem:[%s2164 + $0x3c0] sm:$0xff]
        %v2238 = vld [vmem:[%s2164 + $0x3c8] sm:$0xff]
        %v2239 = vld [vmem:[%s2164 + $0x3d8] sm:$0xff]
        %v2240 = vld [vmem:[%s2164 + $0x3e0] sm:$0xff]
        %v2241 = vld [vmem:[%s2164 + $0x3f0] sm:$0xff]
        %v2242 = vld [vmem:[%s2164 + $0x3f8] sm:$0xff]
        %v2243 = vld [vmem:[%s2164 + $0x408] sm:$0xff]
        %v2244 = vld [vmem:[%s2164 + $0x410] sm:$0xff]
        %v2245 = vld [vmem:[%s2164 + $0x420] sm:$0xff]
        %v2246 = vld [vmem:[%s2164 + $0x428] sm:$0xff]
        %v2247 = vld [vmem:[%s2164 + $0x438] sm:$0xff]
        %v2248 = vld [vmem:[%s2164 + $0x440] sm:$0xff]
        %v2249 = vld [vmem:[%s2164 + $0x450] sm:$0xff]
        %v2250 = vld [vmem:[%s2164 + $0x458] sm:$0xff]
        %v2251 = vld [vmem:[%s2164 + $0x468] sm:$0xff]
        %v2252 = vld [vmem:[%s2164 + $0x470] sm:$0xff]
        %v2253 = vld [vmem:[%s2164 + $0x480] sm:$0xff]
        %v2254 = vld [vmem:[%s2164 + $0x488] sm:$0xff]
        %v2255 = vld [vmem:[%s2164 + $0x498] sm:$0xff]
        %v2256 = vld [vmem:[%s2164 + $0x4a0] sm:$0xff]
        %v2257 = vld [vmem:[%s2164 + $0x4b0] sm:$0xff]
        %v2258 = vld [vmem:[%s2164 + $0x4b8] sm:$0xff]
        %v2259 = vld [vmem:[%s2164 + $0x4c8] sm:$0xff]
        %v2260 = vld [vmem:[%s2164 + $0x4d0] sm:$0xff]
        %v2261 = vld [vmem:[%s2164 + $0x1] sm:$0xff]
        %v2262 = vld [vmem:[%s2164 + $0x9] sm:$0xff]
        %v2263 = vld [vmem:[%s2164 + $0x19] sm:$0xff]
        %v2264 = vld [vmem:[%s2164 + $0x21] sm:$0xff]
        %v2265 = vld [vmem:[%s2164 + $0x31] sm:$0xff]
        %v2266 = vld [vmem:[%s2164 + $0x39] sm:$0xff]
        %v2267 = vld [vmem:[%s2164 + $0x49] sm:$0xff]
        %v2268 = vld [vmem:[%s2164 + $0x51] sm:$0xff]
        %v2269 = vld [vmem:[%s2164 + $0x61] sm:$0xff]
        %v2270 = vld [vmem:[%s2164 + $0x69] sm:$0xff]
        %v2271 = vld [vmem:[%s2164 + $0x79] sm:$0xff]
        %v2272 = vld [vmem:[%s2164 + $0x81] sm:$0xff]
        %v2273 = vld [vmem:[%s2164 + $0x91] sm:$0xff]
        %v2274 = vld [vmem:[%s2164 + $0x99] sm:$0xff]
        %v2275 = vld [vmem:[%s2164 + $0xa9] sm:$0xff]
        %v2276 = vld [vmem:[%s2164 + $0xb1] sm:$0xff]
        %v2277 = vld [vmem:[%s2164 + $0xc1] sm:$0xff]
        %v2278 = vld [vmem:[%s2164 + $0xc9] sm:$0xff]
        %v2279 = vld [vmem:[%s2164 + $0xd9] sm:$0xff]
        %v2280 = vld [vmem:[%s2164 + $0xe1] sm:$0xff]
        %v2281 = vld [vmem:[%s2164 + $0xf1] sm:$0xff]
        %v2282 = vld [vmem:[%s2164 + $0xf9] sm:$0xff]
        %v2283 = vld [vmem:[%s2164 + $0x109] sm:$0xff]
        %v2284 = vld [vmem:[%s2164 + $0x111] sm:$0xff]
        %v2285 = vld [vmem:[%s2164 + $0x121] sm:$0xff]
        %v2286 = vld [vmem:[%s2164 + $0x129] sm:$0xff]
        %v2287 = vld [vmem:[%s2164 + $0x139] sm:$0xff]
        %v2288 = vld [vmem:[%s2164 + $0x141] sm:$0xff]
        %v2289 = vld [vmem:[%s2164 + $0x151] sm:$0xff]
        %v2290 = vld [vmem:[%s2164 + $0x159] sm:$0xff]
        %v2291 = vld [vmem:[%s2164 + $0x169] sm:$0xff]
        %v2292 = vld [vmem:[%s2164 + $0x171] sm:$0xff]
        %v2293 = vld [vmem:[%s2164 + $0x1b1] sm:$0xff]
        %v2294 = vld [vmem:[%s2164 + $0x1b9] sm:$0xff]
        %v2295 = vld [vmem:[%s2164 + $0x1c9] sm:$0xff]
        %v2296 = vld [vmem:[%s2164 + $0x1d1] sm:$0xff]
        %v2297 = vld [vmem:[%s2164 + $0x1e1] sm:$0xff]
        %v2298 = vld [vmem:[%s2164 + $0x1e9] sm:$0xff]
        %v2299 = vld [vmem:[%s2164 + $0x1f9] sm:$0xff]
        %v2300 = vld [vmem:[%s2164 + $0x201] sm:$0xff]
        %v2301 = vld [vmem:[%s2164 + $0x211] sm:$0xff]
        %v2302 = vld [vmem:[%s2164 + $0x219] sm:$0xff]
        %v2303 = vld [vmem:[%s2164 + $0x229] sm:$0xff]
        %v2304 = vld [vmem:[%s2164 + $0x231] sm:$0xff]
        %v2305 = vld [vmem:[%s2164 + $0x241] sm:$0xff]
        %v2306 = vld [vmem:[%s2164 + $0x249] sm:$0xff]
        %v2307 = vld [vmem:[%s2164 + $0x259] sm:$0xff]
        %v2308 = vld [vmem:[%s2164 + $0x261] sm:$0xff]
        %v2309 = vld [vmem:[%s2164 + $0x271] sm:$0xff]
        %v2310 = vld [vmem:[%s2164 + $0x279] sm:$0xff]
        %v2311 = vld [vmem:[%s2164 + $0x289] sm:$0xff]
        %v2312 = vld [vmem:[%s2164 + $0x291] sm:$0xff]
        %v2313 = vld [vmem:[%s2164 + $0x2a1] sm:$0xff]
        %v2314 = vld [vmem:[%s2164 + $0x2a9] sm:$0xff]
        %v2315 = vld [vmem:[%s2164 + $0x2b9] sm:$0xff]
        %v2316 = vld [vmem:[%s2164 + $0x2c1] sm:$0xff]
        %v2317 = vld [vmem:[%s2164 + $0x2d1] sm:$0xff]
        %v2318 = vld [vmem:[%s2164 + $0x2d9] sm:$0xff]
        %v2319 = vld [vmem:[%s2164 + $0x2e9] sm:$0xff]
        %v2320 = vld [vmem:[%s2164 + $0x2f1] sm:$0xff]
        %v2321 = vld [vmem:[%s2164 + $0x301] sm:$0xff]
        %v2322 = vld [vmem:[%s2164 + $0x309] sm:$0xff]
        %v2323 = vld [vmem:[%s2164 + $0x319] sm:$0xff]
        %v2324 = vld [vmem:[%s2164 + $0x321] sm:$0xff]
        %v2325 = vld [vmem:[%s2164 + $0x361] sm:$0xff]
        %v2326 = vld [vmem:[%s2164 + $0x369] sm:$0xff]
        %v2327 = vld [vmem:[%s2164 + $0x379] sm:$0xff]
        %v2328 = vld [vmem:[%s2164 + $0x381] sm:$0xff]
        %v2329 = vld [vmem:[%s2164 + $0x391] sm:$0xff]
        %v2330 = vld [vmem:[%s2164 + $0x399] sm:$0xff]
        %v2331 = vld [vmem:[%s2164 + $0x3a9] sm:$0xff]
        %v2332 = vld [vmem:[%s2164 + $0x3b1] sm:$0xff]
        %v2333 = vld [vmem:[%s2164 + $0x3c1] sm:$0xff]
        %v2334 = vld [vmem:[%s2164 + $0x3c9] sm:$0xff]
        %v2335 = vld [vmem:[%s2164 + $0x3d9] sm:$0xff]
        %v2336 = vld [vmem:[%s2164 + $0x3e1] sm:$0xff]
        %v2337 = vld [vmem:[%s2164 + $0x3f1] sm:$0xff]
        %v2338 = vld [vmem:[%s2164 + $0x3f9] sm:$0xff]
        %v2339 = vld [vmem:[%s2164 + $0x409] sm:$0xff]
        %v2340 = vld [vmem:[%s2164 + $0x411] sm:$0xff]
        %v2341 = vld [vmem:[%s2164 + $0x421] sm:$0xff]
        %v2342 = vld [vmem:[%s2164 + $0x429] sm:$0xff]
        %v2343 = vld [vmem:[%s2164 + $0x439] sm:$0xff]
        %v2344 = vld [vmem:[%s2164 + $0x441] sm:$0xff]
        %v2345 = vld [vmem:[%s2164 + $0x451] sm:$0xff]
        %v2346 = vld [vmem:[%s2164 + $0x459] sm:$0xff]
        %v2347 = vld [vmem:[%s2164 + $0x469] sm:$0xff]
        %v2348 = vld [vmem:[%s2164 + $0x471] sm:$0xff]
        %v2349 = vld [vmem:[%s2164 + $0x481] sm:$0xff]
        %v2350 = vld [vmem:[%s2164 + $0x489] sm:$0xff]
        %v2351 = vld [vmem:[%s2164 + $0x499] sm:$0xff]
        %v2352 = vld [vmem:[%s2164 + $0x4a1] sm:$0xff]
        %v2353 = vld [vmem:[%s2164 + $0x4b1] sm:$0xff]
        %v2354 = vld [vmem:[%s2164 + $0x4b9] sm:$0xff]
        %v2355 = vld [vmem:[%s2164 + $0x4c9] sm:$0xff]
        %v2356 = vld [vmem:[%s2164 + $0x4d1] sm:$0xff]
        %v2357 = vld [vmem:[%s2164 + $0x2] sm:$0xff]
        %v2358 = vld [vmem:[%s2164 + $0xa] sm:$0xff]
        %v2359 = vld [vmem:[%s2164 + $0x1a] sm:$0xff]
        %v2360 = vld [vmem:[%s2164 + $0x22] sm:$0xff]
        %v2361 = vld [vmem:[%s2164 + $0x32] sm:$0xff]
        %v2362 = vld [vmem:[%s2164 + $0x3a] sm:$0xff]
        %v2363 = vld [vmem:[%s2164 + $0x4a] sm:$0xff]
        %v2364 = vld [vmem:[%s2164 + $0x52] sm:$0xff]
        %v2365 = vld [vmem:[%s2164 + $0x62] sm:$0xff]
        %v2366 = vld [vmem:[%s2164 + $0x6a] sm:$0xff]
        %v2367 = vld [vmem:[%s2164 + $0x7a] sm:$0xff]
        %v2368 = vld [vmem:[%s2164 + $0x82] sm:$0xff]
        %v2369 = vld [vmem:[%s2164 + $0x92] sm:$0xff]
        %v2370 = vld [vmem:[%s2164 + $0x9a] sm:$0xff]
        %v2371 = vld [vmem:[%s2164 + $0xaa] sm:$0xff]
        %v2372 = vld [vmem:[%s2164 + $0xb2] sm:$0xff]
        %v2373 = vld [vmem:[%s2164 + $0xc2] sm:$0xff]
        %v2374 = vld [vmem:[%s2164 + $0xca] sm:$0xff]
        %v2375 = vld [vmem:[%s2164 + $0xda] sm:$0xff]
        %v2376 = vld [vmem:[%s2164 + $0xe2] sm:$0xff]
        %v2377 = vld [vmem:[%s2164 + $0xf2] sm:$0xff]
        %v2378 = vld [vmem:[%s2164 + $0xfa] sm:$0xff]
        %v2379 = vld [vmem:[%s2164 + $0x10a] sm:$0xff]
        %v2380 = vld [vmem:[%s2164 + $0x112] sm:$0xff]
        %v2381 = vld [vmem:[%s2164 + $0x122] sm:$0xff]
        %v2382 = vld [vmem:[%s2164 + $0x12a] sm:$0xff]
        %v2383 = vld [vmem:[%s2164 + $0x13a] sm:$0xff]
        %v2384 = vld [vmem:[%s2164 + $0x142] sm:$0xff]
        %v2385 = vld [vmem:[%s2164 + $0x152] sm:$0xff]
        %v2386 = vld [vmem:[%s2164 + $0x15a] sm:$0xff]
        %v2387 = vld [vmem:[%s2164 + $0x16a] sm:$0xff]
        %v2388 = vld [vmem:[%s2164 + $0x172] sm:$0xff]
        %v2389 = vld [vmem:[%s2164 + $0x1b2] sm:$0xff]
        %v2390 = vld [vmem:[%s2164 + $0x1ba] sm:$0xff]
        %v2391 = vld [vmem:[%s2164 + $0x1ca] sm:$0xff]
        %v2392 = vld [vmem:[%s2164 + $0x1d2] sm:$0xff]
        %v2393 = vld [vmem:[%s2164 + $0x1e2] sm:$0xff]
        %v2394 = vld [vmem:[%s2164 + $0x1ea] sm:$0xff]
        %v2395 = vld [vmem:[%s2164 + $0x1fa] sm:$0xff]
        %v2396 = vld [vmem:[%s2164 + $0x202] sm:$0xff]
        %v2397 = vld [vmem:[%s2164 + $0x212] sm:$0xff]
        %v2398 = vld [vmem:[%s2164 + $0x21a] sm:$0xff]
        %v2399 = vld [vmem:[%s2164 + $0x22a] sm:$0xff]
        %v2400 = vld [vmem:[%s2164 + $0x232] sm:$0xff]
        %v2401 = vld [vmem:[%s2164 + $0x242] sm:$0xff]
        %v2402 = vld [vmem:[%s2164 + $0x24a] sm:$0xff]
        %v2403 = vld [vmem:[%s2164 + $0x25a] sm:$0xff]
        %v2404 = vld [vmem:[%s2164 + $0x262] sm:$0xff]
        %v2405 = vld [vmem:[%s2164 + $0x272] sm:$0xff]
        %v2406 = vld [vmem:[%s2164 + $0x27a] sm:$0xff]
        %v2407 = vld [vmem:[%s2164 + $0x28a] sm:$0xff]
        %v2408 = vld [vmem:[%s2164 + $0x292] sm:$0xff]
        %v2409 = vld [vmem:[%s2164 + $0x2a2] sm:$0xff]
        %v2410 = vld [vmem:[%s2164 + $0x2aa] sm:$0xff]
        %v2411 = vld [vmem:[%s2164 + $0x2ba] sm:$0xff]
        %v2412 = vld [vmem:[%s2164 + $0x2c2] sm:$0xff]
        %v2413 = vld [vmem:[%s2164 + $0x2d2] sm:$0xff]
        %v2414 = vld [vmem:[%s2164 + $0x2da] sm:$0xff]
        %v2415 = vld [vmem:[%s2164 + $0x2ea] sm:$0xff]
        %v2416 = vld [vmem:[%s2164 + $0x2f2] sm:$0xff]
        %v2417 = vld [vmem:[%s2164 + $0x302] sm:$0xff]
        %v2418 = vld [vmem:[%s2164 + $0x30a] sm:$0xff]
        %v2419 = vld [vmem:[%s2164 + $0x31a] sm:$0xff]
        %v2420 = vld [vmem:[%s2164 + $0x322] sm:$0xff]
        %v2421 = vld [vmem:[%s2164 + $0x362] sm:$0xff]
        %v2422 = vld [vmem:[%s2164 + $0x36a] sm:$0xff]
        %v2423 = vld [vmem:[%s2164 + $0x37a] sm:$0xff]
        %v2424 = vld [vmem:[%s2164 + $0x382] sm:$0xff]
        %v2425 = vld [vmem:[%s2164 + $0x392] sm:$0xff]
        %v2426 = vld [vmem:[%s2164 + $0x39a] sm:$0xff]
        %v2427 = vld [vmem:[%s2164 + $0x3aa] sm:$0xff]
        %v2428 = vld [vmem:[%s2164 + $0x3b2] sm:$0xff]
        %v2429 = vld [vmem:[%s2164 + $0x3c2] sm:$0xff]
        %v2430 = vld [vmem:[%s2164 + $0x3ca] sm:$0xff]
        %v2431 = vld [vmem:[%s2164 + $0x3da] sm:$0xff]
        %v2432 = vld [vmem:[%s2164 + $0x3e2] sm:$0xff]
        %v2433 = vld [vmem:[%s2164 + $0x3f2] sm:$0xff]
        %v2434 = vld [vmem:[%s2164 + $0x3fa] sm:$0xff]
        %v2435 = vld [vmem:[%s2164 + $0x40a] sm:$0xff]
        %v2436 = vld [vmem:[%s2164 + $0x412] sm:$0xff]
        %v2437 = vld [vmem:[%s2164 + $0x422] sm:$0xff]
        %v2438 = vld [vmem:[%s2164 + $0x42a] sm:$0xff]
        %v2439 = vld [vmem:[%s2164 + $0x43a] sm:$0xff]
        %v2440 = vld [vmem:[%s2164 + $0x442] sm:$0xff]
        %v2441 = vld [vmem:[%s2164 + $0x452] sm:$0xff]
        %v2442 = vld [vmem:[%s2164 + $0x45a] sm:$0xff]
        %v2443 = vld [vmem:[%s2164 + $0x46a] sm:$0xff]
        %v2444 = vld [vmem:[%s2164 + $0x472] sm:$0xff]
        %v2445 = vld [vmem:[%s2164 + $0x482] sm:$0xff]
        %v2446 = vld [vmem:[%s2164 + $0x48a] sm:$0xff]
        %v2447 = vld [vmem:[%s2164 + $0x49a] sm:$0xff]
        %v2448 = vld [vmem:[%s2164 + $0x4a2] sm:$0xff]
        %v2449 = vld [vmem:[%s2164 + $0x4b2] sm:$0xff]
        %v2450 = vld [vmem:[%s2164 + $0x4ba] sm:$0xff]
        %v2451 = vld [vmem:[%s2164 + $0x4ca] sm:$0xff]
        %v2452 = vld [vmem:[%s2164 + $0x4d2] sm:$0xff]
        %2549 = vrot.lane.b32.xlu0 %v1684, 32
        %v2550 = vpop.permute.xlu0 %2549
        %2551 = vrot.lane.b32.xlu0 %v1685, 32
        %v2552 = vpop.permute.xlu0 %2551
        %2553 = vrot.lane.b32.xlu0 %v1686, 32
        %v2554 = vpop.permute.xlu0 %2553
        %2555 = vrot.lane.b32.xlu0 %v1687, 32
        %v2556 = vpop.permute.xlu0 %2555
        %2557 = vrot.lane.b32.xlu0 %v1688, 32
        %v2558 = vpop.permute.xlu0 %2557
        %2559 = vrot.lane.b32.xlu0 %v1689, 32
        %v2560 = vpop.permute.xlu0 %2559
        %2561 = vrot.lane.b32.xlu0 %v1690, 32
        %v2562 = vpop.permute.xlu0 %2561
        %2563 = vrot.lane.b32.xlu0 %v1691, 32
        %v2564 = vpop.permute.xlu0 %2563
        %2565 = vrot.lane.b32.xlu0 %v1692, 32
        %v2566 = vpop.permute.xlu0 %2565
        %2567 = vrot.lane.b32.xlu0 %v1693, 32
        %v2568 = vpop.permute.xlu0 %2567
        %2569 = vrot.lane.b32.xlu0 %v1694, 32
        %v2570 = vpop.permute.xlu0 %2569
        %2571 = vrot.lane.b32.xlu0 %v1695, 32
        %v2572 = vpop.permute.xlu0 %2571
        %2573 = vrot.lane.b32.xlu0 %v1696, 32
        %v2574 = vpop.permute.xlu0 %2573
        %2575 = vrot.lane.b32.xlu0 %v1697, 32
        %v2576 = vpop.permute.xlu0 %2575
        %2577 = vrot.lane.b32.xlu0 %v1698, 32
        %v2578 = vpop.permute.xlu0 %2577
        %2579 = vrot.lane.b32.xlu0 %v1699, 32
        %v2580 = vpop.permute.xlu0 %2579
        %2581 = vrot.lane.b32.xlu0 %v1700, 32
        %v2582 = vpop.permute.xlu0 %2581
        %2583 = vrot.lane.b32.xlu0 %v1701, 32
        %v2584 = vpop.permute.xlu0 %2583
        %2585 = vrot.lane.b32.xlu0 %v1702, 32
        %v2586 = vpop.permute.xlu0 %2585
        %2587 = vrot.lane.b32.xlu0 %v1703, 32
        %v2588 = vpop.permute.xlu0 %2587
        %2589 = vrot.lane.b32.xlu0 %v1704, 32
        %v2590 = vpop.permute.xlu0 %2589
        %2591 = vrot.lane.b32.xlu0 %v1705, 32
        %v2592 = vpop.permute.xlu0 %2591
        %2593 = vrot.lane.b32.xlu0 %v1706, 32
        %v2594 = vpop.permute.xlu0 %2593
        %2595 = vrot.lane.b32.xlu0 %v1707, 32
        %v2596 = vpop.permute.xlu0 %2595
        %2597 = vrot.lane.b32.xlu0 %v1708, 32
        %v2598 = vpop.permute.xlu0 %2597
        %2599 = vrot.lane.b32.xlu0 %v1709, 32
        %v2600 = vpop.permute.xlu0 %2599
        %2601 = vrot.lane.b32.xlu0 %v1710, 32
        %v2602 = vpop.permute.xlu0 %2601
        %2603 = vrot.lane.b32.xlu0 %v1711, 32
        %v2604 = vpop.permute.xlu0 %2603
        %2605 = vrot.lane.b32.xlu0 %v1712, 32
        %v2606 = vpop.permute.xlu0 %2605
        %2607 = vrot.lane.b32.xlu0 %v1713, 32
        %v2608 = vpop.permute.xlu0 %2607
        %2609 = vrot.lane.b32.xlu0 %v1714, 32
        %v2610 = vpop.permute.xlu0 %2609
        %2611 = vrot.lane.b32.xlu0 %v1715, 32
        %v2612 = vpop.permute.xlu0 %2611
        %2613 = vrot.lane.b32.xlu0 %v1716, 32
        %v2614 = vpop.permute.xlu0 %2613
        %2615 = vrot.lane.b32.xlu0 %v1717, 32
        %v2616 = vpop.permute.xlu0 %2615
        %2617 = vrot.lane.b32.xlu0 %v1718, 32
        %v2618 = vpop.permute.xlu0 %2617
        %2619 = vrot.lane.b32.xlu0 %v1719, 32
        %v2620 = vpop.permute.xlu0 %2619
        %2621 = vrot.lane.b32.xlu0 %v1720, 32
        %v2622 = vpop.permute.xlu0 %2621
        %2623 = vrot.lane.b32.xlu0 %v1721, 32
        %v2624 = vpop.permute.xlu0 %2623
        %2625 = vrot.lane.b32.xlu0 %v1722, 32
        %v2626 = vpop.permute.xlu0 %2625
        %2627 = vrot.lane.b32.xlu0 %v1723, 32
        %v2628 = vpop.permute.xlu0 %2627
        %2629 = vrot.lane.b32.xlu0 %v1724, 32
        %v2630 = vpop.permute.xlu0 %2629
        %2631 = vrot.lane.b32.xlu0 %v1725, 32
        %v2632 = vpop.permute.xlu0 %2631
        %2633 = vrot.lane.b32.xlu0 %v1726, 32
        %v2634 = vpop.permute.xlu0 %2633
        %2635 = vrot.lane.b32.xlu0 %v1727, 32
        %v2636 = vpop.permute.xlu0 %2635
        %2637 = vrot.lane.b32.xlu0 %v1728, 32
        %v2638 = vpop.permute.xlu0 %2637
        %2639 = vrot.lane.b32.xlu0 %v1729, 32
        %v2640 = vpop.permute.xlu0 %2639
        %2641 = vrot.lane.b32.xlu0 %v1730, 32
        %v2642 = vpop.permute.xlu0 %2641
        %2643 = vrot.lane.b32.xlu0 %v1731, 32
        %v2644 = vpop.permute.xlu0 %2643
        %2645 = vrot.lane.b32.xlu0 %v1732, 32
        %v2646 = vpop.permute.xlu0 %2645
        %2647 = vrot.lane.b32.xlu0 %v1733, 32
        %v2648 = vpop.permute.xlu0 %2647
        %2649 = vrot.lane.b32.xlu0 %v1734, 32
        %v2650 = vpop.permute.xlu0 %2649
        %2651 = vrot.lane.b32.xlu0 %v1735, 32
        %v2652 = vpop.permute.xlu0 %2651
        %2653 = vrot.lane.b32.xlu0 %v1736, 32
        %v2654 = vpop.permute.xlu0 %2653
        %2655 = vrot.lane.b32.xlu0 %v1737, 32
        %v2656 = vpop.permute.xlu0 %2655
        %2657 = vrot.lane.b32.xlu0 %v1738, 32
        %v2658 = vpop.permute.xlu0 %2657
        %2659 = vrot.lane.b32.xlu0 %v1739, 32
        %v2660 = vpop.permute.xlu0 %2659
        %2661 = vrot.lane.b32.xlu0 %v1740, 32
        %v2662 = vpop.permute.xlu0 %2661
        %2663 = vrot.lane.b32.xlu0 %v1741, 32
        %v2664 = vpop.permute.xlu0 %2663
        %2665 = vrot.lane.b32.xlu0 %v1742, 32
        %v2666 = vpop.permute.xlu0 %2665
        %2667 = vrot.lane.b32.xlu0 %v1743, 32
        %v2668 = vpop.permute.xlu0 %2667
        %2669 = vrot.lane.b32.xlu0 %v1744, 32
        %v2670 = vpop.permute.xlu0 %2669
        %2671 = vrot.lane.b32.xlu0 %v1745, 32
        %v2672 = vpop.permute.xlu0 %2671
        %2673 = vrot.lane.b32.xlu0 %v1746, 32
        %v2674 = vpop.permute.xlu0 %2673
        %2675 = vrot.lane.b32.xlu0 %v1747, 32
        %v2676 = vpop.permute.xlu0 %2675
        %2677 = vrot.lane.b32.xlu0 %v1748, 32
        %v2678 = vpop.permute.xlu0 %2677
        %2679 = vrot.lane.b32.xlu0 %v1749, 32
        %v2680 = vpop.permute.xlu0 %2679
        %2681 = vrot.lane.b32.xlu0 %v1750, 32
        %v2682 = vpop.permute.xlu0 %2681
        %2683 = vrot.lane.b32.xlu0 %v1751, 32
        %v2684 = vpop.permute.xlu0 %2683
        %2685 = vrot.lane.b32.xlu0 %v1752, 32
        %v2686 = vpop.permute.xlu0 %2685
        %2687 = vrot.lane.b32.xlu0 %v1753, 32
        %v2688 = vpop.permute.xlu0 %2687
        %2689 = vrot.lane.b32.xlu0 %v1754, 32
        %v2690 = vpop.permute.xlu0 %2689
        %2691 = vrot.lane.b32.xlu0 %v1755, 32
        %v2692 = vpop.permute.xlu0 %2691
        %2693 = vrot.lane.b32.xlu0 %v1756, 32
        %v2694 = vpop.permute.xlu0 %2693
        %2695 = vrot.lane.b32.xlu0 %v1757, 32
        %v2696 = vpop.permute.xlu0 %2695
        %2697 = vrot.lane.b32.xlu0 %v1758, 32
        %v2698 = vpop.permute.xlu0 %2697
        %2699 = vrot.lane.b32.xlu0 %v1759, 32
        %v2700 = vpop.permute.xlu0 %2699
        %2701 = vrot.lane.b32.xlu0 %v1760, 32
        %v2702 = vpop.permute.xlu0 %2701
        %2703 = vrot.lane.b32.xlu0 %v1761, 32
        %v2704 = vpop.permute.xlu0 %2703
        %2705 = vrot.lane.b32.xlu0 %v1762, 32
        %v2706 = vpop.permute.xlu0 %2705
        %2707 = vrot.lane.b32.xlu0 %v1763, 32
        %v2708 = vpop.permute.xlu0 %2707
        %2709 = vrot.lane.b32.xlu0 %v1764, 32
        %v2710 = vpop.permute.xlu0 %2709
        %2711 = vrot.lane.b32.xlu0 %v1765, 32
        %v2712 = vpop.permute.xlu0 %2711
        %2713 = vrot.lane.b32.xlu0 %v1766, 32
        %v2714 = vpop.permute.xlu0 %2713
        %2715 = vrot.lane.b32.xlu0 %v1767, 32
        %v2716 = vpop.permute.xlu0 %2715
        %2717 = vrot.lane.b32.xlu0 %v1768, 32
        %v2718 = vpop.permute.xlu0 %2717
        %2719 = vrot.lane.b32.xlu0 %v1769, 32
        %v2720 = vpop.permute.xlu0 %2719
        %2721 = vrot.lane.b32.xlu0 %v1770, 32
        %v2722 = vpop.permute.xlu0 %2721
        %2723 = vrot.lane.b32.xlu0 %v1771, 32
        %v2724 = vpop.permute.xlu0 %2723
        %2725 = vrot.lane.b32.xlu0 %v1772, 32
        %v2726 = vpop.permute.xlu0 %2725
        %2727 = vrot.lane.b32.xlu0 %v1773, 32
        %v2728 = vpop.permute.xlu0 %2727
        %2729 = vrot.lane.b32.xlu0 %v1774, 32
        %v2730 = vpop.permute.xlu0 %2729
        %2731 = vrot.lane.b32.xlu0 %v1775, 32
        %v2732 = vpop.permute.xlu0 %2731
        %2733 = vrot.lane.b32.xlu0 %v1776, 32
        %v2734 = vpop.permute.xlu0 %2733
        %2735 = vrot.lane.b32.xlu0 %v1777, 32
        %v2736 = vpop.permute.xlu0 %2735
        %2737 = vrot.lane.b32.xlu0 %v1778, 32
        %v2738 = vpop.permute.xlu0 %2737
        %2739 = vrot.lane.b32.xlu0 %v1779, 32
        %v2740 = vpop.permute.xlu0 %2739
        %2933 = vrot.lane.b32.xlu0 %v1780, 64
        %v2934 = vpop.permute.xlu0 %2933
        %2935 = vrot.lane.b32.xlu0 %v1781, 64
        %v2936 = vpop.permute.xlu0 %2935
        %2937 = vrot.lane.b32.xlu0 %v1782, 64
        %v2938 = vpop.permute.xlu0 %2937
        %2939 = vrot.lane.b32.xlu0 %v1783, 64
        %v2940 = vpop.permute.xlu0 %2939
        %2941 = vrot.lane.b32.xlu0 %v1784, 64
        %v2942 = vpop.permute.xlu0 %2941
        %2943 = vrot.lane.b32.xlu0 %v1785, 64
        %v2944 = vpop.permute.xlu0 %2943
        %2945 = vrot.lane.b32.xlu0 %v1786, 64
        %v2946 = vpop.permute.xlu0 %2945
        %2947 = vrot.lane.b32.xlu0 %v1787, 64
        %v2948 = vpop.permute.xlu0 %2947
        %2949 = vrot.lane.b32.xlu0 %v1788, 64
        %v2950 = vpop.permute.xlu0 %2949
        %2951 = vrot.lane.b32.xlu0 %v1789, 64
        %v2952 = vpop.permute.xlu0 %2951
        %2953 = vrot.lane.b32.xlu0 %v1790, 64
        %v2954 = vpop.permute.xlu0 %2953
        %2955 = vrot.lane.b32.xlu0 %v1791, 64
        %v2956 = vpop.permute.xlu0 %2955
        %2957 = vrot.lane.b32.xlu0 %v1792, 64
        %v2958 = vpop.permute.xlu0 %2957
        %2959 = vrot.lane.b32.xlu0 %v1793, 64
        %v2960 = vpop.permute.xlu0 %2959
        %2961 = vrot.lane.b32.xlu0 %v1794, 64
        %v2962 = vpop.permute.xlu0 %2961
        %2963 = vrot.lane.b32.xlu0 %v1795, 64
        %v2964 = vpop.permute.xlu0 %2963
        %2965 = vrot.lane.b32.xlu0 %v1796, 64
        %v2966 = vpop.permute.xlu0 %2965
        %2967 = vrot.lane.b32.xlu0 %v1797, 64
        %v2968 = vpop.permute.xlu0 %2967
        %2969 = vrot.lane.b32.xlu0 %v1798, 64
        %v2970 = vpop.permute.xlu0 %2969
        %2971 = vrot.lane.b32.xlu0 %v1799, 64
        %v2972 = vpop.permute.xlu0 %2971
        %2973 = vrot.lane.b32.xlu0 %v1800, 64
        %v2974 = vpop.permute.xlu0 %2973
        %2975 = vrot.lane.b32.xlu0 %v1801, 64
        %v2976 = vpop.permute.xlu0 %2975
        %2977 = vrot.lane.b32.xlu0 %v1802, 64
        %v2978 = vpop.permute.xlu0 %2977
        %2979 = vrot.lane.b32.xlu0 %v1803, 64
        %v2980 = vpop.permute.xlu0 %2979
        %2981 = vrot.lane.b32.xlu0 %v1804, 64
        %v2982 = vpop.permute.xlu0 %2981
        %2983 = vrot.lane.b32.xlu0 %v1805, 64
        %v2984 = vpop.permute.xlu0 %2983
        %2985 = vrot.lane.b32.xlu0 %v1806, 64
        %v2986 = vpop.permute.xlu0 %2985
        %2987 = vrot.lane.b32.xlu0 %v1807, 64
        %v2988 = vpop.permute.xlu0 %2987
        %2989 = vrot.lane.b32.xlu0 %v1808, 64
        %v2990 = vpop.permute.xlu0 %2989
        %2991 = vrot.lane.b32.xlu0 %v1809, 64
        %v2992 = vpop.permute.xlu0 %2991
        %2993 = vrot.lane.b32.xlu0 %v1810, 64
        %v2994 = vpop.permute.xlu0 %2993
        %2995 = vrot.lane.b32.xlu0 %v1811, 64
        %v2996 = vpop.permute.xlu0 %2995
        %2997 = vrot.lane.b32.xlu0 %v1812, 64
        %v2998 = vpop.permute.xlu0 %2997
        %2999 = vrot.lane.b32.xlu0 %v1813, 64
        %v3000 = vpop.permute.xlu0 %2999
        %3001 = vrot.lane.b32.xlu0 %v1814, 64
        %v3002 = vpop.permute.xlu0 %3001
        %3003 = vrot.lane.b32.xlu0 %v1815, 64
        %v3004 = vpop.permute.xlu0 %3003
        %3005 = vrot.lane.b32.xlu0 %v1816, 64
        %v3006 = vpop.permute.xlu0 %3005
        %3007 = vrot.lane.b32.xlu0 %v1817, 64
        %v3008 = vpop.permute.xlu0 %3007
        %3009 = vrot.lane.b32.xlu0 %v1818, 64
        %v3010 = vpop.permute.xlu0 %3009
        %3011 = vrot.lane.b32.xlu0 %v1819, 64
        %v3012 = vpop.permute.xlu0 %3011
        %3013 = vrot.lane.b32.xlu0 %v1820, 64
        %v3014 = vpop.permute.xlu0 %3013
        %3015 = vrot.lane.b32.xlu0 %v1821, 64
        %v3016 = vpop.permute.xlu0 %3015
        %3017 = vrot.lane.b32.xlu0 %v1822, 64
        %v3018 = vpop.permute.xlu0 %3017
        %3019 = vrot.lane.b32.xlu0 %v1823, 64
        %v3020 = vpop.permute.xlu0 %3019
        %3021 = vrot.lane.b32.xlu0 %v1824, 64
        %v3022 = vpop.permute.xlu0 %3021
        %3023 = vrot.lane.b32.xlu0 %v1825, 64
        %v3024 = vpop.permute.xlu0 %3023
        %3025 = vrot.lane.b32.xlu0 %v1826, 64
        %v3026 = vpop.permute.xlu0 %3025
        %3027 = vrot.lane.b32.xlu0 %v1827, 64
        %v3028 = vpop.permute.xlu0 %3027
        %3029 = vrot.lane.b32.xlu0 %v1828, 64
        %v3030 = vpop.permute.xlu0 %3029
        %3031 = vrot.lane.b32.xlu0 %v1829, 64
        %v3032 = vpop.permute.xlu0 %3031
        %3033 = vrot.lane.b32.xlu0 %v1830, 64
        %v3034 = vpop.permute.xlu0 %3033
        %3035 = vrot.lane.b32.xlu0 %v1831, 64
        %v3036 = vpop.permute.xlu0 %3035
        %3037 = vrot.lane.b32.xlu0 %v1832, 64
        %v3038 = vpop.permute.xlu0 %3037
        %3039 = vrot.lane.b32.xlu0 %v1833, 64
        %v3040 = vpop.permute.xlu0 %3039
        %3041 = vrot.lane.b32.xlu0 %v1834, 64
        %v3042 = vpop.permute.xlu0 %3041
        %3043 = vrot.lane.b32.xlu0 %v1835, 64
        %v3044 = vpop.permute.xlu0 %3043
        %3045 = vrot.lane.b32.xlu0 %v1836, 64
        %v3046 = vpop.permute.xlu0 %3045
        %3047 = vrot.lane.b32.xlu0 %v1837, 64
        %v3048 = vpop.permute.xlu0 %3047
        %3049 = vrot.lane.b32.xlu0 %v1838, 64
        %v3050 = vpop.permute.xlu0 %3049
        %3051 = vrot.lane.b32.xlu0 %v1839, 64
        %v3052 = vpop.permute.xlu0 %3051
        %3053 = vrot.lane.b32.xlu0 %v1840, 64
        %v3054 = vpop.permute.xlu0 %3053
        %3055 = vrot.lane.b32.xlu0 %v1841, 64
        %v3056 = vpop.permute.xlu0 %3055
        %3057 = vrot.lane.b32.xlu0 %v1842, 64
        %v3058 = vpop.permute.xlu0 %3057
        %3059 = vrot.lane.b32.xlu0 %v1843, 64
        %v3060 = vpop.permute.xlu0 %3059
        %3061 = vrot.lane.b32.xlu0 %v1844, 64
        %v3062 = vpop.permute.xlu0 %3061
        %3063 = vrot.lane.b32.xlu0 %v1845, 64
        %v3064 = vpop.permute.xlu0 %3063
        %3065 = vrot.lane.b32.xlu0 %v1846, 64
        %v3066 = vpop.permute.xlu0 %3065
        %3067 = vrot.lane.b32.xlu0 %v1847, 64
        %v3068 = vpop.permute.xlu0 %3067
        %3069 = vrot.lane.b32.xlu0 %v1848, 64
        %v3070 = vpop.permute.xlu0 %3069
        %3071 = vrot.lane.b32.xlu0 %v1849, 64
        %v3072 = vpop.permute.xlu0 %3071
        %3073 = vrot.lane.b32.xlu0 %v1850, 64
        %v3074 = vpop.permute.xlu0 %3073
        %3075 = vrot.lane.b32.xlu0 %v1851, 64
        %v3076 = vpop.permute.xlu0 %3075
        %3077 = vrot.lane.b32.xlu0 %v1852, 64
        %v3078 = vpop.permute.xlu0 %3077
        %3079 = vrot.lane.b32.xlu0 %v1853, 64
        %v3080 = vpop.permute.xlu0 %3079
        %3081 = vrot.lane.b32.xlu0 %v1854, 64
        %v3082 = vpop.permute.xlu0 %3081
        %3083 = vrot.lane.b32.xlu0 %v1855, 64
        %v3084 = vpop.permute.xlu0 %3083
        %3085 = vrot.lane.b32.xlu0 %v1856, 64
        %v3086 = vpop.permute.xlu0 %3085
        %3087 = vrot.lane.b32.xlu0 %v1857, 64
        %v3088 = vpop.permute.xlu0 %3087
        %3089 = vrot.lane.b32.xlu0 %v1858, 64
        %v3090 = vpop.permute.xlu0 %3089
        %3091 = vrot.lane.b32.xlu0 %v1859, 64
        %v3092 = vpop.permute.xlu0 %3091
        %3093 = vrot.lane.b32.xlu0 %v1860, 64
        %v3094 = vpop.permute.xlu0 %3093
        %3095 = vrot.lane.b32.xlu0 %v1861, 64
        %v3096 = vpop.permute.xlu0 %3095
        %3097 = vrot.lane.b32.xlu0 %v1862, 64
        %v3098 = vpop.permute.xlu0 %3097
        %3099 = vrot.lane.b32.xlu0 %v1863, 64
        %v3100 = vpop.permute.xlu0 %3099
        %3101 = vrot.lane.b32.xlu0 %v1864, 64
        %v3102 = vpop.permute.xlu0 %3101
        %3103 = vrot.lane.b32.xlu0 %v1865, 64
        %v3104 = vpop.permute.xlu0 %3103
        %3105 = vrot.lane.b32.xlu0 %v1866, 64
        %v3106 = vpop.permute.xlu0 %3105
        %3107 = vrot.lane.b32.xlu0 %v1867, 64
        %v3108 = vpop.permute.xlu0 %3107
        %3109 = vrot.lane.b32.xlu0 %v1868, 64
        %v3110 = vpop.permute.xlu0 %3109
        %3111 = vrot.lane.b32.xlu0 %v1869, 64
        %v3112 = vpop.permute.xlu0 %3111
        %3113 = vrot.lane.b32.xlu0 %v1870, 64
        %v3114 = vpop.permute.xlu0 %3113
        %3115 = vrot.lane.b32.xlu0 %v1871, 64
        %v3116 = vpop.permute.xlu0 %3115
        %3117 = vrot.lane.b32.xlu0 %v1872, 64
        %v3118 = vpop.permute.xlu0 %3117
        %3119 = vrot.lane.b32.xlu0 %v1873, 64
        %v3120 = vpop.permute.xlu0 %3119
        %3121 = vrot.lane.b32.xlu0 %v1874, 64
        %v3122 = vpop.permute.xlu0 %3121
        %3123 = vrot.lane.b32.xlu0 %v1875, 64
        %v3124 = vpop.permute.xlu0 %3123
        %3317 = vrot.lane.b32.xlu0 %v1876, 96
        %v3318 = vpop.permute.xlu0 %3317
        %3319 = vrot.lane.b32.xlu0 %v1877, 96
        %v3320 = vpop.permute.xlu0 %3319
        %3321 = vrot.lane.b32.xlu0 %v1878, 96
        %v3322 = vpop.permute.xlu0 %3321
        %3323 = vrot.lane.b32.xlu0 %v1879, 96
        %v3324 = vpop.permute.xlu0 %3323
        %3325 = vrot.lane.b32.xlu0 %v1880, 96
        %v3326 = vpop.permute.xlu0 %3325
        %3327 = vrot.lane.b32.xlu0 %v1881, 96
        %v3328 = vpop.permute.xlu0 %3327
        %3329 = vrot.lane.b32.xlu0 %v1882, 96
        %v3330 = vpop.permute.xlu0 %3329
        %3331 = vrot.lane.b32.xlu0 %v1883, 96
        %v3332 = vpop.permute.xlu0 %3331
        %3333 = vrot.lane.b32.xlu0 %v1884, 96
        %v3334 = vpop.permute.xlu0 %3333
        %3335 = vrot.lane.b32.xlu0 %v1885, 96
        %v3336 = vpop.permute.xlu0 %3335
        %3337 = vrot.lane.b32.xlu0 %v1886, 96
        %v3338 = vpop.permute.xlu0 %3337
        %3339 = vrot.lane.b32.xlu0 %v1887, 96
        %v3340 = vpop.permute.xlu0 %3339
        %3341 = vrot.lane.b32.xlu0 %v1888, 96
        %v3342 = vpop.permute.xlu0 %3341
        %3343 = vrot.lane.b32.xlu0 %v1889, 96
        %v3344 = vpop.permute.xlu0 %3343
        %3345 = vrot.lane.b32.xlu0 %v1890, 96
        %v3346 = vpop.permute.xlu0 %3345
        %3347 = vrot.lane.b32.xlu0 %v1891, 96
        %v3348 = vpop.permute.xlu0 %3347
        %3349 = vrot.lane.b32.xlu0 %v1892, 96
        %v3350 = vpop.permute.xlu0 %3349
        %3351 = vrot.lane.b32.xlu0 %v1893, 96
        %v3352 = vpop.permute.xlu0 %3351
        %3353 = vrot.lane.b32.xlu0 %v1894, 96
        %v3354 = vpop.permute.xlu0 %3353
        %3355 = vrot.lane.b32.xlu0 %v1895, 96
        %v3356 = vpop.permute.xlu0 %3355
        %3357 = vrot.lane.b32.xlu0 %v1896, 96
        %v3358 = vpop.permute.xlu0 %3357
        %3359 = vrot.lane.b32.xlu0 %v1897, 96
        %v3360 = vpop.permute.xlu0 %3359
        %3361 = vrot.lane.b32.xlu0 %v1898, 96
        %v3362 = vpop.permute.xlu0 %3361
        %3363 = vrot.lane.b32.xlu0 %v1899, 96
        %v3364 = vpop.permute.xlu0 %3363
        %3365 = vrot.lane.b32.xlu0 %v1900, 96
        %v3366 = vpop.permute.xlu0 %3365
        %3367 = vrot.lane.b32.xlu0 %v1901, 96
        %v3368 = vpop.permute.xlu0 %3367
        %3369 = vrot.lane.b32.xlu0 %v1902, 96
        %v3370 = vpop.permute.xlu0 %3369
        %3371 = vrot.lane.b32.xlu0 %v1903, 96
        %v3372 = vpop.permute.xlu0 %3371
        %3373 = vrot.lane.b32.xlu0 %v1904, 96
        %v3374 = vpop.permute.xlu0 %3373
        %3375 = vrot.lane.b32.xlu0 %v1905, 96
        %v3376 = vpop.permute.xlu0 %3375
        %3377 = vrot.lane.b32.xlu0 %v1906, 96
        %v3378 = vpop.permute.xlu0 %3377
        %3379 = vrot.lane.b32.xlu0 %v1907, 96
        %v3380 = vpop.permute.xlu0 %3379
        %3381 = vrot.lane.b32.xlu0 %v1908, 96
        %v3382 = vpop.permute.xlu0 %3381
        %3383 = vrot.lane.b32.xlu0 %v1909, 96
        %v3384 = vpop.permute.xlu0 %3383
        %3385 = vrot.lane.b32.xlu0 %v1910, 96
        %v3386 = vpop.permute.xlu0 %3385
        %3387 = vrot.lane.b32.xlu0 %v1911, 96
        %v3388 = vpop.permute.xlu0 %3387
        %3389 = vrot.lane.b32.xlu0 %v1912, 96
        %v3390 = vpop.permute.xlu0 %3389
        %3391 = vrot.lane.b32.xlu0 %v1913, 96
        %v3392 = vpop.permute.xlu0 %3391
        %3393 = vrot.lane.b32.xlu0 %v1914, 96
        %v3394 = vpop.permute.xlu0 %3393
        %3395 = vrot.lane.b32.xlu0 %v1915, 96
        %v3396 = vpop.permute.xlu0 %3395
        %3397 = vrot.lane.b32.xlu0 %v1916, 96
        %v3398 = vpop.permute.xlu0 %3397
        %3399 = vrot.lane.b32.xlu0 %v1917, 96
        %v3400 = vpop.permute.xlu0 %3399
        %3401 = vrot.lane.b32.xlu0 %v1918, 96
        %v3402 = vpop.permute.xlu0 %3401
        %3403 = vrot.lane.b32.xlu0 %v1919, 96
        %v3404 = vpop.permute.xlu0 %3403
        %3405 = vrot.lane.b32.xlu0 %v1920, 96
        %v3406 = vpop.permute.xlu0 %3405
        %3407 = vrot.lane.b32.xlu0 %v1921, 96
        %v3408 = vpop.permute.xlu0 %3407
        %3409 = vrot.lane.b32.xlu0 %v1922, 96
        %v3410 = vpop.permute.xlu0 %3409
        %3411 = vrot.lane.b32.xlu0 %v1923, 96
        %v3412 = vpop.permute.xlu0 %3411
        %3413 = vrot.lane.b32.xlu0 %v1924, 96
        %v3414 = vpop.permute.xlu0 %3413
        %3415 = vrot.lane.b32.xlu0 %v1925, 96
        %v3416 = vpop.permute.xlu0 %3415
        %3417 = vrot.lane.b32.xlu0 %v1926, 96
        %v3418 = vpop.permute.xlu0 %3417
        %3419 = vrot.lane.b32.xlu0 %v1927, 96
        %v3420 = vpop.permute.xlu0 %3419
        %3421 = vrot.lane.b32.xlu0 %v1928, 96
        %v3422 = vpop.permute.xlu0 %3421
        %3423 = vrot.lane.b32.xlu0 %v1929, 96
        %v3424 = vpop.permute.xlu0 %3423
        %3425 = vrot.lane.b32.xlu0 %v1930, 96
        %v3426 = vpop.permute.xlu0 %3425
        %3427 = vrot.lane.b32.xlu0 %v1931, 96
        %v3428 = vpop.permute.xlu0 %3427
        %3429 = vrot.lane.b32.xlu0 %v1932, 96
        %v3430 = vpop.permute.xlu0 %3429
        %3431 = vrot.lane.b32.xlu0 %v1933, 96
        %v3432 = vpop.permute.xlu0 %3431
        %3433 = vrot.lane.b32.xlu0 %v1934, 96
        %v3434 = vpop.permute.xlu0 %3433
        %3435 = vrot.lane.b32.xlu0 %v1935, 96
        %v3436 = vpop.permute.xlu0 %3435
        %3437 = vrot.lane.b32.xlu0 %v1936, 96
        %v3438 = vpop.permute.xlu0 %3437
        %3439 = vrot.lane.b32.xlu0 %v1937, 96
        %v3440 = vpop.permute.xlu0 %3439
        %3441 = vrot.lane.b32.xlu0 %v1938, 96
        %v3442 = vpop.permute.xlu0 %3441
        %3443 = vrot.lane.b32.xlu0 %v1939, 96
        %v3444 = vpop.permute.xlu0 %3443
        %3445 = vrot.lane.b32.xlu0 %v1940, 96
        %v3446 = vpop.permute.xlu0 %3445
        %3447 = vrot.lane.b32.xlu0 %v1941, 96
        %v3448 = vpop.permute.xlu0 %3447
        %3449 = vrot.lane.b32.xlu0 %v1942, 96
        %v3450 = vpop.permute.xlu0 %3449
        %3451 = vrot.lane.b32.xlu0 %v1943, 96
        %v3452 = vpop.permute.xlu0 %3451
        %3453 = vrot.lane.b32.xlu0 %v1944, 96
        %v3454 = vpop.permute.xlu0 %3453
        %3455 = vrot.lane.b32.xlu0 %v1945, 96
        %v3456 = vpop.permute.xlu0 %3455
        %3457 = vrot.lane.b32.xlu0 %v1946, 96
        %v3458 = vpop.permute.xlu0 %3457
        %3459 = vrot.lane.b32.xlu0 %v1947, 96
        %v3460 = vpop.permute.xlu0 %3459
        %3461 = vrot.lane.b32.xlu0 %v1948, 96
        %v3462 = vpop.permute.xlu0 %3461
        %3463 = vrot.lane.b32.xlu0 %v1949, 96
        %v3464 = vpop.permute.xlu0 %3463
        %3465 = vrot.lane.b32.xlu0 %v1950, 96
        %v3466 = vpop.permute.xlu0 %3465
        %3467 = vrot.lane.b32.xlu0 %v1951, 96
        %v3468 = vpop.permute.xlu0 %3467
        %3469 = vrot.lane.b32.xlu0 %v1952, 96
        %v3470 = vpop.permute.xlu0 %3469
        %3471 = vrot.lane.b32.xlu0 %v1953, 96
        %v3472 = vpop.permute.xlu0 %3471
        %3473 = vrot.lane.b32.xlu0 %v1954, 96
        %v3474 = vpop.permute.xlu0 %3473
        %3475 = vrot.lane.b32.xlu0 %v1955, 96
        %v3476 = vpop.permute.xlu0 %3475
        %3477 = vrot.lane.b32.xlu0 %v1956, 96
        %v3478 = vpop.permute.xlu0 %3477
        %3479 = vrot.lane.b32.xlu0 %v1957, 96
        %v3480 = vpop.permute.xlu0 %3479
        %3481 = vrot.lane.b32.xlu0 %v1958, 96
        %v3482 = vpop.permute.xlu0 %3481
        %3483 = vrot.lane.b32.xlu0 %v1959, 96
        %v3484 = vpop.permute.xlu0 %3483
        %3485 = vrot.lane.b32.xlu0 %v1960, 96
        %v3486 = vpop.permute.xlu0 %3485
        %3487 = vrot.lane.b32.xlu0 %v1961, 96
        %v3488 = vpop.permute.xlu0 %3487
        %3489 = vrot.lane.b32.xlu0 %v1962, 96
        %v3490 = vpop.permute.xlu0 %3489
        %3491 = vrot.lane.b32.xlu0 %v1963, 96
        %v3492 = vpop.permute.xlu0 %3491
        %3493 = vrot.lane.b32.xlu0 %v1964, 96
        %v3494 = vpop.permute.xlu0 %3493
        %3495 = vrot.lane.b32.xlu0 %v1965, 96
        %v3496 = vpop.permute.xlu0 %3495
        %3497 = vrot.lane.b32.xlu0 %v1966, 96
        %v3498 = vpop.permute.xlu0 %3497
        %3499 = vrot.lane.b32.xlu0 %v1967, 96
        %v3500 = vpop.permute.xlu0 %3499
        %3501 = vrot.lane.b32.xlu0 %v1968, 96
        %v3502 = vpop.permute.xlu0 %3501
        %3503 = vrot.lane.b32.xlu0 %v1969, 96
        %v3504 = vpop.permute.xlu0 %3503
        %3505 = vrot.lane.b32.xlu0 %v1970, 96
        %v3506 = vpop.permute.xlu0 %3505
        %3507 = vrot.lane.b32.xlu0 %v1971, 96
        %v3508 = vpop.permute.xlu0 %3507
        %3701 = vrot.lane.b32.xlu0 %v2068, 32
        %v3702 = vpop.permute.xlu0 %3701
        %3703 = vrot.lane.b32.xlu0 %v2069, 32
        %v3704 = vpop.permute.xlu0 %3703
        %3705 = vrot.lane.b32.xlu0 %v2070, 32
        %v3706 = vpop.permute.xlu0 %3705
        %3707 = vrot.lane.b32.xlu0 %v2071, 32
        %v3708 = vpop.permute.xlu0 %3707
        %3709 = vrot.lane.b32.xlu0 %v2072, 32
        %v3710 = vpop.permute.xlu0 %3709
        %3711 = vrot.lane.b32.xlu0 %v2073, 32
        %v3712 = vpop.permute.xlu0 %3711
        %3713 = vrot.lane.b32.xlu0 %v2074, 32
        %v3714 = vpop.permute.xlu0 %3713
        %3715 = vrot.lane.b32.xlu0 %v2075, 32
        %v3716 = vpop.permute.xlu0 %3715
        %3717 = vrot.lane.b32.xlu0 %v2076, 32
        %v3718 = vpop.permute.xlu0 %3717
        %3719 = vrot.lane.b32.xlu0 %v2077, 32
        %v3720 = vpop.permute.xlu0 %3719
        %3721 = vrot.lane.b32.xlu0 %v2078, 32
        %v3722 = vpop.permute.xlu0 %3721
        %3723 = vrot.lane.b32.xlu0 %v2079, 32
        %v3724 = vpop.permute.xlu0 %3723
        %3725 = vrot.lane.b32.xlu0 %v2080, 32
        %v3726 = vpop.permute.xlu0 %3725
        %3727 = vrot.lane.b32.xlu0 %v2081, 32
        %v3728 = vpop.permute.xlu0 %3727
        %3729 = vrot.lane.b32.xlu0 %v2082, 32
        %v3730 = vpop.permute.xlu0 %3729
        %3731 = vrot.lane.b32.xlu0 %v2083, 32
        %v3732 = vpop.permute.xlu0 %3731
        %3733 = vrot.lane.b32.xlu0 %v2084, 32
        %v3734 = vpop.permute.xlu0 %3733
        %3735 = vrot.lane.b32.xlu0 %v2085, 32
        %v3736 = vpop.permute.xlu0 %3735
        %3737 = vrot.lane.b32.xlu0 %v2086, 32
        %v3738 = vpop.permute.xlu0 %3737
        %3739 = vrot.lane.b32.xlu0 %v2087, 32
        %v3740 = vpop.permute.xlu0 %3739
        %3741 = vrot.lane.b32.xlu0 %v2088, 32
        %v3742 = vpop.permute.xlu0 %3741
        %3743 = vrot.lane.b32.xlu0 %v2089, 32
        %v3744 = vpop.permute.xlu0 %3743
        %3745 = vrot.lane.b32.xlu0 %v2090, 32
        %v3746 = vpop.permute.xlu0 %3745
        %3747 = vrot.lane.b32.xlu0 %v2091, 32
        %v3748 = vpop.permute.xlu0 %3747
        %3749 = vrot.lane.b32.xlu0 %v2092, 32
        %v3750 = vpop.permute.xlu0 %3749
        %3751 = vrot.lane.b32.xlu0 %v2093, 32
        %v3752 = vpop.permute.xlu0 %3751
        %3753 = vrot.lane.b32.xlu0 %v2094, 32
        %v3754 = vpop.permute.xlu0 %3753
        %3755 = vrot.lane.b32.xlu0 %v2095, 32
        %v3756 = vpop.permute.xlu0 %3755
        %3757 = vrot.lane.b32.xlu0 %v2096, 32
        %v3758 = vpop.permute.xlu0 %3757
        %3759 = vrot.lane.b32.xlu0 %v2097, 32
        %v3760 = vpop.permute.xlu0 %3759
        %3761 = vrot.lane.b32.xlu0 %v2098, 32
        %v3762 = vpop.permute.xlu0 %3761
        %3763 = vrot.lane.b32.xlu0 %v2099, 32
        %v3764 = vpop.permute.xlu0 %3763
        %3765 = vrot.lane.b32.xlu0 %v2100, 32
        %v3766 = vpop.permute.xlu0 %3765
        %3767 = vrot.lane.b32.xlu0 %v2101, 32
        %v3768 = vpop.permute.xlu0 %3767
        %3769 = vrot.lane.b32.xlu0 %v2102, 32
        %v3770 = vpop.permute.xlu0 %3769
        %3771 = vrot.lane.b32.xlu0 %v2103, 32
        %v3772 = vpop.permute.xlu0 %3771
        %3773 = vrot.lane.b32.xlu0 %v2104, 32
        %v3774 = vpop.permute.xlu0 %3773
        %3775 = vrot.lane.b32.xlu0 %v2105, 32
        %v3776 = vpop.permute.xlu0 %3775
        %3777 = vrot.lane.b32.xlu0 %v2106, 32
        %v3778 = vpop.permute.xlu0 %3777
        %3779 = vrot.lane.b32.xlu0 %v2107, 32
        %v3780 = vpop.permute.xlu0 %3779
        %3781 = vrot.lane.b32.xlu0 %v2108, 32
        %v3782 = vpop.permute.xlu0 %3781
        %3783 = vrot.lane.b32.xlu0 %v2109, 32
        %v3784 = vpop.permute.xlu0 %3783
        %3785 = vrot.lane.b32.xlu0 %v2110, 32
        %v3786 = vpop.permute.xlu0 %3785
        %3787 = vrot.lane.b32.xlu0 %v2111, 32
        %v3788 = vpop.permute.xlu0 %3787
        %3789 = vrot.lane.b32.xlu0 %v2112, 32
        %v3790 = vpop.permute.xlu0 %3789
        %3791 = vrot.lane.b32.xlu0 %v2113, 32
        %v3792 = vpop.permute.xlu0 %3791
        %3793 = vrot.lane.b32.xlu0 %v2114, 32
        %v3794 = vpop.permute.xlu0 %3793
        %3795 = vrot.lane.b32.xlu0 %v2115, 32
        %v3796 = vpop.permute.xlu0 %3795
        %3797 = vrot.lane.b32.xlu0 %v2116, 32
        %v3798 = vpop.permute.xlu0 %3797
        %3799 = vrot.lane.b32.xlu0 %v2117, 32
        %v3800 = vpop.permute.xlu0 %3799
        %3801 = vrot.lane.b32.xlu0 %v2118, 32
        %v3802 = vpop.permute.xlu0 %3801
        %3803 = vrot.lane.b32.xlu0 %v2119, 32
        %v3804 = vpop.permute.xlu0 %3803
        %3805 = vrot.lane.b32.xlu0 %v2120, 32
        %v3806 = vpop.permute.xlu0 %3805
        %3807 = vrot.lane.b32.xlu0 %v2121, 32
        %v3808 = vpop.permute.xlu0 %3807
        %3809 = vrot.lane.b32.xlu0 %v2122, 32
        %v3810 = vpop.permute.xlu0 %3809
        %3811 = vrot.lane.b32.xlu0 %v2123, 32
        %v3812 = vpop.permute.xlu0 %3811
        %3813 = vrot.lane.b32.xlu0 %v2124, 32
        %v3814 = vpop.permute.xlu0 %3813
        %3815 = vrot.lane.b32.xlu0 %v2125, 32
        %v3816 = vpop.permute.xlu0 %3815
        %3817 = vrot.lane.b32.xlu0 %v2126, 32
        %v3818 = vpop.permute.xlu0 %3817
        %3819 = vrot.lane.b32.xlu0 %v2127, 32
        %v3820 = vpop.permute.xlu0 %3819
        %3821 = vrot.lane.b32.xlu0 %v2128, 32
        %v3822 = vpop.permute.xlu0 %3821
        %3823 = vrot.lane.b32.xlu0 %v2129, 32
        %v3824 = vpop.permute.xlu0 %3823
        %3825 = vrot.lane.b32.xlu0 %v2130, 32
        %v3826 = vpop.permute.xlu0 %3825
        %3827 = vrot.lane.b32.xlu0 %v2131, 32
        %v3828 = vpop.permute.xlu0 %3827
        %3829 = vrot.lane.b32.xlu0 %v2132, 32
        %v3830 = vpop.permute.xlu0 %3829
        %3831 = vrot.lane.b32.xlu0 %v2133, 32
        %v3832 = vpop.permute.xlu0 %3831
        %3833 = vrot.lane.b32.xlu0 %v2134, 32
        %v3834 = vpop.permute.xlu0 %3833
        %3835 = vrot.lane.b32.xlu0 %v2135, 32
        %v3836 = vpop.permute.xlu0 %3835
        %3837 = vrot.lane.b32.xlu0 %v2136, 32
        %v3838 = vpop.permute.xlu0 %3837
        %3839 = vrot.lane.b32.xlu0 %v2137, 32
        %v3840 = vpop.permute.xlu0 %3839
        %3841 = vrot.lane.b32.xlu0 %v2138, 32
        %v3842 = vpop.permute.xlu0 %3841
        %3843 = vrot.lane.b32.xlu0 %v2139, 32
        %v3844 = vpop.permute.xlu0 %3843
        %3845 = vrot.lane.b32.xlu0 %v2140, 32
        %v3846 = vpop.permute.xlu0 %3845
        %3847 = vrot.lane.b32.xlu0 %v2141, 32
        %v3848 = vpop.permute.xlu0 %3847
        %3849 = vrot.lane.b32.xlu0 %v2142, 32
        %v3850 = vpop.permute.xlu0 %3849
        %3851 = vrot.lane.b32.xlu0 %v2143, 32
        %v3852 = vpop.permute.xlu0 %3851
        %3853 = vrot.lane.b32.xlu0 %v2144, 32
        %v3854 = vpop.permute.xlu0 %3853
        %3855 = vrot.lane.b32.xlu0 %v2145, 32
        %v3856 = vpop.permute.xlu0 %3855
        %3857 = vrot.lane.b32.xlu0 %v2146, 32
        %v3858 = vpop.permute.xlu0 %3857
        %3859 = vrot.lane.b32.xlu0 %v2147, 32
        %v3860 = vpop.permute.xlu0 %3859
        %3861 = vrot.lane.b32.xlu0 %v2148, 32
        %v3862 = vpop.permute.xlu0 %3861
        %3863 = vrot.lane.b32.xlu0 %v2149, 32
        %v3864 = vpop.permute.xlu0 %3863
        %3865 = vrot.lane.b32.xlu0 %v2150, 32
        %v3866 = vpop.permute.xlu0 %3865
        %3867 = vrot.lane.b32.xlu0 %v2151, 32
        %v3868 = vpop.permute.xlu0 %3867
        %3869 = vrot.lane.b32.xlu0 %v2152, 32
        %v3870 = vpop.permute.xlu0 %3869
        %3871 = vrot.lane.b32.xlu0 %v2153, 32
        %v3872 = vpop.permute.xlu0 %3871
        %3873 = vrot.lane.b32.xlu0 %v2154, 32
        %v3874 = vpop.permute.xlu0 %3873
        %3875 = vrot.lane.b32.xlu0 %v2155, 32
        %v3876 = vpop.permute.xlu0 %3875
        %3877 = vrot.lane.b32.xlu0 %v2156, 32
        %v3878 = vpop.permute.xlu0 %3877
        %3879 = vrot.lane.b32.xlu0 %v2157, 32
        %v3880 = vpop.permute.xlu0 %3879
        %3881 = vrot.lane.b32.xlu0 %v2158, 32
        %v3882 = vpop.permute.xlu0 %3881
        %3883 = vrot.lane.b32.xlu0 %v2159, 32
        %v3884 = vpop.permute.xlu0 %3883
        %3885 = vrot.lane.b32.xlu0 %v2160, 32
        %v3886 = vpop.permute.xlu0 %3885
        %3887 = vrot.lane.b32.xlu0 %v2161, 32
        %v3888 = vpop.permute.xlu0 %3887
        %3889 = vrot.lane.b32.xlu0 %v2162, 32
        %v3890 = vpop.permute.xlu0 %3889
        %3891 = vrot.lane.b32.xlu0 %v2163, 32
        %v3892 = vpop.permute.xlu0 %3891
        %4085 = vrot.lane.b32.xlu0 %v2165, 64
        %v4086 = vpop.permute.xlu0 %4085
        %4087 = vrot.lane.b32.xlu0 %v2166, 64
        %v4088 = vpop.permute.xlu0 %4087
        %4089 = vrot.lane.b32.xlu0 %v2167, 64
        %v4090 = vpop.permute.xlu0 %4089
        %4091 = vrot.lane.b32.xlu0 %v2168, 64
        %v4092 = vpop.permute.xlu0 %4091
        %4093 = vrot.lane.b32.xlu0 %v2169, 64
        %v4094 = vpop.permute.xlu0 %4093
        %4095 = vrot.lane.b32.xlu0 %v2170, 64
        %v4096 = vpop.permute.xlu0 %4095
        %4097 = vrot.lane.b32.xlu0 %v2171, 64
        %v4098 = vpop.permute.xlu0 %4097
        %4099 = vrot.lane.b32.xlu0 %v2172, 64
        %v4100 = vpop.permute.xlu0 %4099
        %4101 = vrot.lane.b32.xlu0 %v2173, 64
        %v4102 = vpop.permute.xlu0 %4101
        %4103 = vrot.lane.b32.xlu0 %v2174, 64
        %v4104 = vpop.permute.xlu0 %4103
        %4105 = vrot.lane.b32.xlu0 %v2175, 64
        %v4106 = vpop.permute.xlu0 %4105
        %4107 = vrot.lane.b32.xlu0 %v2176, 64
        %v4108 = vpop.permute.xlu0 %4107
        %4109 = vrot.lane.b32.xlu0 %v2177, 64
        %v4110 = vpop.permute.xlu0 %4109
        %4111 = vrot.lane.b32.xlu0 %v2178, 64
        %v4112 = vpop.permute.xlu0 %4111
        %4113 = vrot.lane.b32.xlu0 %v2179, 64
        %v4114 = vpop.permute.xlu0 %4113
        %4115 = vrot.lane.b32.xlu0 %v2180, 64
        %v4116 = vpop.permute.xlu0 %4115
        %4117 = vrot.lane.b32.xlu0 %v2181, 64
        %v4118 = vpop.permute.xlu0 %4117
        %4119 = vrot.lane.b32.xlu0 %v2182, 64
        %v4120 = vpop.permute.xlu0 %4119
        %4121 = vrot.lane.b32.xlu0 %v2183, 64
        %v4122 = vpop.permute.xlu0 %4121
        %4123 = vrot.lane.b32.xlu0 %v2184, 64
        %v4124 = vpop.permute.xlu0 %4123
        %4125 = vrot.lane.b32.xlu0 %v2185, 64
        %v4126 = vpop.permute.xlu0 %4125
        %4127 = vrot.lane.b32.xlu0 %v2186, 64
        %v4128 = vpop.permute.xlu0 %4127
        %4129 = vrot.lane.b32.xlu0 %v2187, 64
        %v4130 = vpop.permute.xlu0 %4129
        %4131 = vrot.lane.b32.xlu0 %v2188, 64
        %v4132 = vpop.permute.xlu0 %4131
        %4133 = vrot.lane.b32.xlu0 %v2189, 64
        %v4134 = vpop.permute.xlu0 %4133
        %4135 = vrot.lane.b32.xlu0 %v2190, 64
        %v4136 = vpop.permute.xlu0 %4135
        %4137 = vrot.lane.b32.xlu0 %v2191, 64
        %v4138 = vpop.permute.xlu0 %4137
        %4139 = vrot.lane.b32.xlu0 %v2192, 64
        %v4140 = vpop.permute.xlu0 %4139
        %4141 = vrot.lane.b32.xlu0 %v2193, 64
        %v4142 = vpop.permute.xlu0 %4141
        %4143 = vrot.lane.b32.xlu0 %v2194, 64
        %v4144 = vpop.permute.xlu0 %4143
        %4145 = vrot.lane.b32.xlu0 %v2195, 64
        %v4146 = vpop.permute.xlu0 %4145
        %4147 = vrot.lane.b32.xlu0 %v2196, 64
        %v4148 = vpop.permute.xlu0 %4147
        %4149 = vrot.lane.b32.xlu0 %v2197, 64
        %v4150 = vpop.permute.xlu0 %4149
        %4151 = vrot.lane.b32.xlu0 %v2198, 64
        %v4152 = vpop.permute.xlu0 %4151
        %4153 = vrot.lane.b32.xlu0 %v2199, 64
        %v4154 = vpop.permute.xlu0 %4153
        %4155 = vrot.lane.b32.xlu0 %v2200, 64
        %v4156 = vpop.permute.xlu0 %4155
        %4157 = vrot.lane.b32.xlu0 %v2201, 64
        %v4158 = vpop.permute.xlu0 %4157
        %4159 = vrot.lane.b32.xlu0 %v2202, 64
        %v4160 = vpop.permute.xlu0 %4159
        %4161 = vrot.lane.b32.xlu0 %v2203, 64
        %v4162 = vpop.permute.xlu0 %4161
        %4163 = vrot.lane.b32.xlu0 %v2204, 64
        %v4164 = vpop.permute.xlu0 %4163
        %4165 = vrot.lane.b32.xlu0 %v2205, 64
        %v4166 = vpop.permute.xlu0 %4165
        %4167 = vrot.lane.b32.xlu0 %v2206, 64
        %v4168 = vpop.permute.xlu0 %4167
        %4169 = vrot.lane.b32.xlu0 %v2207, 64
        %v4170 = vpop.permute.xlu0 %4169
        %4171 = vrot.lane.b32.xlu0 %v2208, 64
        %v4172 = vpop.permute.xlu0 %4171
        %4173 = vrot.lane.b32.xlu0 %v2209, 64
        %v4174 = vpop.permute.xlu0 %4173
        %4175 = vrot.lane.b32.xlu0 %v2210, 64
        %v4176 = vpop.permute.xlu0 %4175
        %4177 = vrot.lane.b32.xlu0 %v2211, 64
        %v4178 = vpop.permute.xlu0 %4177
        %4179 = vrot.lane.b32.xlu0 %v2212, 64
        %v4180 = vpop.permute.xlu0 %4179
        %4181 = vrot.lane.b32.xlu0 %v2213, 64
        %v4182 = vpop.permute.xlu0 %4181
        %4183 = vrot.lane.b32.xlu0 %v2214, 64
        %v4184 = vpop.permute.xlu0 %4183
        %4185 = vrot.lane.b32.xlu0 %v2215, 64
        %v4186 = vpop.permute.xlu0 %4185
        %4187 = vrot.lane.b32.xlu0 %v2216, 64
        %v4188 = vpop.permute.xlu0 %4187
        %4189 = vrot.lane.b32.xlu0 %v2217, 64
        %v4190 = vpop.permute.xlu0 %4189
        %4191 = vrot.lane.b32.xlu0 %v2218, 64
        %v4192 = vpop.permute.xlu0 %4191
        %4193 = vrot.lane.b32.xlu0 %v2219, 64
        %v4194 = vpop.permute.xlu0 %4193
        %4195 = vrot.lane.b32.xlu0 %v2220, 64
        %v4196 = vpop.permute.xlu0 %4195
        %4197 = vrot.lane.b32.xlu0 %v2221, 64
        %v4198 = vpop.permute.xlu0 %4197
        %4199 = vrot.lane.b32.xlu0 %v2222, 64
        %v4200 = vpop.permute.xlu0 %4199
        %4201 = vrot.lane.b32.xlu0 %v2223, 64
        %v4202 = vpop.permute.xlu0 %4201
        %4203 = vrot.lane.b32.xlu0 %v2224, 64
        %v4204 = vpop.permute.xlu0 %4203
        %4205 = vrot.lane.b32.xlu0 %v2225, 64
        %v4206 = vpop.permute.xlu0 %4205
        %4207 = vrot.lane.b32.xlu0 %v2226, 64
        %v4208 = vpop.permute.xlu0 %4207
        %4209 = vrot.lane.b32.xlu0 %v2227, 64
        %v4210 = vpop.permute.xlu0 %4209
        %4211 = vrot.lane.b32.xlu0 %v2228, 64
        %v4212 = vpop.permute.xlu0 %4211
        %4213 = vrot.lane.b32.xlu0 %v2229, 64
        %v4214 = vpop.permute.xlu0 %4213
        %4215 = vrot.lane.b32.xlu0 %v2230, 64
        %v4216 = vpop.permute.xlu0 %4215
        %4217 = vrot.lane.b32.xlu0 %v2231, 64
        %v4218 = vpop.permute.xlu0 %4217
        %4219 = vrot.lane.b32.xlu0 %v2232, 64
        %v4220 = vpop.permute.xlu0 %4219
        %4221 = vrot.lane.b32.xlu0 %v2233, 64
        %v4222 = vpop.permute.xlu0 %4221
        %4223 = vrot.lane.b32.xlu0 %v2234, 64
        %v4224 = vpop.permute.xlu0 %4223
        %4225 = vrot.lane.b32.xlu0 %v2235, 64
        %v4226 = vpop.permute.xlu0 %4225
        %4227 = vrot.lane.b32.xlu0 %v2236, 64
        %v4228 = vpop.permute.xlu0 %4227
        %4229 = vrot.lane.b32.xlu0 %v2237, 64
        %v4230 = vpop.permute.xlu0 %4229
        %4231 = vrot.lane.b32.xlu0 %v2238, 64
        %v4232 = vpop.permute.xlu0 %4231
        %4233 = vrot.lane.b32.xlu0 %v2239, 64
        %v4234 = vpop.permute.xlu0 %4233
        %4235 = vrot.lane.b32.xlu0 %v2240, 64
        %v4236 = vpop.permute.xlu0 %4235
        %4237 = vrot.lane.b32.xlu0 %v2241, 64
        %v4238 = vpop.permute.xlu0 %4237
        %4239 = vrot.lane.b32.xlu0 %v2242, 64
        %v4240 = vpop.permute.xlu0 %4239
        %4241 = vrot.lane.b32.xlu0 %v2243, 64
        %v4242 = vpop.permute.xlu0 %4241
        %4243 = vrot.lane.b32.xlu0 %v2244, 64
        %v4244 = vpop.permute.xlu0 %4243
        %4245 = vrot.lane.b32.xlu0 %v2245, 64
        %v4246 = vpop.permute.xlu0 %4245
        %4247 = vrot.lane.b32.xlu0 %v2246, 64
        %v4248 = vpop.permute.xlu0 %4247
        %4249 = vrot.lane.b32.xlu0 %v2247, 64
        %v4250 = vpop.permute.xlu0 %4249
        %4251 = vrot.lane.b32.xlu0 %v2248, 64
        %v4252 = vpop.permute.xlu0 %4251
        %4253 = vrot.lane.b32.xlu0 %v2249, 64
        %v4254 = vpop.permute.xlu0 %4253
        %4255 = vrot.lane.b32.xlu0 %v2250, 64
        %v4256 = vpop.permute.xlu0 %4255
        %4257 = vrot.lane.b32.xlu0 %v2251, 64
        %v4258 = vpop.permute.xlu0 %4257
        %4259 = vrot.lane.b32.xlu0 %v2252, 64
        %v4260 = vpop.permute.xlu0 %4259
        %4261 = vrot.lane.b32.xlu0 %v2253, 64
        %v4262 = vpop.permute.xlu0 %4261
        %4263 = vrot.lane.b32.xlu0 %v2254, 64
        %v4264 = vpop.permute.xlu0 %4263
        %4265 = vrot.lane.b32.xlu0 %v2255, 64
        %v4266 = vpop.permute.xlu0 %4265
        %4267 = vrot.lane.b32.xlu0 %v2256, 64
        %v4268 = vpop.permute.xlu0 %4267
        %4269 = vrot.lane.b32.xlu0 %v2257, 64
        %v4270 = vpop.permute.xlu0 %4269
        %4271 = vrot.lane.b32.xlu0 %v2258, 64
        %v4272 = vpop.permute.xlu0 %4271
        %4273 = vrot.lane.b32.xlu0 %v2259, 64
        %v4274 = vpop.permute.xlu0 %4273
        %4275 = vrot.lane.b32.xlu0 %v2260, 64
        %v4276 = vpop.permute.xlu0 %4275
        %4469 = vrot.lane.b32.xlu0 %v2261, 96
        %v4470 = vpop.permute.xlu0 %4469
        %4471 = vrot.lane.b32.xlu0 %v2262, 96
        %v4472 = vpop.permute.xlu0 %4471
        %4473 = vrot.lane.b32.xlu0 %v2263, 96
        %v4474 = vpop.permute.xlu0 %4473
        %4475 = vrot.lane.b32.xlu0 %v2264, 96
        %v4476 = vpop.permute.xlu0 %4475
        %4477 = vrot.lane.b32.xlu0 %v2265, 96
        %v4478 = vpop.permute.xlu0 %4477
        %4479 = vrot.lane.b32.xlu0 %v2266, 96
        %v4480 = vpop.permute.xlu0 %4479
        %4481 = vrot.lane.b32.xlu0 %v2267, 96
        %v4482 = vpop.permute.xlu0 %4481
        %4483 = vrot.lane.b32.xlu0 %v2268, 96
        %v4484 = vpop.permute.xlu0 %4483
        %4485 = vrot.lane.b32.xlu0 %v2269, 96
        %v4486 = vpop.permute.xlu0 %4485
        %4487 = vrot.lane.b32.xlu0 %v2270, 96
        %v4488 = vpop.permute.xlu0 %4487
        %4489 = vrot.lane.b32.xlu0 %v2271, 96
        %v4490 = vpop.permute.xlu0 %4489
        %4491 = vrot.lane.b32.xlu0 %v2272, 96
        %v4492 = vpop.permute.xlu0 %4491
        %4493 = vrot.lane.b32.xlu0 %v2273, 96
        %v4494 = vpop.permute.xlu0 %4493
        %4495 = vrot.lane.b32.xlu0 %v2274, 96
        %v4496 = vpop.permute.xlu0 %4495
        %4497 = vrot.lane.b32.xlu0 %v2275, 96
        %v4498 = vpop.permute.xlu0 %4497
        %4499 = vrot.lane.b32.xlu0 %v2276, 96
        %v4500 = vpop.permute.xlu0 %4499
        %4501 = vrot.lane.b32.xlu0 %v2277, 96
        %v4502 = vpop.permute.xlu0 %4501
        %4503 = vrot.lane.b32.xlu0 %v2278, 96
        %v4504 = vpop.permute.xlu0 %4503
        %4505 = vrot.lane.b32.xlu0 %v2279, 96
        %v4506 = vpop.permute.xlu0 %4505
        %4507 = vrot.lane.b32.xlu0 %v2280, 96
        %v4508 = vpop.permute.xlu0 %4507
        %4509 = vrot.lane.b32.xlu0 %v2281, 96
        %v4510 = vpop.permute.xlu0 %4509
        %4511 = vrot.lane.b32.xlu0 %v2282, 96
        %v4512 = vpop.permute.xlu0 %4511
        %4513 = vrot.lane.b32.xlu0 %v2283, 96
        %v4514 = vpop.permute.xlu0 %4513
        %4515 = vrot.lane.b32.xlu0 %v2284, 96
        %v4516 = vpop.permute.xlu0 %4515
        %4517 = vrot.lane.b32.xlu0 %v2285, 96
        %v4518 = vpop.permute.xlu0 %4517
        %4519 = vrot.lane.b32.xlu0 %v2286, 96
        %v4520 = vpop.permute.xlu0 %4519
        %4521 = vrot.lane.b32.xlu0 %v2287, 96
        %v4522 = vpop.permute.xlu0 %4521
        %4523 = vrot.lane.b32.xlu0 %v2288, 96
        %v4524 = vpop.permute.xlu0 %4523
        %4525 = vrot.lane.b32.xlu0 %v2289, 96
        %v4526 = vpop.permute.xlu0 %4525
        %4527 = vrot.lane.b32.xlu0 %v2290, 96
        %v4528 = vpop.permute.xlu0 %4527
        %4529 = vrot.lane.b32.xlu0 %v2291, 96
        %v4530 = vpop.permute.xlu0 %4529
        %4531 = vrot.lane.b32.xlu0 %v2292, 96
        %v4532 = vpop.permute.xlu0 %4531
        %4533 = vrot.lane.b32.xlu0 %v2293, 96
        %v4534 = vpop.permute.xlu0 %4533
        %4535 = vrot.lane.b32.xlu0 %v2294, 96
        %v4536 = vpop.permute.xlu0 %4535
        %4537 = vrot.lane.b32.xlu0 %v2295, 96
        %v4538 = vpop.permute.xlu0 %4537
        %4539 = vrot.lane.b32.xlu0 %v2296, 96
        %v4540 = vpop.permute.xlu0 %4539
        %4541 = vrot.lane.b32.xlu0 %v2297, 96
        %v4542 = vpop.permute.xlu0 %4541
        %4543 = vrot.lane.b32.xlu0 %v2298, 96
        %v4544 = vpop.permute.xlu0 %4543
        %4545 = vrot.lane.b32.xlu0 %v2299, 96
        %v4546 = vpop.permute.xlu0 %4545
        %4547 = vrot.lane.b32.xlu0 %v2300, 96
        %v4548 = vpop.permute.xlu0 %4547
        %4549 = vrot.lane.b32.xlu0 %v2301, 96
        %v4550 = vpop.permute.xlu0 %4549
        %4551 = vrot.lane.b32.xlu0 %v2302, 96
        %v4552 = vpop.permute.xlu0 %4551
        %4553 = vrot.lane.b32.xlu0 %v2303, 96
        %v4554 = vpop.permute.xlu0 %4553
        %4555 = vrot.lane.b32.xlu0 %v2304, 96
        %v4556 = vpop.permute.xlu0 %4555
        %4557 = vrot.lane.b32.xlu0 %v2305, 96
        %v4558 = vpop.permute.xlu0 %4557
        %4559 = vrot.lane.b32.xlu0 %v2306, 96
        %v4560 = vpop.permute.xlu0 %4559
        %4561 = vrot.lane.b32.xlu0 %v2307, 96
        %v4562 = vpop.permute.xlu0 %4561
        %4563 = vrot.lane.b32.xlu0 %v2308, 96
        %v4564 = vpop.permute.xlu0 %4563
        %4565 = vrot.lane.b32.xlu0 %v2309, 96
        %v4566 = vpop.permute.xlu0 %4565
        %4567 = vrot.lane.b32.xlu0 %v2310, 96
        %v4568 = vpop.permute.xlu0 %4567
        %4569 = vrot.lane.b32.xlu0 %v2311, 96
        %v4570 = vpop.permute.xlu0 %4569
        %4571 = vrot.lane.b32.xlu0 %v2312, 96
        %v4572 = vpop.permute.xlu0 %4571
        %4573 = vrot.lane.b32.xlu0 %v2313, 96
        %v4574 = vpop.permute.xlu0 %4573
        %4575 = vrot.lane.b32.xlu0 %v2314, 96
        %v4576 = vpop.permute.xlu0 %4575
        %4577 = vrot.lane.b32.xlu0 %v2315, 96
        %v4578 = vpop.permute.xlu0 %4577
        %4579 = vrot.lane.b32.xlu0 %v2316, 96
        %v4580 = vpop.permute.xlu0 %4579
        %4581 = vrot.lane.b32.xlu0 %v2317, 96
        %v4582 = vpop.permute.xlu0 %4581
        %4583 = vrot.lane.b32.xlu0 %v2318, 96
        %v4584 = vpop.permute.xlu0 %4583
        %4585 = vrot.lane.b32.xlu0 %v2319, 96
        %v4586 = vpop.permute.xlu0 %4585
        %4587 = vrot.lane.b32.xlu0 %v2320, 96
        %v4588 = vpop.permute.xlu0 %4587
        %4589 = vrot.lane.b32.xlu0 %v2321, 96
        %v4590 = vpop.permute.xlu0 %4589
        %4591 = vrot.lane.b32.xlu0 %v2322, 96
        %v4592 = vpop.permute.xlu0 %4591
        %4593 = vrot.lane.b32.xlu0 %v2323, 96
        %v4594 = vpop.permute.xlu0 %4593
        %4595 = vrot.lane.b32.xlu0 %v2324, 96
        %v4596 = vpop.permute.xlu0 %4595
        %4597 = vrot.lane.b32.xlu0 %v2325, 96
        %v4598 = vpop.permute.xlu0 %4597
        %4599 = vrot.lane.b32.xlu0 %v2326, 96
        %v4600 = vpop.permute.xlu0 %4599
        %4601 = vrot.lane.b32.xlu0 %v2327, 96
        %v4602 = vpop.permute.xlu0 %4601
        %4603 = vrot.lane.b32.xlu0 %v2328, 96
        %v4604 = vpop.permute.xlu0 %4603
        %4605 = vrot.lane.b32.xlu0 %v2329, 96
        %v4606 = vpop.permute.xlu0 %4605
        %4607 = vrot.lane.b32.xlu0 %v2330, 96
        %v4608 = vpop.permute.xlu0 %4607
        %4609 = vrot.lane.b32.xlu0 %v2331, 96
        %v4610 = vpop.permute.xlu0 %4609
        %4611 = vrot.lane.b32.xlu0 %v2332, 96
        %v4612 = vpop.permute.xlu0 %4611
        %4613 = vrot.lane.b32.xlu0 %v2333, 96
        %v4614 = vpop.permute.xlu0 %4613
        %4615 = vrot.lane.b32.xlu0 %v2334, 96
        %v4616 = vpop.permute.xlu0 %4615
        %4617 = vrot.lane.b32.xlu0 %v2335, 96
        %v4618 = vpop.permute.xlu0 %4617
        %4619 = vrot.lane.b32.xlu0 %v2336, 96
        %v4620 = vpop.permute.xlu0 %4619
        %4621 = vrot.lane.b32.xlu0 %v2337, 96
        %v4622 = vpop.permute.xlu0 %4621
        %4623 = vrot.lane.b32.xlu0 %v2338, 96
        %v4624 = vpop.permute.xlu0 %4623
        %4625 = vrot.lane.b32.xlu0 %v2339, 96
        %v4626 = vpop.permute.xlu0 %4625
        %4627 = vrot.lane.b32.xlu0 %v2340, 96
        %v4628 = vpop.permute.xlu0 %4627
        %4629 = vrot.lane.b32.xlu0 %v2341, 96
        %v4630 = vpop.permute.xlu0 %4629
        %4631 = vrot.lane.b32.xlu0 %v2342, 96
        %v4632 = vpop.permute.xlu0 %4631
        %4633 = vrot.lane.b32.xlu0 %v2343, 96
        %v4634 = vpop.permute.xlu0 %4633
        %4635 = vrot.lane.b32.xlu0 %v2344, 96
        %v4636 = vpop.permute.xlu0 %4635
        %4637 = vrot.lane.b32.xlu0 %v2345, 96
        %v4638 = vpop.permute.xlu0 %4637
        %4639 = vrot.lane.b32.xlu0 %v2346, 96
        %v4640 = vpop.permute.xlu0 %4639
        %4641 = vrot.lane.b32.xlu0 %v2347, 96
        %v4642 = vpop.permute.xlu0 %4641
        %4643 = vrot.lane.b32.xlu0 %v2348, 96
        %v4644 = vpop.permute.xlu0 %4643
        %4645 = vrot.lane.b32.xlu0 %v2349, 96
        %v4646 = vpop.permute.xlu0 %4645
        %4647 = vrot.lane.b32.xlu0 %v2350, 96
        %v4648 = vpop.permute.xlu0 %4647
        %4649 = vrot.lane.b32.xlu0 %v2351, 96
        %v4650 = vpop.permute.xlu0 %4649
        %4651 = vrot.lane.b32.xlu0 %v2352, 96
        %v4652 = vpop.permute.xlu0 %4651
        %4653 = vrot.lane.b32.xlu0 %v2353, 96
        %v4654 = vpop.permute.xlu0 %4653
        %4655 = vrot.lane.b32.xlu0 %v2354, 96
        %v4656 = vpop.permute.xlu0 %4655
        %4657 = vrot.lane.b32.xlu0 %v2355, 96
        %v4658 = vpop.permute.xlu0 %4657
        %4659 = vrot.lane.b32.xlu0 %v2356, 96
        %v4660 = vpop.permute.xlu0 %4659
        %v4757 = vsel %vm1361, %v1588, %v2550
        %v4758 = vsel %vm1361, %v1589, %v2552
        %v4759 = vsel %vm1361, %v1590, %v2554
        %v4760 = vsel %vm1361, %v1591, %v2556
        %v4761 = vsel %vm1361, %v1592, %v2558
        %v4762 = vsel %vm1361, %v1593, %v2560
        %v4763 = vsel %vm1361, %v1594, %v2562
        %v4764 = vsel %vm1361, %v1595, %v2564
        %v4765 = vsel %vm1361, %v1596, %v2566
        %v4766 = vsel %vm1361, %v1597, %v2568
        %v4767 = vsel %vm1361, %v1598, %v2570
        %v4768 = vsel %vm1361, %v1599, %v2572
        %v4769 = vsel %vm1361, %v1600, %v2574
        %v4770 = vsel %vm1361, %v1601, %v2576
        %v4771 = vsel %vm1361, %v1602, %v2578
        %v4772 = vsel %vm1361, %v1603, %v2580
        %v4773 = vsel %vm1361, %v1604, %v2582
        %v4774 = vsel %vm1361, %v1605, %v2584
        %v4775 = vsel %vm1361, %v1606, %v2586
        %v4776 = vsel %vm1361, %v1607, %v2588
        %v4777 = vsel %vm1361, %v1608, %v2590
        %v4778 = vsel %vm1361, %v1609, %v2592
        %v4779 = vsel %vm1361, %v1610, %v2594
        %v4780 = vsel %vm1361, %v1611, %v2596
        %v4781 = vsel %vm1361, %v1612, %v2598
        %v4782 = vsel %vm1361, %v1613, %v2600
        %v4783 = vsel %vm1361, %v1614, %v2602
        %v4784 = vsel %vm1361, %v1615, %v2604
        %v4785 = vsel %vm1361, %v1616, %v2606
        %v4786 = vsel %vm1361, %v1617, %v2608
        %v4787 = vsel %vm1361, %v1618, %v2610
        %v4788 = vsel %vm1361, %v1619, %v2612
        %v4789 = vsel %vm1361, %v1620, %v2614
        %v4790 = vsel %vm1361, %v1621, %v2616
        %v4791 = vsel %vm1361, %v1622, %v2618
        %v4792 = vsel %vm1361, %v1623, %v2620
        %v4793 = vsel %vm1361, %v1624, %v2622
        %v4794 = vsel %vm1361, %v1625, %v2624
        %v4795 = vsel %vm1361, %v1626, %v2626
        %v4796 = vsel %vm1361, %v1627, %v2628
        %v4797 = vsel %vm1361, %v1628, %v2630
        %v4798 = vsel %vm1361, %v1629, %v2632
        %v4799 = vsel %vm1361, %v1630, %v2634
        %v4800 = vsel %vm1361, %v1631, %v2636
        %v4801 = vsel %vm1361, %v1632, %v2638
        %v4802 = vsel %vm1361, %v1633, %v2640
        %v4803 = vsel %vm1361, %v1634, %v2642
        %v4804 = vsel %vm1361, %v1635, %v2644
        %v4805 = vsel %vm1361, %v1636, %v2646
        %v4806 = vsel %vm1361, %v1637, %v2648
        %v4807 = vsel %vm1361, %v1638, %v2650
        %v4808 = vsel %vm1361, %v1639, %v2652
        %v4809 = vsel %vm1361, %v1640, %v2654
        %v4810 = vsel %vm1361, %v1641, %v2656
        %v4811 = vsel %vm1361, %v1642, %v2658
        %v4812 = vsel %vm1361, %v1643, %v2660
        %v4813 = vsel %vm1361, %v1644, %v2662
        %v4814 = vsel %vm1361, %v1645, %v2664
        %v4815 = vsel %vm1361, %v1646, %v2666
        %v4816 = vsel %vm1361, %v1647, %v2668
        %v4817 = vsel %vm1361, %v1648, %v2670
        %v4818 = vsel %vm1361, %v1649, %v2672
        %v4819 = vsel %vm1361, %v1650, %v2674
        %v4820 = vsel %vm1361, %v1651, %v2676
        %v4821 = vsel %vm1361, %v1652, %v2678
        %v4822 = vsel %vm1361, %v1653, %v2680
        %v4823 = vsel %vm1361, %v1654, %v2682
        %v4824 = vsel %vm1361, %v1655, %v2684
        %v4825 = vsel %vm1361, %v1656, %v2686
        %v4826 = vsel %vm1361, %v1657, %v2688
        %v4827 = vsel %vm1361, %v1658, %v2690
        %v4828 = vsel %vm1361, %v1659, %v2692
        %v4829 = vsel %vm1361, %v1660, %v2694
        %v4830 = vsel %vm1361, %v1661, %v2696
        %v4831 = vsel %vm1361, %v1662, %v2698
        %v4832 = vsel %vm1361, %v1663, %v2700
        %v4833 = vsel %vm1361, %v1664, %v2702
        %v4834 = vsel %vm1361, %v1665, %v2704
        %v4835 = vsel %vm1361, %v1666, %v2706
        %v4836 = vsel %vm1361, %v1667, %v2708
        %v4837 = vsel %vm1361, %v1668, %v2710
        %v4838 = vsel %vm1361, %v1669, %v2712
        %v4839 = vsel %vm1361, %v1670, %v2714
        %v4840 = vsel %vm1361, %v1671, %v2716
        %v4841 = vsel %vm1361, %v1672, %v2718
        %v4842 = vsel %vm1361, %v1673, %v2720
        %v4843 = vsel %vm1361, %v1674, %v2722
        %v4844 = vsel %vm1361, %v1675, %v2724
        %v4845 = vsel %vm1361, %v1676, %v2726
        %v4846 = vsel %vm1361, %v1677, %v2728
        %v4847 = vsel %vm1361, %v1678, %v2730
        %v4848 = vsel %vm1361, %v1679, %v2732
        %v4849 = vsel %vm1361, %v1680, %v2734
        %v4850 = vsel %vm1361, %v1681, %v2736
        %v4851 = vsel %vm1361, %v1682, %v2738
        %v4852 = vsel %vm1361, %v1683, %v2740
        %vm4853 = vcmask 523264
        %v4854 = vsel %vm4853, %v4757, %v2934
        %v4855 = vsel %vm4853, %v4758, %v2936
        %v4856 = vsel %vm4853, %v4759, %v2938
        %v4857 = vsel %vm4853, %v4760, %v2940
        %v4858 = vsel %vm4853, %v4761, %v2942
        %v4859 = vsel %vm4853, %v4762, %v2944
        %v4860 = vsel %vm4853, %v4763, %v2946
        %v4861 = vsel %vm4853, %v4764, %v2948
        %v4862 = vsel %vm4853, %v4765, %v2950
        %v4863 = vsel %vm4853, %v4766, %v2952
        %v4864 = vsel %vm4853, %v4767, %v2954
        %v4865 = vsel %vm4853, %v4768, %v2956
        %v4866 = vsel %vm4853, %v4769, %v2958
        %v4867 = vsel %vm4853, %v4770, %v2960
        %v4868 = vsel %vm4853, %v4771, %v2962
        %v4869 = vsel %vm4853, %v4772, %v2964
        %v4870 = vsel %vm4853, %v4773, %v2966
        %v4871 = vsel %vm4853, %v4774, %v2968
        %v4872 = vsel %vm4853, %v4775, %v2970
        %v4873 = vsel %vm4853, %v4776, %v2972
        %v4874 = vsel %vm4853, %v4777, %v2974
        %v4875 = vsel %vm4853, %v4778, %v2976
        %v4876 = vsel %vm4853, %v4779, %v2978
        %v4877 = vsel %vm4853, %v4780, %v2980
        %v4878 = vsel %vm4853, %v4781, %v2982
        %v4879 = vsel %vm4853, %v4782, %v2984
        %v4880 = vsel %vm4853, %v4783, %v2986
        %v4881 = vsel %vm4853, %v4784, %v2988
        %v4882 = vsel %vm4853, %v4785, %v2990
        %v4883 = vsel %vm4853, %v4786, %v2992
        %v4884 = vsel %vm4853, %v4787, %v2994
        %v4885 = vsel %vm4853, %v4788, %v2996
        %v4886 = vsel %vm4853, %v4789, %v2998
        %v4887 = vsel %vm4853, %v4790, %v3000
        %v4888 = vsel %vm4853, %v4791, %v3002
        %v4889 = vsel %vm4853, %v4792, %v3004
        %v4890 = vsel %vm4853, %v4793, %v3006
        %v4891 = vsel %vm4853, %v4794, %v3008
        %v4892 = vsel %vm4853, %v4795, %v3010
        %v4893 = vsel %vm4853, %v4796, %v3012
        %v4894 = vsel %vm4853, %v4797, %v3014
        %v4895 = vsel %vm4853, %v4798, %v3016
        %v4896 = vsel %vm4853, %v4799, %v3018
        %v4897 = vsel %vm4853, %v4800, %v3020
        %v4898 = vsel %vm4853, %v4801, %v3022
        %v4899 = vsel %vm4853, %v4802, %v3024
        %v4900 = vsel %vm4853, %v4803, %v3026
        %v4901 = vsel %vm4853, %v4804, %v3028
        %v4902 = vsel %vm4853, %v4805, %v3030
        %v4903 = vsel %vm4853, %v4806, %v3032
        %v4904 = vsel %vm4853, %v4807, %v3034
        %v4905 = vsel %vm4853, %v4808, %v3036
        %v4906 = vsel %vm4853, %v4809, %v3038
        %v4907 = vsel %vm4853, %v4810, %v3040
        %v4908 = vsel %vm4853, %v4811, %v3042
        %v4909 = vsel %vm4853, %v4812, %v3044
        %v4910 = vsel %vm4853, %v4813, %v3046
        %v4911 = vsel %vm4853, %v4814, %v3048
        %v4912 = vsel %vm4853, %v4815, %v3050
        %v4913 = vsel %vm4853, %v4816, %v3052
        %v4914 = vsel %vm4853, %v4817, %v3054
        %v4915 = vsel %vm4853, %v4818, %v3056
        %v4916 = vsel %vm4853, %v4819, %v3058
        %v4917 = vsel %vm4853, %v4820, %v3060
        %v4918 = vsel %vm4853, %v4821, %v3062
        %v4919 = vsel %vm4853, %v4822, %v3064
        %v4920 = vsel %vm4853, %v4823, %v3066
        %v4921 = vsel %vm4853, %v4824, %v3068
        %v4922 = vsel %vm4853, %v4825, %v3070
        %v4923 = vsel %vm4853, %v4826, %v3072
        %v4924 = vsel %vm4853, %v4827, %v3074
        %v4925 = vsel %vm4853, %v4828, %v3076
        %v4926 = vsel %vm4853, %v4829, %v3078
        %v4927 = vsel %vm4853, %v4830, %v3080
        %v4928 = vsel %vm4853, %v4831, %v3082
        %v4929 = vsel %vm4853, %v4832, %v3084
        %v4930 = vsel %vm4853, %v4833, %v3086
        %v4931 = vsel %vm4853, %v4834, %v3088
        %v4932 = vsel %vm4853, %v4835, %v3090
        %v4933 = vsel %vm4853, %v4836, %v3092
        %v4934 = vsel %vm4853, %v4837, %v3094
        %v4935 = vsel %vm4853, %v4838, %v3096
        %v4936 = vsel %vm4853, %v4839, %v3098
        %v4937 = vsel %vm4853, %v4840, %v3100
        %v4938 = vsel %vm4853, %v4841, %v3102
        %v4939 = vsel %vm4853, %v4842, %v3104
        %v4940 = vsel %vm4853, %v4843, %v3106
        %v4941 = vsel %vm4853, %v4844, %v3108
        %v4942 = vsel %vm4853, %v4845, %v3110
        %v4943 = vsel %vm4853, %v4846, %v3112
        %v4944 = vsel %vm4853, %v4847, %v3114
        %v4945 = vsel %vm4853, %v4848, %v3116
        %v4946 = vsel %vm4853, %v4849, %v3118
        %v4947 = vsel %vm4853, %v4850, %v3120
        %v4948 = vsel %vm4853, %v4851, %v3122
        %v4949 = vsel %vm4853, %v4852, %v3124
        %vm4950 = vcmask 785408
        %v4951 = vsel %vm4950, %v4854, %v3318
        %v4952 = vsel %vm4950, %v4855, %v3320
        %v4953 = vsel %vm4950, %v4856, %v3322
        %v4954 = vsel %vm4950, %v4857, %v3324
        %v4955 = vsel %vm4950, %v4858, %v3326
        %v4956 = vsel %vm4950, %v4859, %v3328
        %v4957 = vsel %vm4950, %v4860, %v3330
        %v4958 = vsel %vm4950, %v4861, %v3332
        %v4959 = vsel %vm4950, %v4862, %v3334
        %v4960 = vsel %vm4950, %v4863, %v3336
        %v4961 = vsel %vm4950, %v4864, %v3338
        %v4962 = vsel %vm4950, %v4865, %v3340
        %v4963 = vsel %vm4950, %v4866, %v3342
        %v4964 = vsel %vm4950, %v4867, %v3344
        %v4965 = vsel %vm4950, %v4868, %v3346
        %v4966 = vsel %vm4950, %v4869, %v3348
        %v4967 = vsel %vm4950, %v4870, %v3350
        %v4968 = vsel %vm4950, %v4871, %v3352
        %v4969 = vsel %vm4950, %v4872, %v3354
        %v4970 = vsel %vm4950, %v4873, %v3356
        %v4971 = vsel %vm4950, %v4874, %v3358
        %v4972 = vsel %vm4950, %v4875, %v3360
        %v4973 = vsel %vm4950, %v4876, %v3362
        %v4974 = vsel %vm4950, %v4877, %v3364
        %v4975 = vsel %vm4950, %v4878, %v3366
        %v4976 = vsel %vm4950, %v4879, %v3368
        %v4977 = vsel %vm4950, %v4880, %v3370
        %v4978 = vsel %vm4950, %v4881, %v3372
        %v4979 = vsel %vm4950, %v4882, %v3374
        %v4980 = vsel %vm4950, %v4883, %v3376
        %v4981 = vsel %vm4950, %v4884, %v3378
        %v4982 = vsel %vm4950, %v4885, %v3380
        %v4983 = vsel %vm4950, %v4886, %v3382
        %v4984 = vsel %vm4950, %v4887, %v3384
        %v4985 = vsel %vm4950, %v4888, %v3386
        %v4986 = vsel %vm4950, %v4889, %v3388
        %v4987 = vsel %vm4950, %v4890, %v3390
        %v4988 = vsel %vm4950, %v4891, %v3392
        %v4989 = vsel %vm4950, %v4892, %v3394
        %v4990 = vsel %vm4950, %v4893, %v3396
        %v4991 = vsel %vm4950, %v4894, %v3398
        %v4992 = vsel %vm4950, %v4895, %v3400
        %v4993 = vsel %vm4950, %v4896, %v3402
        %v4994 = vsel %vm4950, %v4897, %v3404
        %v4995 = vsel %vm4950, %v4898, %v3406
        %v4996 = vsel %vm4950, %v4899, %v3408
        %v4997 = vsel %vm4950, %v4900, %v3410
        %v4998 = vsel %vm4950, %v4901, %v3412
        %v4999 = vsel %vm4950, %v4902, %v3414
        %v5000 = vsel %vm4950, %v4903, %v3416
        %v5001 = vsel %vm4950, %v4904, %v3418
        %v5002 = vsel %vm4950, %v4905, %v3420
        %v5003 = vsel %vm4950, %v4906, %v3422
        %v5004 = vsel %vm4950, %v4907, %v3424
        %v5005 = vsel %vm4950, %v4908, %v3426
        %v5006 = vsel %vm4950, %v4909, %v3428
        %v5007 = vsel %vm4950, %v4910, %v3430
        %v5008 = vsel %vm4950, %v4911, %v3432
        %v5009 = vsel %vm4950, %v4912, %v3434
        %v5010 = vsel %vm4950, %v4913, %v3436
        %v5011 = vsel %vm4950, %v4914, %v3438
        %v5012 = vsel %vm4950, %v4915, %v3440
        %v5013 = vsel %vm4950, %v4916, %v3442
        %v5014 = vsel %vm4950, %v4917, %v3444
        %v5015 = vsel %vm4950, %v4918, %v3446
        %v5016 = vsel %vm4950, %v4919, %v3448
        %v5017 = vsel %vm4950, %v4920, %v3450
        %v5018 = vsel %vm4950, %v4921, %v3452
        %v5019 = vsel %vm4950, %v4922, %v3454
        %v5020 = vsel %vm4950, %v4923, %v3456
        %v5021 = vsel %vm4950, %v4924, %v3458
        %v5022 = vsel %vm4950, %v4925, %v3460
        %v5023 = vsel %vm4950, %v4926, %v3462
        %v5024 = vsel %vm4950, %v4927, %v3464
        %v5025 = vsel %vm4950, %v4928, %v3466
        %v5026 = vsel %vm4950, %v4929, %v3468
        %v5027 = vsel %vm4950, %v4930, %v3470
        %v5028 = vsel %vm4950, %v4931, %v3472
        %v5029 = vsel %vm4950, %v4932, %v3474
        %v5030 = vsel %vm4950, %v4933, %v3476
        %v5031 = vsel %vm4950, %v4934, %v3478
        %v5032 = vsel %vm4950, %v4935, %v3480
        %v5033 = vsel %vm4950, %v4936, %v3482
        %v5034 = vsel %vm4950, %v4937, %v3484
        %v5035 = vsel %vm4950, %v4938, %v3486
        %v5036 = vsel %vm4950, %v4939, %v3488
        %v5037 = vsel %vm4950, %v4940, %v3490
        %v5038 = vsel %vm4950, %v4941, %v3492
        %v5039 = vsel %vm4950, %v4942, %v3494
        %v5040 = vsel %vm4950, %v4943, %v3496
        %v5041 = vsel %vm4950, %v4944, %v3498
        %v5042 = vsel %vm4950, %v4945, %v3500
        %v5043 = vsel %vm4950, %v4946, %v3502
        %v5044 = vsel %vm4950, %v4947, %v3504
        %v5045 = vsel %vm4950, %v4948, %v3506
        %v5046 = vsel %vm4950, %v4949, %v3508
        %v5047 = vsel %vm1361, %v1972, %v3702
        %v5048 = vsel %vm1361, %v1973, %v3704
        %v5049 = vsel %vm1361, %v1974, %v3706
        %v5050 = vsel %vm1361, %v1975, %v3708
        %v5051 = vsel %vm1361, %v1976, %v3710
        %v5052 = vsel %vm1361, %v1977, %v3712
        %v5053 = vsel %vm1361, %v1978, %v3714
        %v5054 = vsel %vm1361, %v1979, %v3716
        %v5055 = vsel %vm1361, %v1980, %v3718
        %v5056 = vsel %vm1361, %v1981, %v3720
        %v5057 = vsel %vm1361, %v1982, %v3722
        %v5058 = vsel %vm1361, %v1983, %v3724
        %v5059 = vsel %vm1361, %v1984, %v3726
        %v5060 = vsel %vm1361, %v1985, %v3728
        %v5061 = vsel %vm1361, %v1986, %v3730
        %v5062 = vsel %vm1361, %v1987, %v3732
        %v5063 = vsel %vm1361, %v1988, %v3734
        %v5064 = vsel %vm1361, %v1989, %v3736
        %v5065 = vsel %vm1361, %v1990, %v3738
        %v5066 = vsel %vm1361, %v1991, %v3740
        %v5067 = vsel %vm1361, %v1992, %v3742
        %v5068 = vsel %vm1361, %v1993, %v3744
        %v5069 = vsel %vm1361, %v1994, %v3746
        %v5070 = vsel %vm1361, %v1995, %v3748
        %v5071 = vsel %vm1361, %v1996, %v3750
        %v5072 = vsel %vm1361, %v1997, %v3752
        %v5073 = vsel %vm1361, %v1998, %v3754
        %v5074 = vsel %vm1361, %v1999, %v3756
        %v5075 = vsel %vm1361, %v2000, %v3758
        %v5076 = vsel %vm1361, %v2001, %v3760
        %v5077 = vsel %vm1361, %v2002, %v3762
        %v5078 = vsel %vm1361, %v2003, %v3764
        %v5079 = vsel %vm1361, %v2004, %v3766
        %v5080 = vsel %vm1361, %v2005, %v3768
        %v5081 = vsel %vm1361, %v2006, %v3770
        %v5082 = vsel %vm1361, %v2007, %v3772
        %v5083 = vsel %vm1361, %v2008, %v3774
        %v5084 = vsel %vm1361, %v2009, %v3776
        %v5085 = vsel %vm1361, %v2010, %v3778
        %v5086 = vsel %vm1361, %v2011, %v3780
        %v5087 = vsel %vm1361, %v2012, %v3782
        %v5088 = vsel %vm1361, %v2013, %v3784
        %v5089 = vsel %vm1361, %v2014, %v3786
        %v5090 = vsel %vm1361, %v2015, %v3788
        %v5091 = vsel %vm1361, %v2016, %v3790
        %v5092 = vsel %vm1361, %v2017, %v3792
        %v5093 = vsel %vm1361, %v2018, %v3794
        %v5094 = vsel %vm1361, %v2019, %v3796
        %v5095 = vsel %vm1361, %v2020, %v3798
        %v5096 = vsel %vm1361, %v2021, %v3800
        %v5097 = vsel %vm1361, %v2022, %v3802
        %v5098 = vsel %vm1361, %v2023, %v3804
        %v5099 = vsel %vm1361, %v2024, %v3806
        %v5100 = vsel %vm1361, %v2025, %v3808
        %v5101 = vsel %vm1361, %v2026, %v3810
        %v5102 = vsel %vm1361, %v2027, %v3812
        %v5103 = vsel %vm1361, %v2028, %v3814
        %v5104 = vsel %vm1361, %v2029, %v3816
        %v5105 = vsel %vm1361, %v2030, %v3818
        %v5106 = vsel %vm1361, %v2031, %v3820
        %v5107 = vsel %vm1361, %v2032, %v3822
        %v5108 = vsel %vm1361, %v2033, %v3824
        %v5109 = vsel %vm1361, %v2034, %v3826
        %v5110 = vsel %vm1361, %v2035, %v3828
        %v5111 = vsel %vm1361, %v2036, %v3830
        %v5112 = vsel %vm1361, %v2037, %v3832
        %v5113 = vsel %vm1361, %v2038, %v3834
        %v5114 = vsel %vm1361, %v2039, %v3836
        %v5115 = vsel %vm1361, %v2040, %v3838
        %v5116 = vsel %vm1361, %v2041, %v3840
        %v5117 = vsel %vm1361, %v2042, %v3842
        %v5118 = vsel %vm1361, %v2043, %v3844
        %v5119 = vsel %vm1361, %v2044, %v3846
        %v5120 = vsel %vm1361, %v2045, %v3848
        %v5121 = vsel %vm1361, %v2046, %v3850
        %v5122 = vsel %vm1361, %v2047, %v3852
        %v5123 = vsel %vm1361, %v2048, %v3854
        %v5124 = vsel %vm1361, %v2049, %v3856
        %v5125 = vsel %vm1361, %v2050, %v3858
        %v5126 = vsel %vm1361, %v2051, %v3860
        %v5127 = vsel %vm1361, %v2052, %v3862
        %v5128 = vsel %vm1361, %v2053, %v3864
        %v5129 = vsel %vm1361, %v2054, %v3866
        %v5130 = vsel %vm1361, %v2055, %v3868
        %v5131 = vsel %vm1361, %v2056, %v3870
        %v5132 = vsel %vm1361, %v2057, %v3872
        %v5133 = vsel %vm1361, %v2058, %v3874
        %v5134 = vsel %vm1361, %v2059, %v3876
        %v5135 = vsel %vm1361, %v2060, %v3878
        %v5136 = vsel %vm1361, %v2061, %v3880
        %v5137 = vsel %vm1361, %v2062, %v3882
        %v5138 = vsel %vm1361, %v2063, %v3884
        %v5139 = vsel %vm1361, %v2064, %v3886
        %v5140 = vsel %vm1361, %v2065, %v3888
        %v5141 = vsel %vm1361, %v2066, %v3890
        %v5142 = vsel %vm1361, %v2067, %v3892
        %v5143 = vsel %vm4853, %v5047, %v4086
        %v5144 = vsel %vm4853, %v5048, %v4088
        %v5145 = vsel %vm4853, %v5049, %v4090
        %v5146 = vsel %vm4853, %v5050, %v4092
        %v5147 = vsel %vm4853, %v5051, %v4094
        %v5148 = vsel %vm4853, %v5052, %v4096
        %v5149 = vsel %vm4853, %v5053, %v4098
        %v5150 = vsel %vm4853, %v5054, %v4100
        %v5151 = vsel %vm4853, %v5055, %v4102
        %v5152 = vsel %vm4853, %v5056, %v4104
        %v5153 = vsel %vm4853, %v5057, %v4106
        %v5154 = vsel %vm4853, %v5058, %v4108
        %v5155 = vsel %vm4853, %v5059, %v4110
        %v5156 = vsel %vm4853, %v5060, %v4112
        %v5157 = vsel %vm4853, %v5061, %v4114
        %v5158 = vsel %vm4853, %v5062, %v4116
        %v5159 = vsel %vm4853, %v5063, %v4118
        %v5160 = vsel %vm4853, %v5064, %v4120
        %v5161 = vsel %vm4853, %v5065, %v4122
        %v5162 = vsel %vm4853, %v5066, %v4124
        %v5163 = vsel %vm4853, %v5067, %v4126
        %v5164 = vsel %vm4853, %v5068, %v4128
        %v5165 = vsel %vm4853, %v5069, %v4130
        %v5166 = vsel %vm4853, %v5070, %v4132
        %v5167 = vsel %vm4853, %v5071, %v4134
        %v5168 = vsel %vm4853, %v5072, %v4136
        %v5169 = vsel %vm4853, %v5073, %v4138
        %v5170 = vsel %vm4853, %v5074, %v4140
        %v5171 = vsel %vm4853, %v5075, %v4142
        %v5172 = vsel %vm4853, %v5076, %v4144
        %v5173 = vsel %vm4853, %v5077, %v4146
        %v5174 = vsel %vm4853, %v5078, %v4148
        %v5175 = vsel %vm4853, %v5079, %v4150
        %v5176 = vsel %vm4853, %v5080, %v4152
        %v5177 = vsel %vm4853, %v5081, %v4154
        %v5178 = vsel %vm4853, %v5082, %v4156
        %v5179 = vsel %vm4853, %v5083, %v4158
        %v5180 = vsel %vm4853, %v5084, %v4160
        %v5181 = vsel %vm4853, %v5085, %v4162
        %v5182 = vsel %vm4853, %v5086, %v4164
        %v5183 = vsel %vm4853, %v5087, %v4166
        %v5184 = vsel %vm4853, %v5088, %v4168
        %v5185 = vsel %vm4853, %v5089, %v4170
        %v5186 = vsel %vm4853, %v5090, %v4172
        %v5187 = vsel %vm4853, %v5091, %v4174
        %v5188 = vsel %vm4853, %v5092, %v4176
        %v5189 = vsel %vm4853, %v5093, %v4178
        %v5190 = vsel %vm4853, %v5094, %v4180
        %v5191 = vsel %vm4853, %v5095, %v4182
        %v5192 = vsel %vm4853, %v5096, %v4184
        %v5193 = vsel %vm4853, %v5097, %v4186
        %v5194 = vsel %vm4853, %v5098, %v4188
        %v5195 = vsel %vm4853, %v5099, %v4190
        %v5196 = vsel %vm4853, %v5100, %v4192
        %v5197 = vsel %vm4853, %v5101, %v4194
        %v5198 = vsel %vm4853, %v5102, %v4196
        %v5199 = vsel %vm4853, %v5103, %v4198
        %v5200 = vsel %vm4853, %v5104, %v4200
        %v5201 = vsel %vm4853, %v5105, %v4202
        %v5202 = vsel %vm4853, %v5106, %v4204
        %v5203 = vsel %vm4853, %v5107, %v4206
        %v5204 = vsel %vm4853, %v5108, %v4208
        %v5205 = vsel %vm4853, %v5109, %v4210
        %v5206 = vsel %vm4853, %v5110, %v4212
        %v5207 = vsel %vm4853, %v5111, %v4214
        %v5208 = vsel %vm4853, %v5112, %v4216
        %v5209 = vsel %vm4853, %v5113, %v4218
        %v5210 = vsel %vm4853, %v5114, %v4220
        %v5211 = vsel %vm4853, %v5115, %v4222
        %v5212 = vsel %vm4853, %v5116, %v4224
        %v5213 = vsel %vm4853, %v5117, %v4226
        %v5214 = vsel %vm4853, %v5118, %v4228
        %v5215 = vsel %vm4853, %v5119, %v4230
        %v5216 = vsel %vm4853, %v5120, %v4232
        %v5217 = vsel %vm4853, %v5121, %v4234
        %v5218 = vsel %vm4853, %v5122, %v4236
        %v5219 = vsel %vm4853, %v5123, %v4238
        %v5220 = vsel %vm4853, %v5124, %v4240
        %v5221 = vsel %vm4853, %v5125, %v4242
        %v5222 = vsel %vm4853, %v5126, %v4244
        %v5223 = vsel %vm4853, %v5127, %v4246
        %v5224 = vsel %vm4853, %v5128, %v4248
        %v5225 = vsel %vm4853, %v5129, %v4250
        %v5226 = vsel %vm4853, %v5130, %v4252
        %v5227 = vsel %vm4853, %v5131, %v4254
        %v5228 = vsel %vm4853, %v5132, %v4256
        %v5229 = vsel %vm4853, %v5133, %v4258
        %v5230 = vsel %vm4853, %v5134, %v4260
        %v5231 = vsel %vm4853, %v5135, %v4262
        %v5232 = vsel %vm4853, %v5136, %v4264
        %v5233 = vsel %vm4853, %v5137, %v4266
        %v5234 = vsel %vm4853, %v5138, %v4268
        %v5235 = vsel %vm4853, %v5139, %v4270
        %v5236 = vsel %vm4853, %v5140, %v4272
        %v5237 = vsel %vm4853, %v5141, %v4274
        %v5238 = vsel %vm4853, %v5142, %v4276
        %v5239 = vsel %vm4950, %v5143, %v4470
        %v5240 = vsel %vm4950, %v5144, %v4472
        %v5241 = vsel %vm4950, %v5145, %v4474
        %v5242 = vsel %vm4950, %v5146, %v4476
        %v5243 = vsel %vm4950, %v5147, %v4478
        %v5244 = vsel %vm4950, %v5148, %v4480
        %v5245 = vsel %vm4950, %v5149, %v4482
        %v5246 = vsel %vm4950, %v5150, %v4484
        %v5247 = vsel %vm4950, %v5151, %v4486
        %v5248 = vsel %vm4950, %v5152, %v4488
        %v5249 = vsel %vm4950, %v5153, %v4490
        %v5250 = vsel %vm4950, %v5154, %v4492
        %v5251 = vsel %vm4950, %v5155, %v4494
        %v5252 = vsel %vm4950, %v5156, %v4496
        %v5253 = vsel %vm4950, %v5157, %v4498
        %v5254 = vsel %vm4950, %v5158, %v4500
        %v5255 = vsel %vm4950, %v5159, %v4502
        %v5256 = vsel %vm4950, %v5160, %v4504
        %v5257 = vsel %vm4950, %v5161, %v4506
        %v5258 = vsel %vm4950, %v5162, %v4508
        %v5259 = vsel %vm4950, %v5163, %v4510
        %v5260 = vsel %vm4950, %v5164, %v4512
        %v5261 = vsel %vm4950, %v5165, %v4514
        %v5262 = vsel %vm4950, %v5166, %v4516
        %v5263 = vsel %vm4950, %v5167, %v4518
        %v5264 = vsel %vm4950, %v5168, %v4520
        %v5265 = vsel %vm4950, %v5169, %v4522
        %v5266 = vsel %vm4950, %v5170, %v4524
        %v5267 = vsel %vm4950, %v5171, %v4526
        %v5268 = vsel %vm4950, %v5172, %v4528
        %v5269 = vsel %vm4950, %v5173, %v4530
        %v5270 = vsel %vm4950, %v5174, %v4532
        %v5271 = vsel %vm4950, %v5175, %v4534
        %v5272 = vsel %vm4950, %v5176, %v4536
        %v5273 = vsel %vm4950, %v5177, %v4538
        %v5274 = vsel %vm4950, %v5178, %v4540
        %v5275 = vsel %vm4950, %v5179, %v4542
        %v5276 = vsel %vm4950, %v5180, %v4544
        %v5277 = vsel %vm4950, %v5181, %v4546
        %v5278 = vsel %vm4950, %v5182, %v4548
        %v5279 = vsel %vm4950, %v5183, %v4550
        %v5280 = vsel %vm4950, %v5184, %v4552
        %v5281 = vsel %vm4950, %v5185, %v4554
        %v5282 = vsel %vm4950, %v5186, %v4556
        %v5283 = vsel %vm4950, %v5187, %v4558
        %v5284 = vsel %vm4950, %v5188, %v4560
        %v5285 = vsel %vm4950, %v5189, %v4562
        %v5286 = vsel %vm4950, %v5190, %v4564
        %v5287 = vsel %vm4950, %v5191, %v4566
        %v5288 = vsel %vm4950, %v5192, %v4568
        %v5289 = vsel %vm4950, %v5193, %v4570
        %v5290 = vsel %vm4950, %v5194, %v4572
        %v5291 = vsel %vm4950, %v5195, %v4574
        %v5292 = vsel %vm4950, %v5196, %v4576
        %v5293 = vsel %vm4950, %v5197, %v4578
        %v5294 = vsel %vm4950, %v5198, %v4580
        %v5295 = vsel %vm4950, %v5199, %v4582
        %v5296 = vsel %vm4950, %v5200, %v4584
        %v5297 = vsel %vm4950, %v5201, %v4586
        %v5298 = vsel %vm4950, %v5202, %v4588
        %v5299 = vsel %vm4950, %v5203, %v4590
        %v5300 = vsel %vm4950, %v5204, %v4592
        %v5301 = vsel %vm4950, %v5205, %v4594
        %v5302 = vsel %vm4950, %v5206, %v4596
        %v5303 = vsel %vm4950, %v5207, %v4598
        %v5304 = vsel %vm4950, %v5208, %v4600
        %v5305 = vsel %vm4950, %v5209, %v4602
        %v5306 = vsel %vm4950, %v5210, %v4604
        %v5307 = vsel %vm4950, %v5211, %v4606
        %v5308 = vsel %vm4950, %v5212, %v4608
        %v5309 = vsel %vm4950, %v5213, %v4610
        %v5310 = vsel %vm4950, %v5214, %v4612
        %v5311 = vsel %vm4950, %v5215, %v4614
        %v5312 = vsel %vm4950, %v5216, %v4616
        %v5313 = vsel %vm4950, %v5217, %v4618
        %v5314 = vsel %vm4950, %v5218, %v4620
        %v5315 = vsel %vm4950, %v5219, %v4622
        %v5316 = vsel %vm4950, %v5220, %v4624
        %v5317 = vsel %vm4950, %v5221, %v4626
        %v5318 = vsel %vm4950, %v5222, %v4628
        %v5319 = vsel %vm4950, %v5223, %v4630
        %v5320 = vsel %vm4950, %v5224, %v4632
        %v5321 = vsel %vm4950, %v5225, %v4634
        %v5322 = vsel %vm4950, %v5226, %v4636
        %v5323 = vsel %vm4950, %v5227, %v4638
        %v5324 = vsel %vm4950, %v5228, %v4640
        %v5325 = vsel %vm4950, %v5229, %v4642
        %v5326 = vsel %vm4950, %v5230, %v4644
        %v5327 = vsel %vm4950, %v5231, %v4646
        %v5328 = vsel %vm4950, %v5232, %v4648
        %v5329 = vsel %vm4950, %v5233, %v4650
        %v5330 = vsel %vm4950, %v5234, %v4652
        %v5331 = vsel %vm4950, %v5235, %v4654
        %v5332 = vsel %vm4950, %v5236, %v4656
        %v5333 = vsel %vm4950, %v5237, %v4658
        %v5334 = vsel %vm4950, %v5238, %v4660
        %v5335 = vpack.c.bf16 %v4952, %v4951
        %v5336 = vpack.c.bf16 %v5240, %v5239
        %v5337 = vpack.c.bf16 %v2358, %v2357
        %v5338 = vpack.c.bf16 %v4954, %v4953
        %v5339 = vpack.c.bf16 %v5242, %v5241
        %v5340 = vpack.c.bf16 %v2360, %v2359
        %v5341 = vpack.c.bf16 %v4956, %v4955
        %v5342 = vpack.c.bf16 %v5244, %v5243
        %v5343 = vpack.c.bf16 %v2362, %v2361
        %v5344 = vpack.c.bf16 %v4958, %v4957
        %v5345 = vpack.c.bf16 %v5246, %v5245
        %v5346 = vpack.c.bf16 %v2364, %v2363
        %v5347 = vpack.c.bf16 %v4960, %v4959
        %v5348 = vpack.c.bf16 %v5248, %v5247
        %v5349 = vpack.c.bf16 %v2366, %v2365
        %v5350 = vpack.c.bf16 %v4962, %v4961
        %v5351 = vpack.c.bf16 %v5250, %v5249
        %v5352 = vpack.c.bf16 %v2368, %v2367
        %v5353 = vpack.c.bf16 %v4964, %v4963
        %v5354 = vpack.c.bf16 %v5252, %v5251
        %v5355 = vpack.c.bf16 %v2370, %v2369
        %v5356 = vpack.c.bf16 %v4966, %v4965
        %v5357 = vpack.c.bf16 %v5254, %v5253
        %v5358 = vpack.c.bf16 %v2372, %v2371
        %v5359 = vpack.c.bf16 %v4968, %v4967
        %v5360 = vpack.c.bf16 %v5256, %v5255
        %v5361 = vpack.c.bf16 %v2374, %v2373
        %v5362 = vpack.c.bf16 %v4970, %v4969
        %v5363 = vpack.c.bf16 %v5258, %v5257
        %v5364 = vpack.c.bf16 %v2376, %v2375
        %v5365 = vpack.c.bf16 %v4972, %v4971
        %v5366 = vpack.c.bf16 %v5260, %v5259
        %v5367 = vpack.c.bf16 %v2378, %v2377
        %v5368 = vpack.c.bf16 %v4974, %v4973
        %v5369 = vpack.c.bf16 %v5262, %v5261
        %v5370 = vpack.c.bf16 %v2380, %v2379
        %v5371 = vpack.c.bf16 %v4976, %v4975
        %v5372 = vpack.c.bf16 %v5264, %v5263
        %v5373 = vpack.c.bf16 %v2382, %v2381
        %v5374 = vpack.c.bf16 %v4978, %v4977
        %v5375 = vpack.c.bf16 %v5266, %v5265
        %v5376 = vpack.c.bf16 %v2384, %v2383
        %v5377 = vpack.c.bf16 %v4980, %v4979
        %v5378 = vpack.c.bf16 %v5268, %v5267
        %v5379 = vpack.c.bf16 %v2386, %v2385
        %v5380 = vpack.c.bf16 %v4982, %v4981
        %v5381 = vpack.c.bf16 %v5270, %v5269
        %v5382 = vpack.c.bf16 %v2388, %v2387
        %v5383 = vpack.c.bf16 %v4984, %v4983
        %v5384 = vpack.c.bf16 %v5272, %v5271
        %v5385 = vpack.c.bf16 %v2390, %v2389
        %v5386 = vpack.c.bf16 %v4986, %v4985
        %v5387 = vpack.c.bf16 %v5274, %v5273
        %v5388 = vpack.c.bf16 %v2392, %v2391
        %v5389 = vpack.c.bf16 %v4988, %v4987
        %v5390 = vpack.c.bf16 %v5276, %v5275
        %v5391 = vpack.c.bf16 %v2394, %v2393
        %v5392 = vpack.c.bf16 %v4990, %v4989
        %v5393 = vpack.c.bf16 %v5278, %v5277
        %v5394 = vpack.c.bf16 %v2396, %v2395
        %v5395 = vpack.c.bf16 %v4992, %v4991
        %v5396 = vpack.c.bf16 %v5280, %v5279
        %v5397 = vpack.c.bf16 %v2398, %v2397
        %v5398 = vpack.c.bf16 %v4994, %v4993
        %v5399 = vpack.c.bf16 %v5282, %v5281
        %v5400 = vpack.c.bf16 %v2400, %v2399
        %v5401 = vpack.c.bf16 %v4996, %v4995
        %v5402 = vpack.c.bf16 %v5284, %v5283
        %v5403 = vpack.c.bf16 %v2402, %v2401
        %v5404 = vpack.c.bf16 %v4998, %v4997
        %v5405 = vpack.c.bf16 %v5286, %v5285
        %v5406 = vpack.c.bf16 %v2404, %v2403
        %v5407 = vpack.c.bf16 %v5000, %v4999
        %v5408 = vpack.c.bf16 %v5288, %v5287
        %v5409 = vpack.c.bf16 %v2406, %v2405
        %v5410 = vpack.c.bf16 %v5002, %v5001
        %v5411 = vpack.c.bf16 %v5290, %v5289
        %v5412 = vpack.c.bf16 %v2408, %v2407
        %v5413 = vpack.c.bf16 %v5004, %v5003
        %v5414 = vpack.c.bf16 %v5292, %v5291
        %v5415 = vpack.c.bf16 %v2410, %v2409
        %v5416 = vpack.c.bf16 %v5006, %v5005
        %v5417 = vpack.c.bf16 %v5294, %v5293
        %v5418 = vpack.c.bf16 %v2412, %v2411
        %v5419 = vpack.c.bf16 %v5008, %v5007
        %v5420 = vpack.c.bf16 %v5296, %v5295
        %v5421 = vpack.c.bf16 %v2414, %v2413
        %v5422 = vpack.c.bf16 %v5010, %v5009
        %v5423 = vpack.c.bf16 %v5298, %v5297
        %v5424 = vpack.c.bf16 %v2416, %v2415
        %v5425 = vpack.c.bf16 %v5012, %v5011
        %v5426 = vpack.c.bf16 %v5300, %v5299
        %v5427 = vpack.c.bf16 %v2418, %v2417
        %v5428 = vpack.c.bf16 %v5014, %v5013
        %v5429 = vpack.c.bf16 %v5302, %v5301
        %v5430 = vpack.c.bf16 %v2420, %v2419
        %v5431 = vpack.c.bf16 %v5016, %v5015
        %v5432 = vpack.c.bf16 %v5304, %v5303
        %v5433 = vpack.c.bf16 %v2422, %v2421
        %v5434 = vpack.c.bf16 %v5018, %v5017
        %v5435 = vpack.c.bf16 %v5306, %v5305
        %v5436 = vpack.c.bf16 %v2424, %v2423
        %v5437 = vpack.c.bf16 %v5020, %v5019
        %v5438 = vpack.c.bf16 %v5308, %v5307
        %v5439 = vpack.c.bf16 %v2426, %v2425
        %v5440 = vpack.c.bf16 %v5022, %v5021
        %v5441 = vpack.c.bf16 %v5310, %v5309
        %v5442 = vpack.c.bf16 %v2428, %v2427
        %v5443 = vpack.c.bf16 %v5024, %v5023
        %v5444 = vpack.c.bf16 %v5312, %v5311
        %v5445 = vpack.c.bf16 %v2430, %v2429
        %v5446 = vpack.c.bf16 %v5026, %v5025
        %v5447 = vpack.c.bf16 %v5314, %v5313
        %v5448 = vpack.c.bf16 %v2432, %v2431
        %v5449 = vpack.c.bf16 %v5028, %v5027
        %v5450 = vpack.c.bf16 %v5316, %v5315
        %v5451 = vpack.c.bf16 %v2434, %v2433
        %v5452 = vpack.c.bf16 %v5030, %v5029
        %v5453 = vpack.c.bf16 %v5318, %v5317
        %v5454 = vpack.c.bf16 %v2436, %v2435
        %v5455 = vpack.c.bf16 %v5032, %v5031
        %v5456 = vpack.c.bf16 %v5320, %v5319
        %v5457 = vpack.c.bf16 %v2438, %v2437
        %v5458 = vpack.c.bf16 %v5034, %v5033
        %v5459 = vpack.c.bf16 %v5322, %v5321
        %v5460 = vpack.c.bf16 %v2440, %v2439
        %v5461 = vpack.c.bf16 %v5036, %v5035
        %v5462 = vpack.c.bf16 %v5324, %v5323
        %v5463 = vpack.c.bf16 %v2442, %v2441
        %v5464 = vpack.c.bf16 %v5038, %v5037
        %v5465 = vpack.c.bf16 %v5326, %v5325
        %v5466 = vpack.c.bf16 %v2444, %v2443
        %v5467 = vpack.c.bf16 %v5040, %v5039
        %v5468 = vpack.c.bf16 %v5328, %v5327
        %v5469 = vpack.c.bf16 %v2446, %v2445
        %v5470 = vpack.c.bf16 %v5042, %v5041
        %v5471 = vpack.c.bf16 %v5330, %v5329
        %v5472 = vpack.c.bf16 %v2448, %v2447
        %v5473 = vpack.c.bf16 %v5044, %v5043
        %v5474 = vpack.c.bf16 %v5332, %v5331
        %v5475 = vpack.c.bf16 %v2450, %v2449
        %v5476 = vpack.c.bf16 %v5046, %v5045
        %v5477 = vpack.c.bf16 %v5334, %v5333
        %v5478 = vpack.c.bf16 %v2452, %v2451
        %v5479 = vld [vmem:[%s3] sm:$0xf]
        %v5480 = vld [vmem:[%s3 + $0x4] sm:$0xf]
        %v5481 = vld [vmem:[%s3 + $0x8] sm:$0xf]
        %v5482 = vld [vmem:[%s3 + $0xc] sm:$0xf]
        %v5483 = vld [vmem:[%s3 + $0x10] sm:$0xf]
        %v5484 = vld [vmem:[%s3 + $0x14] sm:$0xf]
        %v5485 = vld [vmem:[%s3 + $0x18] sm:$0xf]
        %v5486 = vld [vmem:[%s3 + $0x1c] sm:$0xf]
        %v5487 = vld [vmem:[%s3 + $0x20] sm:$0xf]
        %v5488 = vld [vmem:[%s3 + $0x24] sm:$0xf]
        %v5489 = vld [vmem:[%s3 + $0x28] sm:$0xf]
        %v5490 = vld [vmem:[%s3 + $0x2c] sm:$0xf]
        %v5491 = vld [vmem:[%s3 + $0x30] sm:$0xf]
        %v5492 = vld [vmem:[%s3 + $0x34] sm:$0xf]
        %v5493 = vld [vmem:[%s3 + $0x38] sm:$0xf]
        %v5494 = vld [vmem:[%s3 + $0x3c] sm:$0xf]
        %v5495 = vld [vmem:[%s3 + $0x40] sm:$0xf]
        %v5496 = vld [vmem:[%s3 + $0x44] sm:$0xf]
        %v5497 = vld [vmem:[%s3 + $0x48] sm:$0xf]
        %v5498 = vld [vmem:[%s3 + $0x4c] sm:$0xf]
        %v5499 = vld [vmem:[%s3 + $0x50] sm:$0xf]
        %v5500 = vld [vmem:[%s3 + $0x54] sm:$0xf]
        %v5501 = vld [vmem:[%s3 + $0x58] sm:$0xf]
        %v5502 = vld [vmem:[%s3 + $0x5c] sm:$0xf]
        %v5503 = vld [vmem:[%s3 + $0x60] sm:$0xf]
        %v5504 = vld [vmem:[%s3 + $0x64] sm:$0xf]
        %v5505 = vld [vmem:[%s3 + $0x68] sm:$0xf]
        %v5506 = vld [vmem:[%s3 + $0x6c] sm:$0xf]
        %v5507 = vld [vmem:[%s3 + $0x70] sm:$0xf]
        %v5508 = vld [vmem:[%s3 + $0x74] sm:$0xf]
        %v5509 = vld [vmem:[%s3 + $0x78] sm:$0xf]
        %v5510 = vld [vmem:[%s3 + $0x7c] sm:$0xf]
        %v5511 = vld [vmem:[%s3 + $0x80] sm:$0xf]
        %v5512 = vld [vmem:[%s3 + $0x84] sm:$0xf]
        %v5513 = vld [vmem:[%s3 + $0x88] sm:$0xf]
        %v5514 = vld [vmem:[%s3 + $0x8c] sm:$0xf]
        %v5515 = vld [vmem:[%s4] sm:$0x1]
        %v5517 = vlaneseq
        %v5518 = vshrl.u32 %v5517, 7
        %v5519 = vsub.s32 0, %v5518
        %v5520 = vrot.slane %v5515, %v5519
        %v5558 = vunpack.c.l.b16 %v5479
        %v5559 = vunpack.c.l.b16 %v5480
        %v5560 = vunpack.c.l.b16 %v5481
        %v5561 = vunpack.c.l.b16 %v5482
        %v5562 = vunpack.c.l.b16 %v5483
        %v5563 = vunpack.c.l.b16 %v5484
        %v5564 = vunpack.c.l.b16 %v5485
        %v5565 = vunpack.c.l.b16 %v5486
        %v5566 = vunpack.c.l.b16 %v5487
        %v5567 = vunpack.c.l.b16 %v5488
        %v5568 = vunpack.c.l.b16 %v5489
        %v5569 = vunpack.c.l.b16 %v5490
        %v5570 = vunpack.c.l.b16 %v5491
        %v5571 = vunpack.c.l.b16 %v5492
        %v5572 = vunpack.c.l.b16 %v5493
        %v5573 = vunpack.c.l.b16 %v5494
        %v5574 = vunpack.c.l.b16 %v5495
        %v5575 = vunpack.c.l.b16 %v5496
        %v5576 = vunpack.c.l.b16 %v5497
        %v5577 = vunpack.c.l.b16 %v5498
        %v5578 = vunpack.c.l.b16 %v5499
        %v5579 = vunpack.c.l.b16 %v5500
        %v5580 = vunpack.c.l.b16 %v5501
        %v5581 = vunpack.c.l.b16 %v5502
        %v5582 = vunpack.c.l.b16 %v5503
        %v5583 = vunpack.c.l.b16 %v5504
        %v5584 = vunpack.c.l.b16 %v5505
        %v5585 = vunpack.c.l.b16 %v5506
        %v5586 = vunpack.c.l.b16 %v5507
        %v5587 = vunpack.c.l.b16 %v5508
        %v5588 = vunpack.c.l.b16 %v5509
        %v5589 = vunpack.c.l.b16 %v5510
        %v5590 = vunpack.c.l.b16 %v5511
        %v5591 = vunpack.c.l.b16 %v5512
        %v5592 = vunpack.c.l.b16 %v5513
        %v5593 = vunpack.c.l.b16 %v5514
        %v5594 = vpack.c.b16 %v5559, %v5558
        %v5595 = vpack.c.b16 %v5561, %v5560
        %v5596 = vpack.c.b16 %v5563, %v5562
        %v5597 = vpack.c.b16 %v5565, %v5564
        %v5598 = vpack.c.b16 %v5567, %v5566
        %v5599 = vpack.c.b16 %v5569, %v5568
        %v5600 = vpack.c.b16 %v5571, %v5570
        %v5601 = vpack.c.b16 %v5573, %v5572
        %v5602 = vpack.c.b16 %v5575, %v5574
        %v5603 = vpack.c.b16 %v5577, %v5576
        %v5604 = vpack.c.b16 %v5579, %v5578
        %v5605 = vpack.c.b16 %v5581, %v5580
        %v5606 = vpack.c.b16 %v5583, %v5582
        %v5607 = vpack.c.b16 %v5585, %v5584
        %v5608 = vpack.c.b16 %v5587, %v5586
        %v5609 = vpack.c.b16 %v5589, %v5588
        %v5610 = vpack.c.b16 %v5591, %v5590
        %v5611 = vpack.c.b16 %v5593, %v5592
        %v5631 = vsel %vm1361, %v5337, 0
        %v5634 = vsel %vm1361, %v5340, 0
        %v5637 = vsel %vm1361, %v5343, 0
        %v5640 = vsel %vm1361, %v5346, 0
        %v5643 = vsel %vm1361, %v5349, 0
        %v5646 = vsel %vm1361, %v5352, 0
        %v5649 = vsel %vm1361, %v5355, 0
        %v5652 = vsel %vm1361, %v5358, 0
        %v5655 = vsel %vm1361, %v5361, 0
        %v5658 = vsel %vm1361, %v5364, 0
        %v5661 = vsel %vm1361, %v5367, 0
        %v5664 = vsel %vm1361, %v5370, 0
        %v5667 = vsel %vm1361, %v5373, 0
        %v5670 = vsel %vm1361, %v5376, 0
        %v5673 = vsel %vm1361, %v5379, 0
        %v5676 = vsel %vm1361, %v5382, 0
        %v5679 = vsel %vm1361, %v5385, 0
        %v5682 = vsel %vm1361, %v5388, 0
        %v5685 = vsel %vm1361, %v5391, 0
        %v5688 = vsel %vm1361, %v5394, 0
        %v5691 = vsel %vm1361, %v5397, 0
        %v5694 = vsel %vm1361, %v5400, 0
        %v5697 = vsel %vm1361, %v5403, 0
        %v5700 = vsel %vm1361, %v5406, 0
        %v5703 = vsel %vm1361, %v5409, 0
        %v5706 = vsel %vm1361, %v5412, 0
        %v5709 = vsel %vm1361, %v5415, 0
        %v5712 = vsel %vm1361, %v5418, 0
        %v5715 = vsel %vm1361, %v5421, 0
        %v5718 = vsel %vm1361, %v5424, 0
        %v5721 = vsel %vm1361, %v5427, 0
        %v5724 = vsel %vm1361, %v5430, 0
        %v5727 = vsel %vm1361, %v5433, 0
        %v5730 = vsel %vm1361, %v5436, 0
        %v5733 = vsel %vm1361, %v5439, 0
        %v5736 = vsel %vm1361, %v5442, 0
        %v5739 = vsel %vm1361, %v5445, 0
        %v5742 = vsel %vm1361, %v5448, 0
        %v5745 = vsel %vm1361, %v5451, 0
        %v5748 = vsel %vm1361, %v5454, 0
        %v5751 = vsel %vm1361, %v5457, 0
        %v5754 = vsel %vm1361, %v5460, 0
        %v5757 = vsel %vm1361, %v5463, 0
        %v5760 = vsel %vm1361, %v5466, 0
        %v5763 = vsel %vm1361, %v5469, 0
        %v5766 = vsel %vm1361, %v5472, 0
        %v5769 = vsel %vm1361, %v5475, 0
        %v5772 = vsel %vm1361, %v5478, 0
        %5774 = vmatprep.subr.bf16.mxu0 0
        %5775 = vmatpush1.bf16.msra.mxu0 %v5601
        %5776 = vmatprep.subr.bf16.mxu0 0
        %5777 = vmatpush1.bf16.msra.mxu0 %v5600
        %5778 = vmatprep.subr.bf16.mxu0 0
        %5779 = vmatpush1.bf16.msra.mxu0 %v5599
        %5780 = vmatprep.subr.bf16.mxu0 0
        %5781 = vmatpush1.bf16.msra.mxu0 %v5598
        %5782 = vmatprep.subr.bf16.mxu0 0
        %5783 = vmatpush1.bf16.msra.mxu0 %v5597
        %5784 = vmatprep.subr.bf16.mxu0 0
        %5785 = vmatpush1.bf16.msra.mxu0 %v5596
        %5786 = vmatprep.subr.bf16.mxu0 0
        %5787 = vmatpush1.bf16.msra.mxu0 %v5595
        %5788 = vmatprep.subr.bf16.mxu0 0
        %5789 = vmatpush1.bf16.msra.mxu0 %v5594
        %5790 = vmatprep.subr.bf16.mxu0 0
        %5791 = vmatpush2.bf16.msra.mxu0 %v5609
        %5792 = vmatprep.subr.bf16.mxu0 0
        %5793 = vmatpush2.bf16.msra.mxu0 %v5608
        %5794 = vmatprep.subr.bf16.mxu0 0
        %5795 = vmatpush2.bf16.msra.mxu0 %v5607
        %5796 = vmatprep.subr.bf16.mxu0 0
        %5797 = vmatpush2.bf16.msra.mxu0 %v5606
        %5798 = vmatprep.subr.bf16.mxu0 0
        %5799 = vmatpush2.bf16.msra.mxu0 %v5605
        %5800 = vmatprep.subr.bf16.mxu0 0
        %5801 = vmatpush2.bf16.msra.mxu0 %v5604
        %5802 = vmatprep.subr.bf16.mxu0 0
        %5803 = vmatpush2.bf16.msra.mxu0 %v5603
        %5804 = vmatprep.subr.bf16.mxu0 0
        %5805 = vmatpush2.bf16.msra.mxu0 %v5602
        %5806 = vmatprep.mubr.bf16.mxu0 %v5336
        %5807 = vmatmul.mubr.bf16.gmra.mxu0 %v5335
        %v5808 = vpop.f32.mrf.mxu0
        %v5809 = vadd.f32 %v5520, %v5808
        %v5810 = vpop.f32.mrf.mxu0
        %v5811 = vpop.f32.mrf.mxu0
        %v5812 = vadd.f32 %v5520, %v5811
        %v5813 = vpop.f32.mrf.mxu0
        %5814 = vmatprep.mubr.bf16.mxu0 %v5339
        %5815 = vmatmul.mubr.bf16.gmra.mxu0 %v5338
        %v5816 = vpop.f32.mrf.mxu0
        %v5817 = vadd.f32 %v5520, %v5816
        %v5818 = vpop.f32.mrf.mxu0
        %v5819 = vpop.f32.mrf.mxu0
        %v5820 = vadd.f32 %v5520, %v5819
        %v5821 = vpop.f32.mrf.mxu0
        %5822 = vmatprep.mubr.bf16.mxu0 %v5342
        %5823 = vmatmul.mubr.bf16.gmra.mxu0 %v5341
        %v5824 = vpop.f32.mrf.mxu0
        %v5825 = vadd.f32 %v5520, %v5824
        %v5826 = vpop.f32.mrf.mxu0
        %v5827 = vpop.f32.mrf.mxu0
        %v5828 = vadd.f32 %v5520, %v5827
        %v5829 = vpop.f32.mrf.mxu0
        %5830 = vmatprep.mubr.bf16.mxu0 %v5345
        %5831 = vmatmul.mubr.bf16.gmra.mxu0 %v5344
        %v5832 = vpop.f32.mrf.mxu0
        %v5833 = vadd.f32 %v5520, %v5832
        %v5834 = vpop.f32.mrf.mxu0
        %v5835 = vpop.f32.mrf.mxu0
        %v5836 = vadd.f32 %v5520, %v5835
        %v5837 = vpop.f32.mrf.mxu0
        %5838 = vmatprep.mubr.bf16.mxu0 %v5348
        %5839 = vmatmul.mubr.bf16.gmra.mxu0 %v5347
        %v5840 = vpop.f32.mrf.mxu0
        %v5841 = vadd.f32 %v5520, %v5840
        %v5842 = vpop.f32.mrf.mxu0
        %v5843 = vpop.f32.mrf.mxu0
        %v5844 = vadd.f32 %v5520, %v5843
        %v5845 = vpop.f32.mrf.mxu0
        %5846 = vmatprep.mubr.bf16.mxu0 %v5351
        %5847 = vmatmul.mubr.bf16.gmra.mxu0 %v5350
        %v5848 = vpop.f32.mrf.mxu0
        %v5849 = vadd.f32 %v5520, %v5848
        %v5850 = vpop.f32.mrf.mxu0
        %v5851 = vpop.f32.mrf.mxu0
        %v5852 = vadd.f32 %v5520, %v5851
        %v5853 = vpop.f32.mrf.mxu0
        %5854 = vmatprep.mubr.bf16.mxu0 %v5354
        %5855 = vmatmul.mubr.bf16.gmra.mxu0 %v5353
        %v5856 = vpop.f32.mrf.mxu0
        %v5857 = vadd.f32 %v5520, %v5856
        %v5858 = vpop.f32.mrf.mxu0
        %v5859 = vpop.f32.mrf.mxu0
        %v5860 = vadd.f32 %v5520, %v5859
        %v5861 = vpop.f32.mrf.mxu0
        %5862 = vmatprep.mubr.bf16.mxu0 %v5357
        %5863 = vmatmul.mubr.bf16.gmra.mxu0 %v5356
        %v5864 = vpop.f32.mrf.mxu0
        %v5865 = vadd.f32 %v5520, %v5864
        %v5866 = vpop.f32.mrf.mxu0
        %v5867 = vpop.f32.mrf.mxu0
        %v5868 = vadd.f32 %v5520, %v5867
        %v5869 = vpop.f32.mrf.mxu0
        %5870 = vmatprep.mubr.bf16.mxu0 %v5360
        %5871 = vmatmul.mubr.bf16.gmra.mxu0 %v5359
        %v5872 = vpop.f32.mrf.mxu0
        %v5873 = vadd.f32 %v5520, %v5872
        %v5874 = vpop.f32.mrf.mxu0
        %v5875 = vpop.f32.mrf.mxu0
        %v5876 = vadd.f32 %v5520, %v5875
        %v5877 = vpop.f32.mrf.mxu0
        %5878 = vmatprep.mubr.bf16.mxu0 %v5363
        %5879 = vmatmul.mubr.bf16.gmra.mxu0 %v5362
        %v5880 = vpop.f32.mrf.mxu0
        %v5881 = vadd.f32 %v5520, %v5880
        %v5882 = vpop.f32.mrf.mxu0
        %v5883 = vpop.f32.mrf.mxu0
        %v5884 = vadd.f32 %v5520, %v5883
        %v5885 = vpop.f32.mrf.mxu0
        %5886 = vmatprep.mubr.bf16.mxu0 %v5366
        %5887 = vmatmul.mubr.bf16.gmra.mxu0 %v5365
        %v5888 = vpop.f32.mrf.mxu0
        %v5889 = vadd.f32 %v5520, %v5888
        %v5890 = vpop.f32.mrf.mxu0
        %v5891 = vpop.f32.mrf.mxu0
        %v5892 = vadd.f32 %v5520, %v5891
        %v5893 = vpop.f32.mrf.mxu0
        %5894 = vmatprep.mubr.bf16.mxu0 %v5369
        %5895 = vmatmul.mubr.bf16.gmra.mxu0 %v5368
        %v5896 = vpop.f32.mrf.mxu0
        %v5897 = vadd.f32 %v5520, %v5896
        %v5898 = vpop.f32.mrf.mxu0
        %v5899 = vpop.f32.mrf.mxu0
        %v5900 = vadd.f32 %v5520, %v5899
        %v5901 = vpop.f32.mrf.mxu0
        %5902 = vmatprep.mubr.bf16.mxu0 %v5372
        %5903 = vmatmul.mubr.bf16.gmra.mxu0 %v5371
        %v5904 = vpop.f32.mrf.mxu0
        %v5905 = vadd.f32 %v5520, %v5904
        %v5906 = vpop.f32.mrf.mxu0
        %v5907 = vpop.f32.mrf.mxu0
        %v5908 = vadd.f32 %v5520, %v5907
        %v5909 = vpop.f32.mrf.mxu0
        %5910 = vmatprep.mubr.bf16.mxu0 %v5375
        %5911 = vmatmul.mubr.bf16.gmra.mxu0 %v5374
        %v5912 = vpop.f32.mrf.mxu0
        %v5913 = vadd.f32 %v5520, %v5912
        %v5914 = vpop.f32.mrf.mxu0
        %v5915 = vpop.f32.mrf.mxu0
        %v5916 = vadd.f32 %v5520, %v5915
        %v5917 = vpop.f32.mrf.mxu0
        %5918 = vmatprep.mubr.bf16.mxu0 %v5378
        %5919 = vmatmul.mubr.bf16.gmra.mxu0 %v5377
        %v5920 = vpop.f32.mrf.mxu0
        %v5921 = vadd.f32 %v5520, %v5920
        %v5922 = vpop.f32.mrf.mxu0
        %v5923 = vpop.f32.mrf.mxu0
        %v5924 = vadd.f32 %v5520, %v5923
        %v5925 = vpop.f32.mrf.mxu0
        %5926 = vmatprep.mubr.bf16.mxu0 %v5381
        %5927 = vmatmul.mubr.bf16.gmra.mxu0 %v5380
        %v5928 = vpop.f32.mrf.mxu0
        %v5929 = vadd.f32 %v5520, %v5928
        %v5930 = vpop.f32.mrf.mxu0
        %v5931 = vpop.f32.mrf.mxu0
        %v5932 = vadd.f32 %v5520, %v5931
        %v5933 = vpop.f32.mrf.mxu0
        %5934 = vmatprep.mubr.bf16.mxu0 %v5384
        %5935 = vmatmul.mubr.bf16.gmra.mxu0 %v5383
        %v5936 = vpop.f32.mrf.mxu0
        %v5937 = vadd.f32 %v5520, %v5936
        %v5938 = vpop.f32.mrf.mxu0
        %v5939 = vpop.f32.mrf.mxu0
        %v5940 = vadd.f32 %v5520, %v5939
        %v5941 = vpop.f32.mrf.mxu0
        %5942 = vmatprep.mubr.bf16.mxu0 %v5387
        %5943 = vmatmul.mubr.bf16.gmra.mxu0 %v5386
        %v5944 = vpop.f32.mrf.mxu0
        %v5945 = vadd.f32 %v5520, %v5944
        %v5946 = vpop.f32.mrf.mxu0
        %v5947 = vpop.f32.mrf.mxu0
        %v5948 = vadd.f32 %v5520, %v5947
        %v5949 = vpop.f32.mrf.mxu0
        %5950 = vmatprep.mubr.bf16.mxu0 %v5390
        %5951 = vmatmul.mubr.bf16.gmra.mxu0 %v5389
        %v5952 = vpop.f32.mrf.mxu0
        %v5953 = vadd.f32 %v5520, %v5952
        %v5954 = vpop.f32.mrf.mxu0
        %v5955 = vpop.f32.mrf.mxu0
        %v5956 = vadd.f32 %v5520, %v5955
        %v5957 = vpop.f32.mrf.mxu0
        %5958 = vmatprep.mubr.bf16.mxu0 %v5393
        %5959 = vmatmul.mubr.bf16.gmra.mxu0 %v5392
        %v5960 = vpop.f32.mrf.mxu0
        %v5961 = vadd.f32 %v5520, %v5960
        %v5962 = vpop.f32.mrf.mxu0
        %v5963 = vpop.f32.mrf.mxu0
        %v5964 = vadd.f32 %v5520, %v5963
        %v5965 = vpop.f32.mrf.mxu0
        %5966 = vmatprep.mubr.bf16.mxu0 %v5396
        %5967 = vmatmul.mubr.bf16.gmra.mxu0 %v5395
        %v5968 = vpop.f32.mrf.mxu0
        %v5969 = vadd.f32 %v5520, %v5968
        %v5970 = vpop.f32.mrf.mxu0
        %v5971 = vpop.f32.mrf.mxu0
        %v5972 = vadd.f32 %v5520, %v5971
        %v5973 = vpop.f32.mrf.mxu0
        %5974 = vmatprep.mubr.bf16.mxu0 %v5399
        %5975 = vmatmul.mubr.bf16.gmra.mxu0 %v5398
        %v5976 = vpop.f32.mrf.mxu0
        %v5977 = vadd.f32 %v5520, %v5976
        %v5978 = vpop.f32.mrf.mxu0
        %v5979 = vpop.f32.mrf.mxu0
        %v5980 = vadd.f32 %v5520, %v5979
        %v5981 = vpop.f32.mrf.mxu0
        %5982 = vmatprep.mubr.bf16.mxu0 %v5402
        %5983 = vmatmul.mubr.bf16.gmra.mxu0 %v5401
        %v5984 = vpop.f32.mrf.mxu0
        %v5985 = vadd.f32 %v5520, %v5984
        %v5986 = vpop.f32.mrf.mxu0
        %v5987 = vpop.f32.mrf.mxu0
        %v5988 = vadd.f32 %v5520, %v5987
        %v5989 = vpop.f32.mrf.mxu0
        %5990 = vmatprep.mubr.bf16.mxu0 %v5405
        %5991 = vmatmul.mubr.bf16.gmra.mxu0 %v5404
        %v5992 = vpop.f32.mrf.mxu0
        %v5993 = vadd.f32 %v5520, %v5992
        %v5994 = vpop.f32.mrf.mxu0
        %v5995 = vpop.f32.mrf.mxu0
        %v5996 = vadd.f32 %v5520, %v5995
        %v5997 = vpop.f32.mrf.mxu0
        %5998 = vmatprep.mubr.bf16.mxu0 %v5408
        %5999 = vmatmul.mubr.bf16.gmra.mxu0 %v5407
        %v6000 = vpop.f32.mrf.mxu0
        %v6001 = vadd.f32 %v5520, %v6000
        %v6002 = vpop.f32.mrf.mxu0
        %v6003 = vpop.f32.mrf.mxu0
        %v6004 = vadd.f32 %v5520, %v6003
        %v6005 = vpop.f32.mrf.mxu0
        %6006 = vmatprep.mubr.bf16.mxu0 %v5411
        %6007 = vmatmul.mubr.bf16.gmra.mxu0 %v5410
        %v6008 = vpop.f32.mrf.mxu0
        %v6009 = vadd.f32 %v5520, %v6008
        %v6010 = vpop.f32.mrf.mxu0
        %v6011 = vpop.f32.mrf.mxu0
        %v6012 = vadd.f32 %v5520, %v6011
        %v6013 = vpop.f32.mrf.mxu0
        %6014 = vmatprep.mubr.bf16.mxu0 %v5414
        %6015 = vmatmul.mubr.bf16.gmra.mxu0 %v5413
        %v6016 = vpop.f32.mrf.mxu0
        %v6017 = vadd.f32 %v5520, %v6016
        %v6018 = vpop.f32.mrf.mxu0
        %v6019 = vpop.f32.mrf.mxu0
        %v6020 = vadd.f32 %v5520, %v6019
        %v6021 = vpop.f32.mrf.mxu0
        %6022 = vmatprep.mubr.bf16.mxu0 %v5417
        %6023 = vmatmul.mubr.bf16.gmra.mxu0 %v5416
        %v6024 = vpop.f32.mrf.mxu0
        %v6025 = vadd.f32 %v5520, %v6024
        %v6026 = vpop.f32.mrf.mxu0
        %v6027 = vpop.f32.mrf.mxu0
        %v6028 = vadd.f32 %v5520, %v6027
        %v6029 = vpop.f32.mrf.mxu0
        %6030 = vmatprep.mubr.bf16.mxu0 %v5420
        %6031 = vmatmul.mubr.bf16.gmra.mxu0 %v5419
        %v6032 = vpop.f32.mrf.mxu0
        %v6033 = vadd.f32 %v5520, %v6032
        %v6034 = vpop.f32.mrf.mxu0
        %v6035 = vpop.f32.mrf.mxu0
        %v6036 = vadd.f32 %v5520, %v6035
        %v6037 = vpop.f32.mrf.mxu0
        %6038 = vmatprep.mubr.bf16.mxu0 %v5423
        %6039 = vmatmul.mubr.bf16.gmra.mxu0 %v5422
        %v6040 = vpop.f32.mrf.mxu0
        %v6041 = vadd.f32 %v5520, %v6040
        %v6042 = vpop.f32.mrf.mxu0
        %v6043 = vpop.f32.mrf.mxu0
        %v6044 = vadd.f32 %v5520, %v6043
        %v6045 = vpop.f32.mrf.mxu0
        %6046 = vmatprep.mubr.bf16.mxu0 %v5426
        %6047 = vmatmul.mubr.bf16.gmra.mxu0 %v5425
        %v6048 = vpop.f32.mrf.mxu0
        %v6049 = vadd.f32 %v5520, %v6048
        %v6050 = vpop.f32.mrf.mxu0
        %v6051 = vpop.f32.mrf.mxu0
        %v6052 = vadd.f32 %v5520, %v6051
        %v6053 = vpop.f32.mrf.mxu0
        %6054 = vmatprep.mubr.bf16.mxu0 %v5429
        %6055 = vmatmul.mubr.bf16.gmra.mxu0 %v5428
        %v6056 = vpop.f32.mrf.mxu0
        %v6057 = vadd.f32 %v5520, %v6056
        %v6058 = vpop.f32.mrf.mxu0
        %v6059 = vpop.f32.mrf.mxu0
        %v6060 = vadd.f32 %v5520, %v6059
        %v6061 = vpop.f32.mrf.mxu0
        %6062 = vmatprep.mubr.bf16.mxu0 %v5432
        %6063 = vmatmul.mubr.bf16.gmra.mxu0 %v5431
        %v6064 = vpop.f32.mrf.mxu0
        %v6065 = vadd.f32 %v5520, %v6064
        %v6066 = vpop.f32.mrf.mxu0
        %v6067 = vpop.f32.mrf.mxu0
        %v6068 = vadd.f32 %v5520, %v6067
        %v6069 = vpop.f32.mrf.mxu0
        %6070 = vmatprep.mubr.bf16.mxu0 %v5435
        %6071 = vmatmul.mubr.bf16.gmra.mxu0 %v5434
        %v6072 = vpop.f32.mrf.mxu0
        %v6073 = vadd.f32 %v5520, %v6072
        %v6074 = vpop.f32.mrf.mxu0
        %v6075 = vpop.f32.mrf.mxu0
        %v6076 = vadd.f32 %v5520, %v6075
        %v6077 = vpop.f32.mrf.mxu0
        %6078 = vmatprep.mubr.bf16.mxu0 %v5438
        %6079 = vmatmul.mubr.bf16.gmra.mxu0 %v5437
        %v6080 = vpop.f32.mrf.mxu0
        %v6081 = vadd.f32 %v5520, %v6080
        %v6082 = vpop.f32.mrf.mxu0
        %v6083 = vpop.f32.mrf.mxu0
        %v6084 = vadd.f32 %v5520, %v6083
        %v6085 = vpop.f32.mrf.mxu0
        %6086 = vmatprep.mubr.bf16.mxu0 %v5441
        %6087 = vmatmul.mubr.bf16.gmra.mxu0 %v5440
        %v6088 = vpop.f32.mrf.mxu0
        %v6089 = vadd.f32 %v5520, %v6088
        %v6090 = vpop.f32.mrf.mxu0
        %v6091 = vpop.f32.mrf.mxu0
        %v6092 = vadd.f32 %v5520, %v6091
        %v6093 = vpop.f32.mrf.mxu0
        %6094 = vmatprep.mubr.bf16.mxu0 %v5444
        %6095 = vmatmul.mubr.bf16.gmra.mxu0 %v5443
        %v6096 = vpop.f32.mrf.mxu0
        %v6097 = vadd.f32 %v5520, %v6096
        %v6098 = vpop.f32.mrf.mxu0
        %v6099 = vpop.f32.mrf.mxu0
        %v6100 = vadd.f32 %v5520, %v6099
        %v6101 = vpop.f32.mrf.mxu0
        %6102 = vmatprep.mubr.bf16.mxu0 %v5447
        %6103 = vmatmul.mubr.bf16.gmra.mxu0 %v5446
        %v6104 = vpop.f32.mrf.mxu0
        %v6105 = vadd.f32 %v5520, %v6104
        %v6106 = vpop.f32.mrf.mxu0
        %v6107 = vpop.f32.mrf.mxu0
        %v6108 = vadd.f32 %v5520, %v6107
        %v6109 = vpop.f32.mrf.mxu0
        %6110 = vmatprep.mubr.bf16.mxu0 %v5450
        %6111 = vmatmul.mubr.bf16.gmra.mxu0 %v5449
        %v6112 = vpop.f32.mrf.mxu0
        %v6113 = vadd.f32 %v5520, %v6112
        %v6114 = vpop.f32.mrf.mxu0
        %v6115 = vpop.f32.mrf.mxu0
        %v6116 = vadd.f32 %v5520, %v6115
        %v6117 = vpop.f32.mrf.mxu0
        %6118 = vmatprep.mubr.bf16.mxu0 %v5453
        %6119 = vmatmul.mubr.bf16.gmra.mxu0 %v5452
        %v6120 = vpop.f32.mrf.mxu0
        %v6121 = vadd.f32 %v5520, %v6120
        %v6122 = vpop.f32.mrf.mxu0
        %v6123 = vpop.f32.mrf.mxu0
        %v6124 = vadd.f32 %v5520, %v6123
        %v6125 = vpop.f32.mrf.mxu0
        %6126 = vmatprep.mubr.bf16.mxu0 %v5456
        %6127 = vmatmul.mubr.bf16.gmra.mxu0 %v5455
        %v6128 = vpop.f32.mrf.mxu0
        %v6129 = vadd.f32 %v5520, %v6128
        %v6130 = vpop.f32.mrf.mxu0
        %v6131 = vpop.f32.mrf.mxu0
        %v6132 = vadd.f32 %v5520, %v6131
        %v6133 = vpop.f32.mrf.mxu0
        %6134 = vmatprep.mubr.bf16.mxu0 %v5459
        %6135 = vmatmul.mubr.bf16.gmra.mxu0 %v5458
        %v6136 = vpop.f32.mrf.mxu0
        %v6137 = vadd.f32 %v5520, %v6136
        %v6138 = vpop.f32.mrf.mxu0
        %v6139 = vpop.f32.mrf.mxu0
        %v6140 = vadd.f32 %v5520, %v6139
        %v6141 = vpop.f32.mrf.mxu0
        %6142 = vmatprep.mubr.bf16.mxu0 %v5462
        %6143 = vmatmul.mubr.bf16.gmra.mxu0 %v5461
        %v6144 = vpop.f32.mrf.mxu0
        %v6145 = vadd.f32 %v5520, %v6144
        %v6146 = vpop.f32.mrf.mxu0
        %v6147 = vpop.f32.mrf.mxu0
        %v6148 = vadd.f32 %v5520, %v6147
        %v6149 = vpop.f32.mrf.mxu0
        %6150 = vmatprep.mubr.bf16.mxu0 %v5465
        %6151 = vmatmul.mubr.bf16.gmra.mxu0 %v5464
        %v6152 = vpop.f32.mrf.mxu0
        %v6153 = vadd.f32 %v5520, %v6152
        %v6154 = vpop.f32.mrf.mxu0
        %v6155 = vpop.f32.mrf.mxu0
        %v6156 = vadd.f32 %v5520, %v6155
        %v6157 = vpop.f32.mrf.mxu0
        %6158 = vmatprep.mubr.bf16.mxu0 %v5468
        %6159 = vmatmul.mubr.bf16.gmra.mxu0 %v5467
        %v6160 = vpop.f32.mrf.mxu0
        %v6161 = vadd.f32 %v5520, %v6160
        %v6162 = vpop.f32.mrf.mxu0
        %v6163 = vpop.f32.mrf.mxu0
        %v6164 = vadd.f32 %v5520, %v6163
        %v6165 = vpop.f32.mrf.mxu0
        %6166 = vmatprep.mubr.bf16.mxu0 %v5471
        %6167 = vmatmul.mubr.bf16.gmra.mxu0 %v5470
        %v6168 = vpop.f32.mrf.mxu0
        %v6169 = vadd.f32 %v5520, %v6168
        %v6170 = vpop.f32.mrf.mxu0
        %v6171 = vpop.f32.mrf.mxu0
        %v6172 = vadd.f32 %v5520, %v6171
        %v6173 = vpop.f32.mrf.mxu0
        %6174 = vmatprep.mubr.bf16.mxu0 %v5474
        %6175 = vmatmul.mubr.bf16.gmra.mxu0 %v5473
        %v6176 = vpop.f32.mrf.mxu0
        %v6177 = vadd.f32 %v5520, %v6176
        %v6178 = vpop.f32.mrf.mxu0
        %v6179 = vpop.f32.mrf.mxu0
        %v6180 = vadd.f32 %v5520, %v6179
        %v6181 = vpop.f32.mrf.mxu0
        %6182 = vmatprep.mubr.bf16.mxu0 %v5477
        %6183 = vmatmul.mubr.bf16.gmra.mxu0 %v5476
        %v6184 = vpop.f32.mrf.mxu0
        %v6185 = vadd.f32 %v5520, %v6184
        %v6186 = vpop.f32.mrf.mxu0
        %v6187 = vpop.f32.mrf.mxu0
        %v6188 = vadd.f32 %v5520, %v6187
        %v6189 = vpop.f32.mrf.mxu0
        %6190 = vdwg.mxu0
        %6191 = vmatprep.subr.bf16.mxu0 0
        %6192 = vmatpush1.bf16.msra.mxu0 0
        %6193 = vmatprep.subr.bf16.mxu0 0
        %6194 = vmatpush1.bf16.msra.mxu0 0
        %6195 = vmatprep.subr.bf16.mxu0 0
        %6196 = vmatpush1.bf16.msra.mxu0 0
        %6197 = vmatprep.subr.bf16.mxu0 0
        %6198 = vmatpush1.bf16.msra.mxu0 0
        %6199 = vmatprep.subr.bf16.mxu0 0
        %6200 = vmatpush1.bf16.msra.mxu0 0
        %6201 = vmatprep.subr.bf16.mxu0 0
        %6202 = vmatpush1.bf16.msra.mxu0 0
        %6203 = vmatprep.subr.bf16.mxu0 0
        %6204 = vmatpush1.bf16.msra.mxu0 %v5611
        %6205 = vmatprep.subr.bf16.mxu0 0
        %6206 = vmatpush1.bf16.msra.mxu0 %v5610
        %6207 = vmatprep.subr.bf16.mxu0 0
        %6208 = vmatpush2.bf16.msra.mxu0 0
        %6209 = vmatprep.subr.bf16.mxu0 0
        %6210 = vmatpush2.bf16.msra.mxu0 0
        %6211 = vmatprep.subr.bf16.mxu0 0
        %6212 = vmatpush2.bf16.msra.mxu0 0
        %6213 = vmatprep.subr.bf16.mxu0 0
        %6214 = vmatpush2.bf16.msra.mxu0 0
        %6215 = vmatprep.subr.bf16.mxu0 0
        %6216 = vmatpush2.bf16.msra.mxu0 0
        %6217 = vmatprep.subr.bf16.mxu0 0
        %6218 = vmatpush2.bf16.msra.mxu0 0
        %6219 = vmatprep.subr.bf16.mxu0 0
        %6220 = vmatpush2.bf16.msra.mxu0 0
        %6221 = vmatprep.subr.bf16.mxu0 0
        %6222 = vmatpush2.bf16.msra.mxu0 0
        %6223 = vmatprep.mubr.bf16.mxu0 0
        %6224 = vmatmul.mubr.bf16.gmra.mxu0 %v5631
        %v6225 = vpop.f32.mrf.mxu0
        %v6226 = vadd.f32 %v5809, %v6225
        %v6227 = vpop.f32.mrf.mxu0
        %v6228 = vpop.f32.mrf.mxu0
        %v6229 = vadd.f32 %v5812, %v6228
        %v6230 = vpop.f32.mrf.mxu0
        %6231 = vmatprep.mubr.bf16.mxu0 0
        %6232 = vmatmul.mubr.bf16.gmra.mxu0 %v5634
        %v6233 = vpop.f32.mrf.mxu0
        %v6234 = vadd.f32 %v5817, %v6233
        %v6235 = vpop.f32.mrf.mxu0
        %v6236 = vpop.f32.mrf.mxu0
        %v6237 = vadd.f32 %v5820, %v6236
        %v6238 = vpop.f32.mrf.mxu0
        %6239 = vmatprep.mubr.bf16.mxu0 0
        %6240 = vmatmul.mubr.bf16.gmra.mxu0 %v5637
        %v6241 = vpop.f32.mrf.mxu0
        %v6242 = vadd.f32 %v5825, %v6241
        %v6243 = vpop.f32.mrf.mxu0
        %v6244 = vpop.f32.mrf.mxu0
        %v6245 = vadd.f32 %v5828, %v6244
        %v6246 = vpop.f32.mrf.mxu0
        %6247 = vmatprep.mubr.bf16.mxu0 0
        %6248 = vmatmul.mubr.bf16.gmra.mxu0 %v5640
        %v6249 = vpop.f32.mrf.mxu0
        %v6250 = vadd.f32 %v5833, %v6249
        %v6251 = vpop.f32.mrf.mxu0
        %v6252 = vpop.f32.mrf.mxu0
        %v6253 = vadd.f32 %v5836, %v6252
        %v6254 = vpop.f32.mrf.mxu0
        %6255 = vmatprep.mubr.bf16.mxu0 0
        %6256 = vmatmul.mubr.bf16.gmra.mxu0 %v5643
        %v6257 = vpop.f32.mrf.mxu0
        %v6258 = vadd.f32 %v5841, %v6257
        %v6259 = vpop.f32.mrf.mxu0
        %v6260 = vpop.f32.mrf.mxu0
        %v6261 = vadd.f32 %v5844, %v6260
        %v6262 = vpop.f32.mrf.mxu0
        %6263 = vmatprep.mubr.bf16.mxu0 0
        %6264 = vmatmul.mubr.bf16.gmra.mxu0 %v5646
        %v6265 = vpop.f32.mrf.mxu0
        %v6266 = vadd.f32 %v5849, %v6265
        %v6267 = vpop.f32.mrf.mxu0
        %v6268 = vpop.f32.mrf.mxu0
        %v6269 = vadd.f32 %v5852, %v6268
        %v6270 = vpop.f32.mrf.mxu0
        %6271 = vmatprep.mubr.bf16.mxu0 0
        %6272 = vmatmul.mubr.bf16.gmra.mxu0 %v5649
        %v6273 = vpop.f32.mrf.mxu0
        %v6274 = vadd.f32 %v5857, %v6273
        %v6275 = vpop.f32.mrf.mxu0
        %v6276 = vpop.f32.mrf.mxu0
        %v6277 = vadd.f32 %v5860, %v6276
        %v6278 = vpop.f32.mrf.mxu0
        %6279 = vmatprep.mubr.bf16.mxu0 0
        %6280 = vmatmul.mubr.bf16.gmra.mxu0 %v5652
        %v6281 = vpop.f32.mrf.mxu0
        %v6282 = vadd.f32 %v5865, %v6281
        %v6283 = vpop.f32.mrf.mxu0
        %v6284 = vpop.f32.mrf.mxu0
        %v6285 = vadd.f32 %v5868, %v6284
        %v6286 = vpop.f32.mrf.mxu0
        %6287 = vmatprep.mubr.bf16.mxu0 0
        %6288 = vmatmul.mubr.bf16.gmra.mxu0 %v5655
        %v6289 = vpop.f32.mrf.mxu0
        %v6290 = vadd.f32 %v5873, %v6289
        %v6291 = vpop.f32.mrf.mxu0
        %v6292 = vpop.f32.mrf.mxu0
        %v6293 = vadd.f32 %v5876, %v6292
        %v6294 = vpop.f32.mrf.mxu0
        %6295 = vmatprep.mubr.bf16.mxu0 0
        %6296 = vmatmul.mubr.bf16.gmra.mxu0 %v5658
        %v6297 = vpop.f32.mrf.mxu0
        %v6298 = vadd.f32 %v5881, %v6297
        %v6299 = vpop.f32.mrf.mxu0
        %v6300 = vpop.f32.mrf.mxu0
        %v6301 = vadd.f32 %v5884, %v6300
        %v6302 = vpop.f32.mrf.mxu0
        %6303 = vmatprep.mubr.bf16.mxu0 0
        %6304 = vmatmul.mubr.bf16.gmra.mxu0 %v5661
        %v6305 = vpop.f32.mrf.mxu0
        %v6306 = vadd.f32 %v5889, %v6305
        %v6307 = vpop.f32.mrf.mxu0
        %v6308 = vpop.f32.mrf.mxu0
        %v6309 = vadd.f32 %v5892, %v6308
        %v6310 = vpop.f32.mrf.mxu0
        %6311 = vmatprep.mubr.bf16.mxu0 0
        %6312 = vmatmul.mubr.bf16.gmra.mxu0 %v5664
        %v6313 = vpop.f32.mrf.mxu0
        %v6314 = vadd.f32 %v5897, %v6313
        %v6315 = vpop.f32.mrf.mxu0
        %v6316 = vpop.f32.mrf.mxu0
        %v6317 = vadd.f32 %v5900, %v6316
        %v6318 = vpop.f32.mrf.mxu0
        %6319 = vmatprep.mubr.bf16.mxu0 0
        %6320 = vmatmul.mubr.bf16.gmra.mxu0 %v5667
        %v6321 = vpop.f32.mrf.mxu0
        %v6322 = vadd.f32 %v5905, %v6321
        %v6323 = vpop.f32.mrf.mxu0
        %v6324 = vpop.f32.mrf.mxu0
        %v6325 = vadd.f32 %v5908, %v6324
        %v6326 = vpop.f32.mrf.mxu0
        %6327 = vmatprep.mubr.bf16.mxu0 0
        %6328 = vmatmul.mubr.bf16.gmra.mxu0 %v5670
        %v6329 = vpop.f32.mrf.mxu0
        %v6330 = vadd.f32 %v5913, %v6329
        %v6331 = vpop.f32.mrf.mxu0
        %v6332 = vpop.f32.mrf.mxu0
        %v6333 = vadd.f32 %v5916, %v6332
        %v6334 = vpop.f32.mrf.mxu0
        %6335 = vmatprep.mubr.bf16.mxu0 0
        %6336 = vmatmul.mubr.bf16.gmra.mxu0 %v5673
        %v6337 = vpop.f32.mrf.mxu0
        %v6338 = vadd.f32 %v5921, %v6337
        %v6339 = vpop.f32.mrf.mxu0
        %v6340 = vpop.f32.mrf.mxu0
        %v6341 = vadd.f32 %v5924, %v6340
        %v6342 = vpop.f32.mrf.mxu0
        %6343 = vmatprep.mubr.bf16.mxu0 0
        %6344 = vmatmul.mubr.bf16.gmra.mxu0 %v5676
        %v6345 = vpop.f32.mrf.mxu0
        %v6346 = vadd.f32 %v5929, %v6345
        %v6347 = vpop.f32.mrf.mxu0
        %v6348 = vpop.f32.mrf.mxu0
        %v6349 = vadd.f32 %v5932, %v6348
        %v6350 = vpop.f32.mrf.mxu0
        %6351 = vmatprep.mubr.bf16.mxu0 0
        %6352 = vmatmul.mubr.bf16.gmra.mxu0 %v5679
        %v6353 = vpop.f32.mrf.mxu0
        %v6354 = vadd.f32 %v5937, %v6353
        %v6355 = vpop.f32.mrf.mxu0
        %v6356 = vpop.f32.mrf.mxu0
        %v6357 = vadd.f32 %v5940, %v6356
        %v6358 = vpop.f32.mrf.mxu0
        %6359 = vmatprep.mubr.bf16.mxu0 0
        %6360 = vmatmul.mubr.bf16.gmra.mxu0 %v5682
        %v6361 = vpop.f32.mrf.mxu0
        %v6362 = vadd.f32 %v5945, %v6361
        %v6363 = vpop.f32.mrf.mxu0
        %v6364 = vpop.f32.mrf.mxu0
        %v6365 = vadd.f32 %v5948, %v6364
        %v6366 = vpop.f32.mrf.mxu0
        %6367 = vmatprep.mubr.bf16.mxu0 0
        %6368 = vmatmul.mubr.bf16.gmra.mxu0 %v5685
        %v6369 = vpop.f32.mrf.mxu0
        %v6370 = vadd.f32 %v5953, %v6369
        %v6371 = vpop.f32.mrf.mxu0
        %v6372 = vpop.f32.mrf.mxu0
        %v6373 = vadd.f32 %v5956, %v6372
        %v6374 = vpop.f32.mrf.mxu0
        %6375 = vmatprep.mubr.bf16.mxu0 0
        %6376 = vmatmul.mubr.bf16.gmra.mxu0 %v5688
        %v6377 = vpop.f32.mrf.mxu0
        %v6378 = vadd.f32 %v5961, %v6377
        %v6379 = vpop.f32.mrf.mxu0
        %v6380 = vpop.f32.mrf.mxu0
        %v6381 = vadd.f32 %v5964, %v6380
        %v6382 = vpop.f32.mrf.mxu0
        %6383 = vmatprep.mubr.bf16.mxu0 0
        %6384 = vmatmul.mubr.bf16.gmra.mxu0 %v5691
        %v6385 = vpop.f32.mrf.mxu0
        %v6386 = vadd.f32 %v5969, %v6385
        %v6387 = vpop.f32.mrf.mxu0
        %v6388 = vpop.f32.mrf.mxu0
        %v6389 = vadd.f32 %v5972, %v6388
        %v6390 = vpop.f32.mrf.mxu0
        %6391 = vmatprep.mubr.bf16.mxu0 0
        %6392 = vmatmul.mubr.bf16.gmra.mxu0 %v5694
        %v6393 = vpop.f32.mrf.mxu0
        %v6394 = vadd.f32 %v5977, %v6393
        %v6395 = vpop.f32.mrf.mxu0
        %v6396 = vpop.f32.mrf.mxu0
        %v6397 = vadd.f32 %v5980, %v6396
        %v6398 = vpop.f32.mrf.mxu0
        %6399 = vmatprep.mubr.bf16.mxu0 0
        %6400 = vmatmul.mubr.bf16.gmra.mxu0 %v5697
        %v6401 = vpop.f32.mrf.mxu0
        %v6402 = vadd.f32 %v5985, %v6401
        %v6403 = vpop.f32.mrf.mxu0
        %v6404 = vpop.f32.mrf.mxu0
        %v6405 = vadd.f32 %v5988, %v6404
        %v6406 = vpop.f32.mrf.mxu0
        %6407 = vmatprep.mubr.bf16.mxu0 0
        %6408 = vmatmul.mubr.bf16.gmra.mxu0 %v5700
        %v6409 = vpop.f32.mrf.mxu0
        %v6410 = vadd.f32 %v5993, %v6409
        %v6411 = vpop.f32.mrf.mxu0
        %v6412 = vpop.f32.mrf.mxu0
        %v6413 = vadd.f32 %v5996, %v6412
        %v6414 = vpop.f32.mrf.mxu0
        %6415 = vmatprep.mubr.bf16.mxu0 0
        %6416 = vmatmul.mubr.bf16.gmra.mxu0 %v5703
        %v6417 = vpop.f32.mrf.mxu0
        %v6418 = vadd.f32 %v6001, %v6417
        %v6419 = vpop.f32.mrf.mxu0
        %v6420 = vpop.f32.mrf.mxu0
        %v6421 = vadd.f32 %v6004, %v6420
        %v6422 = vpop.f32.mrf.mxu0
        %6423 = vmatprep.mubr.bf16.mxu0 0
        %6424 = vmatmul.mubr.bf16.gmra.mxu0 %v5706
        %v6425 = vpop.f32.mrf.mxu0
        %v6426 = vadd.f32 %v6009, %v6425
        %v6427 = vpop.f32.mrf.mxu0
        %v6428 = vpop.f32.mrf.mxu0
        %v6429 = vadd.f32 %v6012, %v6428
        %v6430 = vpop.f32.mrf.mxu0
        %6431 = vmatprep.mubr.bf16.mxu0 0
        %6432 = vmatmul.mubr.bf16.gmra.mxu0 %v5709
        %v6433 = vpop.f32.mrf.mxu0
        %v6434 = vadd.f32 %v6017, %v6433
        %v6435 = vpop.f32.mrf.mxu0
        %v6436 = vpop.f32.mrf.mxu0
        %v6437 = vadd.f32 %v6020, %v6436
        %v6438 = vpop.f32.mrf.mxu0
        %6439 = vmatprep.mubr.bf16.mxu0 0
        %6440 = vmatmul.mubr.bf16.gmra.mxu0 %v5712
        %v6441 = vpop.f32.mrf.mxu0
        %v6442 = vadd.f32 %v6025, %v6441
        %v6443 = vpop.f32.mrf.mxu0
        %v6444 = vpop.f32.mrf.mxu0
        %v6445 = vadd.f32 %v6028, %v6444
        %v6446 = vpop.f32.mrf.mxu0
        %6447 = vmatprep.mubr.bf16.mxu0 0
        %6448 = vmatmul.mubr.bf16.gmra.mxu0 %v5715
        %v6449 = vpop.f32.mrf.mxu0
        %v6450 = vadd.f32 %v6033, %v6449
        %v6451 = vpop.f32.mrf.mxu0
        %v6452 = vpop.f32.mrf.mxu0
        %v6453 = vadd.f32 %v6036, %v6452
        %v6454 = vpop.f32.mrf.mxu0
        %6455 = vmatprep.mubr.bf16.mxu0 0
        %6456 = vmatmul.mubr.bf16.gmra.mxu0 %v5718
        %v6457 = vpop.f32.mrf.mxu0
        %v6458 = vadd.f32 %v6041, %v6457
        %v6459 = vpop.f32.mrf.mxu0
        %v6460 = vpop.f32.mrf.mxu0
        %v6461 = vadd.f32 %v6044, %v6460
        %v6462 = vpop.f32.mrf.mxu0
        %6463 = vmatprep.mubr.bf16.mxu0 0
        %6464 = vmatmul.mubr.bf16.gmra.mxu0 %v5721
        %v6465 = vpop.f32.mrf.mxu0
        %v6466 = vadd.f32 %v6049, %v6465
        %v6467 = vpop.f32.mrf.mxu0
        %v6468 = vpop.f32.mrf.mxu0
        %v6469 = vadd.f32 %v6052, %v6468
        %v6470 = vpop.f32.mrf.mxu0
        %6471 = vmatprep.mubr.bf16.mxu0 0
        %6472 = vmatmul.mubr.bf16.gmra.mxu0 %v5724
        %v6473 = vpop.f32.mrf.mxu0
        %v6474 = vadd.f32 %v6057, %v6473
        %v6475 = vpop.f32.mrf.mxu0
        %v6476 = vpop.f32.mrf.mxu0
        %v6477 = vadd.f32 %v6060, %v6476
        %v6478 = vpop.f32.mrf.mxu0
        %6479 = vmatprep.mubr.bf16.mxu0 0
        %6480 = vmatmul.mubr.bf16.gmra.mxu0 %v5727
        %v6481 = vpop.f32.mrf.mxu0
        %v6482 = vadd.f32 %v6065, %v6481
        %v6483 = vpop.f32.mrf.mxu0
        %v6484 = vpop.f32.mrf.mxu0
        %v6485 = vadd.f32 %v6068, %v6484
        %v6486 = vpop.f32.mrf.mxu0
        %6487 = vmatprep.mubr.bf16.mxu0 0
        %6488 = vmatmul.mubr.bf16.gmra.mxu0 %v5730
        %v6489 = vpop.f32.mrf.mxu0
        %v6490 = vadd.f32 %v6073, %v6489
        %v6491 = vpop.f32.mrf.mxu0
        %v6492 = vpop.f32.mrf.mxu0
        %v6493 = vadd.f32 %v6076, %v6492
        %v6494 = vpop.f32.mrf.mxu0
        %6495 = vmatprep.mubr.bf16.mxu0 0
        %6496 = vmatmul.mubr.bf16.gmra.mxu0 %v5733
        %v6497 = vpop.f32.mrf.mxu0
        %v6498 = vadd.f32 %v6081, %v6497
        %v6499 = vpop.f32.mrf.mxu0
        %v6500 = vpop.f32.mrf.mxu0
        %v6501 = vadd.f32 %v6084, %v6500
        %v6502 = vpop.f32.mrf.mxu0
        %6503 = vmatprep.mubr.bf16.mxu0 0
        %6504 = vmatmul.mubr.bf16.gmra.mxu0 %v5736
        %v6505 = vpop.f32.mrf.mxu0
        %v6506 = vadd.f32 %v6089, %v6505
        %v6507 = vpop.f32.mrf.mxu0
        %v6508 = vpop.f32.mrf.mxu0
        %v6509 = vadd.f32 %v6092, %v6508
        %v6510 = vpop.f32.mrf.mxu0
        %6511 = vmatprep.mubr.bf16.mxu0 0
        %6512 = vmatmul.mubr.bf16.gmra.mxu0 %v5739
        %v6513 = vpop.f32.mrf.mxu0
        %v6514 = vadd.f32 %v6097, %v6513
        %v6515 = vpop.f32.mrf.mxu0
        %v6516 = vpop.f32.mrf.mxu0
        %v6517 = vadd.f32 %v6100, %v6516
        %v6518 = vpop.f32.mrf.mxu0
        %6519 = vmatprep.mubr.bf16.mxu0 0
        %6520 = vmatmul.mubr.bf16.gmra.mxu0 %v5742
        %v6521 = vpop.f32.mrf.mxu0
        %v6522 = vadd.f32 %v6105, %v6521
        %v6523 = vpop.f32.mrf.mxu0
        %v6524 = vpop.f32.mrf.mxu0
        %v6525 = vadd.f32 %v6108, %v6524
        %v6526 = vpop.f32.mrf.mxu0
        %6527 = vmatprep.mubr.bf16.mxu0 0
        %6528 = vmatmul.mubr.bf16.gmra.mxu0 %v5745
        %v6529 = vpop.f32.mrf.mxu0
        %v6530 = vadd.f32 %v6113, %v6529
        %v6531 = vpop.f32.mrf.mxu0
        %v6532 = vpop.f32.mrf.mxu0
        %v6533 = vadd.f32 %v6116, %v6532
        %v6534 = vpop.f32.mrf.mxu0
        %6535 = vmatprep.mubr.bf16.mxu0 0
        %6536 = vmatmul.mubr.bf16.gmra.mxu0 %v5748
        %v6537 = vpop.f32.mrf.mxu0
        %v6538 = vadd.f32 %v6121, %v6537
        %v6539 = vpop.f32.mrf.mxu0
        %v6540 = vpop.f32.mrf.mxu0
        %v6541 = vadd.f32 %v6124, %v6540
        %v6542 = vpop.f32.mrf.mxu0
        %6543 = vmatprep.mubr.bf16.mxu0 0
        %6544 = vmatmul.mubr.bf16.gmra.mxu0 %v5751
        %v6545 = vpop.f32.mrf.mxu0
        %v6546 = vadd.f32 %v6129, %v6545
        %v6547 = vpop.f32.mrf.mxu0
        %v6548 = vpop.f32.mrf.mxu0
        %v6549 = vadd.f32 %v6132, %v6548
        %v6550 = vpop.f32.mrf.mxu0
        %6551 = vmatprep.mubr.bf16.mxu0 0
        %6552 = vmatmul.mubr.bf16.gmra.mxu0 %v5754
        %v6553 = vpop.f32.mrf.mxu0
        %v6554 = vadd.f32 %v6137, %v6553
        %v6555 = vpop.f32.mrf.mxu0
        %v6556 = vpop.f32.mrf.mxu0
        %v6557 = vadd.f32 %v6140, %v6556
        %v6558 = vpop.f32.mrf.mxu0
        %6559 = vmatprep.mubr.bf16.mxu0 0
        %6560 = vmatmul.mubr.bf16.gmra.mxu0 %v5757
        %v6561 = vpop.f32.mrf.mxu0
        %v6562 = vadd.f32 %v6145, %v6561
        %v6563 = vpop.f32.mrf.mxu0
        %v6564 = vpop.f32.mrf.mxu0
        %v6565 = vadd.f32 %v6148, %v6564
        %v6566 = vpop.f32.mrf.mxu0
        %6567 = vmatprep.mubr.bf16.mxu0 0
        %6568 = vmatmul.mubr.bf16.gmra.mxu0 %v5760
        %v6569 = vpop.f32.mrf.mxu0
        %v6570 = vadd.f32 %v6153, %v6569
        %v6571 = vpop.f32.mrf.mxu0
        %v6572 = vpop.f32.mrf.mxu0
        %v6573 = vadd.f32 %v6156, %v6572
        %v6574 = vpop.f32.mrf.mxu0
        %6575 = vmatprep.mubr.bf16.mxu0 0
        %6576 = vmatmul.mubr.bf16.gmra.mxu0 %v5763
        %v6577 = vpop.f32.mrf.mxu0
        %v6578 = vadd.f32 %v6161, %v6577
        %v6579 = vpop.f32.mrf.mxu0
        %v6580 = vpop.f32.mrf.mxu0
        %v6581 = vadd.f32 %v6164, %v6580
        %v6582 = vpop.f32.mrf.mxu0
        %6583 = vmatprep.mubr.bf16.mxu0 0
        %6584 = vmatmul.mubr.bf16.gmra.mxu0 %v5766
        %v6585 = vpop.f32.mrf.mxu0
        %v6586 = vadd.f32 %v6169, %v6585
        %v6587 = vpop.f32.mrf.mxu0
        %v6588 = vpop.f32.mrf.mxu0
        %v6589 = vadd.f32 %v6172, %v6588
        %v6590 = vpop.f32.mrf.mxu0
        %6591 = vmatprep.mubr.bf16.mxu0 0
        %6592 = vmatmul.mubr.bf16.gmra.mxu0 %v5769
        %v6593 = vpop.f32.mrf.mxu0
        %v6594 = vadd.f32 %v6177, %v6593
        %v6595 = vpop.f32.mrf.mxu0
        %v6596 = vpop.f32.mrf.mxu0
        %v6597 = vadd.f32 %v6180, %v6596
        %v6598 = vpop.f32.mrf.mxu0
        %6599 = vmatprep.mubr.bf16.mxu0 0
        %6600 = vmatmul.mubr.bf16.gmra.mxu0 %v5772
        %v6601 = vpop.f32.mrf.mxu0
        %v6602 = vadd.f32 %v6185, %v6601
        %v6603 = vpop.f32.mrf.mxu0
        %v6604 = vpop.f32.mrf.mxu0
        %v6605 = vadd.f32 %v6188, %v6604
        %v6606 = vpop.f32.mrf.mxu0
        %6607 = vdwg.mxu0
        %v6608 = vmax.f32 %v6226, 0.0
        %v6609 = vmax.f32 %v6229, 0.0
        %v6610 = vmax.f32 %v6234, 0.0
        %v6611 = vmax.f32 %v6237, 0.0
        %v6612 = vmax.f32 %v6242, 0.0
        %v6613 = vmax.f32 %v6245, 0.0
        %v6614 = vmax.f32 %v6250, 0.0
        %v6615 = vmax.f32 %v6253, 0.0
        %v6616 = vmax.f32 %v6258, 0.0
        %v6617 = vmax.f32 %v6261, 0.0
        %v6618 = vmax.f32 %v6266, 0.0
        %v6619 = vmax.f32 %v6269, 0.0
        %v6620 = vmax.f32 %v6274, 0.0
        %v6621 = vmax.f32 %v6277, 0.0
        %v6622 = vmax.f32 %v6282, 0.0
        %v6623 = vmax.f32 %v6285, 0.0
        %v6624 = vmax.f32 %v6290, 0.0
        %v6625 = vmax.f32 %v6293, 0.0
        %v6626 = vmax.f32 %v6298, 0.0
        %v6627 = vmax.f32 %v6301, 0.0
        %v6628 = vmax.f32 %v6306, 0.0
        %v6629 = vmax.f32 %v6309, 0.0
        %v6630 = vmax.f32 %v6314, 0.0
        %v6631 = vmax.f32 %v6317, 0.0
        %v6632 = vmax.f32 %v6322, 0.0
        %v6633 = vmax.f32 %v6325, 0.0
        %v6634 = vmax.f32 %v6330, 0.0
        %v6635 = vmax.f32 %v6333, 0.0
        %v6636 = vmax.f32 %v6338, 0.0
        %v6637 = vmax.f32 %v6341, 0.0
        %v6638 = vmax.f32 %v6346, 0.0
        %v6639 = vmax.f32 %v6349, 0.0
        %v6640 = vmax.f32 %v6354, 0.0
        %v6641 = vmax.f32 %v6357, 0.0
        %v6642 = vmax.f32 %v6362, 0.0
        %v6643 = vmax.f32 %v6365, 0.0
        %v6644 = vmax.f32 %v6370, 0.0
        %v6645 = vmax.f32 %v6373, 0.0
        %v6646 = vmax.f32 %v6378, 0.0
        %v6647 = vmax.f32 %v6381, 0.0
        %v6648 = vmax.f32 %v6386, 0.0
        %v6649 = vmax.f32 %v6389, 0.0
        %v6650 = vmax.f32 %v6394, 0.0
        %v6651 = vmax.f32 %v6397, 0.0
        %v6652 = vmax.f32 %v6402, 0.0
        %v6653 = vmax.f32 %v6405, 0.0
        %v6654 = vmax.f32 %v6410, 0.0
        %v6655 = vmax.f32 %v6413, 0.0
        %v6656 = vmax.f32 %v6418, 0.0
        %v6657 = vmax.f32 %v6421, 0.0
        %v6658 = vmax.f32 %v6426, 0.0
        %v6659 = vmax.f32 %v6429, 0.0
        %v6660 = vmax.f32 %v6434, 0.0
        %v6661 = vmax.f32 %v6437, 0.0
        %v6662 = vmax.f32 %v6442, 0.0
        %v6663 = vmax.f32 %v6445, 0.0
        %v6664 = vmax.f32 %v6450, 0.0
        %v6665 = vmax.f32 %v6453, 0.0
        %v6666 = vmax.f32 %v6458, 0.0
        %v6667 = vmax.f32 %v6461, 0.0
        %v6668 = vmax.f32 %v6466, 0.0
        %v6669 = vmax.f32 %v6469, 0.0
        %v6670 = vmax.f32 %v6474, 0.0
        %v6671 = vmax.f32 %v6477, 0.0
        %v6672 = vmax.f32 %v6482, 0.0
        %v6673 = vmax.f32 %v6485, 0.0
        %v6674 = vmax.f32 %v6490, 0.0
        %v6675 = vmax.f32 %v6493, 0.0
        %v6676 = vmax.f32 %v6498, 0.0
        %v6677 = vmax.f32 %v6501, 0.0
        %v6678 = vmax.f32 %v6506, 0.0
        %v6679 = vmax.f32 %v6509, 0.0
        %v6680 = vmax.f32 %v6514, 0.0
        %v6681 = vmax.f32 %v6517, 0.0
        %v6682 = vmax.f32 %v6522, 0.0
        %v6683 = vmax.f32 %v6525, 0.0
        %v6684 = vmax.f32 %v6530, 0.0
        %v6685 = vmax.f32 %v6533, 0.0
        %v6686 = vmax.f32 %v6538, 0.0
        %v6687 = vmax.f32 %v6541, 0.0
        %v6688 = vmax.f32 %v6546, 0.0
        %v6689 = vmax.f32 %v6549, 0.0
        %v6690 = vmax.f32 %v6554, 0.0
        %v6691 = vmax.f32 %v6557, 0.0
        %v6692 = vmax.f32 %v6562, 0.0
        %v6693 = vmax.f32 %v6565, 0.0
        %v6694 = vmax.f32 %v6570, 0.0
        %v6695 = vmax.f32 %v6573, 0.0
        %v6696 = vmax.f32 %v6578, 0.0
        %v6697 = vmax.f32 %v6581, 0.0
        %v6698 = vmax.f32 %v6586, 0.0
        %v6699 = vmax.f32 %v6589, 0.0
        %v6700 = vmax.f32 %v6594, 0.0
        %v6701 = vmax.f32 %v6597, 0.0
        %v6702 = vmax.f32 %v6602, 0.0
        %v6703 = vmax.f32 %v6605, 0.0
        %v6704 = vpack.c.bf16 %v6609, %v6608
        %v6705 = vpack.c.bf16 %v6611, %v6610
        %v6706 = vpack.c.bf16 %v6613, %v6612
        %v6707 = vpack.c.bf16 %v6615, %v6614
        %v6708 = vpack.c.bf16 %v6617, %v6616
        %v6709 = vpack.c.bf16 %v6619, %v6618
        %v6710 = vpack.c.bf16 %v6621, %v6620
        %v6711 = vpack.c.bf16 %v6623, %v6622
        %v6712 = vpack.c.bf16 %v6625, %v6624
        %v6713 = vpack.c.bf16 %v6627, %v6626
        %v6714 = vpack.c.bf16 %v6629, %v6628
        %v6715 = vpack.c.bf16 %v6631, %v6630
        %v6716 = vpack.c.bf16 %v6633, %v6632
        %v6717 = vpack.c.bf16 %v6635, %v6634
        %v6718 = vpack.c.bf16 %v6637, %v6636
        %v6719 = vpack.c.bf16 %v6639, %v6638
        %v6720 = vpack.c.bf16 %v6641, %v6640
        %v6721 = vpack.c.bf16 %v6643, %v6642
        %v6722 = vpack.c.bf16 %v6645, %v6644
        %v6723 = vpack.c.bf16 %v6647, %v6646
        %v6724 = vpack.c.bf16 %v6649, %v6648
        %v6725 = vpack.c.bf16 %v6651, %v6650
        %v6726 = vpack.c.bf16 %v6653, %v6652
        %v6727 = vpack.c.bf16 %v6655, %v6654
        %v6728 = vpack.c.bf16 %v6657, %v6656
        %v6729 = vpack.c.bf16 %v6659, %v6658
        %v6730 = vpack.c.bf16 %v6661, %v6660
        %v6731 = vpack.c.bf16 %v6663, %v6662
        %v6732 = vpack.c.bf16 %v6665, %v6664
        %v6733 = vpack.c.bf16 %v6667, %v6666
        %v6734 = vpack.c.bf16 %v6669, %v6668
        %v6735 = vpack.c.bf16 %v6671, %v6670
        %v6736 = vpack.c.bf16 %v6673, %v6672
        %v6737 = vpack.c.bf16 %v6675, %v6674
        %v6738 = vpack.c.bf16 %v6677, %v6676
        %v6739 = vpack.c.bf16 %v6679, %v6678
        %v6740 = vpack.c.bf16 %v6681, %v6680
        %v6741 = vpack.c.bf16 %v6683, %v6682
        %v6742 = vpack.c.bf16 %v6685, %v6684
        %v6743 = vpack.c.bf16 %v6687, %v6686
        %v6744 = vpack.c.bf16 %v6689, %v6688
        %v6745 = vpack.c.bf16 %v6691, %v6690
        %v6746 = vpack.c.bf16 %v6693, %v6692
        %v6747 = vpack.c.bf16 %v6695, %v6694
        %v6748 = vpack.c.bf16 %v6697, %v6696
        %v6749 = vpack.c.bf16 %v6699, %v6698
        %v6750 = vpack.c.bf16 %v6701, %v6700
        %v6751 = vpack.c.bf16 %v6703, %v6702
        %v6752 = vld [vmem:[%s5] sm:$0xf]
        %v6753 = vld [vmem:[%s5 + $0x4] sm:$0xf]
        %v6754 = vld [vmem:[%s5 + $0x8] sm:$0xf]
        %v6755 = vld [vmem:[%s5 + $0xc] sm:$0xf]
        %v6756 = vld [vmem:[%s6] sm:$0x1]
        %v6758 = vlaneseq
        %v6759 = vshrl.u32 %v6758, 7
        %v6760 = vsub.s32 0, %v6759
        %v6761 = vrot.slane %v6756, %v6760
        %v6767 = vunpack.c.l.b16 %v6752
        %v6768 = vunpack.c.l.b16 %v6753
        %v6769 = vunpack.c.l.b16 %v6754
        %v6770 = vunpack.c.l.b16 %v6755
        %v6771 = vpack.c.b16 %v6768, %v6767
        %v6772 = vpack.c.b16 %v6770, %v6769
        %v6776 = vsel %vm1361, %v6704, 0
        %v6779 = vsel %vm1361, %v6705, 0
        %v6782 = vsel %vm1361, %v6706, 0
        %v6785 = vsel %vm1361, %v6707, 0
        %v6788 = vsel %vm1361, %v6708, 0
        %v6791 = vsel %vm1361, %v6709, 0
        %v6794 = vsel %vm1361, %v6710, 0
        %v6797 = vsel %vm1361, %v6711, 0
        %v6800 = vsel %vm1361, %v6712, 0
        %v6803 = vsel %vm1361, %v6713, 0
        %v6806 = vsel %vm1361, %v6714, 0
        %v6809 = vsel %vm1361, %v6715, 0
        %v6812 = vsel %vm1361, %v6716, 0
        %v6815 = vsel %vm1361, %v6717, 0
        %v6818 = vsel %vm1361, %v6718, 0
        %v6821 = vsel %vm1361, %v6719, 0
        %v6824 = vsel %vm1361, %v6720, 0
        %v6827 = vsel %vm1361, %v6721, 0
        %v6830 = vsel %vm1361, %v6722, 0
        %v6833 = vsel %vm1361, %v6723, 0
        %v6836 = vsel %vm1361, %v6724, 0
        %v6839 = vsel %vm1361, %v6725, 0
        %v6842 = vsel %vm1361, %v6726, 0
        %v6845 = vsel %vm1361, %v6727, 0
        %v6848 = vsel %vm1361, %v6728, 0
        %v6851 = vsel %vm1361, %v6729, 0
        %v6854 = vsel %vm1361, %v6730, 0
        %v6857 = vsel %vm1361, %v6731, 0
        %v6860 = vsel %vm1361, %v6732, 0
        %v6863 = vsel %vm1361, %v6733, 0
        %v6866 = vsel %vm1361, %v6734, 0
        %v6869 = vsel %vm1361, %v6735, 0
        %v6872 = vsel %vm1361, %v6736, 0
        %v6875 = vsel %vm1361, %v6737, 0
        %v6878 = vsel %vm1361, %v6738, 0
        %v6881 = vsel %vm1361, %v6739, 0
        %v6884 = vsel %vm1361, %v6740, 0
        %v6887 = vsel %vm1361, %v6741, 0
        %v6890 = vsel %vm1361, %v6742, 0
        %v6893 = vsel %vm1361, %v6743, 0
        %v6896 = vsel %vm1361, %v6744, 0
        %v6899 = vsel %vm1361, %v6745, 0
        %v6902 = vsel %vm1361, %v6746, 0
        %v6905 = vsel %vm1361, %v6747, 0
        %v6908 = vsel %vm1361, %v6748, 0
        %v6911 = vsel %vm1361, %v6749, 0
        %v6914 = vsel %vm1361, %v6750, 0
        %v6917 = vsel %vm1361, %v6751, 0
        %6919 = vmatprep.subr.bf16.mxu0 0
        %6920 = vmatpush1.bf16.msra.mxu0 0
        %6921 = vmatprep.subr.bf16.mxu0 0
        %6922 = vmatpush1.bf16.msra.mxu0 0
        %6923 = vmatprep.subr.bf16.mxu0 0
        %6924 = vmatpush1.bf16.msra.mxu0 0
        %6925 = vmatprep.subr.bf16.mxu0 0
        %6926 = vmatpush1.bf16.msra.mxu0 0
        %6927 = vmatprep.subr.bf16.mxu0 0
        %6928 = vmatpush1.bf16.msra.mxu0 0
        %6929 = vmatprep.subr.bf16.mxu0 0
        %6930 = vmatpush1.bf16.msra.mxu0 0
        %6931 = vmatprep.subr.bf16.mxu0 0
        %6932 = vmatpush1.bf16.msra.mxu0 %v6772
        %6933 = vmatprep.subr.bf16.mxu0 0
        %6934 = vmatpush1.bf16.msra.mxu0 %v6771
        %6935 = vmatprep.subr.bf16.mxu0 0
        %6936 = vmatpush2.bf16.msra.mxu0 0
        %6937 = vmatprep.subr.bf16.mxu0 0
        %6938 = vmatpush2.bf16.msra.mxu0 0
        %6939 = vmatprep.subr.bf16.mxu0 0
        %6940 = vmatpush2.bf16.msra.mxu0 0
        %6941 = vmatprep.subr.bf16.mxu0 0
        %6942 = vmatpush2.bf16.msra.mxu0 0
        %6943 = vmatprep.subr.bf16.mxu0 0
        %6944 = vmatpush2.bf16.msra.mxu0 0
        %6945 = vmatprep.subr.bf16.mxu0 0
        %6946 = vmatpush2.bf16.msra.mxu0 0
        %6947 = vmatprep.subr.bf16.mxu0 0
        %6948 = vmatpush2.bf16.msra.mxu0 0
        %6949 = vmatprep.subr.bf16.mxu0 0
        %6950 = vmatpush2.bf16.msra.mxu0 0
        %6951 = vmatprep.mubr.bf16.mxu0 0
        %6952 = vmatmul.mubr.bf16.gmra.mxu0 %v6776
        %v6953 = vpop.f32.mrf.mxu0
        %v6954 = vadd.f32 %v6761, %v6953
        %v6955 = vpop.f32.mrf.mxu0
        %v6956 = vpop.f32.mrf.mxu0
        %v6957 = vadd.f32 %v6761, %v6956
        %v6958 = vpop.f32.mrf.mxu0
        %6959 = vmatprep.mubr.bf16.mxu0 0
        %6960 = vmatmul.mubr.bf16.gmra.mxu0 %v6779
        %v6961 = vpop.f32.mrf.mxu0
        %v6962 = vadd.f32 %v6761, %v6961
        %v6963 = vpop.f32.mrf.mxu0
        %v6964 = vpop.f32.mrf.mxu0
        %v6965 = vadd.f32 %v6761, %v6964
        %v6966 = vpop.f32.mrf.mxu0
        %6967 = vmatprep.mubr.bf16.mxu0 0
        %6968 = vmatmul.mubr.bf16.gmra.mxu0 %v6782
        %v6969 = vpop.f32.mrf.mxu0
        %v6970 = vadd.f32 %v6761, %v6969
        %v6971 = vpop.f32.mrf.mxu0
        %v6972 = vpop.f32.mrf.mxu0
        %v6973 = vadd.f32 %v6761, %v6972
        %v6974 = vpop.f32.mrf.mxu0
        %6975 = vmatprep.mubr.bf16.mxu0 0
        %6976 = vmatmul.mubr.bf16.gmra.mxu0 %v6785
        %v6977 = vpop.f32.mrf.mxu0
        %v6978 = vadd.f32 %v6761, %v6977
        %v6979 = vpop.f32.mrf.mxu0
        %v6980 = vpop.f32.mrf.mxu0
        %v6981 = vadd.f32 %v6761, %v6980
        %v6982 = vpop.f32.mrf.mxu0
        %6983 = vmatprep.mubr.bf16.mxu0 0
        %6984 = vmatmul.mubr.bf16.gmra.mxu0 %v6788
        %v6985 = vpop.f32.mrf.mxu0
        %v6986 = vadd.f32 %v6761, %v6985
        %v6987 = vpop.f32.mrf.mxu0
        %v6988 = vpop.f32.mrf.mxu0
        %v6989 = vadd.f32 %v6761, %v6988
        %v6990 = vpop.f32.mrf.mxu0
        %6991 = vmatprep.mubr.bf16.mxu0 0
        %6992 = vmatmul.mubr.bf16.gmra.mxu0 %v6791
        %v6993 = vpop.f32.mrf.mxu0
        %v6994 = vadd.f32 %v6761, %v6993
        %v6995 = vpop.f32.mrf.mxu0
        %v6996 = vpop.f32.mrf.mxu0
        %v6997 = vadd.f32 %v6761, %v6996
        %v6998 = vpop.f32.mrf.mxu0
        %6999 = vmatprep.mubr.bf16.mxu0 0
        %7000 = vmatmul.mubr.bf16.gmra.mxu0 %v6794
        %v7001 = vpop.f32.mrf.mxu0
        %v7002 = vadd.f32 %v6761, %v7001
        %v7003 = vpop.f32.mrf.mxu0
        %v7004 = vpop.f32.mrf.mxu0
        %v7005 = vadd.f32 %v6761, %v7004
        %v7006 = vpop.f32.mrf.mxu0
        %7007 = vmatprep.mubr.bf16.mxu0 0
        %7008 = vmatmul.mubr.bf16.gmra.mxu0 %v6797
        %v7009 = vpop.f32.mrf.mxu0
        %v7010 = vadd.f32 %v6761, %v7009
        %v7011 = vpop.f32.mrf.mxu0
        %v7012 = vpop.f32.mrf.mxu0
        %v7013 = vadd.f32 %v6761, %v7012
        %v7014 = vpop.f32.mrf.mxu0
        %7015 = vmatprep.mubr.bf16.mxu0 0
        %7016 = vmatmul.mubr.bf16.gmra.mxu0 %v6800
        %v7017 = vpop.f32.mrf.mxu0
        %v7018 = vadd.f32 %v6761, %v7017
        %v7019 = vpop.f32.mrf.mxu0
        %v7020 = vpop.f32.mrf.mxu0
        %v7021 = vadd.f32 %v6761, %v7020
        %v7022 = vpop.f32.mrf.mxu0
        %7023 = vmatprep.mubr.bf16.mxu0 0
        %7024 = vmatmul.mubr.bf16.gmra.mxu0 %v6803
        %v7025 = vpop.f32.mrf.mxu0
        %v7026 = vadd.f32 %v6761, %v7025
        %v7027 = vpop.f32.mrf.mxu0
        %v7028 = vpop.f32.mrf.mxu0
        %v7029 = vadd.f32 %v6761, %v7028
        %v7030 = vpop.f32.mrf.mxu0
        %7031 = vmatprep.mubr.bf16.mxu0 0
        %7032 = vmatmul.mubr.bf16.gmra.mxu0 %v6806
        %v7033 = vpop.f32.mrf.mxu0
        %v7034 = vadd.f32 %v6761, %v7033
        %v7035 = vpop.f32.mrf.mxu0
        %v7036 = vpop.f32.mrf.mxu0
        %v7037 = vadd.f32 %v6761, %v7036
        %v7038 = vpop.f32.mrf.mxu0
        %7039 = vmatprep.mubr.bf16.mxu0 0
        %7040 = vmatmul.mubr.bf16.gmra.mxu0 %v6809
        %v7041 = vpop.f32.mrf.mxu0
        %v7042 = vadd.f32 %v6761, %v7041
        %v7043 = vpop.f32.mrf.mxu0
        %v7044 = vpop.f32.mrf.mxu0
        %v7045 = vadd.f32 %v6761, %v7044
        %v7046 = vpop.f32.mrf.mxu0
        %7047 = vmatprep.mubr.bf16.mxu0 0
        %7048 = vmatmul.mubr.bf16.gmra.mxu0 %v6812
        %v7049 = vpop.f32.mrf.mxu0
        %v7050 = vadd.f32 %v6761, %v7049
        %v7051 = vpop.f32.mrf.mxu0
        %v7052 = vpop.f32.mrf.mxu0
        %v7053 = vadd.f32 %v6761, %v7052
        %v7054 = vpop.f32.mrf.mxu0
        %7055 = vmatprep.mubr.bf16.mxu0 0
        %7056 = vmatmul.mubr.bf16.gmra.mxu0 %v6815
        %v7057 = vpop.f32.mrf.mxu0
        %v7058 = vadd.f32 %v6761, %v7057
        %v7059 = vpop.f32.mrf.mxu0
        %v7060 = vpop.f32.mrf.mxu0
        %v7061 = vadd.f32 %v6761, %v7060
        %v7062 = vpop.f32.mrf.mxu0
        %7063 = vmatprep.mubr.bf16.mxu0 0
        %7064 = vmatmul.mubr.bf16.gmra.mxu0 %v6818
        %v7065 = vpop.f32.mrf.mxu0
        %v7066 = vadd.f32 %v6761, %v7065
        %v7067 = vpop.f32.mrf.mxu0
        %v7068 = vpop.f32.mrf.mxu0
        %v7069 = vadd.f32 %v6761, %v7068
        %v7070 = vpop.f32.mrf.mxu0
        %7071 = vmatprep.mubr.bf16.mxu0 0
        %7072 = vmatmul.mubr.bf16.gmra.mxu0 %v6821
        %v7073 = vpop.f32.mrf.mxu0
        %v7074 = vadd.f32 %v6761, %v7073
        %v7075 = vpop.f32.mrf.mxu0
        %v7076 = vpop.f32.mrf.mxu0
        %v7077 = vadd.f32 %v6761, %v7076
        %v7078 = vpop.f32.mrf.mxu0
        %7079 = vmatprep.mubr.bf16.mxu0 0
        %7080 = vmatmul.mubr.bf16.gmra.mxu0 %v6824
        %v7081 = vpop.f32.mrf.mxu0
        %v7082 = vadd.f32 %v6761, %v7081
        %v7083 = vpop.f32.mrf.mxu0
        %v7084 = vpop.f32.mrf.mxu0
        %v7085 = vadd.f32 %v6761, %v7084
        %v7086 = vpop.f32.mrf.mxu0
        %7087 = vmatprep.mubr.bf16.mxu0 0
        %7088 = vmatmul.mubr.bf16.gmra.mxu0 %v6827
        %v7089 = vpop.f32.mrf.mxu0
        %v7090 = vadd.f32 %v6761, %v7089
        %v7091 = vpop.f32.mrf.mxu0
        %v7092 = vpop.f32.mrf.mxu0
        %v7093 = vadd.f32 %v6761, %v7092
        %v7094 = vpop.f32.mrf.mxu0
        %7095 = vmatprep.mubr.bf16.mxu0 0
        %7096 = vmatmul.mubr.bf16.gmra.mxu0 %v6830
        %v7097 = vpop.f32.mrf.mxu0
        %v7098 = vadd.f32 %v6761, %v7097
        %v7099 = vpop.f32.mrf.mxu0
        %v7100 = vpop.f32.mrf.mxu0
        %v7101 = vadd.f32 %v6761, %v7100
        %v7102 = vpop.f32.mrf.mxu0
        %7103 = vmatprep.mubr.bf16.mxu0 0
        %7104 = vmatmul.mubr.bf16.gmra.mxu0 %v6833
        %v7105 = vpop.f32.mrf.mxu0
        %v7106 = vadd.f32 %v6761, %v7105
        %v7107 = vpop.f32.mrf.mxu0
        %v7108 = vpop.f32.mrf.mxu0
        %v7109 = vadd.f32 %v6761, %v7108
        %v7110 = vpop.f32.mrf.mxu0
        %7111 = vmatprep.mubr.bf16.mxu0 0
        %7112 = vmatmul.mubr.bf16.gmra.mxu0 %v6836
        %v7113 = vpop.f32.mrf.mxu0
        %v7114 = vadd.f32 %v6761, %v7113
        %v7115 = vpop.f32.mrf.mxu0
        %v7116 = vpop.f32.mrf.mxu0
        %v7117 = vadd.f32 %v6761, %v7116
        %v7118 = vpop.f32.mrf.mxu0
        %7119 = vmatprep.mubr.bf16.mxu0 0
        %7120 = vmatmul.mubr.bf16.gmra.mxu0 %v6839
        %v7121 = vpop.f32.mrf.mxu0
        %v7122 = vadd.f32 %v6761, %v7121
        %v7123 = vpop.f32.mrf.mxu0
        %v7124 = vpop.f32.mrf.mxu0
        %v7125 = vadd.f32 %v6761, %v7124
        %v7126 = vpop.f32.mrf.mxu0
        %7127 = vmatprep.mubr.bf16.mxu0 0
        %7128 = vmatmul.mubr.bf16.gmra.mxu0 %v6842
        %v7129 = vpop.f32.mrf.mxu0
        %v7130 = vadd.f32 %v6761, %v7129
        %v7131 = vpop.f32.mrf.mxu0
        %v7132 = vpop.f32.mrf.mxu0
        %v7133 = vadd.f32 %v6761, %v7132
        %v7134 = vpop.f32.mrf.mxu0
        %7135 = vmatprep.mubr.bf16.mxu0 0
        %7136 = vmatmul.mubr.bf16.gmra.mxu0 %v6845
        %v7137 = vpop.f32.mrf.mxu0
        %v7138 = vadd.f32 %v6761, %v7137
        %v7139 = vpop.f32.mrf.mxu0
        %v7140 = vpop.f32.mrf.mxu0
        %v7141 = vadd.f32 %v6761, %v7140
        %v7142 = vpop.f32.mrf.mxu0
        %7143 = vmatprep.mubr.bf16.mxu0 0
        %7144 = vmatmul.mubr.bf16.gmra.mxu0 %v6848
        %v7145 = vpop.f32.mrf.mxu0
        %v7146 = vadd.f32 %v6761, %v7145
        %v7147 = vpop.f32.mrf.mxu0
        %v7148 = vpop.f32.mrf.mxu0
        %v7149 = vadd.f32 %v6761, %v7148
        %v7150 = vpop.f32.mrf.mxu0
        %7151 = vmatprep.mubr.bf16.mxu0 0
        %7152 = vmatmul.mubr.bf16.gmra.mxu0 %v6851
        %v7153 = vpop.f32.mrf.mxu0
        %v7154 = vadd.f32 %v6761, %v7153
        %v7155 = vpop.f32.mrf.mxu0
        %v7156 = vpop.f32.mrf.mxu0
        %v7157 = vadd.f32 %v6761, %v7156
        %v7158 = vpop.f32.mrf.mxu0
        %7159 = vmatprep.mubr.bf16.mxu0 0
        %7160 = vmatmul.mubr.bf16.gmra.mxu0 %v6854
        %v7161 = vpop.f32.mrf.mxu0
        %v7162 = vadd.f32 %v6761, %v7161
        %v7163 = vpop.f32.mrf.mxu0
        %v7164 = vpop.f32.mrf.mxu0
        %v7165 = vadd.f32 %v6761, %v7164
        %v7166 = vpop.f32.mrf.mxu0
        %7167 = vmatprep.mubr.bf16.mxu0 0
        %7168 = vmatmul.mubr.bf16.gmra.mxu0 %v6857
        %v7169 = vpop.f32.mrf.mxu0
        %v7170 = vadd.f32 %v6761, %v7169
        %v7171 = vpop.f32.mrf.mxu0
        %v7172 = vpop.f32.mrf.mxu0
        %v7173 = vadd.f32 %v6761, %v7172
        %v7174 = vpop.f32.mrf.mxu0
        %7175 = vmatprep.mubr.bf16.mxu0 0
        %7176 = vmatmul.mubr.bf16.gmra.mxu0 %v6860
        %v7177 = vpop.f32.mrf.mxu0
        %v7178 = vadd.f32 %v6761, %v7177
        %v7179 = vpop.f32.mrf.mxu0
        %v7180 = vpop.f32.mrf.mxu0
        %v7181 = vadd.f32 %v6761, %v7180
        %v7182 = vpop.f32.mrf.mxu0
        %7183 = vmatprep.mubr.bf16.mxu0 0
        %7184 = vmatmul.mubr.bf16.gmra.mxu0 %v6863
        %v7185 = vpop.f32.mrf.mxu0
        %v7186 = vadd.f32 %v6761, %v7185
        %v7187 = vpop.f32.mrf.mxu0
        %v7188 = vpop.f32.mrf.mxu0
        %v7189 = vadd.f32 %v6761, %v7188
        %v7190 = vpop.f32.mrf.mxu0
        %7191 = vmatprep.mubr.bf16.mxu0 0
        %7192 = vmatmul.mubr.bf16.gmra.mxu0 %v6866
        %v7193 = vpop.f32.mrf.mxu0
        %v7194 = vadd.f32 %v6761, %v7193
        %v7195 = vpop.f32.mrf.mxu0
        %v7196 = vpop.f32.mrf.mxu0
        %v7197 = vadd.f32 %v6761, %v7196
        %v7198 = vpop.f32.mrf.mxu0
        %7199 = vmatprep.mubr.bf16.mxu0 0
        %7200 = vmatmul.mubr.bf16.gmra.mxu0 %v6869
        %v7201 = vpop.f32.mrf.mxu0
        %v7202 = vadd.f32 %v6761, %v7201
        %v7203 = vpop.f32.mrf.mxu0
        %v7204 = vpop.f32.mrf.mxu0
        %v7205 = vadd.f32 %v6761, %v7204
        %v7206 = vpop.f32.mrf.mxu0
        %7207 = vmatprep.mubr.bf16.mxu0 0
        %7208 = vmatmul.mubr.bf16.gmra.mxu0 %v6872
        %v7209 = vpop.f32.mrf.mxu0
        %v7210 = vadd.f32 %v6761, %v7209
        %v7211 = vpop.f32.mrf.mxu0
        %v7212 = vpop.f32.mrf.mxu0
        %v7213 = vadd.f32 %v6761, %v7212
        %v7214 = vpop.f32.mrf.mxu0
        %7215 = vmatprep.mubr.bf16.mxu0 0
        %7216 = vmatmul.mubr.bf16.gmra.mxu0 %v6875
        %v7217 = vpop.f32.mrf.mxu0
        %v7218 = vadd.f32 %v6761, %v7217
        %v7219 = vpop.f32.mrf.mxu0
        %v7220 = vpop.f32.mrf.mxu0
        %v7221 = vadd.f32 %v6761, %v7220
        %v7222 = vpop.f32.mrf.mxu0
        %7223 = vmatprep.mubr.bf16.mxu0 0
        %7224 = vmatmul.mubr.bf16.gmra.mxu0 %v6878
        %v7225 = vpop.f32.mrf.mxu0
        %v7226 = vadd.f32 %v6761, %v7225
        %v7227 = vpop.f32.mrf.mxu0
        %v7228 = vpop.f32.mrf.mxu0
        %v7229 = vadd.f32 %v6761, %v7228
        %v7230 = vpop.f32.mrf.mxu0
        %7231 = vmatprep.mubr.bf16.mxu0 0
        %7232 = vmatmul.mubr.bf16.gmra.mxu0 %v6881
        %v7233 = vpop.f32.mrf.mxu0
        %v7234 = vadd.f32 %v6761, %v7233
        %v7235 = vpop.f32.mrf.mxu0
        %v7236 = vpop.f32.mrf.mxu0
        %v7237 = vadd.f32 %v6761, %v7236
        %v7238 = vpop.f32.mrf.mxu0
        %7239 = vmatprep.mubr.bf16.mxu0 0
        %7240 = vmatmul.mubr.bf16.gmra.mxu0 %v6884
        %v7241 = vpop.f32.mrf.mxu0
        %v7242 = vadd.f32 %v6761, %v7241
        %v7243 = vpop.f32.mrf.mxu0
        %v7244 = vpop.f32.mrf.mxu0
        %v7245 = vadd.f32 %v6761, %v7244
        %v7246 = vpop.f32.mrf.mxu0
        %7247 = vmatprep.mubr.bf16.mxu0 0
        %7248 = vmatmul.mubr.bf16.gmra.mxu0 %v6887
        %v7249 = vpop.f32.mrf.mxu0
        %v7250 = vadd.f32 %v6761, %v7249
        %v7251 = vpop.f32.mrf.mxu0
        %v7252 = vpop.f32.mrf.mxu0
        %v7253 = vadd.f32 %v6761, %v7252
        %v7254 = vpop.f32.mrf.mxu0
        %7255 = vmatprep.mubr.bf16.mxu0 0
        %7256 = vmatmul.mubr.bf16.gmra.mxu0 %v6890
        %v7257 = vpop.f32.mrf.mxu0
        %v7258 = vadd.f32 %v6761, %v7257
        %v7259 = vpop.f32.mrf.mxu0
        %v7260 = vpop.f32.mrf.mxu0
        %v7261 = vadd.f32 %v6761, %v7260
        %v7262 = vpop.f32.mrf.mxu0
        %7263 = vmatprep.mubr.bf16.mxu0 0
        %7264 = vmatmul.mubr.bf16.gmra.mxu0 %v6893
        %v7265 = vpop.f32.mrf.mxu0
        %v7266 = vadd.f32 %v6761, %v7265
        %v7267 = vpop.f32.mrf.mxu0
        %v7268 = vpop.f32.mrf.mxu0
        %v7269 = vadd.f32 %v6761, %v7268
        %v7270 = vpop.f32.mrf.mxu0
        %7271 = vmatprep.mubr.bf16.mxu0 0
        %7272 = vmatmul.mubr.bf16.gmra.mxu0 %v6896
        %v7273 = vpop.f32.mrf.mxu0
        %v7274 = vadd.f32 %v6761, %v7273
        %v7275 = vpop.f32.mrf.mxu0
        %v7276 = vpop.f32.mrf.mxu0
        %v7277 = vadd.f32 %v6761, %v7276
        %v7278 = vpop.f32.mrf.mxu0
        %7279 = vmatprep.mubr.bf16.mxu0 0
        %7280 = vmatmul.mubr.bf16.gmra.mxu0 %v6899
        %v7281 = vpop.f32.mrf.mxu0
        %v7282 = vadd.f32 %v6761, %v7281
        %v7283 = vpop.f32.mrf.mxu0
        %v7284 = vpop.f32.mrf.mxu0
        %v7285 = vadd.f32 %v6761, %v7284
        %v7286 = vpop.f32.mrf.mxu0
        %7287 = vmatprep.mubr.bf16.mxu0 0
        %7288 = vmatmul.mubr.bf16.gmra.mxu0 %v6902
        %v7289 = vpop.f32.mrf.mxu0
        %v7290 = vadd.f32 %v6761, %v7289
        %v7291 = vpop.f32.mrf.mxu0
        %v7292 = vpop.f32.mrf.mxu0
        %v7293 = vadd.f32 %v6761, %v7292
        %v7294 = vpop.f32.mrf.mxu0
        %7295 = vmatprep.mubr.bf16.mxu0 0
        %7296 = vmatmul.mubr.bf16.gmra.mxu0 %v6905
        %v7297 = vpop.f32.mrf.mxu0
        %v7298 = vadd.f32 %v6761, %v7297
        %v7299 = vpop.f32.mrf.mxu0
        %v7300 = vpop.f32.mrf.mxu0
        %v7301 = vadd.f32 %v6761, %v7300
        %v7302 = vpop.f32.mrf.mxu0
        %7303 = vmatprep.mubr.bf16.mxu0 0
        %7304 = vmatmul.mubr.bf16.gmra.mxu0 %v6908
        %v7305 = vpop.f32.mrf.mxu0
        %v7306 = vadd.f32 %v6761, %v7305
        %v7307 = vpop.f32.mrf.mxu0
        %v7308 = vpop.f32.mrf.mxu0
        %v7309 = vadd.f32 %v6761, %v7308
        %v7310 = vpop.f32.mrf.mxu0
        %7311 = vmatprep.mubr.bf16.mxu0 0
        %7312 = vmatmul.mubr.bf16.gmra.mxu0 %v6911
        %v7313 = vpop.f32.mrf.mxu0
        %v7314 = vadd.f32 %v6761, %v7313
        %v7315 = vpop.f32.mrf.mxu0
        %v7316 = vpop.f32.mrf.mxu0
        %v7317 = vadd.f32 %v6761, %v7316
        %v7318 = vpop.f32.mrf.mxu0
        %7319 = vmatprep.mubr.bf16.mxu0 0
        %7320 = vmatmul.mubr.bf16.gmra.mxu0 %v6914
        %v7321 = vpop.f32.mrf.mxu0
        %v7322 = vadd.f32 %v6761, %v7321
        %v7323 = vpop.f32.mrf.mxu0
        %v7324 = vpop.f32.mrf.mxu0
        %v7325 = vadd.f32 %v6761, %v7324
        %v7326 = vpop.f32.mrf.mxu0
        %7327 = vmatprep.mubr.bf16.mxu0 0
        %7328 = vmatmul.mubr.bf16.gmra.mxu0 %v6917
        %v7329 = vpop.f32.mrf.mxu0
        %v7330 = vadd.f32 %v6761, %v7329
        %v7331 = vpop.f32.mrf.mxu0
        %v7332 = vpop.f32.mrf.mxu0
        %v7333 = vadd.f32 %v6761, %v7332
        %v7334 = vpop.f32.mrf.mxu0
        %7335 = vdwg.mxu0
        %v7336 = vmax.f32 %v6954, 0.0
        %v7337 = vmax.f32 %v6957, 0.0
        %v7338 = vmax.f32 %v6962, 0.0
        %v7339 = vmax.f32 %v6965, 0.0
        %v7340 = vmax.f32 %v6970, 0.0
        %v7341 = vmax.f32 %v6973, 0.0
        %v7342 = vmax.f32 %v6978, 0.0
        %v7343 = vmax.f32 %v6981, 0.0
        %v7344 = vmax.f32 %v6986, 0.0
        %v7345 = vmax.f32 %v6989, 0.0
        %v7346 = vmax.f32 %v6994, 0.0
        %v7347 = vmax.f32 %v6997, 0.0
        %v7348 = vmax.f32 %v7002, 0.0
        %v7349 = vmax.f32 %v7005, 0.0
        %v7350 = vmax.f32 %v7010, 0.0
        %v7351 = vmax.f32 %v7013, 0.0
        %v7352 = vmax.f32 %v7018, 0.0
        %v7353 = vmax.f32 %v7021, 0.0
        %v7354 = vmax.f32 %v7026, 0.0
        %v7355 = vmax.f32 %v7029, 0.0
        %v7356 = vmax.f32 %v7034, 0.0
        %v7357 = vmax.f32 %v7037, 0.0
        %v7358 = vmax.f32 %v7042, 0.0
        %v7359 = vmax.f32 %v7045, 0.0
        %v7360 = vmax.f32 %v7050, 0.0
        %v7361 = vmax.f32 %v7053, 0.0
        %v7362 = vmax.f32 %v7058, 0.0
        %v7363 = vmax.f32 %v7061, 0.0
        %v7364 = vmax.f32 %v7066, 0.0
        %v7365 = vmax.f32 %v7069, 0.0
        %v7366 = vmax.f32 %v7074, 0.0
        %v7367 = vmax.f32 %v7077, 0.0
        %v7368 = vmax.f32 %v7082, 0.0
        %v7369 = vmax.f32 %v7085, 0.0
        %v7370 = vmax.f32 %v7090, 0.0
        %v7371 = vmax.f32 %v7093, 0.0
        %v7372 = vmax.f32 %v7098, 0.0
        %v7373 = vmax.f32 %v7101, 0.0
        %v7374 = vmax.f32 %v7106, 0.0
        %v7375 = vmax.f32 %v7109, 0.0
        %v7376 = vmax.f32 %v7114, 0.0
        %v7377 = vmax.f32 %v7117, 0.0
        %v7378 = vmax.f32 %v7122, 0.0
        %v7379 = vmax.f32 %v7125, 0.0
        %v7380 = vmax.f32 %v7130, 0.0
        %v7381 = vmax.f32 %v7133, 0.0
        %v7382 = vmax.f32 %v7138, 0.0
        %v7383 = vmax.f32 %v7141, 0.0
        %v7384 = vmax.f32 %v7146, 0.0
        %v7385 = vmax.f32 %v7149, 0.0
        %v7386 = vmax.f32 %v7154, 0.0
        %v7387 = vmax.f32 %v7157, 0.0
        %v7388 = vmax.f32 %v7162, 0.0
        %v7389 = vmax.f32 %v7165, 0.0
        %v7390 = vmax.f32 %v7170, 0.0
        %v7391 = vmax.f32 %v7173, 0.0
        %v7392 = vmax.f32 %v7178, 0.0
        %v7393 = vmax.f32 %v7181, 0.0
        %v7394 = vmax.f32 %v7186, 0.0
        %v7395 = vmax.f32 %v7189, 0.0
        %v7396 = vmax.f32 %v7194, 0.0
        %v7397 = vmax.f32 %v7197, 0.0
        %v7398 = vmax.f32 %v7202, 0.0
        %v7399 = vmax.f32 %v7205, 0.0
        %v7400 = vmax.f32 %v7210, 0.0
        %v7401 = vmax.f32 %v7213, 0.0
        %v7402 = vmax.f32 %v7218, 0.0
        %v7403 = vmax.f32 %v7221, 0.0
        %v7404 = vmax.f32 %v7226, 0.0
        %v7405 = vmax.f32 %v7229, 0.0
        %v7406 = vmax.f32 %v7234, 0.0
        %v7407 = vmax.f32 %v7237, 0.0
        %v7408 = vmax.f32 %v7242, 0.0
        %v7409 = vmax.f32 %v7245, 0.0
        %v7410 = vmax.f32 %v7250, 0.0
        %v7411 = vmax.f32 %v7253, 0.0
        %v7412 = vmax.f32 %v7258, 0.0
        %v7413 = vmax.f32 %v7261, 0.0
        %v7414 = vmax.f32 %v7266, 0.0
        %v7415 = vmax.f32 %v7269, 0.0
        %v7416 = vmax.f32 %v7274, 0.0
        %v7417 = vmax.f32 %v7277, 0.0
        %v7418 = vmax.f32 %v7282, 0.0
        %v7419 = vmax.f32 %v7285, 0.0
        %v7420 = vmax.f32 %v7290, 0.0
        %v7421 = vmax.f32 %v7293, 0.0
        %v7422 = vmax.f32 %v7298, 0.0
        %v7423 = vmax.f32 %v7301, 0.0
        %v7424 = vmax.f32 %v7306, 0.0
        %v7425 = vmax.f32 %v7309, 0.0
        %v7426 = vmax.f32 %v7314, 0.0
        %v7427 = vmax.f32 %v7317, 0.0
        %v7428 = vmax.f32 %v7322, 0.0
        %v7429 = vmax.f32 %v7325, 0.0
        %v7430 = vmax.f32 %v7330, 0.0
        %v7431 = vmax.f32 %v7333, 0.0
        %v7432 = vld [vmem:[%s7] sm:$0x3]
        %v7433 = vpack.c.bf16 %v7337, %v7336
        %v7434 = vpack.c.bf16 %v7339, %v7338
        %v7435 = vpack.c.bf16 %v7341, %v7340
        %v7436 = vpack.c.bf16 %v7343, %v7342
        %v7437 = vpack.c.bf16 %v7345, %v7344
        %v7438 = vpack.c.bf16 %v7347, %v7346
        %v7439 = vpack.c.bf16 %v7349, %v7348
        %v7440 = vpack.c.bf16 %v7351, %v7350
        %v7441 = vpack.c.bf16 %v7353, %v7352
        %v7442 = vpack.c.bf16 %v7355, %v7354
        %v7443 = vpack.c.bf16 %v7357, %v7356
        %v7444 = vpack.c.bf16 %v7359, %v7358
        %v7445 = vpack.c.bf16 %v7361, %v7360
        %v7446 = vpack.c.bf16 %v7363, %v7362
        %v7447 = vpack.c.bf16 %v7365, %v7364
        %v7448 = vpack.c.bf16 %v7367, %v7366
        %v7449 = vpack.c.bf16 %v7369, %v7368
        %v7450 = vpack.c.bf16 %v7371, %v7370
        %v7451 = vpack.c.bf16 %v7373, %v7372
        %v7452 = vpack.c.bf16 %v7375, %v7374
        %v7453 = vpack.c.bf16 %v7377, %v7376
        %v7454 = vpack.c.bf16 %v7379, %v7378
        %v7455 = vpack.c.bf16 %v7381, %v7380
        %v7456 = vpack.c.bf16 %v7383, %v7382
        %v7457 = vpack.c.bf16 %v7385, %v7384
        %v7458 = vpack.c.bf16 %v7387, %v7386
        %v7459 = vpack.c.bf16 %v7389, %v7388
        %v7460 = vpack.c.bf16 %v7391, %v7390
        %v7461 = vpack.c.bf16 %v7393, %v7392
        %v7462 = vpack.c.bf16 %v7395, %v7394
        %v7463 = vpack.c.bf16 %v7397, %v7396
        %v7464 = vpack.c.bf16 %v7399, %v7398
        %v7465 = vpack.c.bf16 %v7401, %v7400
        %v7466 = vpack.c.bf16 %v7403, %v7402
        %v7467 = vpack.c.bf16 %v7405, %v7404
        %v7468 = vpack.c.bf16 %v7407, %v7406
        %v7469 = vpack.c.bf16 %v7409, %v7408
        %v7470 = vpack.c.bf16 %v7411, %v7410
        %v7471 = vpack.c.bf16 %v7413, %v7412
        %v7472 = vpack.c.bf16 %v7415, %v7414
        %v7473 = vpack.c.bf16 %v7417, %v7416
        %v7474 = vpack.c.bf16 %v7419, %v7418
        %v7475 = vpack.c.bf16 %v7421, %v7420
        %v7476 = vpack.c.bf16 %v7423, %v7422
        %v7477 = vpack.c.bf16 %v7425, %v7424
        %v7478 = vpack.c.bf16 %v7427, %v7426
        %v7479 = vpack.c.bf16 %v7429, %v7428
        %v7480 = vpack.c.bf16 %v7431, %v7430
        %v7481 = vld [vmem:[%s8] sm:$0x7]
        %7483 = vset.pattern.permute.xlu0 0
        %7484 = vperm.xlu0 %7483, %v7481
        %v7485 = vpop.permute.xlu0 %7484
        %v7488 = vsel %vm1361, %v7432, 0
        %v7491 = vsel %vm1361, %v7433, 0
        %v7494 = vsel %vm1361, %v7434, 0
        %v7497 = vsel %vm1361, %v7435, 0
        %v7500 = vsel %vm1361, %v7436, 0
        %v7503 = vsel %vm1361, %v7437, 0
        %v7506 = vsel %vm1361, %v7438, 0
        %v7509 = vsel %vm1361, %v7439, 0
        %v7512 = vsel %vm1361, %v7440, 0
        %v7515 = vsel %vm1361, %v7441, 0
        %v7518 = vsel %vm1361, %v7442, 0
        %v7521 = vsel %vm1361, %v7443, 0
        %v7524 = vsel %vm1361, %v7444, 0
        %v7527 = vsel %vm1361, %v7445, 0
        %v7530 = vsel %vm1361, %v7446, 0
        %v7533 = vsel %vm1361, %v7447, 0
        %v7536 = vsel %vm1361, %v7448, 0
        %v7539 = vsel %vm1361, %v7449, 0
        %v7542 = vsel %vm1361, %v7450, 0
        %v7545 = vsel %vm1361, %v7451, 0
        %v7548 = vsel %vm1361, %v7452, 0
        %v7551 = vsel %vm1361, %v7453, 0
        %v7554 = vsel %vm1361, %v7454, 0
        %v7557 = vsel %vm1361, %v7455, 0
        %v7560 = vsel %vm1361, %v7456, 0
        %v7563 = vsel %vm1361, %v7457, 0
        %v7566 = vsel %vm1361, %v7458, 0
        %v7569 = vsel %vm1361, %v7459, 0
        %v7572 = vsel %vm1361, %v7460, 0
        %v7575 = vsel %vm1361, %v7461, 0
        %v7578 = vsel %vm1361, %v7462, 0
        %v7581 = vsel %vm1361, %v7463, 0
        %v7584 = vsel %vm1361, %v7464, 0
        %v7587 = vsel %vm1361, %v7465, 0
        %v7590 = vsel %vm1361, %v7466, 0
        %v7593 = vsel %vm1361, %v7467, 0
        %v7596 = vsel %vm1361, %v7468, 0
        %v7599 = vsel %vm1361, %v7469, 0
        %v7602 = vsel %vm1361, %v7470, 0
        %v7605 = vsel %vm1361, %v7471, 0
        %v7608 = vsel %vm1361, %v7472, 0
        %v7611 = vsel %vm1361, %v7473, 0
        %v7614 = vsel %vm1361, %v7474, 0
        %v7617 = vsel %vm1361, %v7475, 0
        %v7620 = vsel %vm1361, %v7476, 0
        %v7623 = vsel %vm1361, %v7477, 0
        %v7626 = vsel %vm1361, %v7478, 0
        %v7629 = vsel %vm1361, %v7479, 0
        %v7632 = vsel %vm1361, %v7480, 0
        %7634 = vmatprep.subr.bf16.mxu0 0
        %7635 = vmatpush1.bf16.xpose.msra.mxu0 %v7512
        %7636 = vmatprep.subr.bf16.mxu0 0
        %7637 = vmatpush1.bf16.xpose.msra.mxu0 %v7509
        %7638 = vmatprep.subr.bf16.mxu0 0
        %7639 = vmatpush1.bf16.xpose.msra.mxu0 %v7506
        %7640 = vmatprep.subr.bf16.mxu0 0
        %7641 = vmatpush1.bf16.xpose.msra.mxu0 %v7503
        %7642 = vmatprep.subr.bf16.mxu0 0
        %7643 = vmatpush1.bf16.xpose.msra.mxu0 %v7500
        %7644 = vmatprep.subr.bf16.mxu0 0
        %7645 = vmatpush1.bf16.xpose.msra.mxu0 %v7497
        %7646 = vmatprep.subr.bf16.mxu0 0
        %7647 = vmatpush1.bf16.xpose.msra.mxu0 %v7494
        %7648 = vmatprep.subr.bf16.mxu0 0
        %7649 = vmatpush1.bf16.xpose.msra.mxu0 %v7491
        %7650 = vmatprep.subr.bf16.mxu0 0
        %7651 = vmatpush2.bf16.xpose.msra.mxu0 %v7536
        %7652 = vmatprep.subr.bf16.mxu0 0
        %7653 = vmatpush2.bf16.xpose.msra.mxu0 %v7533
        %7654 = vmatprep.subr.bf16.mxu0 0
        %7655 = vmatpush2.bf16.xpose.msra.mxu0 %v7530
        %7656 = vmatprep.subr.bf16.mxu0 0
        %7657 = vmatpush2.bf16.xpose.msra.mxu0 %v7527
        %7658 = vmatprep.subr.bf16.mxu0 0
        %7659 = vmatpush2.bf16.xpose.msra.mxu0 %v7524
        %7660 = vmatprep.subr.bf16.mxu0 0
        %7661 = vmatpush2.bf16.xpose.msra.mxu0 %v7521
        %7662 = vmatprep.subr.bf16.mxu0 0
        %7663 = vmatpush2.bf16.xpose.msra.mxu0 %v7518
        %7664 = vmatprep.subr.bf16.mxu0 0
        %7665 = vmatpush2.bf16.xpose.msra.mxu0 %v7515
        %7666 = vmatprep.mubr.bf16.mxu0 0
        %7667 = vmatmul.mubr.bf16.gmra.mxu0 %v7488
        %v7668 = vpop.f32.mrf.mxu0
        %v7669 = vadd.f32 %v7485, %v7668
        %v7670 = vpop.f32.mrf.mxu0
        %v7671 = vadd.f32 %v7485, %v7670
        %v7672 = vpop.f32.mrf.mxu0
        %v7673 = vpop.f32.mrf.mxu0
        %7674 = vdwg.mxu0
        %7675 = vmatprep.subr.bf16.mxu0 0
        %7676 = vmatpush1.bf16.xpose.msra.mxu0 %v7560
        %7677 = vmatprep.subr.bf16.mxu0 0
        %7678 = vmatpush1.bf16.xpose.msra.mxu0 %v7557
        %7679 = vmatprep.subr.bf16.mxu0 0
        %7680 = vmatpush1.bf16.xpose.msra.mxu0 %v7554
        %7681 = vmatprep.subr.bf16.mxu0 0
        %7682 = vmatpush1.bf16.xpose.msra.mxu0 %v7551
        %7683 = vmatprep.subr.bf16.mxu0 0
        %7684 = vmatpush1.bf16.xpose.msra.mxu0 %v7548
        %7685 = vmatprep.subr.bf16.mxu0 0
        %7686 = vmatpush1.bf16.xpose.msra.mxu0 %v7545
        %7687 = vmatprep.subr.bf16.mxu0 0
        %7688 = vmatpush1.bf16.xpose.msra.mxu0 %v7542
        %7689 = vmatprep.subr.bf16.mxu0 0
        %7690 = vmatpush1.bf16.xpose.msra.mxu0 %v7539
        %7691 = vmatprep.subr.bf16.mxu0 0
        %7692 = vmatpush2.bf16.xpose.msra.mxu0 %v7584
        %7693 = vmatprep.subr.bf16.mxu0 0
        %7694 = vmatpush2.bf16.xpose.msra.mxu0 %v7581
        %7695 = vmatprep.subr.bf16.mxu0 0
        %7696 = vmatpush2.bf16.xpose.msra.mxu0 %v7578
        %7697 = vmatprep.subr.bf16.mxu0 0
        %7698 = vmatpush2.bf16.xpose.msra.mxu0 %v7575
        %7699 = vmatprep.subr.bf16.mxu0 0
        %7700 = vmatpush2.bf16.xpose.msra.mxu0 %v7572
        %7701 = vmatprep.subr.bf16.mxu0 0
        %7702 = vmatpush2.bf16.xpose.msra.mxu0 %v7569
        %7703 = vmatprep.subr.bf16.mxu0 0
        %7704 = vmatpush2.bf16.xpose.msra.mxu0 %v7566
        %7705 = vmatprep.subr.bf16.mxu0 0
        %7706 = vmatpush2.bf16.xpose.msra.mxu0 %v7563
        %7707 = vmatprep.mubr.bf16.mxu0 0
        %7708 = vmatmul.mubr.bf16.gmra.mxu0 %v7488
        %v7709 = vpop.f32.mrf.mxu0
        %v7710 = vadd.f32 %v7485, %v7709
        %v7711 = vpop.f32.mrf.mxu0
        %v7712 = vadd.f32 %v7485, %v7711
        %v7713 = vpop.f32.mrf.mxu0
        %v7714 = vpop.f32.mrf.mxu0
        %7715 = vdwg.mxu0
        %7716 = vmatprep.subr.bf16.mxu0 0
        %7717 = vmatpush1.bf16.xpose.msra.mxu0 %v7608
        %7718 = vmatprep.subr.bf16.mxu0 0
        %7719 = vmatpush1.bf16.xpose.msra.mxu0 %v7605
        %7720 = vmatprep.subr.bf16.mxu0 0
        %7721 = vmatpush1.bf16.xpose.msra.mxu0 %v7602
        %7722 = vmatprep.subr.bf16.mxu0 0
        %7723 = vmatpush1.bf16.xpose.msra.mxu0 %v7599
        %7724 = vmatprep.subr.bf16.mxu0 0
        %7725 = vmatpush1.bf16.xpose.msra.mxu0 %v7596
        %7726 = vmatprep.subr.bf16.mxu0 0
        %7727 = vmatpush1.bf16.xpose.msra.mxu0 %v7593
        %7728 = vmatprep.subr.bf16.mxu0 0
        %7729 = vmatpush1.bf16.xpose.msra.mxu0 %v7590
        %7730 = vmatprep.subr.bf16.mxu0 0
        %7731 = vmatpush1.bf16.xpose.msra.mxu0 %v7587
        %7732 = vmatprep.subr.bf16.mxu0 0
        %7733 = vmatpush2.bf16.xpose.msra.mxu0 %v7632
        %7734 = vmatprep.subr.bf16.mxu0 0
        %7735 = vmatpush2.bf16.xpose.msra.mxu0 %v7629
        %7736 = vmatprep.subr.bf16.mxu0 0
        %7737 = vmatpush2.bf16.xpose.msra.mxu0 %v7626
        %7738 = vmatprep.subr.bf16.mxu0 0
        %7739 = vmatpush2.bf16.xpose.msra.mxu0 %v7623
        %7740 = vmatprep.subr.bf16.mxu0 0
        %7741 = vmatpush2.bf16.xpose.msra.mxu0 %v7620
        %7742 = vmatprep.subr.bf16.mxu0 0
        %7743 = vmatpush2.bf16.xpose.msra.mxu0 %v7617
        %7744 = vmatprep.subr.bf16.mxu0 0
        %7745 = vmatpush2.bf16.xpose.msra.mxu0 %v7614
        %7746 = vmatprep.subr.bf16.mxu0 0
        %7747 = vmatpush2.bf16.xpose.msra.mxu0 %v7611
        %7748 = vmatprep.mubr.bf16.mxu0 0
        %7749 = vmatmul.mubr.bf16.gmra.mxu0 %v7488
        %v7750 = vpop.f32.mrf.mxu0
        %v7751 = vadd.f32 %v7485, %v7750
        %v7752 = vpop.f32.mrf.mxu0
        %v7753 = vadd.f32 %v7485, %v7752
        %v7754 = vpop.f32.mrf.mxu0
        %v7755 = vpop.f32.mrf.mxu0
        %7756 = vdwg.mxu0
        %v7759 = vcombine.low %v7669, %v7671
        %7761 = vst [vmem:[%s328] sm:$0x77] %v7759
        %v7764 = vcombine.low %v7710, %v7712
        %s7766 = scalar_lea.vmem %s328, 8 [#allocation3]
        %7767 = vst [vmem:[%s7766] sm:$0x77] %v7764
        %v7770 = vcombine.low %v7751, %v7753
        %s7772 = scalar_lea.vmem %s328, 16 [#allocation3]
        %7773 = vst [vmem:[%s7772] sm:$0x77] %v7770
        %s7774 = sand.u32 %s225, 1
        %s7775 = scalar_lea.sflag [#allocation4], %s7774
        %s7776 = sand.u32 %s225, 1
        %s7777 = smul.addr %s7776, 24
        %s7778 = scalar_lea.vmem [#allocation3], %s7777
        // Predicated region
        $region57: #{tpu_custom_call.1} parent=55 // pred_check
          %p7779 = pneg %p235
        $region58: #{tpu_custom_call.1} parent=55 // pred_check_branch
          %7781 = sbr.rel (%p7779) target = $region60
        $region59: #{tpu_custom_call.1} parent=55 // pred_region
          %s7782 = smul.u32 3, %s23
          %s7784 = ssub.s32 384, 384
          %7785 = vsyncadd %s7775, %s7784
          %s7786 = smul.addr %s7782, 2
          %s7787 = smul.addr %s7786, 64
          %s7788 = scalar_lea.hbm %s9, %s7787
          %s7789 = sshll.u32 %s7778, 4
          %s7790 = int_to_ptr.vmem [resolvable:$true] %s7789
          %7795 = dma.vmem_to_hbm [thread:$0]  %s7790, 384, %s7788, %s7775, 128, 128, 8
        $region60: #{tpu_custom_call.1} parent=55 // pred_fallthru
          _
      $region56: #{tpu_custom_call.1} parent=5 // pred_fallthru
        _
      %p7796 = scmp.le.s32.totalorder 2, %s18
      // Predicated region
      $region61: #{tpu_custom_call.1} parent=5 // pred_check
        %p7797 = pneg %p7796
      $region62: #{tpu_custom_call.1} parent=5 // pred_check_branch
        %7799 = sbr.rel (%p7797) target = $region64
      $region63: #{tpu_custom_call.1} parent=5 // pred_region
        %s7800 = ssub.s32 %s18, 2
        // Predicated region
        $region65: #{tpu_custom_call.1} parent=63 // pred_check
          %p7801 = pneg %p241
        $region66: #{tpu_custom_call.1} parent=63 // pred_check_branch
          %7803 = sbr.rel (%p7801) target = $region68
        $region67: #{tpu_custom_call.1} parent=63 // pred_region
          %s7804 = sand.u32 %s226, 1
          %s7805 = scalar_lea.sflag [#allocation4], %s7804
          %s7806 = sand.u32 %s226, 1
          %s7807 = smul.addr %s7806, 24
          %s7808 = scalar_lea.vmem [#allocation3], %s7807
          %7809 = dma.done %s7805, 384
        $region68: #{tpu_custom_call.1} parent=63 // pred_fallthru
          _
      $region64: #{tpu_custom_call.1} parent=5 // pred_fallthru
        _
    $region6: #{tpu_custom_call.1} parent=1 // loop_footer
      %s22 = sadd.s32 1, %s18
    $region7: #{tpu_custom_call.1} parent=1 // loop_footer_branch
      %17 = sbr.rel target = $region3
    $region8: #{tpu_custom_call.1} parent=1 // loop_exit
      _
    %7810 = vsyncpa [#allocation4], 1
    %s7811 = scalar_lea.sflag [#allocation4], 1
    %7812 = vsyncpa %s7811, 1

</llo_original>
